<compile_context>
chip_gen: v6e
topology: v6e:2x2x1
jax: 0.10.0
libtpu: 0.0.40
codegen_flags: <defaults>
</compile_context>

<pallas_src>
import jax
import jax.numpy as jnp
import numpy as np
from jax.experimental import pallas as pl
from jax.experimental.pallas import tpu as pltpu


# ----------------------------- Pallas kernel --------------------------------
def classifier_kernel(a_ref, x_ref,
                      w1_ref, b1_ref, w2_ref, b2_ref,
                      wh_ref, bh_ref,
                      pred_ref):
    f32 = jnp.float32
    A = a_ref[...]                       # (Bb, N, N) weighted adjacency, A[b, dst, src]
    x0 = x_ref[...]                      # (Bb, N, D)
    Bb, N, D = x0.shape                  # static

    def gin_aggregate(h):
        # VPU broadcast-MAC over the N=8 source nodes instead of a padded K=8 MXU matmul:
        #   acc[b, i, :] = sum_j A[b, i, j] * h[b, j, :]
        acc = A[:, :, 0:1] * h[:, 0:1, :]
        for j in range(1, N):            # small static unroll
            acc = acc + A[:, :, j:j + 1] * h[:, j:j + 1, :]
        return acc

    # --- GIN layer 1 (eps = 0): h1 = (x0 + A @ x0) @ W1 + b1 ---
    z1 = (x0 + gin_aggregate(x0)).reshape(Bb * N, D)         # tile-aligned, layout-free reshape
    h1 = jnp.dot(z1, w1_ref[...], preferred_element_type=f32) + b1_ref[...]
    h1 = h1.reshape(Bb, N, D)

    # --- GIN layer 2: h2 = (h1 + A @ h1) @ W2 + b2 ---
    z2 = (h1 + gin_aggregate(h1)).reshape(Bb * N, D)
    h2 = jnp.dot(z2, w2_ref[...], preferred_element_type=f32) + b2_ref[...]

    # --- residual (use_lm = 1) + mean over nodes ---
    out = h2.reshape(Bb, N, D) + x0                           # (Bb, N, D)
    graph_repre = out.sum(axis=1) * (1.0 / N)                 # (Bb, D)

    # --- head: Linear(D, cls_num) -> tanh ---
    pred_ref[...] = jnp.tanh(
        jnp.dot(graph_repre, wh_ref[...], preferred_element_type=f32) + bh_ref[...])


# ------------------------------ wrapper --------------------------------------
def classifier_forward(A, x0, params, *, block_b=64):
    B, N, D = x0.shape
    W1, b1, W2, b2, Wh, bh = params
    C = Wh.shape[1]
    block_b = min(block_b, B)
    assert B % block_b == 0, "batch must be a multiple of block_b"

    grid = (B // block_b,)
    in_specs = [
        pl.BlockSpec((block_b, N, N), lambda i: (i, 0, 0)),   # A      (iterates)
        pl.BlockSpec((block_b, N, D), lambda i: (i, 0, 0)),   # x0     (iterates)
        pl.BlockSpec((D, D), lambda i: (0, 0)),               # W1     (resident)
        pl.BlockSpec((1, D), lambda i: (0, 0)),               # b1
        pl.BlockSpec((D, D), lambda i: (0, 0)),               # W2
        pl.BlockSpec((1, D), lambda i: (0, 0)),               # b2
        pl.BlockSpec((D, C), lambda i: (0, 0)),               # W_head
        pl.BlockSpec((1, C), lambda i: (0, 0)),               # b_head
    ]
    out_specs = pl.BlockSpec((block_b, C), lambda i: (i, 0))

    return pl.pallas_call(
        classifier_kernel,
        out_shape=jax.ShapeDtypeStruct((B, C), jnp.float32),
        grid=grid,
        in_specs=in_specs,
        out_specs=out_specs,
        compiler_params=pltpu.CompilerParams(
            dimension_semantics=("parallel",),
            vmem_limit_bytes=64 << 20),
    )(A, x0, W1, b1, W2, b2, Wh, bh)


# --------------------------- pure-JAX reference -------------------------------
def classifier_reference(A, x0, params):
    hp = jax.lax.Precision.HIGHEST
    W1, b1, W2, b2, Wh, bh = params
    agg1 = jnp.einsum('bij,bjd->bid', A, x0, precision=hp)
    h1 = jnp.einsum('bnd,de->bne', x0 + agg1, W1, precision=hp) + b1
    agg2 = jnp.einsum('bij,bjd->bid', A, h1, precision=hp)
    h2 = jnp.einsum('bnd,de->bne', h1 + agg2, W2, precision=hp) + b2
    out = h2 + x0
    graph_repre = jnp.mean(out, axis=1)
    return jnp.tanh(jnp.dot(graph_repre, Wh, precision=hp) + bh)


# -------------------------- deterministic init --------------------------------
def linear_init(key, fan_in, fan_out):
    # PyTorch-style uniform(-1/sqrt(fan_in), 1/sqrt(fan_in)); weight stored (in, out).
    kw, kb = jax.random.split(key)
    bound = 1.0 / np.sqrt(fan_in)
    W = jax.random.uniform(kw, (fan_in, fan_out), jnp.float32, -bound, bound)
    b = jax.random.uniform(kb, (1, fan_out), jnp.float32, -bound, bound)
    return W, b


if __name__ == "__main__":
    # small, self-consistent shapes
    D = 128                 # node_emb_size
    S = 10                  # BERT sequence length -> N = S - 2 graph nodes
    N = S - 2               # 8 nodes per graph
    D_lm = 96               # LM embedding width
    D_node = D - D_lm       # raw node-feature width (concat gives D total)
    E = 16                  # directed edges per graph
    C = 2                   # cls_num
    B = 256                 # batch of graphs per pallas_call
    BLOCK_B = 64            # graphs per grid step

    key = jax.random.PRNGKey(0)
    k = jax.random.split(key, 10)

    # ---- inputs (what the PyTorch forward receives, batched over graphs) ----
    lm_embedding = jax.random.normal(k[0], (B, S, D_lm), jnp.float32)   # frozen LM output
    node_feat = jax.random.normal(k[1], (B, N, D_node), jnp.float32)
    edge_src = jax.random.randint(k[2], (B, E), 0, N)
    edge_dst = jax.random.randint(k[3], (B, E), 0, N)
    edge_feat = jax.random.uniform(k[4], (B, E), jnp.float32, 0.5, 2.0)

    # ---- parameters (deterministic; torch.load'ed weights replaced by random init) ----
    W1, b1 = linear_init(k[5], D, D)      # gin.apply_func
    W2, b2 = linear_init(k[6], D, D)      # gin1.apply_func
    Wh, bh = linear_init(k[7], D, C)      # head[0]
    params = (W1, b1, W2, b2, Wh, bh)

    # ---- host-side glue: concat features, edge weights -> dense adjacency ----
    x0 = jnp.concatenate([lm_embedding[:, 1:-1, :], node_feat], axis=2)   # (B, N, D)
    edge_w = 1.0 / (edge_feat ** 2 + 1e-6)
    b_idx = jnp.broadcast_to(jnp.arange(B)[:, None], (B, E))
    A = jnp.zeros((B, N, N), jnp.float32).at[b_idx, edge_dst, edge_src].add(edge_w)

    # ---- run Pallas kernel ----
    pred = classifier_forward(A, x0, params, block_b=BLOCK_B)
    jax.block_until_ready(pred)

    # ---- check against pure-JAX reference ----
    ref = classifier_reference(A, x0, params)
    np.testing.assert_allclose(np.asarray(pred), np.asarray(ref), rtol=2e-3, atol=2e-3)
    assert pred.shape == (B, C)

    print("KERNEL_OK")
</pallas_src>

<mosaic_0001>
module attributes {stable_mosaic.version = 11 : i64} {
  func.func @classifier_kernel(%arg0: i32, %arg1: memref<64x8x8xf32, #tpu.memory_space<vmem>>, %arg2: memref<64x8x128xf32, #tpu.memory_space<vmem>>, %arg3: memref<128x128xf32, #tpu.memory_space<vmem>>, %arg4: memref<1x128xf32, #tpu.memory_space<vmem>>, %arg5: memref<128x128xf32, #tpu.memory_space<vmem>>, %arg6: memref<1x128xf32, #tpu.memory_space<vmem>>, %arg7: memref<128x2xf32, #tpu.memory_space<vmem>>, %arg8: memref<1x2xf32, #tpu.memory_space<vmem>>, %arg9: memref<64x2xf32, #tpu.memory_space<vmem>>) attributes {dimension_semantics = [#tpu.dimension_semantics<parallel>], iteration_bounds = array<i64: 4>, scalar_prefetch = 0 : i64, scratch_operands = 0 : i64, tpu.core_type = #tpu.core_type<tc>, window_params = [{transform_indices = @transform_0, window_bounds = array<i64: 64, 8, 8>}, {transform_indices = @transform_1, window_bounds = array<i64: 64, 8, 128>}, {pipeline_mode = #tpu.pipeline_mode<synchronous>, transform_indices = @transform_2, window_bounds = array<i64: 128, 128>}, {pipeline_mode = #tpu.pipeline_mode<synchronous>, transform_indices = @transform_3, window_bounds = array<i64: 1, 128>}, {pipeline_mode = #tpu.pipeline_mode<synchronous>, transform_indices = @transform_4, window_bounds = array<i64: 128, 128>}, {pipeline_mode = #tpu.pipeline_mode<synchronous>, transform_indices = @transform_5, window_bounds = array<i64: 1, 128>}, {pipeline_mode = #tpu.pipeline_mode<synchronous>, transform_indices = @transform_6, window_bounds = array<i64: 128, 2>}, {pipeline_mode = #tpu.pipeline_mode<synchronous>, transform_indices = @transform_7, window_bounds = array<i64: 1, 2>}, {transform_indices = @transform_8, window_bounds = array<i64: 64, 2>}]} {
    %c0 = arith.constant 0 : index
    %c0_0 = arith.constant 0 : index
    %c0_1 = arith.constant 0 : index
    %0 = vector.load %arg1[%c0, %c0_0, %c0_1] : memref<64x8x8xf32, #tpu.memory_space<vmem>>, vector<64x8x8xf32>
    %c0_2 = arith.constant 0 : index
    %c0_3 = arith.constant 0 : index
    %c0_4 = arith.constant 0 : index
    %1 = vector.load %arg2[%c0_2, %c0_3, %c0_4] : memref<64x8x128xf32, #tpu.memory_space<vmem>>, vector<64x8x128xf32>
    %2 = vector.extract_strided_slice %0 {offsets = [0, 0, 0], sizes = [64, 8, 1], strides = [1, 1, 1]} : vector<64x8x8xf32> to vector<64x8x1xf32>
    %3 = vector.extract_strided_slice %1 {offsets = [0, 0, 0], sizes = [64, 1, 128], strides = [1, 1, 1]} : vector<64x8x128xf32> to vector<64x1x128xf32>
    %4 = vector.broadcast %2 : vector<64x8x1xf32> to vector<64x8x128xf32>
    %5 = vector.broadcast %3 : vector<64x1x128xf32> to vector<64x8x128xf32>
    %6 = arith.mulf %4, %5 : vector<64x8x128xf32>
    %7 = vector.extract_strided_slice %0 {offsets = [0, 0, 1], sizes = [64, 8, 1], strides = [1, 1, 1]} : vector<64x8x8xf32> to vector<64x8x1xf32>
    %8 = vector.extract_strided_slice %1 {offsets = [0, 1, 0], sizes = [64, 1, 128], strides = [1, 1, 1]} : vector<64x8x128xf32> to vector<64x1x128xf32>
    %9 = vector.broadcast %7 : vector<64x8x1xf32> to vector<64x8x128xf32>
    %10 = vector.broadcast %8 : vector<64x1x128xf32> to vector<64x8x128xf32>
    %11 = arith.mulf %9, %10 : vector<64x8x128xf32>
    %12 = arith.addf %6, %11 : vector<64x8x128xf32>
    %13 = vector.extract_strided_slice %0 {offsets = [0, 0, 2], sizes = [64, 8, 1], strides = [1, 1, 1]} : vector<64x8x8xf32> to vector<64x8x1xf32>
    %14 = vector.extract_strided_slice %1 {offsets = [0, 2, 0], sizes = [64, 1, 128], strides = [1, 1, 1]} : vector<64x8x128xf32> to vector<64x1x128xf32>
    %15 = vector.broadcast %13 : vector<64x8x1xf32> to vector<64x8x128xf32>
    %16 = vector.broadcast %14 : vector<64x1x128xf32> to vector<64x8x128xf32>
    %17 = arith.mulf %15, %16 : vector<64x8x128xf32>
    %18 = arith.addf %12, %17 : vector<64x8x128xf32>
    %19 = vector.extract_strided_slice %0 {offsets = [0, 0, 3], sizes = [64, 8, 1], strides = [1, 1, 1]} : vector<64x8x8xf32> to vector<64x8x1xf32>
    %20 = vector.extract_strided_slice %1 {offsets = [0, 3, 0], sizes = [64, 1, 128], strides = [1, 1, 1]} : vector<64x8x128xf32> to vector<64x1x128xf32>
    %21 = vector.broadcast %19 : vector<64x8x1xf32> to vector<64x8x128xf32>
    %22 = vector.broadcast %20 : vector<64x1x128xf32> to vector<64x8x128xf32>
    %23 = arith.mulf %21, %22 : vector<64x8x128xf32>
    %24 = arith.addf %18, %23 : vector<64x8x128xf32>
    %25 = vector.extract_strided_slice %0 {offsets = [0, 0, 4], sizes = [64, 8, 1], strides = [1, 1, 1]} : vector<64x8x8xf32> to vector<64x8x1xf32>
    %26 = vector.extract_strided_slice %1 {offsets = [0, 4, 0], sizes = [64, 1, 128], strides = [1, 1, 1]} : vector<64x8x128xf32> to vector<64x1x128xf32>
    %27 = vector.broadcast %25 : vector<64x8x1xf32> to vector<64x8x128xf32>
    %28 = vector.broadcast %26 : vector<64x1x128xf32> to vector<64x8x128xf32>
    %29 = arith.mulf %27, %28 : vector<64x8x128xf32>
    %30 = arith.addf %24, %29 : vector<64x8x128xf32>
    %31 = vector.extract_strided_slice %0 {offsets = [0, 0, 5], sizes = [64, 8, 1], strides = [1, 1, 1]} : vector<64x8x8xf32> to vector<64x8x1xf32>
    %32 = vector.extract_strided_slice %1 {offsets = [0, 5, 0], sizes = [64, 1, 128], strides = [1, 1, 1]} : vector<64x8x128xf32> to vector<64x1x128xf32>
    %33 = vector.broadcast %31 : vector<64x8x1xf32> to vector<64x8x128xf32>
    %34 = vector.broadcast %32 : vector<64x1x128xf32> to vector<64x8x128xf32>
    %35 = arith.mulf %33, %34 : vector<64x8x128xf32>
    %36 = arith.addf %30, %35 : vector<64x8x128xf32>
    %37 = vector.extract_strided_slice %0 {offsets = [0, 0, 6], sizes = [64, 8, 1], strides = [1, 1, 1]} : vector<64x8x8xf32> to vector<64x8x1xf32>
    %38 = vector.extract_strided_slice %1 {offsets = [0, 6, 0], sizes = [64, 1, 128], strides = [1, 1, 1]} : vector<64x8x128xf32> to vector<64x1x128xf32>
    %39 = vector.broadcast %37 : vector<64x8x1xf32> to vector<64x8x128xf32>
    %40 = vector.broadcast %38 : vector<64x1x128xf32> to vector<64x8x128xf32>
    %41 = arith.mulf %39, %40 : vector<64x8x128xf32>
    %42 = arith.addf %36, %41 : vector<64x8x128xf32>
    %43 = vector.extract_strided_slice %0 {offsets = [0, 0, 7], sizes = [64, 8, 1], strides = [1, 1, 1]} : vector<64x8x8xf32> to vector<64x8x1xf32>
    %44 = vector.extract_strided_slice %1 {offsets = [0, 7, 0], sizes = [64, 1, 128], strides = [1, 1, 1]} : vector<64x8x128xf32> to vector<64x1x128xf32>
    %45 = vector.broadcast %43 : vector<64x8x1xf32> to vector<64x8x128xf32>
    %46 = vector.broadcast %44 : vector<64x1x128xf32> to vector<64x8x128xf32>
    %47 = arith.mulf %45, %46 : vector<64x8x128xf32>
    %48 = arith.addf %42, %47 : vector<64x8x128xf32>
    %49 = arith.addf %1, %48 : vector<64x8x128xf32>
    %50 = vector.shape_cast %49 : vector<64x8x128xf32> to vector<512x128xf32>
    %c0_5 = arith.constant 0 : index
    %c0_6 = arith.constant 0 : index
    %51 = vector.load %arg3[%c0_5, %c0_6] : memref<128x128xf32, #tpu.memory_space<vmem>>, vector<128x128xf32>
    %cst = arith.constant dense<0.000000e+00> : vector<512x128xf32>
    %52 = tpu.matmul %50, %51, %cst {dimension_numbers = #tpu.dot_dimension_numbers<[1], [0], [0], [1], [0, 0, 1, 1], [], []>} : vector<512x128xf32>, vector<128x128xf32>, vector<512x128xf32> -> vector<512x128xf32>
    %c0_7 = arith.constant 0 : index
    %c0_8 = arith.constant 0 : index
    %53 = vector.load %arg4[%c0_7, %c0_8] : memref<1x128xf32, #tpu.memory_space<vmem>>, vector<1x128xf32>
    %54 = vector.broadcast %53 : vector<1x128xf32> to vector<512x128xf32>
    %55 = arith.addf %52, %54 : vector<512x128xf32>
    %56 = vector.shape_cast %55 : vector<512x128xf32> to vector<64x8x128xf32>
    %57 = vector.extract_strided_slice %0 {offsets = [0, 0, 0], sizes = [64, 8, 1], strides = [1, 1, 1]} : vector<64x8x8xf32> to vector<64x8x1xf32>
    %58 = vector.extract_strided_slice %56 {offsets = [0, 0, 0], sizes = [64, 1, 128], strides = [1, 1, 1]} : vector<64x8x128xf32> to vector<64x1x128xf32>
    %59 = vector.broadcast %57 : vector<64x8x1xf32> to vector<64x8x128xf32>
    %60 = vector.broadcast %58 : vector<64x1x128xf32> to vector<64x8x128xf32>
    %61 = arith.mulf %59, %60 : vector<64x8x128xf32>
    %62 = vector.extract_strided_slice %0 {offsets = [0, 0, 1], sizes = [64, 8, 1], strides = [1, 1, 1]} : vector<64x8x8xf32> to vector<64x8x1xf32>
    %63 = vector.extract_strided_slice %56 {offsets = [0, 1, 0], sizes = [64, 1, 128], strides = [1, 1, 1]} : vector<64x8x128xf32> to vector<64x1x128xf32>
    %64 = vector.broadcast %62 : vector<64x8x1xf32> to vector<64x8x128xf32>
    %65 = vector.broadcast %63 : vector<64x1x128xf32> to vector<64x8x128xf32>
    %66 = arith.mulf %64, %65 : vector<64x8x128xf32>
    %67 = arith.addf %61, %66 : vector<64x8x128xf32>
    %68 = vector.extract_strided_slice %0 {offsets = [0, 0, 2], sizes = [64, 8, 1], strides = [1, 1, 1]} : vector<64x8x8xf32> to vector<64x8x1xf32>
    %69 = vector.extract_strided_slice %56 {offsets = [0, 2, 0], sizes = [64, 1, 128], strides = [1, 1, 1]} : vector<64x8x128xf32> to vector<64x1x128xf32>
    %70 = vector.broadcast %68 : vector<64x8x1xf32> to vector<64x8x128xf32>
    %71 = vector.broadcast %69 : vector<64x1x128xf32> to vector<64x8x128xf32>
    %72 = arith.mulf %70, %71 : vector<64x8x128xf32>
    %73 = arith.addf %67, %72 : vector<64x8x128xf32>
    %74 = vector.extract_strided_slice %0 {offsets = [0, 0, 3], sizes = [64, 8, 1], strides = [1, 1, 1]} : vector<64x8x8xf32> to vector<64x8x1xf32>
    %75 = vector.extract_strided_slice %56 {offsets = [0, 3, 0], sizes = [64, 1, 128], strides = [1, 1, 1]} : vector<64x8x128xf32> to vector<64x1x128xf32>
    %76 = vector.broadcast %74 : vector<64x8x1xf32> to vector<64x8x128xf32>
    %77 = vector.broadcast %75 : vector<64x1x128xf32> to vector<64x8x128xf32>
    %78 = arith.mulf %76, %77 : vector<64x8x128xf32>
    %79 = arith.addf %73, %78 : vector<64x8x128xf32>
    %80 = vector.extract_strided_slice %0 {offsets = [0, 0, 4], sizes = [64, 8, 1], strides = [1, 1, 1]} : vector<64x8x8xf32> to vector<64x8x1xf32>
    %81 = vector.extract_strided_slice %56 {offsets = [0, 4, 0], sizes = [64, 1, 128], strides = [1, 1, 1]} : vector<64x8x128xf32> to vector<64x1x128xf32>
    %82 = vector.broadcast %80 : vector<64x8x1xf32> to vector<64x8x128xf32>
    %83 = vector.broadcast %81 : vector<64x1x128xf32> to vector<64x8x128xf32>
    %84 = arith.mulf %82, %83 : vector<64x8x128xf32>
    %85 = arith.addf %79, %84 : vector<64x8x128xf32>
    %86 = vector.extract_strided_slice %0 {offsets = [0, 0, 5], sizes = [64, 8, 1], strides = [1, 1, 1]} : vector<64x8x8xf32> to vector<64x8x1xf32>
    %87 = vector.extract_strided_slice %56 {offsets = [0, 5, 0], sizes = [64, 1, 128], strides = [1, 1, 1]} : vector<64x8x128xf32> to vector<64x1x128xf32>
    %88 = vector.broadcast %86 : vector<64x8x1xf32> to vector<64x8x128xf32>
    %89 = vector.broadcast %87 : vector<64x1x128xf32> to vector<64x8x128xf32>
    %90 = arith.mulf %88, %89 : vector<64x8x128xf32>
    %91 = arith.addf %85, %90 : vector<64x8x128xf32>
    %92 = vector.extract_strided_slice %0 {offsets = [0, 0, 6], sizes = [64, 8, 1], strides = [1, 1, 1]} : vector<64x8x8xf32> to vector<64x8x1xf32>
    %93 = vector.extract_strided_slice %56 {offsets = [0, 6, 0], sizes = [64, 1, 128], strides = [1, 1, 1]} : vector<64x8x128xf32> to vector<64x1x128xf32>
    %94 = vector.broadcast %92 : vector<64x8x1xf32> to vector<64x8x128xf32>
    %95 = vector.broadcast %93 : vector<64x1x128xf32> to vector<64x8x128xf32>
    %96 = arith.mulf %94, %95 : vector<64x8x128xf32>
    %97 = arith.addf %91, %96 : vector<64x8x128xf32>
    %98 = vector.extract_strided_slice %0 {offsets = [0, 0, 7], sizes = [64, 8, 1], strides = [1, 1, 1]} : vector<64x8x8xf32> to vector<64x8x1xf32>
    %99 = vector.extract_strided_slice %56 {offsets = [0, 7, 0], sizes = [64, 1, 128], strides = [1, 1, 1]} : vector<64x8x128xf32> to vector<64x1x128xf32>
    %100 = vector.broadcast %98 : vector<64x8x1xf32> to vector<64x8x128xf32>
    %101 = vector.broadcast %99 : vector<64x1x128xf32> to vector<64x8x128xf32>
    %102 = arith.mulf %100, %101 : vector<64x8x128xf32>
    %103 = arith.addf %97, %102 : vector<64x8x128xf32>
    %104 = arith.addf %56, %103 : vector<64x8x128xf32>
    %105 = vector.shape_cast %104 : vector<64x8x128xf32> to vector<512x128xf32>
    %c0_9 = arith.constant 0 : index
    %c0_10 = arith.constant 0 : index
    %106 = vector.load %arg5[%c0_9, %c0_10] : memref<128x128xf32, #tpu.memory_space<vmem>>, vector<128x128xf32>
    %cst_11 = arith.constant dense<0.000000e+00> : vector<512x128xf32>
    %107 = tpu.matmul %105, %106, %cst_11 {dimension_numbers = #tpu.dot_dimension_numbers<[1], [0], [0], [1], [0, 0, 1, 1], [], []>} : vector<512x128xf32>, vector<128x128xf32>, vector<512x128xf32> -> vector<512x128xf32>
    %c0_12 = arith.constant 0 : index
    %c0_13 = arith.constant 0 : index
    %108 = vector.load %arg6[%c0_12, %c0_13] : memref<1x128xf32, #tpu.memory_space<vmem>>, vector<1x128xf32>
    %109 = vector.broadcast %108 : vector<1x128xf32> to vector<512x128xf32>
    %110 = arith.addf %107, %109 : vector<512x128xf32>
    %111 = vector.shape_cast %110 : vector<512x128xf32> to vector<64x8x128xf32>
    %112 = arith.addf %111, %1 : vector<64x8x128xf32>
    %cst_14 = arith.constant dense<0.000000e+00> : vector<64x128xf32>
    %113 = vector.multi_reduction <add>, %112, %cst_14 [1] : vector<64x8x128xf32> to vector<64x128xf32>
    %cst_15 = arith.constant 1.250000e-01 : f32
    %114 = vector.broadcast %cst_15 : f32 to vector<64x128xf32>
    %115 = arith.mulf %113, %114 : vector<64x128xf32>
    %c0_16 = arith.constant 0 : index
    %c0_17 = arith.constant 0 : index
    %116 = vector.load %arg7[%c0_16, %c0_17] : memref<128x2xf32, #tpu.memory_space<vmem>>, vector<128x2xf32>
    %cst_18 = arith.constant dense<0.000000e+00> : vector<64x2xf32>
    %117 = tpu.matmul %115, %116, %cst_18 {dimension_numbers = #tpu.dot_dimension_numbers<[1], [0], [0], [1], [0, 0, 1, 1], [], []>} : vector<64x128xf32>, vector<128x2xf32>, vector<64x2xf32> -> vector<64x2xf32>
    %c0_19 = arith.constant 0 : index
    %c0_20 = arith.constant 0 : index
    %118 = vector.load %arg8[%c0_19, %c0_20] : memref<1x2xf32, #tpu.memory_space<vmem>>, vector<1x2xf32>
    %119 = vector.broadcast %118 : vector<1x2xf32> to vector<64x2xf32>
    %120 = arith.addf %117, %119 : vector<64x2xf32>
    %121 = math.tanh %120 : vector<64x2xf32>
    %c0_21 = arith.constant 0 : index
    %c0_22 = arith.constant 0 : index
    %122 = vector.load %arg9[%c0_21, %c0_22] : memref<64x2xf32, #tpu.memory_space<vmem>>, vector<64x2xf32>
    tpu.vector_store %arg9[%c0_21, %c0_22], %121 {strides = array<i32>} : memref<64x2xf32, #tpu.memory_space<vmem>>, vector<64x2xf32>,
    return
  }
  func.func @transform_0(%arg0: i32) -> (i32, i32, i32) {
    %c0_i32 = arith.constant 0 : i32
    %c0_i32_0 = arith.constant 0 : i32
    %c0_i32_1 = arith.constant 0 : i32
    return %arg0, %c0_i32, %c0_i32_0 : i32, i32, i32
  }
  func.func @transform_1(%arg0: i32) -> (i32, i32, i32) {
    %c0_i32 = arith.constant 0 : i32
    %c0_i32_0 = arith.constant 0 : i32
    %c0_i32_1 = arith.constant 0 : i32
    return %arg0, %c0_i32, %c0_i32_0 : i32, i32, i32
  }
  func.func @transform_2(%arg0: i32) -> (i32, i32) {
    %c0_i32 = arith.constant 0 : i32
    %c0_i32_0 = arith.constant 0 : i32
    %c0_i32_1 = arith.constant 0 : i32
    return %c0_i32, %c0_i32_0 : i32, i32
  }
  func.func @transform_3(%arg0: i32) -> (i32, i32) {
    %c0_i32 = arith.constant 0 : i32
    %c0_i32_0 = arith.constant 0 : i32
    %c0_i32_1 = arith.constant 0 : i32
    return %c0_i32, %c0_i32_0 : i32, i32
  }
  func.func @transform_4(%arg0: i32) -> (i32, i32) {
    %c0_i32 = arith.constant 0 : i32
    %c0_i32_0 = arith.constant 0 : i32
    %c0_i32_1 = arith.constant 0 : i32
    return %c0_i32, %c0_i32_0 : i32, i32
  }
  func.func @transform_5(%arg0: i32) -> (i32, i32) {
    %c0_i32 = arith.constant 0 : i32
    %c0_i32_0 = arith.constant 0 : i32
    %c0_i32_1 = arith.constant 0 : i32
    return %c0_i32, %c0_i32_0 : i32, i32
  }
  func.func @transform_6(%arg0: i32) -> (i32, i32) {
    %c0_i32 = arith.constant 0 : i32
    %c0_i32_0 = arith.constant 0 : i32
    %c0_i32_1 = arith.constant 0 : i32
    return %c0_i32, %c0_i32_0 : i32, i32
  }
  func.func @transform_7(%arg0: i32) -> (i32, i32) {
    %c0_i32 = arith.constant 0 : i32
    %c0_i32_0 = arith.constant 0 : i32
    %c0_i32_1 = arith.constant 0 : i32
    return %c0_i32, %c0_i32_0 : i32, i32
  }
  func.func @transform_8(%arg0: i32) -> (i32, i32) {
    %c0_i32 = arith.constant 0 : i32
    %c0_i32_0 = arith.constant 0 : i32
    return %arg0, %c0_i32 : i32, i32
  }
}

</mosaic_0001>

<llo_original>
// kernel: tpu_custom_call.1
$region0: #{tpu_custom_call.1}
  #allocation0 [shape = 'u32[]', space=smem, size = 0x4, offset = 0x4, fixed_abs, tag = 'smem constant byte address 0x4 - core index']
  #allocation1 [shape = 'u32[144,128]{1,0:T(1,128)}', space=vmem, size = 0x12000, scoped, tag = 'internal scratch']
  %s0 = inlined_call_operand.vmem [shape: f32[256,8,8], index: 0, kind: input, shape index: {}]
  %s1 = inlined_call_operand.vmem [shape: f32[256,8,128], index: 1, kind: input, shape index: {}]
  %s2 = inlined_call_operand.vmem [shape: f32[128,128], index: 2, kind: input, shape index: {}]
  %s3 = inlined_call_operand.vmem [shape: f32[1,128], index: 3, kind: input, shape index: {}]
  %s4 = inlined_call_operand.vmem [shape: f32[128,128], index: 4, kind: input, shape index: {}]
  %s5 = inlined_call_operand.vmem [shape: f32[1,128], index: 5, kind: input, shape index: {}]
  %s6 = inlined_call_operand.vmem [shape: f32[128,2], index: 6, kind: input, shape index: {}]
  %s7 = inlined_call_operand.vmem [shape: f32[1,2], index: 7, kind: input, shape index: {}]
  %s8 = inlined_call_operand.vmem [shape: f32[256,2], index: 8, kind: output, shape index: {}]
  %s9 = sld [smem:[#allocation0]]
  $region65: #{tpu_custom_call.1} parent=0
    _
  %s11 = ssub.s32 1, %s9
  %s12 = scalar_select 0, %s11, %s9
  loop: start=0, step=1, limit=6
  $region2: #{tpu_custom_call.1} parent=0 // loop_pre_header
    _
  $region3: #{tpu_custom_call.1} parent=0 // loop_header
    %s14 = sphi 0, %s18
    %p15 = scmp.ge.s32.totalorder %s14, 6
    %s24 = sphi 0, %s26
    %s27 = sphi 0, %s24
    %s28 = sphi 0, %s27
    %s44 = sphi 0, %s28
    %s50 = sphi 0, %s52
    %s53 = sphi 0, %s50
    %s54 = sphi 0, %s53
    %s70 = sphi 0, %s54
    %s74 = sphi 0, %s74
    %s76 = sphi 0, %s74
    %s77 = sphi 0, %s76
    %s91 = sphi 0, %s77
    %s95 = sphi 0, %s95
    %s97 = sphi 0, %s95
    %s98 = sphi 0, %s97
    %s112 = sphi 0, %s98
    %s116 = sphi 0, %s116
    %s118 = sphi 0, %s116
    %s119 = sphi 0, %s118
    %s133 = sphi 0, %s119
    %s137 = sphi 0, %s137
    %s139 = sphi 0, %s137
    %s140 = sphi 0, %s139
    %s154 = sphi 0, %s140
    %s158 = sphi 0, %s158
    %s160 = sphi 0, %s158
    %s161 = sphi 0, %s160
    %s175 = sphi 0, %s161
    %s179 = sphi 0, %s179
    %s181 = sphi 0, %s179
    %s182 = sphi 0, %s181
    %s196 = sphi 0, %s182
    %s202 = sphi 0, %s204
    %s205 = sphi 0, %s202
    %s206 = sphi 0, %s205
    %s222 = sphi 0, %s206
  $region4: #{tpu_custom_call.1} parent=0 // loop_header_branch
    %17 = sbr.rel (%p15) target = $region8
  $region5: #{tpu_custom_call.1} parent=0 // loop_body
    %s19 = ssub.s32 %s14, 1
    %s20 = ssub.s32 %s14, 2
    %s21 = sadd.s32 %s14, 1
    %s22 = ssub.s32 %s14, %s21
    %p23 = scmp.eq.s32.totalorder %s22, 0
    %s25 = sadd.s32 %s24, 1
    %s26 = scalar_select %p23, %s24, %s25
    %p29 = pneg %p23
    %p30 = scmp.eq.s32.totalorder %s14, 3
    %p31 = por %p29, %p30
    %p32 = scmp.ne.s32.totalorder %s24, %s27
    %p33 = scmp.eq.s32.totalorder %s14, 0
    %p34 = por %p32, %p33
    %p35 = scmp.ne.s32.totalorder %s24, %s27
    %p36 = scmp.eq.s32.totalorder %s19, 3
    %p37 = por %p35, %p36
    %p38 = scmp.ne.s32.totalorder %s27, %s28
    %p39 = scmp.eq.s32.totalorder %s19, 0
    %p40 = por %p38, %p39
    %p41 = scmp.ne.s32.totalorder %s27, %s28
    %p42 = scmp.eq.s32.totalorder %s20, 3
    %p43 = por %p41, %p42
    %p45 = scmp.ne.s32.totalorder %s28, %s44
    %p46 = scmp.eq.s32.totalorder %s20, 0
    %p47 = por %p45, %p46
    %s48 = ssub.s32 %s14, %s21
    %p49 = scmp.eq.s32.totalorder %s48, 0
    %s51 = sadd.s32 %s50, 1
    %s52 = scalar_select %p49, %s50, %s51
    %p55 = pneg %p49
    %p56 = scmp.eq.s32.totalorder %s14, 3
    %p57 = por %p55, %p56
    %p58 = scmp.ne.s32.totalorder %s50, %s53
    %p59 = scmp.eq.s32.totalorder %s14, 0
    %p60 = por %p58, %p59
    %p61 = scmp.ne.s32.totalorder %s50, %s53
    %p62 = scmp.eq.s32.totalorder %s19, 3
    %p63 = por %p61, %p62
    %p64 = scmp.ne.s32.totalorder %s53, %s54
    %p65 = scmp.eq.s32.totalorder %s19, 0
    %p66 = por %p64, %p65
    %p67 = scmp.ne.s32.totalorder %s53, %s54
    %p68 = scmp.eq.s32.totalorder %s20, 3
    %p69 = por %p67, %p68
    %p71 = scmp.ne.s32.totalorder %s54, %s70
    %p72 = scmp.eq.s32.totalorder %s20, 0
    %p73 = por %p71, %p72
    %s75 = sadd.s32 %s74, 1
    %p78 = scmp.eq.s32.totalorder %s14, 3
    %p79 = scmp.ne.s32.totalorder %s74, %s76
    %p80 = scmp.eq.s32.totalorder %s14, 0
    %p81 = por %p79, %p80
    %p82 = scmp.ne.s32.totalorder %s74, %s76
    %p83 = scmp.eq.s32.totalorder %s19, 3
    %p84 = por %p82, %p83
    %p85 = scmp.ne.s32.totalorder %s76, %s77
    %p86 = scmp.eq.s32.totalorder %s19, 0
    %p87 = por %p85, %p86
    %p88 = scmp.ne.s32.totalorder %s76, %s77
    %p89 = scmp.eq.s32.totalorder %s20, 3
    %p90 = por %p88, %p89
    %p92 = scmp.ne.s32.totalorder %s77, %s91
    %p93 = scmp.eq.s32.totalorder %s20, 0
    %p94 = por %p92, %p93
    %s96 = sadd.s32 %s95, 1
    %p99 = scmp.eq.s32.totalorder %s14, 3
    %p100 = scmp.ne.s32.totalorder %s95, %s97
    %p101 = scmp.eq.s32.totalorder %s14, 0
    %p102 = por %p100, %p101
    %p103 = scmp.ne.s32.totalorder %s95, %s97
    %p104 = scmp.eq.s32.totalorder %s19, 3
    %p105 = por %p103, %p104
    %p106 = scmp.ne.s32.totalorder %s97, %s98
    %p107 = scmp.eq.s32.totalorder %s19, 0
    %p108 = por %p106, %p107
    %p109 = scmp.ne.s32.totalorder %s97, %s98
    %p110 = scmp.eq.s32.totalorder %s20, 3
    %p111 = por %p109, %p110
    %p113 = scmp.ne.s32.totalorder %s98, %s112
    %p114 = scmp.eq.s32.totalorder %s20, 0
    %p115 = por %p113, %p114
    %s117 = sadd.s32 %s116, 1
    %p120 = scmp.eq.s32.totalorder %s14, 3
    %p121 = scmp.ne.s32.totalorder %s116, %s118
    %p122 = scmp.eq.s32.totalorder %s14, 0
    %p123 = por %p121, %p122
    %p124 = scmp.ne.s32.totalorder %s116, %s118
    %p125 = scmp.eq.s32.totalorder %s19, 3
    %p126 = por %p124, %p125
    %p127 = scmp.ne.s32.totalorder %s118, %s119
    %p128 = scmp.eq.s32.totalorder %s19, 0
    %p129 = por %p127, %p128
    %p130 = scmp.ne.s32.totalorder %s118, %s119
    %p131 = scmp.eq.s32.totalorder %s20, 3
    %p132 = por %p130, %p131
    %p134 = scmp.ne.s32.totalorder %s119, %s133
    %p135 = scmp.eq.s32.totalorder %s20, 0
    %p136 = por %p134, %p135
    %s138 = sadd.s32 %s137, 1
    %p141 = scmp.eq.s32.totalorder %s14, 3
    %p142 = scmp.ne.s32.totalorder %s137, %s139
    %p143 = scmp.eq.s32.totalorder %s14, 0
    %p144 = por %p142, %p143
    %p145 = scmp.ne.s32.totalorder %s137, %s139
    %p146 = scmp.eq.s32.totalorder %s19, 3
    %p147 = por %p145, %p146
    %p148 = scmp.ne.s32.totalorder %s139, %s140
    %p149 = scmp.eq.s32.totalorder %s19, 0
    %p150 = por %p148, %p149
    %p151 = scmp.ne.s32.totalorder %s139, %s140
    %p152 = scmp.eq.s32.totalorder %s20, 3
    %p153 = por %p151, %p152
    %p155 = scmp.ne.s32.totalorder %s140, %s154
    %p156 = scmp.eq.s32.totalorder %s20, 0
    %p157 = por %p155, %p156
    %s159 = sadd.s32 %s158, 1
    %p162 = scmp.eq.s32.totalorder %s14, 3
    %p163 = scmp.ne.s32.totalorder %s158, %s160
    %p164 = scmp.eq.s32.totalorder %s14, 0
    %p165 = por %p163, %p164
    %p166 = scmp.ne.s32.totalorder %s158, %s160
    %p167 = scmp.eq.s32.totalorder %s19, 3
    %p168 = por %p166, %p167
    %p169 = scmp.ne.s32.totalorder %s160, %s161
    %p170 = scmp.eq.s32.totalorder %s19, 0
    %p171 = por %p169, %p170
    %p172 = scmp.ne.s32.totalorder %s160, %s161
    %p173 = scmp.eq.s32.totalorder %s20, 3
    %p174 = por %p172, %p173
    %p176 = scmp.ne.s32.totalorder %s161, %s175
    %p177 = scmp.eq.s32.totalorder %s20, 0
    %p178 = por %p176, %p177
    %s180 = sadd.s32 %s179, 1
    %p183 = scmp.eq.s32.totalorder %s14, 3
    %p184 = scmp.ne.s32.totalorder %s179, %s181
    %p185 = scmp.eq.s32.totalorder %s14, 0
    %p186 = por %p184, %p185
    %p187 = scmp.ne.s32.totalorder %s179, %s181
    %p188 = scmp.eq.s32.totalorder %s19, 3
    %p189 = por %p187, %p188
    %p190 = scmp.ne.s32.totalorder %s181, %s182
    %p191 = scmp.eq.s32.totalorder %s19, 0
    %p192 = por %p190, %p191
    %p193 = scmp.ne.s32.totalorder %s181, %s182
    %p194 = scmp.eq.s32.totalorder %s20, 3
    %p195 = por %p193, %p194
    %p197 = scmp.ne.s32.totalorder %s182, %s196
    %p198 = scmp.eq.s32.totalorder %s20, 0
    %p199 = por %p197, %p198
    %s200 = ssub.s32 %s14, %s21
    %p201 = scmp.eq.s32.totalorder %s200, 0
    %s203 = sadd.s32 %s202, 1
    %s204 = scalar_select %p201, %s202, %s203
    %p207 = pneg %p201
    %p208 = scmp.eq.s32.totalorder %s14, 3
    %p209 = por %p207, %p208
    %p210 = scmp.ne.s32.totalorder %s202, %s205
    %p211 = scmp.eq.s32.totalorder %s14, 0
    %p212 = por %p210, %p211
    %p213 = scmp.ne.s32.totalorder %s202, %s205
    %p214 = scmp.eq.s32.totalorder %s19, 3
    %p215 = por %p213, %p214
    %p216 = scmp.ne.s32.totalorder %s205, %s206
    %p217 = scmp.eq.s32.totalorder %s19, 0
    %p218 = por %p216, %p217
    %p219 = scmp.ne.s32.totalorder %s205, %s206
    %p220 = scmp.eq.s32.totalorder %s20, 3
    %p221 = por %p219, %p220
    %p223 = scmp.ne.s32.totalorder %s206, %s222
    %p224 = scmp.eq.s32.totalorder %s20, 0
    %p225 = por %p223, %p224
    %p226 = scmp.le.s32.totalorder 1, %s14
    %p227 = scmp.lt.s32.totalorder %s14, 5
    %p228 = pnand %p226, %p227
    %p229 = pneg %p228
    // Predicated region
    $region9: #{tpu_custom_call.1} parent=5 // pred_check
      _
    $region10: #{tpu_custom_call.1} parent=5 // pred_check_branch
      %231 = sbr.rel (%p228) target = $region12
    $region11: #{tpu_custom_call.1} parent=5 // pred_region
      %s232 = ssub.s32 %s14, 1
      // Predicated region
      $region13: #{tpu_custom_call.1} parent=11 // pred_check
        %p233 = pneg %p87
      $region14: #{tpu_custom_call.1} parent=11 // pred_check_branch
        %235 = sbr.rel (%p233) target = $region16
      $region15: #{tpu_custom_call.1} parent=11 // pred_region
        _
      $region16: #{tpu_custom_call.1} parent=11 // pred_fallthru
        _
      // Predicated region
      $region17: #{tpu_custom_call.1} parent=11 // pred_check
        %p236 = pneg %p108
      $region18: #{tpu_custom_call.1} parent=11 // pred_check_branch
        %238 = sbr.rel (%p236) target = $region20
      $region19: #{tpu_custom_call.1} parent=11 // pred_region
        _
      $region20: #{tpu_custom_call.1} parent=11 // pred_fallthru
        _
      // Predicated region
      $region21: #{tpu_custom_call.1} parent=11 // pred_check
        %p239 = pneg %p129
      $region22: #{tpu_custom_call.1} parent=11 // pred_check_branch
        %241 = sbr.rel (%p239) target = $region24
      $region23: #{tpu_custom_call.1} parent=11 // pred_region
        _
      $region24: #{tpu_custom_call.1} parent=11 // pred_fallthru
        _
      // Predicated region
      $region25: #{tpu_custom_call.1} parent=11 // pred_check
        %p242 = pneg %p150
      $region26: #{tpu_custom_call.1} parent=11 // pred_check_branch
        %244 = sbr.rel (%p242) target = $region28
      $region27: #{tpu_custom_call.1} parent=11 // pred_region
        _
      $region28: #{tpu_custom_call.1} parent=11 // pred_fallthru
        _
      // Predicated region
      $region29: #{tpu_custom_call.1} parent=11 // pred_check
        %p245 = pneg %p171
      $region30: #{tpu_custom_call.1} parent=11 // pred_check_branch
        %247 = sbr.rel (%p245) target = $region32
      $region31: #{tpu_custom_call.1} parent=11 // pred_region
        _
      $region32: #{tpu_custom_call.1} parent=11 // pred_fallthru
        _
      // Predicated region
      $region33: #{tpu_custom_call.1} parent=11 // pred_check
        %p248 = pneg %p192
      $region34: #{tpu_custom_call.1} parent=11 // pred_check_branch
        %250 = sbr.rel (%p248) target = $region36
      $region35: #{tpu_custom_call.1} parent=11 // pred_region
        _
      $region36: #{tpu_custom_call.1} parent=11 // pred_fallthru
        _
    $region12: #{tpu_custom_call.1} parent=5 // pred_fallthru
      _
    %p251 = scmp.lt.s32.totalorder %s14, 4
    // Predicated region
    $region37: #{tpu_custom_call.1} parent=5 // pred_check
      %p252 = pneg %p251
    $region38: #{tpu_custom_call.1} parent=5 // pred_check_branch
      %254 = sbr.rel (%p252) target = $region40
    $region39: #{tpu_custom_call.1} parent=5 // pred_region
      // Predicated region
      $region41: #{tpu_custom_call.1} parent=39 // pred_check
        %p255 = pneg %p34
      $region42: #{tpu_custom_call.1} parent=39 // pred_check_branch
        %257 = sbr.rel (%p255) target = $region44
      $region43: #{tpu_custom_call.1} parent=39 // pred_region
        %s258 = smul.u32 64, %s14
        %p259 = scmp.lt.s32.totalorder %s258, 255
        %s260 = scalar_select %p259, %s258, 255
        %s261 = smul.addr %s260, 8
        %s262 = scalar_lea.vmem %s0, %s261
        %s263 = smul.u32 64, %s14
      $region44: #{tpu_custom_call.1} parent=39 // pred_fallthru
        _
      // Predicated region
      $region45: #{tpu_custom_call.1} parent=39 // pred_check
        %p264 = pneg %p60
      $region46: #{tpu_custom_call.1} parent=39 // pred_check_branch
        %266 = sbr.rel (%p264) target = $region48
      $region47: #{tpu_custom_call.1} parent=39 // pred_region
        %s267 = smul.u32 64, %s14
        %p268 = scmp.lt.s32.totalorder %s267, 255
        %s269 = scalar_select %p268, %s267, 255
        %s270 = smul.addr %s269, 8
        %s271 = scalar_lea.vmem %s1, %s270
        %s272 = smul.u32 64, %s14
      $region48: #{tpu_custom_call.1} parent=39 // pred_fallthru
        _
    $region40: #{tpu_custom_call.1} parent=5 // pred_fallthru
      _
    %p273 = scmp.le.s32.totalorder 1, %s14
    %p274 = scmp.lt.s32.totalorder %s14, 5
    %p275 = pnand %p273, %p274
    %p276 = pneg %p275
    // Predicated region
    $region49: #{tpu_custom_call.1} parent=5 // pred_check
      _
    $region50: #{tpu_custom_call.1} parent=5 // pred_check_branch
      %278 = sbr.rel (%p275) target = $region52
    $region51: #{tpu_custom_call.1} parent=5 // pred_region
      %s279 = ssub.s32 %s14, 1
      %s280 = smul.u32 64, %s19
      %p281 = scmp.lt.s32.totalorder %s280, 255
      %s282 = scalar_select %p281, %s280, 255
      %s283 = smul.addr %s282, 8
      %s284 = scalar_lea.vmem %s0, %s283
      %p285 = pneg %p40
      %p286 = pneg %p37
      %s287 = smul.u32 64, %s19
      %p288 = scmp.lt.s32.totalorder %s287, 255
      %s289 = scalar_select %p288, %s287, 255
      %s290 = smul.addr %s289, 8
      %s291 = scalar_lea.vmem %s1, %s290
      %p292 = pneg %p66
      %p293 = pneg %p63
      %p294 = pneg %p87
      %p295 = pneg %p84
      %p296 = pneg %p108
      %p297 = pneg %p105
      %p298 = pneg %p129
      %p299 = pneg %p126
      %p300 = pneg %p150
      %p301 = pneg %p147
      %p302 = pneg %p171
      %p303 = pneg %p168
      %p304 = pneg %p192
      %p305 = pneg %p189
      %p306 = pneg %p218
      %p307 = pneg %p215
      %s308 = smul.u32 8, %s19
      %p309 = scmp.lt.s32.totalorder %s308, 31
      %s310 = scalar_select %p309, %s308, 31
      %s311 = smul.addr %s310, 8
      %s312 = scalar_lea.vmem %s8, %s311
      %s313 = smul.u32 64, %s19
      %p314 = scmp.lt.s32.totalorder %s313, 255
      %s315 = scalar_select %p314, %s313, 255
      %s316 = smul.addr %s315, 8
      %s317 = scalar_lea.vmem %s0, %s316
      %s318 = smul.u32 64, %s19
      %s319 = smul.u32 64, %s19
      %p320 = scmp.lt.s32.totalorder %s319, 255
      %s321 = scalar_select %p320, %s319, 255
      %s322 = smul.addr %s321, 8
      %s323 = scalar_lea.vmem %s1, %s322
      %s324 = smul.u32 64, %s19
      %s325 = smul.u32 8, %s19
      %p326 = scmp.lt.s32.totalorder %s325, 31
      %s327 = scalar_select %p326, %s325, 31
      %s328 = smul.addr %s327, 8
      %s329 = scalar_lea.vmem %s8, %s328
      %s330 = smul.u32 8, %s19
      %v331 = vld [vmem:[%s317] sm:$0xff]
      %v332 = vld [vmem:[%s317 + $0x8] sm:$0xff]
      %v333 = vld [vmem:[%s317 + $0x10] sm:$0xff]
      %v334 = vld [vmem:[%s317 + $0x18] sm:$0xff]
      %v335 = vld [vmem:[%s317 + $0x20] sm:$0xff]
      %v336 = vld [vmem:[%s317 + $0x28] sm:$0xff]
      %v337 = vld [vmem:[%s317 + $0x30] sm:$0xff]
      %v338 = vld [vmem:[%s317 + $0x38] sm:$0xff]
      %v339 = vld [vmem:[%s317 + $0x40] sm:$0xff]
      %v340 = vld [vmem:[%s317 + $0x48] sm:$0xff]
      %v341 = vld [vmem:[%s317 + $0x50] sm:$0xff]
      %v342 = vld [vmem:[%s317 + $0x58] sm:$0xff]
      %v343 = vld [vmem:[%s317 + $0x60] sm:$0xff]
      %v344 = vld [vmem:[%s317 + $0x68] sm:$0xff]
      %v345 = vld [vmem:[%s317 + $0x70] sm:$0xff]
      %v346 = vld [vmem:[%s317 + $0x78] sm:$0xff]
      %v347 = vld [vmem:[%s317 + $0x80] sm:$0xff]
      %v348 = vld [vmem:[%s317 + $0x88] sm:$0xff]
      %v349 = vld [vmem:[%s317 + $0x90] sm:$0xff]
      %v350 = vld [vmem:[%s317 + $0x98] sm:$0xff]
      %v351 = vld [vmem:[%s317 + $0xa0] sm:$0xff]
      %v352 = vld [vmem:[%s317 + $0xa8] sm:$0xff]
      %v353 = vld [vmem:[%s317 + $0xb0] sm:$0xff]
      %v354 = vld [vmem:[%s317 + $0xb8] sm:$0xff]
      %v355 = vld [vmem:[%s317 + $0xc0] sm:$0xff]
      %v356 = vld [vmem:[%s317 + $0xc8] sm:$0xff]
      %v357 = vld [vmem:[%s317 + $0xd0] sm:$0xff]
      %v358 = vld [vmem:[%s317 + $0xd8] sm:$0xff]
      %v359 = vld [vmem:[%s317 + $0xe0] sm:$0xff]
      %v360 = vld [vmem:[%s317 + $0xe8] sm:$0xff]
      %v361 = vld [vmem:[%s317 + $0xf0] sm:$0xff]
      %v362 = vld [vmem:[%s317 + $0xf8] sm:$0xff]
      %v363 = vld [vmem:[%s317 + $0x100] sm:$0xff]
      %v364 = vld [vmem:[%s317 + $0x108] sm:$0xff]
      %v365 = vld [vmem:[%s317 + $0x110] sm:$0xff]
      %v366 = vld [vmem:[%s317 + $0x118] sm:$0xff]
      %v367 = vld [vmem:[%s317 + $0x120] sm:$0xff]
      %v368 = vld [vmem:[%s317 + $0x128] sm:$0xff]
      %v369 = vld [vmem:[%s317 + $0x130] sm:$0xff]
      %v370 = vld [vmem:[%s317 + $0x138] sm:$0xff]
      %v371 = vld [vmem:[%s317 + $0x140] sm:$0xff]
      %v372 = vld [vmem:[%s317 + $0x148] sm:$0xff]
      %v373 = vld [vmem:[%s317 + $0x150] sm:$0xff]
      %v374 = vld [vmem:[%s317 + $0x158] sm:$0xff]
      %v375 = vld [vmem:[%s317 + $0x160] sm:$0xff]
      %v376 = vld [vmem:[%s317 + $0x168] sm:$0xff]
      %v377 = vld [vmem:[%s317 + $0x170] sm:$0xff]
      %v378 = vld [vmem:[%s317 + $0x178] sm:$0xff]
      %v379 = vld [vmem:[%s317 + $0x180] sm:$0xff]
      %v380 = vld [vmem:[%s317 + $0x188] sm:$0xff]
      %v381 = vld [vmem:[%s317 + $0x190] sm:$0xff]
      %v382 = vld [vmem:[%s317 + $0x198] sm:$0xff]
      %v383 = vld [vmem:[%s317 + $0x1a0] sm:$0xff]
      %v384 = vld [vmem:[%s317 + $0x1a8] sm:$0xff]
      %v385 = vld [vmem:[%s317 + $0x1b0] sm:$0xff]
      %v386 = vld [vmem:[%s317 + $0x1b8] sm:$0xff]
      %v387 = vld [vmem:[%s317 + $0x1c0] sm:$0xff]
      %v388 = vld [vmem:[%s317 + $0x1c8] sm:$0xff]
      %v389 = vld [vmem:[%s317 + $0x1d0] sm:$0xff]
      %v390 = vld [vmem:[%s317 + $0x1d8] sm:$0xff]
      %v391 = vld [vmem:[%s317 + $0x1e0] sm:$0xff]
      %v392 = vld [vmem:[%s317 + $0x1e8] sm:$0xff]
      %v393 = vld [vmem:[%s317 + $0x1f0] sm:$0xff]
      %v394 = vld [vmem:[%s317 + $0x1f8] sm:$0xff]
      %v395 = vld [vmem:[%s323] sm:$0xff]
      %v396 = vld [vmem:[%s323 + $0x8] sm:$0xff]
      %v397 = vld [vmem:[%s323 + $0x10] sm:$0xff]
      %v398 = vld [vmem:[%s323 + $0x18] sm:$0xff]
      %v399 = vld [vmem:[%s323 + $0x20] sm:$0xff]
      %v400 = vld [vmem:[%s323 + $0x28] sm:$0xff]
      %v401 = vld [vmem:[%s323 + $0x30] sm:$0xff]
      %v402 = vld [vmem:[%s323 + $0x38] sm:$0xff]
      %v403 = vld [vmem:[%s323 + $0x40] sm:$0xff]
      %v404 = vld [vmem:[%s323 + $0x48] sm:$0xff]
      %v405 = vld [vmem:[%s323 + $0x50] sm:$0xff]
      %v406 = vld [vmem:[%s323 + $0x58] sm:$0xff]
      %v407 = vld [vmem:[%s323 + $0x60] sm:$0xff]
      %v408 = vld [vmem:[%s323 + $0x68] sm:$0xff]
      %v409 = vld [vmem:[%s323 + $0x70] sm:$0xff]
      %v410 = vld [vmem:[%s323 + $0x78] sm:$0xff]
      %v411 = vld [vmem:[%s323 + $0x80] sm:$0xff]
      %v412 = vld [vmem:[%s323 + $0x88] sm:$0xff]
      %v413 = vld [vmem:[%s323 + $0x90] sm:$0xff]
      %v414 = vld [vmem:[%s323 + $0x98] sm:$0xff]
      %v415 = vld [vmem:[%s323 + $0xa0] sm:$0xff]
      %v416 = vld [vmem:[%s323 + $0xa8] sm:$0xff]
      %v417 = vld [vmem:[%s323 + $0xb0] sm:$0xff]
      %v418 = vld [vmem:[%s323 + $0xb8] sm:$0xff]
      %v419 = vld [vmem:[%s323 + $0xc0] sm:$0xff]
      %v420 = vld [vmem:[%s323 + $0xc8] sm:$0xff]
      %v421 = vld [vmem:[%s323 + $0xd0] sm:$0xff]
      %v422 = vld [vmem:[%s323 + $0xd8] sm:$0xff]
      %v423 = vld [vmem:[%s323 + $0xe0] sm:$0xff]
      %v424 = vld [vmem:[%s323 + $0xe8] sm:$0xff]
      %v425 = vld [vmem:[%s323 + $0xf0] sm:$0xff]
      %v426 = vld [vmem:[%s323 + $0xf8] sm:$0xff]
      %v427 = vld [vmem:[%s323 + $0x100] sm:$0xff]
      %v428 = vld [vmem:[%s323 + $0x108] sm:$0xff]
      %v429 = vld [vmem:[%s323 + $0x110] sm:$0xff]
      %v430 = vld [vmem:[%s323 + $0x118] sm:$0xff]
      %v431 = vld [vmem:[%s323 + $0x120] sm:$0xff]
      %v432 = vld [vmem:[%s323 + $0x128] sm:$0xff]
      %v433 = vld [vmem:[%s323 + $0x130] sm:$0xff]
      %v434 = vld [vmem:[%s323 + $0x138] sm:$0xff]
      %v435 = vld [vmem:[%s323 + $0x140] sm:$0xff]
      %v436 = vld [vmem:[%s323 + $0x148] sm:$0xff]
      %v437 = vld [vmem:[%s323 + $0x150] sm:$0xff]
      %v438 = vld [vmem:[%s323 + $0x158] sm:$0xff]
      %v439 = vld [vmem:[%s323 + $0x160] sm:$0xff]
      %v440 = vld [vmem:[%s323 + $0x168] sm:$0xff]
      %v441 = vld [vmem:[%s323 + $0x170] sm:$0xff]
      %v442 = vld [vmem:[%s323 + $0x178] sm:$0xff]
      %v443 = vld [vmem:[%s323 + $0x180] sm:$0xff]
      %v444 = vld [vmem:[%s323 + $0x188] sm:$0xff]
      %v445 = vld [vmem:[%s323 + $0x190] sm:$0xff]
      %v446 = vld [vmem:[%s323 + $0x198] sm:$0xff]
      %v447 = vld [vmem:[%s323 + $0x1a0] sm:$0xff]
      %v448 = vld [vmem:[%s323 + $0x1a8] sm:$0xff]
      %v449 = vld [vmem:[%s323 + $0x1b0] sm:$0xff]
      %v450 = vld [vmem:[%s323 + $0x1b8] sm:$0xff]
      %v451 = vld [vmem:[%s323 + $0x1c0] sm:$0xff]
      %v452 = vld [vmem:[%s323 + $0x1c8] sm:$0xff]
      %v453 = vld [vmem:[%s323 + $0x1d0] sm:$0xff]
      %v454 = vld [vmem:[%s323 + $0x1d8] sm:$0xff]
      %v455 = vld [vmem:[%s323 + $0x1e0] sm:$0xff]
      %v456 = vld [vmem:[%s323 + $0x1e8] sm:$0xff]
      %v457 = vld [vmem:[%s323 + $0x1f0] sm:$0xff]
      %v458 = vld [vmem:[%s323 + $0x1f8] sm:$0xff]
      %460 = vset.pattern.permute.xlu0 0
      %461 = vperm.xlu0 %460, %v331
      %v462 = vpop.permute.xlu0 %461
      %465 = vset.pattern.permute.xlu0 0
      %466 = vperm.xlu0 %465, %v332
      %v467 = vpop.permute.xlu0 %466
      %470 = vset.pattern.permute.xlu0 0
      %471 = vperm.xlu0 %470, %v333
      %v472 = vpop.permute.xlu0 %471
      %475 = vset.pattern.permute.xlu0 0
      %476 = vperm.xlu0 %475, %v334
      %v477 = vpop.permute.xlu0 %476
      %480 = vset.pattern.permute.xlu0 0
      %481 = vperm.xlu0 %480, %v335
      %v482 = vpop.permute.xlu0 %481
      %485 = vset.pattern.permute.xlu0 0
      %486 = vperm.xlu0 %485, %v336
      %v487 = vpop.permute.xlu0 %486
      %490 = vset.pattern.permute.xlu0 0
      %491 = vperm.xlu0 %490, %v337
      %v492 = vpop.permute.xlu0 %491
      %495 = vset.pattern.permute.xlu0 0
      %496 = vperm.xlu0 %495, %v338
      %v497 = vpop.permute.xlu0 %496
      %500 = vset.pattern.permute.xlu0 0
      %501 = vperm.xlu0 %500, %v339
      %v502 = vpop.permute.xlu0 %501
      %505 = vset.pattern.permute.xlu0 0
      %506 = vperm.xlu0 %505, %v340
      %v507 = vpop.permute.xlu0 %506
      %510 = vset.pattern.permute.xlu0 0
      %511 = vperm.xlu0 %510, %v341
      %v512 = vpop.permute.xlu0 %511
      %515 = vset.pattern.permute.xlu0 0
      %516 = vperm.xlu0 %515, %v342
      %v517 = vpop.permute.xlu0 %516
      %520 = vset.pattern.permute.xlu0 0
      %521 = vperm.xlu0 %520, %v343
      %v522 = vpop.permute.xlu0 %521
      %525 = vset.pattern.permute.xlu0 0
      %526 = vperm.xlu0 %525, %v344
      %v527 = vpop.permute.xlu0 %526
      %530 = vset.pattern.permute.xlu0 0
      %531 = vperm.xlu0 %530, %v345
      %v532 = vpop.permute.xlu0 %531
      %535 = vset.pattern.permute.xlu0 0
      %536 = vperm.xlu0 %535, %v346
      %v537 = vpop.permute.xlu0 %536
      %540 = vset.pattern.permute.xlu0 0
      %541 = vperm.xlu0 %540, %v347
      %v542 = vpop.permute.xlu0 %541
      %545 = vset.pattern.permute.xlu0 0
      %546 = vperm.xlu0 %545, %v348
      %v547 = vpop.permute.xlu0 %546
      %550 = vset.pattern.permute.xlu0 0
      %551 = vperm.xlu0 %550, %v349
      %v552 = vpop.permute.xlu0 %551
      %555 = vset.pattern.permute.xlu0 0
      %556 = vperm.xlu0 %555, %v350
      %v557 = vpop.permute.xlu0 %556
      %560 = vset.pattern.permute.xlu0 0
      %561 = vperm.xlu0 %560, %v351
      %v562 = vpop.permute.xlu0 %561
      %565 = vset.pattern.permute.xlu0 0
      %566 = vperm.xlu0 %565, %v352
      %v567 = vpop.permute.xlu0 %566
      %570 = vset.pattern.permute.xlu0 0
      %571 = vperm.xlu0 %570, %v353
      %v572 = vpop.permute.xlu0 %571
      %575 = vset.pattern.permute.xlu0 0
      %576 = vperm.xlu0 %575, %v354
      %v577 = vpop.permute.xlu0 %576
      %580 = vset.pattern.permute.xlu0 0
      %581 = vperm.xlu0 %580, %v355
      %v582 = vpop.permute.xlu0 %581
      %585 = vset.pattern.permute.xlu0 0
      %586 = vperm.xlu0 %585, %v356
      %v587 = vpop.permute.xlu0 %586
      %590 = vset.pattern.permute.xlu0 0
      %591 = vperm.xlu0 %590, %v357
      %v592 = vpop.permute.xlu0 %591
      %595 = vset.pattern.permute.xlu0 0
      %596 = vperm.xlu0 %595, %v358
      %v597 = vpop.permute.xlu0 %596
      %600 = vset.pattern.permute.xlu0 0
      %601 = vperm.xlu0 %600, %v359
      %v602 = vpop.permute.xlu0 %601
      %605 = vset.pattern.permute.xlu0 0
      %606 = vperm.xlu0 %605, %v360
      %v607 = vpop.permute.xlu0 %606
      %610 = vset.pattern.permute.xlu0 0
      %611 = vperm.xlu0 %610, %v361
      %v612 = vpop.permute.xlu0 %611
      %615 = vset.pattern.permute.xlu0 0
      %616 = vperm.xlu0 %615, %v362
      %v617 = vpop.permute.xlu0 %616
      %620 = vset.pattern.permute.xlu0 0
      %621 = vperm.xlu0 %620, %v363
      %v622 = vpop.permute.xlu0 %621
      %625 = vset.pattern.permute.xlu0 0
      %626 = vperm.xlu0 %625, %v364
      %v627 = vpop.permute.xlu0 %626
      %630 = vset.pattern.permute.xlu0 0
      %631 = vperm.xlu0 %630, %v365
      %v632 = vpop.permute.xlu0 %631
      %635 = vset.pattern.permute.xlu0 0
      %636 = vperm.xlu0 %635, %v366
      %v637 = vpop.permute.xlu0 %636
      %640 = vset.pattern.permute.xlu0 0
      %641 = vperm.xlu0 %640, %v367
      %v642 = vpop.permute.xlu0 %641
      %645 = vset.pattern.permute.xlu0 0
      %646 = vperm.xlu0 %645, %v368
      %v647 = vpop.permute.xlu0 %646
      %650 = vset.pattern.permute.xlu0 0
      %651 = vperm.xlu0 %650, %v369
      %v652 = vpop.permute.xlu0 %651
      %655 = vset.pattern.permute.xlu0 0
      %656 = vperm.xlu0 %655, %v370
      %v657 = vpop.permute.xlu0 %656
      %660 = vset.pattern.permute.xlu0 0
      %661 = vperm.xlu0 %660, %v371
      %v662 = vpop.permute.xlu0 %661
      %665 = vset.pattern.permute.xlu0 0
      %666 = vperm.xlu0 %665, %v372
      %v667 = vpop.permute.xlu0 %666
      %670 = vset.pattern.permute.xlu0 0
      %671 = vperm.xlu0 %670, %v373
      %v672 = vpop.permute.xlu0 %671
      %675 = vset.pattern.permute.xlu0 0
      %676 = vperm.xlu0 %675, %v374
      %v677 = vpop.permute.xlu0 %676
      %680 = vset.pattern.permute.xlu0 0
      %681 = vperm.xlu0 %680, %v375
      %v682 = vpop.permute.xlu0 %681
      %685 = vset.pattern.permute.xlu0 0
      %686 = vperm.xlu0 %685, %v376
      %v687 = vpop.permute.xlu0 %686
      %690 = vset.pattern.permute.xlu0 0
      %691 = vperm.xlu0 %690, %v377
      %v692 = vpop.permute.xlu0 %691
      %695 = vset.pattern.permute.xlu0 0
      %696 = vperm.xlu0 %695, %v378
      %v697 = vpop.permute.xlu0 %696
      %700 = vset.pattern.permute.xlu0 0
      %701 = vperm.xlu0 %700, %v379
      %v702 = vpop.permute.xlu0 %701
      %705 = vset.pattern.permute.xlu0 0
      %706 = vperm.xlu0 %705, %v380
      %v707 = vpop.permute.xlu0 %706
      %710 = vset.pattern.permute.xlu0 0
      %711 = vperm.xlu0 %710, %v381
      %v712 = vpop.permute.xlu0 %711
      %715 = vset.pattern.permute.xlu0 0
      %716 = vperm.xlu0 %715, %v382
      %v717 = vpop.permute.xlu0 %716
      %720 = vset.pattern.permute.xlu0 0
      %721 = vperm.xlu0 %720, %v383
      %v722 = vpop.permute.xlu0 %721
      %725 = vset.pattern.permute.xlu0 0
      %726 = vperm.xlu0 %725, %v384
      %v727 = vpop.permute.xlu0 %726
      %730 = vset.pattern.permute.xlu0 0
      %731 = vperm.xlu0 %730, %v385
      %v732 = vpop.permute.xlu0 %731
      %735 = vset.pattern.permute.xlu0 0
      %736 = vperm.xlu0 %735, %v386
      %v737 = vpop.permute.xlu0 %736
      %740 = vset.pattern.permute.xlu0 0
      %741 = vperm.xlu0 %740, %v387
      %v742 = vpop.permute.xlu0 %741
      %745 = vset.pattern.permute.xlu0 0
      %746 = vperm.xlu0 %745, %v388
      %v747 = vpop.permute.xlu0 %746
      %750 = vset.pattern.permute.xlu0 0
      %751 = vperm.xlu0 %750, %v389
      %v752 = vpop.permute.xlu0 %751
      %755 = vset.pattern.permute.xlu0 0
      %756 = vperm.xlu0 %755, %v390
      %v757 = vpop.permute.xlu0 %756
      %760 = vset.pattern.permute.xlu0 0
      %761 = vperm.xlu0 %760, %v391
      %v762 = vpop.permute.xlu0 %761
      %765 = vset.pattern.permute.xlu0 0
      %766 = vperm.xlu0 %765, %v392
      %v767 = vpop.permute.xlu0 %766
      %770 = vset.pattern.permute.xlu0 0
      %771 = vperm.xlu0 %770, %v393
      %v772 = vpop.permute.xlu0 %771
      %775 = vset.pattern.permute.xlu0 0
      %776 = vperm.xlu0 %775, %v394
      %v777 = vpop.permute.xlu0 %776
      %v779 = vlaneseq
      %v780 = vshrl.u32 %v779, 7
      %v781 = vsub.s32 0, %v780
      %v782 = vrot.slane %v395, %v781
      %v783 = vlaneseq
      %v784 = vshrl.u32 %v783, 7
      %v785 = vsub.s32 0, %v784
      %v786 = vrot.slane %v396, %v785
      %v787 = vlaneseq
      %v788 = vshrl.u32 %v787, 7
      %v789 = vsub.s32 0, %v788
      %v790 = vrot.slane %v397, %v789
      %v791 = vlaneseq
      %v792 = vshrl.u32 %v791, 7
      %v793 = vsub.s32 0, %v792
      %v794 = vrot.slane %v398, %v793
      %v795 = vlaneseq
      %v796 = vshrl.u32 %v795, 7
      %v797 = vsub.s32 0, %v796
      %v798 = vrot.slane %v399, %v797
      %v799 = vlaneseq
      %v800 = vshrl.u32 %v799, 7
      %v801 = vsub.s32 0, %v800
      %v802 = vrot.slane %v400, %v801
      %v803 = vlaneseq
      %v804 = vshrl.u32 %v803, 7
      %v805 = vsub.s32 0, %v804
      %v806 = vrot.slane %v401, %v805
      %v807 = vlaneseq
      %v808 = vshrl.u32 %v807, 7
      %v809 = vsub.s32 0, %v808
      %v810 = vrot.slane %v402, %v809
      %v811 = vlaneseq
      %v812 = vshrl.u32 %v811, 7
      %v813 = vsub.s32 0, %v812
      %v814 = vrot.slane %v403, %v813
      %v815 = vlaneseq
      %v816 = vshrl.u32 %v815, 7
      %v817 = vsub.s32 0, %v816
      %v818 = vrot.slane %v404, %v817
      %v819 = vlaneseq
      %v820 = vshrl.u32 %v819, 7
      %v821 = vsub.s32 0, %v820
      %v822 = vrot.slane %v405, %v821
      %v823 = vlaneseq
      %v824 = vshrl.u32 %v823, 7
      %v825 = vsub.s32 0, %v824
      %v826 = vrot.slane %v406, %v825
      %v827 = vlaneseq
      %v828 = vshrl.u32 %v827, 7
      %v829 = vsub.s32 0, %v828
      %v830 = vrot.slane %v407, %v829
      %v831 = vlaneseq
      %v832 = vshrl.u32 %v831, 7
      %v833 = vsub.s32 0, %v832
      %v834 = vrot.slane %v408, %v833
      %v835 = vlaneseq
      %v836 = vshrl.u32 %v835, 7
      %v837 = vsub.s32 0, %v836
      %v838 = vrot.slane %v409, %v837
      %v839 = vlaneseq
      %v840 = vshrl.u32 %v839, 7
      %v841 = vsub.s32 0, %v840
      %v842 = vrot.slane %v410, %v841
      %v843 = vlaneseq
      %v844 = vshrl.u32 %v843, 7
      %v845 = vsub.s32 0, %v844
      %v846 = vrot.slane %v411, %v845
      %v847 = vlaneseq
      %v848 = vshrl.u32 %v847, 7
      %v849 = vsub.s32 0, %v848
      %v850 = vrot.slane %v412, %v849
      %v851 = vlaneseq
      %v852 = vshrl.u32 %v851, 7
      %v853 = vsub.s32 0, %v852
      %v854 = vrot.slane %v413, %v853
      %v855 = vlaneseq
      %v856 = vshrl.u32 %v855, 7
      %v857 = vsub.s32 0, %v856
      %v858 = vrot.slane %v414, %v857
      %v859 = vlaneseq
      %v860 = vshrl.u32 %v859, 7
      %v861 = vsub.s32 0, %v860
      %v862 = vrot.slane %v415, %v861
      %v863 = vlaneseq
      %v864 = vshrl.u32 %v863, 7
      %v865 = vsub.s32 0, %v864
      %v866 = vrot.slane %v416, %v865
      %v867 = vlaneseq
      %v868 = vshrl.u32 %v867, 7
      %v869 = vsub.s32 0, %v868
      %v870 = vrot.slane %v417, %v869
      %v871 = vlaneseq
      %v872 = vshrl.u32 %v871, 7
      %v873 = vsub.s32 0, %v872
      %v874 = vrot.slane %v418, %v873
      %v875 = vlaneseq
      %v876 = vshrl.u32 %v875, 7
      %v877 = vsub.s32 0, %v876
      %v878 = vrot.slane %v419, %v877
      %v879 = vlaneseq
      %v880 = vshrl.u32 %v879, 7
      %v881 = vsub.s32 0, %v880
      %v882 = vrot.slane %v420, %v881
      %v883 = vlaneseq
      %v884 = vshrl.u32 %v883, 7
      %v885 = vsub.s32 0, %v884
      %v886 = vrot.slane %v421, %v885
      %v887 = vlaneseq
      %v888 = vshrl.u32 %v887, 7
      %v889 = vsub.s32 0, %v888
      %v890 = vrot.slane %v422, %v889
      %v891 = vlaneseq
      %v892 = vshrl.u32 %v891, 7
      %v893 = vsub.s32 0, %v892
      %v894 = vrot.slane %v423, %v893
      %v895 = vlaneseq
      %v896 = vshrl.u32 %v895, 7
      %v897 = vsub.s32 0, %v896
      %v898 = vrot.slane %v424, %v897
      %v899 = vlaneseq
      %v900 = vshrl.u32 %v899, 7
      %v901 = vsub.s32 0, %v900
      %v902 = vrot.slane %v425, %v901
      %v903 = vlaneseq
      %v904 = vshrl.u32 %v903, 7
      %v905 = vsub.s32 0, %v904
      %v906 = vrot.slane %v426, %v905
      %v907 = vlaneseq
      %v908 = vshrl.u32 %v907, 7
      %v909 = vsub.s32 0, %v908
      %v910 = vrot.slane %v427, %v909
      %v911 = vlaneseq
      %v912 = vshrl.u32 %v911, 7
      %v913 = vsub.s32 0, %v912
      %v914 = vrot.slane %v428, %v913
      %v915 = vlaneseq
      %v916 = vshrl.u32 %v915, 7
      %v917 = vsub.s32 0, %v916
      %v918 = vrot.slane %v429, %v917
      %v919 = vlaneseq
      %v920 = vshrl.u32 %v919, 7
      %v921 = vsub.s32 0, %v920
      %v922 = vrot.slane %v430, %v921
      %v923 = vlaneseq
      %v924 = vshrl.u32 %v923, 7
      %v925 = vsub.s32 0, %v924
      %v926 = vrot.slane %v431, %v925
      %v927 = vlaneseq
      %v928 = vshrl.u32 %v927, 7
      %v929 = vsub.s32 0, %v928
      %v930 = vrot.slane %v432, %v929
      %v931 = vlaneseq
      %v932 = vshrl.u32 %v931, 7
      %v933 = vsub.s32 0, %v932
      %v934 = vrot.slane %v433, %v933
      %v935 = vlaneseq
      %v936 = vshrl.u32 %v935, 7
      %v937 = vsub.s32 0, %v936
      %v938 = vrot.slane %v434, %v937
      %v939 = vlaneseq
      %v940 = vshrl.u32 %v939, 7
      %v941 = vsub.s32 0, %v940
      %v942 = vrot.slane %v435, %v941
      %v943 = vlaneseq
      %v944 = vshrl.u32 %v943, 7
      %v945 = vsub.s32 0, %v944
      %v946 = vrot.slane %v436, %v945
      %v947 = vlaneseq
      %v948 = vshrl.u32 %v947, 7
      %v949 = vsub.s32 0, %v948
      %v950 = vrot.slane %v437, %v949
      %v951 = vlaneseq
      %v952 = vshrl.u32 %v951, 7
      %v953 = vsub.s32 0, %v952
      %v954 = vrot.slane %v438, %v953
      %v955 = vlaneseq
      %v956 = vshrl.u32 %v955, 7
      %v957 = vsub.s32 0, %v956
      %v958 = vrot.slane %v439, %v957
      %v959 = vlaneseq
      %v960 = vshrl.u32 %v959, 7
      %v961 = vsub.s32 0, %v960
      %v962 = vrot.slane %v440, %v961
      %v963 = vlaneseq
      %v964 = vshrl.u32 %v963, 7
      %v965 = vsub.s32 0, %v964
      %v966 = vrot.slane %v441, %v965
      %v967 = vlaneseq
      %v968 = vshrl.u32 %v967, 7
      %v969 = vsub.s32 0, %v968
      %v970 = vrot.slane %v442, %v969
      %v971 = vlaneseq
      %v972 = vshrl.u32 %v971, 7
      %v973 = vsub.s32 0, %v972
      %v974 = vrot.slane %v443, %v973
      %v975 = vlaneseq
      %v976 = vshrl.u32 %v975, 7
      %v977 = vsub.s32 0, %v976
      %v978 = vrot.slane %v444, %v977
      %v979 = vlaneseq
      %v980 = vshrl.u32 %v979, 7
      %v981 = vsub.s32 0, %v980
      %v982 = vrot.slane %v445, %v981
      %v983 = vlaneseq
      %v984 = vshrl.u32 %v983, 7
      %v985 = vsub.s32 0, %v984
      %v986 = vrot.slane %v446, %v985
      %v987 = vlaneseq
      %v988 = vshrl.u32 %v987, 7
      %v989 = vsub.s32 0, %v988
      %v990 = vrot.slane %v447, %v989
      %v991 = vlaneseq
      %v992 = vshrl.u32 %v991, 7
      %v993 = vsub.s32 0, %v992
      %v994 = vrot.slane %v448, %v993
      %v995 = vlaneseq
      %v996 = vshrl.u32 %v995, 7
      %v997 = vsub.s32 0, %v996
      %v998 = vrot.slane %v449, %v997
      %v999 = vlaneseq
      %v1000 = vshrl.u32 %v999, 7
      %v1001 = vsub.s32 0, %v1000
      %v1002 = vrot.slane %v450, %v1001
      %v1003 = vlaneseq
      %v1004 = vshrl.u32 %v1003, 7
      %v1005 = vsub.s32 0, %v1004
      %v1006 = vrot.slane %v451, %v1005
      %v1007 = vlaneseq
      %v1008 = vshrl.u32 %v1007, 7
      %v1009 = vsub.s32 0, %v1008
      %v1010 = vrot.slane %v452, %v1009
      %v1011 = vlaneseq
      %v1012 = vshrl.u32 %v1011, 7
      %v1013 = vsub.s32 0, %v1012
      %v1014 = vrot.slane %v453, %v1013
      %v1015 = vlaneseq
      %v1016 = vshrl.u32 %v1015, 7
      %v1017 = vsub.s32 0, %v1016
      %v1018 = vrot.slane %v454, %v1017
      %v1019 = vlaneseq
      %v1020 = vshrl.u32 %v1019, 7
      %v1021 = vsub.s32 0, %v1020
      %v1022 = vrot.slane %v455, %v1021
      %v1023 = vlaneseq
      %v1024 = vshrl.u32 %v1023, 7
      %v1025 = vsub.s32 0, %v1024
      %v1026 = vrot.slane %v456, %v1025
      %v1027 = vlaneseq
      %v1028 = vshrl.u32 %v1027, 7
      %v1029 = vsub.s32 0, %v1028
      %v1030 = vrot.slane %v457, %v1029
      %v1031 = vlaneseq
      %v1032 = vshrl.u32 %v1031, 7
      %v1033 = vsub.s32 0, %v1032
      %v1034 = vrot.slane %v458, %v1033
      %v1035 = vmul.f32 %v462, %v782
      %v1036 = vmul.f32 %v467, %v786
      %v1037 = vmul.f32 %v472, %v790
      %v1038 = vmul.f32 %v477, %v794
      %v1039 = vmul.f32 %v482, %v798
      %v1040 = vmul.f32 %v487, %v802
      %v1041 = vmul.f32 %v492, %v806
      %v1042 = vmul.f32 %v497, %v810
      %v1043 = vmul.f32 %v502, %v814
      %v1044 = vmul.f32 %v507, %v818
      %v1045 = vmul.f32 %v512, %v822
      %v1046 = vmul.f32 %v517, %v826
      %v1047 = vmul.f32 %v522, %v830
      %v1048 = vmul.f32 %v527, %v834
      %v1049 = vmul.f32 %v532, %v838
      %v1050 = vmul.f32 %v537, %v842
      %v1051 = vmul.f32 %v542, %v846
      %v1052 = vmul.f32 %v547, %v850
      %v1053 = vmul.f32 %v552, %v854
      %v1054 = vmul.f32 %v557, %v858
      %v1055 = vmul.f32 %v562, %v862
      %v1056 = vmul.f32 %v567, %v866
      %v1057 = vmul.f32 %v572, %v870
      %v1058 = vmul.f32 %v577, %v874
      %v1059 = vmul.f32 %v582, %v878
      %v1060 = vmul.f32 %v587, %v882
      %v1061 = vmul.f32 %v592, %v886
      %v1062 = vmul.f32 %v597, %v890
      %v1063 = vmul.f32 %v602, %v894
      %v1064 = vmul.f32 %v607, %v898
      %v1065 = vmul.f32 %v612, %v902
      %v1066 = vmul.f32 %v617, %v906
      %v1067 = vmul.f32 %v622, %v910
      %v1068 = vmul.f32 %v627, %v914
      %v1069 = vmul.f32 %v632, %v918
      %v1070 = vmul.f32 %v637, %v922
      %v1071 = vmul.f32 %v642, %v926
      %v1072 = vmul.f32 %v647, %v930
      %v1073 = vmul.f32 %v652, %v934
      %v1074 = vmul.f32 %v657, %v938
      %v1075 = vmul.f32 %v662, %v942
      %v1076 = vmul.f32 %v667, %v946
      %v1077 = vmul.f32 %v672, %v950
      %v1078 = vmul.f32 %v677, %v954
      %v1079 = vmul.f32 %v682, %v958
      %v1080 = vmul.f32 %v687, %v962
      %v1081 = vmul.f32 %v692, %v966
      %v1082 = vmul.f32 %v697, %v970
      %v1083 = vmul.f32 %v702, %v974
      %v1084 = vmul.f32 %v707, %v978
      %v1085 = vmul.f32 %v712, %v982
      %v1086 = vmul.f32 %v717, %v986
      %v1087 = vmul.f32 %v722, %v990
      %v1088 = vmul.f32 %v727, %v994
      %v1089 = vmul.f32 %v732, %v998
      %v1090 = vmul.f32 %v737, %v1002
      %v1091 = vmul.f32 %v742, %v1006
      %v1092 = vmul.f32 %v747, %v1010
      %v1093 = vmul.f32 %v752, %v1014
      %v1094 = vmul.f32 %v757, %v1018
      %v1095 = vmul.f32 %v762, %v1022
      %v1096 = vmul.f32 %v767, %v1026
      %v1097 = vmul.f32 %v772, %v1030
      %v1098 = vmul.f32 %v777, %v1034
      %1099 = vset.pattern.permute.xlu0 1
      %1100 = vperm.xlu0 %1099, %v331
      %v1101 = vpop.permute.xlu0 %1100
      %1103 = vset.pattern.permute.xlu0 1
      %1104 = vperm.xlu0 %1103, %v332
      %v1105 = vpop.permute.xlu0 %1104
      %1107 = vset.pattern.permute.xlu0 1
      %1108 = vperm.xlu0 %1107, %v333
      %v1109 = vpop.permute.xlu0 %1108
      %1111 = vset.pattern.permute.xlu0 1
      %1112 = vperm.xlu0 %1111, %v334
      %v1113 = vpop.permute.xlu0 %1112
      %1115 = vset.pattern.permute.xlu0 1
      %1116 = vperm.xlu0 %1115, %v335
      %v1117 = vpop.permute.xlu0 %1116
      %1119 = vset.pattern.permute.xlu0 1
      %1120 = vperm.xlu0 %1119, %v336
      %v1121 = vpop.permute.xlu0 %1120
      %1123 = vset.pattern.permute.xlu0 1
      %1124 = vperm.xlu0 %1123, %v337
      %v1125 = vpop.permute.xlu0 %1124
      %1127 = vset.pattern.permute.xlu0 1
      %1128 = vperm.xlu0 %1127, %v338
      %v1129 = vpop.permute.xlu0 %1128
      %1131 = vset.pattern.permute.xlu0 1
      %1132 = vperm.xlu0 %1131, %v339
      %v1133 = vpop.permute.xlu0 %1132
      %1135 = vset.pattern.permute.xlu0 1
      %1136 = vperm.xlu0 %1135, %v340
      %v1137 = vpop.permute.xlu0 %1136
      %1139 = vset.pattern.permute.xlu0 1
      %1140 = vperm.xlu0 %1139, %v341
      %v1141 = vpop.permute.xlu0 %1140
      %1143 = vset.pattern.permute.xlu0 1
      %1144 = vperm.xlu0 %1143, %v342
      %v1145 = vpop.permute.xlu0 %1144
      %1147 = vset.pattern.permute.xlu0 1
      %1148 = vperm.xlu0 %1147, %v343
      %v1149 = vpop.permute.xlu0 %1148
      %1151 = vset.pattern.permute.xlu0 1
      %1152 = vperm.xlu0 %1151, %v344
      %v1153 = vpop.permute.xlu0 %1152
      %1155 = vset.pattern.permute.xlu0 1
      %1156 = vperm.xlu0 %1155, %v345
      %v1157 = vpop.permute.xlu0 %1156
      %1159 = vset.pattern.permute.xlu0 1
      %1160 = vperm.xlu0 %1159, %v346
      %v1161 = vpop.permute.xlu0 %1160
      %1163 = vset.pattern.permute.xlu0 1
      %1164 = vperm.xlu0 %1163, %v347
      %v1165 = vpop.permute.xlu0 %1164
      %1167 = vset.pattern.permute.xlu0 1
      %1168 = vperm.xlu0 %1167, %v348
      %v1169 = vpop.permute.xlu0 %1168
      %1171 = vset.pattern.permute.xlu0 1
      %1172 = vperm.xlu0 %1171, %v349
      %v1173 = vpop.permute.xlu0 %1172
      %1175 = vset.pattern.permute.xlu0 1
      %1176 = vperm.xlu0 %1175, %v350
      %v1177 = vpop.permute.xlu0 %1176
      %1179 = vset.pattern.permute.xlu0 1
      %1180 = vperm.xlu0 %1179, %v351
      %v1181 = vpop.permute.xlu0 %1180
      %1183 = vset.pattern.permute.xlu0 1
      %1184 = vperm.xlu0 %1183, %v352
      %v1185 = vpop.permute.xlu0 %1184
      %1187 = vset.pattern.permute.xlu0 1
      %1188 = vperm.xlu0 %1187, %v353
      %v1189 = vpop.permute.xlu0 %1188
      %1191 = vset.pattern.permute.xlu0 1
      %1192 = vperm.xlu0 %1191, %v354
      %v1193 = vpop.permute.xlu0 %1192
      %1195 = vset.pattern.permute.xlu0 1
      %1196 = vperm.xlu0 %1195, %v355
      %v1197 = vpop.permute.xlu0 %1196
      %1199 = vset.pattern.permute.xlu0 1
      %1200 = vperm.xlu0 %1199, %v356
      %v1201 = vpop.permute.xlu0 %1200
      %1203 = vset.pattern.permute.xlu0 1
      %1204 = vperm.xlu0 %1203, %v357
      %v1205 = vpop.permute.xlu0 %1204
      %1207 = vset.pattern.permute.xlu0 1
      %1208 = vperm.xlu0 %1207, %v358
      %v1209 = vpop.permute.xlu0 %1208
      %1211 = vset.pattern.permute.xlu0 1
      %1212 = vperm.xlu0 %1211, %v359
      %v1213 = vpop.permute.xlu0 %1212
      %1215 = vset.pattern.permute.xlu0 1
      %1216 = vperm.xlu0 %1215, %v360
      %v1217 = vpop.permute.xlu0 %1216
      %1219 = vset.pattern.permute.xlu0 1
      %1220 = vperm.xlu0 %1219, %v361
      %v1221 = vpop.permute.xlu0 %1220
      %1223 = vset.pattern.permute.xlu0 1
      %1224 = vperm.xlu0 %1223, %v362
      %v1225 = vpop.permute.xlu0 %1224
      %1227 = vset.pattern.permute.xlu0 1
      %1228 = vperm.xlu0 %1227, %v363
      %v1229 = vpop.permute.xlu0 %1228
      %1231 = vset.pattern.permute.xlu0 1
      %1232 = vperm.xlu0 %1231, %v364
      %v1233 = vpop.permute.xlu0 %1232
      %1235 = vset.pattern.permute.xlu0 1
      %1236 = vperm.xlu0 %1235, %v365
      %v1237 = vpop.permute.xlu0 %1236
      %1239 = vset.pattern.permute.xlu0 1
      %1240 = vperm.xlu0 %1239, %v366
      %v1241 = vpop.permute.xlu0 %1240
      %1243 = vset.pattern.permute.xlu0 1
      %1244 = vperm.xlu0 %1243, %v367
      %v1245 = vpop.permute.xlu0 %1244
      %1247 = vset.pattern.permute.xlu0 1
      %1248 = vperm.xlu0 %1247, %v368
      %v1249 = vpop.permute.xlu0 %1248
      %1251 = vset.pattern.permute.xlu0 1
      %1252 = vperm.xlu0 %1251, %v369
      %v1253 = vpop.permute.xlu0 %1252
      %1255 = vset.pattern.permute.xlu0 1
      %1256 = vperm.xlu0 %1255, %v370
      %v1257 = vpop.permute.xlu0 %1256
      %1259 = vset.pattern.permute.xlu0 1
      %1260 = vperm.xlu0 %1259, %v371
      %v1261 = vpop.permute.xlu0 %1260
      %1263 = vset.pattern.permute.xlu0 1
      %1264 = vperm.xlu0 %1263, %v372
      %v1265 = vpop.permute.xlu0 %1264
      %1267 = vset.pattern.permute.xlu0 1
      %1268 = vperm.xlu0 %1267, %v373
      %v1269 = vpop.permute.xlu0 %1268
      %1271 = vset.pattern.permute.xlu0 1
      %1272 = vperm.xlu0 %1271, %v374
      %v1273 = vpop.permute.xlu0 %1272
      %1275 = vset.pattern.permute.xlu0 1
      %1276 = vperm.xlu0 %1275, %v375
      %v1277 = vpop.permute.xlu0 %1276
      %1279 = vset.pattern.permute.xlu0 1
      %1280 = vperm.xlu0 %1279, %v376
      %v1281 = vpop.permute.xlu0 %1280
      %1283 = vset.pattern.permute.xlu0 1
      %1284 = vperm.xlu0 %1283, %v377
      %v1285 = vpop.permute.xlu0 %1284
      %1287 = vset.pattern.permute.xlu0 1
      %1288 = vperm.xlu0 %1287, %v378
      %v1289 = vpop.permute.xlu0 %1288
      %1291 = vset.pattern.permute.xlu0 1
      %1292 = vperm.xlu0 %1291, %v379
      %v1293 = vpop.permute.xlu0 %1292
      %1295 = vset.pattern.permute.xlu0 1
      %1296 = vperm.xlu0 %1295, %v380
      %v1297 = vpop.permute.xlu0 %1296
      %1299 = vset.pattern.permute.xlu0 1
      %1300 = vperm.xlu0 %1299, %v381
      %v1301 = vpop.permute.xlu0 %1300
      %1303 = vset.pattern.permute.xlu0 1
      %1304 = vperm.xlu0 %1303, %v382
      %v1305 = vpop.permute.xlu0 %1304
      %1307 = vset.pattern.permute.xlu0 1
      %1308 = vperm.xlu0 %1307, %v383
      %v1309 = vpop.permute.xlu0 %1308
      %1311 = vset.pattern.permute.xlu0 1
      %1312 = vperm.xlu0 %1311, %v384
      %v1313 = vpop.permute.xlu0 %1312
      %1315 = vset.pattern.permute.xlu0 1
      %1316 = vperm.xlu0 %1315, %v385
      %v1317 = vpop.permute.xlu0 %1316
      %1319 = vset.pattern.permute.xlu0 1
      %1320 = vperm.xlu0 %1319, %v386
      %v1321 = vpop.permute.xlu0 %1320
      %1323 = vset.pattern.permute.xlu0 1
      %1324 = vperm.xlu0 %1323, %v387
      %v1325 = vpop.permute.xlu0 %1324
      %1327 = vset.pattern.permute.xlu0 1
      %1328 = vperm.xlu0 %1327, %v388
      %v1329 = vpop.permute.xlu0 %1328
      %1331 = vset.pattern.permute.xlu0 1
      %1332 = vperm.xlu0 %1331, %v389
      %v1333 = vpop.permute.xlu0 %1332
      %1335 = vset.pattern.permute.xlu0 1
      %1336 = vperm.xlu0 %1335, %v390
      %v1337 = vpop.permute.xlu0 %1336
      %1339 = vset.pattern.permute.xlu0 1
      %1340 = vperm.xlu0 %1339, %v391
      %v1341 = vpop.permute.xlu0 %1340
      %1343 = vset.pattern.permute.xlu0 1
      %1344 = vperm.xlu0 %1343, %v392
      %v1345 = vpop.permute.xlu0 %1344
      %1347 = vset.pattern.permute.xlu0 1
      %1348 = vperm.xlu0 %1347, %v393
      %v1349 = vpop.permute.xlu0 %1348
      %1351 = vset.pattern.permute.xlu0 1
      %1352 = vperm.xlu0 %1351, %v394
      %v1353 = vpop.permute.xlu0 %1352
      %v1355 = vlaneseq
      %v1356 = vshrl.u32 %v1355, 7
      %v1357 = vsub.s32 1, %v1356
      %v1358 = vrot.slane %v395, %v1357
      %v1359 = vlaneseq
      %v1360 = vshrl.u32 %v1359, 7
      %v1361 = vsub.s32 1, %v1360
      %v1362 = vrot.slane %v396, %v1361
      %v1363 = vlaneseq
      %v1364 = vshrl.u32 %v1363, 7
      %v1365 = vsub.s32 1, %v1364
      %v1366 = vrot.slane %v397, %v1365
      %v1367 = vlaneseq
      %v1368 = vshrl.u32 %v1367, 7
      %v1369 = vsub.s32 1, %v1368
      %v1370 = vrot.slane %v398, %v1369
      %v1371 = vlaneseq
      %v1372 = vshrl.u32 %v1371, 7
      %v1373 = vsub.s32 1, %v1372
      %v1374 = vrot.slane %v399, %v1373
      %v1375 = vlaneseq
      %v1376 = vshrl.u32 %v1375, 7
      %v1377 = vsub.s32 1, %v1376
      %v1378 = vrot.slane %v400, %v1377
      %v1379 = vlaneseq
      %v1380 = vshrl.u32 %v1379, 7
      %v1381 = vsub.s32 1, %v1380
      %v1382 = vrot.slane %v401, %v1381
      %v1383 = vlaneseq
      %v1384 = vshrl.u32 %v1383, 7
      %v1385 = vsub.s32 1, %v1384
      %v1386 = vrot.slane %v402, %v1385
      %v1387 = vlaneseq
      %v1388 = vshrl.u32 %v1387, 7
      %v1389 = vsub.s32 1, %v1388
      %v1390 = vrot.slane %v403, %v1389
      %v1391 = vlaneseq
      %v1392 = vshrl.u32 %v1391, 7
      %v1393 = vsub.s32 1, %v1392
      %v1394 = vrot.slane %v404, %v1393
      %v1395 = vlaneseq
      %v1396 = vshrl.u32 %v1395, 7
      %v1397 = vsub.s32 1, %v1396
      %v1398 = vrot.slane %v405, %v1397
      %v1399 = vlaneseq
      %v1400 = vshrl.u32 %v1399, 7
      %v1401 = vsub.s32 1, %v1400
      %v1402 = vrot.slane %v406, %v1401
      %v1403 = vlaneseq
      %v1404 = vshrl.u32 %v1403, 7
      %v1405 = vsub.s32 1, %v1404
      %v1406 = vrot.slane %v407, %v1405
      %v1407 = vlaneseq
      %v1408 = vshrl.u32 %v1407, 7
      %v1409 = vsub.s32 1, %v1408
      %v1410 = vrot.slane %v408, %v1409
      %v1411 = vlaneseq
      %v1412 = vshrl.u32 %v1411, 7
      %v1413 = vsub.s32 1, %v1412
      %v1414 = vrot.slane %v409, %v1413
      %v1415 = vlaneseq
      %v1416 = vshrl.u32 %v1415, 7
      %v1417 = vsub.s32 1, %v1416
      %v1418 = vrot.slane %v410, %v1417
      %v1419 = vlaneseq
      %v1420 = vshrl.u32 %v1419, 7
      %v1421 = vsub.s32 1, %v1420
      %v1422 = vrot.slane %v411, %v1421
      %v1423 = vlaneseq
      %v1424 = vshrl.u32 %v1423, 7
      %v1425 = vsub.s32 1, %v1424
      %v1426 = vrot.slane %v412, %v1425
      %v1427 = vlaneseq
      %v1428 = vshrl.u32 %v1427, 7
      %v1429 = vsub.s32 1, %v1428
      %v1430 = vrot.slane %v413, %v1429
      %v1431 = vlaneseq
      %v1432 = vshrl.u32 %v1431, 7
      %v1433 = vsub.s32 1, %v1432
      %v1434 = vrot.slane %v414, %v1433
      %v1435 = vlaneseq
      %v1436 = vshrl.u32 %v1435, 7
      %v1437 = vsub.s32 1, %v1436
      %v1438 = vrot.slane %v415, %v1437
      %v1439 = vlaneseq
      %v1440 = vshrl.u32 %v1439, 7
      %v1441 = vsub.s32 1, %v1440
      %v1442 = vrot.slane %v416, %v1441
      %v1443 = vlaneseq
      %v1444 = vshrl.u32 %v1443, 7
      %v1445 = vsub.s32 1, %v1444
      %v1446 = vrot.slane %v417, %v1445
      %v1447 = vlaneseq
      %v1448 = vshrl.u32 %v1447, 7
      %v1449 = vsub.s32 1, %v1448
      %v1450 = vrot.slane %v418, %v1449
      %v1451 = vlaneseq
      %v1452 = vshrl.u32 %v1451, 7
      %v1453 = vsub.s32 1, %v1452
      %v1454 = vrot.slane %v419, %v1453
      %v1455 = vlaneseq
      %v1456 = vshrl.u32 %v1455, 7
      %v1457 = vsub.s32 1, %v1456
      %v1458 = vrot.slane %v420, %v1457
      %v1459 = vlaneseq
      %v1460 = vshrl.u32 %v1459, 7
      %v1461 = vsub.s32 1, %v1460
      %v1462 = vrot.slane %v421, %v1461
      %v1463 = vlaneseq
      %v1464 = vshrl.u32 %v1463, 7
      %v1465 = vsub.s32 1, %v1464
      %v1466 = vrot.slane %v422, %v1465
      %v1467 = vlaneseq
      %v1468 = vshrl.u32 %v1467, 7
      %v1469 = vsub.s32 1, %v1468
      %v1470 = vrot.slane %v423, %v1469
      %v1471 = vlaneseq
      %v1472 = vshrl.u32 %v1471, 7
      %v1473 = vsub.s32 1, %v1472
      %v1474 = vrot.slane %v424, %v1473
      %v1475 = vlaneseq
      %v1476 = vshrl.u32 %v1475, 7
      %v1477 = vsub.s32 1, %v1476
      %v1478 = vrot.slane %v425, %v1477
      %v1479 = vlaneseq
      %v1480 = vshrl.u32 %v1479, 7
      %v1481 = vsub.s32 1, %v1480
      %v1482 = vrot.slane %v426, %v1481
      %v1483 = vlaneseq
      %v1484 = vshrl.u32 %v1483, 7
      %v1485 = vsub.s32 1, %v1484
      %v1486 = vrot.slane %v427, %v1485
      %v1487 = vlaneseq
      %v1488 = vshrl.u32 %v1487, 7
      %v1489 = vsub.s32 1, %v1488
      %v1490 = vrot.slane %v428, %v1489
      %v1491 = vlaneseq
      %v1492 = vshrl.u32 %v1491, 7
      %v1493 = vsub.s32 1, %v1492
      %v1494 = vrot.slane %v429, %v1493
      %v1495 = vlaneseq
      %v1496 = vshrl.u32 %v1495, 7
      %v1497 = vsub.s32 1, %v1496
      %v1498 = vrot.slane %v430, %v1497
      %v1499 = vlaneseq
      %v1500 = vshrl.u32 %v1499, 7
      %v1501 = vsub.s32 1, %v1500
      %v1502 = vrot.slane %v431, %v1501
      %v1503 = vlaneseq
      %v1504 = vshrl.u32 %v1503, 7
      %v1505 = vsub.s32 1, %v1504
      %v1506 = vrot.slane %v432, %v1505
      %v1507 = vlaneseq
      %v1508 = vshrl.u32 %v1507, 7
      %v1509 = vsub.s32 1, %v1508
      %v1510 = vrot.slane %v433, %v1509
      %v1511 = vlaneseq
      %v1512 = vshrl.u32 %v1511, 7
      %v1513 = vsub.s32 1, %v1512
      %v1514 = vrot.slane %v434, %v1513
      %v1515 = vlaneseq
      %v1516 = vshrl.u32 %v1515, 7
      %v1517 = vsub.s32 1, %v1516
      %v1518 = vrot.slane %v435, %v1517
      %v1519 = vlaneseq
      %v1520 = vshrl.u32 %v1519, 7
      %v1521 = vsub.s32 1, %v1520
      %v1522 = vrot.slane %v436, %v1521
      %v1523 = vlaneseq
      %v1524 = vshrl.u32 %v1523, 7
      %v1525 = vsub.s32 1, %v1524
      %v1526 = vrot.slane %v437, %v1525
      %v1527 = vlaneseq
      %v1528 = vshrl.u32 %v1527, 7
      %v1529 = vsub.s32 1, %v1528
      %v1530 = vrot.slane %v438, %v1529
      %v1531 = vlaneseq
      %v1532 = vshrl.u32 %v1531, 7
      %v1533 = vsub.s32 1, %v1532
      %v1534 = vrot.slane %v439, %v1533
      %v1535 = vlaneseq
      %v1536 = vshrl.u32 %v1535, 7
      %v1537 = vsub.s32 1, %v1536
      %v1538 = vrot.slane %v440, %v1537
      %v1539 = vlaneseq
      %v1540 = vshrl.u32 %v1539, 7
      %v1541 = vsub.s32 1, %v1540
      %v1542 = vrot.slane %v441, %v1541
      %v1543 = vlaneseq
      %v1544 = vshrl.u32 %v1543, 7
      %v1545 = vsub.s32 1, %v1544
      %v1546 = vrot.slane %v442, %v1545
      %v1547 = vlaneseq
      %v1548 = vshrl.u32 %v1547, 7
      %v1549 = vsub.s32 1, %v1548
      %v1550 = vrot.slane %v443, %v1549
      %v1551 = vlaneseq
      %v1552 = vshrl.u32 %v1551, 7
      %v1553 = vsub.s32 1, %v1552
      %v1554 = vrot.slane %v444, %v1553
      %v1555 = vlaneseq
      %v1556 = vshrl.u32 %v1555, 7
      %v1557 = vsub.s32 1, %v1556
      %v1558 = vrot.slane %v445, %v1557
      %v1559 = vlaneseq
      %v1560 = vshrl.u32 %v1559, 7
      %v1561 = vsub.s32 1, %v1560
      %v1562 = vrot.slane %v446, %v1561
      %v1563 = vlaneseq
      %v1564 = vshrl.u32 %v1563, 7
      %v1565 = vsub.s32 1, %v1564
      %v1566 = vrot.slane %v447, %v1565
      %v1567 = vlaneseq
      %v1568 = vshrl.u32 %v1567, 7
      %v1569 = vsub.s32 1, %v1568
      %v1570 = vrot.slane %v448, %v1569
      %v1571 = vlaneseq
      %v1572 = vshrl.u32 %v1571, 7
      %v1573 = vsub.s32 1, %v1572
      %v1574 = vrot.slane %v449, %v1573
      %v1575 = vlaneseq
      %v1576 = vshrl.u32 %v1575, 7
      %v1577 = vsub.s32 1, %v1576
      %v1578 = vrot.slane %v450, %v1577
      %v1579 = vlaneseq
      %v1580 = vshrl.u32 %v1579, 7
      %v1581 = vsub.s32 1, %v1580
      %v1582 = vrot.slane %v451, %v1581
      %v1583 = vlaneseq
      %v1584 = vshrl.u32 %v1583, 7
      %v1585 = vsub.s32 1, %v1584
      %v1586 = vrot.slane %v452, %v1585
      %v1587 = vlaneseq
      %v1588 = vshrl.u32 %v1587, 7
      %v1589 = vsub.s32 1, %v1588
      %v1590 = vrot.slane %v453, %v1589
      %v1591 = vlaneseq
      %v1592 = vshrl.u32 %v1591, 7
      %v1593 = vsub.s32 1, %v1592
      %v1594 = vrot.slane %v454, %v1593
      %v1595 = vlaneseq
      %v1596 = vshrl.u32 %v1595, 7
      %v1597 = vsub.s32 1, %v1596
      %v1598 = vrot.slane %v455, %v1597
      %v1599 = vlaneseq
      %v1600 = vshrl.u32 %v1599, 7
      %v1601 = vsub.s32 1, %v1600
      %v1602 = vrot.slane %v456, %v1601
      %v1603 = vlaneseq
      %v1604 = vshrl.u32 %v1603, 7
      %v1605 = vsub.s32 1, %v1604
      %v1606 = vrot.slane %v457, %v1605
      %v1607 = vlaneseq
      %v1608 = vshrl.u32 %v1607, 7
      %v1609 = vsub.s32 1, %v1608
      %v1610 = vrot.slane %v458, %v1609
      %v1611 = vmul.f32 %v1101, %v1358
      %v1612 = vmul.f32 %v1105, %v1362
      %v1613 = vmul.f32 %v1109, %v1366
      %v1614 = vmul.f32 %v1113, %v1370
      %v1615 = vmul.f32 %v1117, %v1374
      %v1616 = vmul.f32 %v1121, %v1378
      %v1617 = vmul.f32 %v1125, %v1382
      %v1618 = vmul.f32 %v1129, %v1386
      %v1619 = vmul.f32 %v1133, %v1390
      %v1620 = vmul.f32 %v1137, %v1394
      %v1621 = vmul.f32 %v1141, %v1398
      %v1622 = vmul.f32 %v1145, %v1402
      %v1623 = vmul.f32 %v1149, %v1406
      %v1624 = vmul.f32 %v1153, %v1410
      %v1625 = vmul.f32 %v1157, %v1414
      %v1626 = vmul.f32 %v1161, %v1418
      %v1627 = vmul.f32 %v1165, %v1422
      %v1628 = vmul.f32 %v1169, %v1426
      %v1629 = vmul.f32 %v1173, %v1430
      %v1630 = vmul.f32 %v1177, %v1434
      %v1631 = vmul.f32 %v1181, %v1438
      %v1632 = vmul.f32 %v1185, %v1442
      %v1633 = vmul.f32 %v1189, %v1446
      %v1634 = vmul.f32 %v1193, %v1450
      %v1635 = vmul.f32 %v1197, %v1454
      %v1636 = vmul.f32 %v1201, %v1458
      %v1637 = vmul.f32 %v1205, %v1462
      %v1638 = vmul.f32 %v1209, %v1466
      %v1639 = vmul.f32 %v1213, %v1470
      %v1640 = vmul.f32 %v1217, %v1474
      %v1641 = vmul.f32 %v1221, %v1478
      %v1642 = vmul.f32 %v1225, %v1482
      %v1643 = vmul.f32 %v1229, %v1486
      %v1644 = vmul.f32 %v1233, %v1490
      %v1645 = vmul.f32 %v1237, %v1494
      %v1646 = vmul.f32 %v1241, %v1498
      %v1647 = vmul.f32 %v1245, %v1502
      %v1648 = vmul.f32 %v1249, %v1506
      %v1649 = vmul.f32 %v1253, %v1510
      %v1650 = vmul.f32 %v1257, %v1514
      %v1651 = vmul.f32 %v1261, %v1518
      %v1652 = vmul.f32 %v1265, %v1522
      %v1653 = vmul.f32 %v1269, %v1526
      %v1654 = vmul.f32 %v1273, %v1530
      %v1655 = vmul.f32 %v1277, %v1534
      %v1656 = vmul.f32 %v1281, %v1538
      %v1657 = vmul.f32 %v1285, %v1542
      %v1658 = vmul.f32 %v1289, %v1546
      %v1659 = vmul.f32 %v1293, %v1550
      %v1660 = vmul.f32 %v1297, %v1554
      %v1661 = vmul.f32 %v1301, %v1558
      %v1662 = vmul.f32 %v1305, %v1562
      %v1663 = vmul.f32 %v1309, %v1566
      %v1664 = vmul.f32 %v1313, %v1570
      %v1665 = vmul.f32 %v1317, %v1574
      %v1666 = vmul.f32 %v1321, %v1578
      %v1667 = vmul.f32 %v1325, %v1582
      %v1668 = vmul.f32 %v1329, %v1586
      %v1669 = vmul.f32 %v1333, %v1590
      %v1670 = vmul.f32 %v1337, %v1594
      %v1671 = vmul.f32 %v1341, %v1598
      %v1672 = vmul.f32 %v1345, %v1602
      %v1673 = vmul.f32 %v1349, %v1606
      %v1674 = vmul.f32 %v1353, %v1610
      %v1675 = vadd.f32 %v1035, %v1611
      %v1676 = vadd.f32 %v1036, %v1612
      %v1677 = vadd.f32 %v1037, %v1613
      %v1678 = vadd.f32 %v1038, %v1614
      %v1679 = vadd.f32 %v1039, %v1615
      %v1680 = vadd.f32 %v1040, %v1616
      %v1681 = vadd.f32 %v1041, %v1617
      %v1682 = vadd.f32 %v1042, %v1618
      %v1683 = vadd.f32 %v1043, %v1619
      %v1684 = vadd.f32 %v1044, %v1620
      %v1685 = vadd.f32 %v1045, %v1621
      %v1686 = vadd.f32 %v1046, %v1622
      %v1687 = vadd.f32 %v1047, %v1623
      %v1688 = vadd.f32 %v1048, %v1624
      %v1689 = vadd.f32 %v1049, %v1625
      %v1690 = vadd.f32 %v1050, %v1626
      %v1691 = vadd.f32 %v1051, %v1627
      %v1692 = vadd.f32 %v1052, %v1628
      %v1693 = vadd.f32 %v1053, %v1629
      %v1694 = vadd.f32 %v1054, %v1630
      %v1695 = vadd.f32 %v1055, %v1631
      %v1696 = vadd.f32 %v1056, %v1632
      %v1697 = vadd.f32 %v1057, %v1633
      %v1698 = vadd.f32 %v1058, %v1634
      %v1699 = vadd.f32 %v1059, %v1635
      %v1700 = vadd.f32 %v1060, %v1636
      %v1701 = vadd.f32 %v1061, %v1637
      %v1702 = vadd.f32 %v1062, %v1638
      %v1703 = vadd.f32 %v1063, %v1639
      %v1704 = vadd.f32 %v1064, %v1640
      %v1705 = vadd.f32 %v1065, %v1641
      %v1706 = vadd.f32 %v1066, %v1642
      %v1707 = vadd.f32 %v1067, %v1643
      %v1708 = vadd.f32 %v1068, %v1644
      %v1709 = vadd.f32 %v1069, %v1645
      %v1710 = vadd.f32 %v1070, %v1646
      %v1711 = vadd.f32 %v1071, %v1647
      %v1712 = vadd.f32 %v1072, %v1648
      %v1713 = vadd.f32 %v1073, %v1649
      %v1714 = vadd.f32 %v1074, %v1650
      %v1715 = vadd.f32 %v1075, %v1651
      %v1716 = vadd.f32 %v1076, %v1652
      %v1717 = vadd.f32 %v1077, %v1653
      %v1718 = vadd.f32 %v1078, %v1654
      %v1719 = vadd.f32 %v1079, %v1655
      %v1720 = vadd.f32 %v1080, %v1656
      %v1721 = vadd.f32 %v1081, %v1657
      %v1722 = vadd.f32 %v1082, %v1658
      %v1723 = vadd.f32 %v1083, %v1659
      %v1724 = vadd.f32 %v1084, %v1660
      %v1725 = vadd.f32 %v1085, %v1661
      %v1726 = vadd.f32 %v1086, %v1662
      %v1727 = vadd.f32 %v1087, %v1663
      %v1728 = vadd.f32 %v1088, %v1664
      %v1729 = vadd.f32 %v1089, %v1665
      %v1730 = vadd.f32 %v1090, %v1666
      %v1731 = vadd.f32 %v1091, %v1667
      %v1732 = vadd.f32 %v1092, %v1668
      %v1733 = vadd.f32 %v1093, %v1669
      %v1734 = vadd.f32 %v1094, %v1670
      %v1735 = vadd.f32 %v1095, %v1671
      %v1736 = vadd.f32 %v1096, %v1672
      %v1737 = vadd.f32 %v1097, %v1673
      %v1738 = vadd.f32 %v1098, %v1674
      %1739 = vset.pattern.permute.xlu0 2
      %1740 = vperm.xlu0 %1739, %v331
      %v1741 = vpop.permute.xlu0 %1740
      %1743 = vset.pattern.permute.xlu0 2
      %1744 = vperm.xlu0 %1743, %v332
      %v1745 = vpop.permute.xlu0 %1744
      %1747 = vset.pattern.permute.xlu0 2
      %1748 = vperm.xlu0 %1747, %v333
      %v1749 = vpop.permute.xlu0 %1748
      %1751 = vset.pattern.permute.xlu0 2
      %1752 = vperm.xlu0 %1751, %v334
      %v1753 = vpop.permute.xlu0 %1752
      %1755 = vset.pattern.permute.xlu0 2
      %1756 = vperm.xlu0 %1755, %v335
      %v1757 = vpop.permute.xlu0 %1756
      %1759 = vset.pattern.permute.xlu0 2
      %1760 = vperm.xlu0 %1759, %v336
      %v1761 = vpop.permute.xlu0 %1760
      %1763 = vset.pattern.permute.xlu0 2
      %1764 = vperm.xlu0 %1763, %v337
      %v1765 = vpop.permute.xlu0 %1764
      %1767 = vset.pattern.permute.xlu0 2
      %1768 = vperm.xlu0 %1767, %v338
      %v1769 = vpop.permute.xlu0 %1768
      %1771 = vset.pattern.permute.xlu0 2
      %1772 = vperm.xlu0 %1771, %v339
      %v1773 = vpop.permute.xlu0 %1772
      %1775 = vset.pattern.permute.xlu0 2
      %1776 = vperm.xlu0 %1775, %v340
      %v1777 = vpop.permute.xlu0 %1776
      %1779 = vset.pattern.permute.xlu0 2
      %1780 = vperm.xlu0 %1779, %v341
      %v1781 = vpop.permute.xlu0 %1780
      %1783 = vset.pattern.permute.xlu0 2
      %1784 = vperm.xlu0 %1783, %v342
      %v1785 = vpop.permute.xlu0 %1784
      %1787 = vset.pattern.permute.xlu0 2
      %1788 = vperm.xlu0 %1787, %v343
      %v1789 = vpop.permute.xlu0 %1788
      %1791 = vset.pattern.permute.xlu0 2
      %1792 = vperm.xlu0 %1791, %v344
      %v1793 = vpop.permute.xlu0 %1792
      %1795 = vset.pattern.permute.xlu0 2
      %1796 = vperm.xlu0 %1795, %v345
      %v1797 = vpop.permute.xlu0 %1796
      %1799 = vset.pattern.permute.xlu0 2
      %1800 = vperm.xlu0 %1799, %v346
      %v1801 = vpop.permute.xlu0 %1800
      %1803 = vset.pattern.permute.xlu0 2
      %1804 = vperm.xlu0 %1803, %v347
      %v1805 = vpop.permute.xlu0 %1804
      %1807 = vset.pattern.permute.xlu0 2
      %1808 = vperm.xlu0 %1807, %v348
      %v1809 = vpop.permute.xlu0 %1808
      %1811 = vset.pattern.permute.xlu0 2
      %1812 = vperm.xlu0 %1811, %v349
      %v1813 = vpop.permute.xlu0 %1812
      %1815 = vset.pattern.permute.xlu0 2
      %1816 = vperm.xlu0 %1815, %v350
      %v1817 = vpop.permute.xlu0 %1816
      %1819 = vset.pattern.permute.xlu0 2
      %1820 = vperm.xlu0 %1819, %v351
      %v1821 = vpop.permute.xlu0 %1820
      %1823 = vset.pattern.permute.xlu0 2
      %1824 = vperm.xlu0 %1823, %v352
      %v1825 = vpop.permute.xlu0 %1824
      %1827 = vset.pattern.permute.xlu0 2
      %1828 = vperm.xlu0 %1827, %v353
      %v1829 = vpop.permute.xlu0 %1828
      %1831 = vset.pattern.permute.xlu0 2
      %1832 = vperm.xlu0 %1831, %v354
      %v1833 = vpop.permute.xlu0 %1832
      %1835 = vset.pattern.permute.xlu0 2
      %1836 = vperm.xlu0 %1835, %v355
      %v1837 = vpop.permute.xlu0 %1836
      %1839 = vset.pattern.permute.xlu0 2
      %1840 = vperm.xlu0 %1839, %v356
      %v1841 = vpop.permute.xlu0 %1840
      %1843 = vset.pattern.permute.xlu0 2
      %1844 = vperm.xlu0 %1843, %v357
      %v1845 = vpop.permute.xlu0 %1844
      %1847 = vset.pattern.permute.xlu0 2
      %1848 = vperm.xlu0 %1847, %v358
      %v1849 = vpop.permute.xlu0 %1848
      %1851 = vset.pattern.permute.xlu0 2
      %1852 = vperm.xlu0 %1851, %v359
      %v1853 = vpop.permute.xlu0 %1852
      %1855 = vset.pattern.permute.xlu0 2
      %1856 = vperm.xlu0 %1855, %v360
      %v1857 = vpop.permute.xlu0 %1856
      %1859 = vset.pattern.permute.xlu0 2
      %1860 = vperm.xlu0 %1859, %v361
      %v1861 = vpop.permute.xlu0 %1860
      %1863 = vset.pattern.permute.xlu0 2
      %1864 = vperm.xlu0 %1863, %v362
      %v1865 = vpop.permute.xlu0 %1864
      %1867 = vset.pattern.permute.xlu0 2
      %1868 = vperm.xlu0 %1867, %v363
      %v1869 = vpop.permute.xlu0 %1868
      %1871 = vset.pattern.permute.xlu0 2
      %1872 = vperm.xlu0 %1871, %v364
      %v1873 = vpop.permute.xlu0 %1872
      %1875 = vset.pattern.permute.xlu0 2
      %1876 = vperm.xlu0 %1875, %v365
      %v1877 = vpop.permute.xlu0 %1876
      %1879 = vset.pattern.permute.xlu0 2
      %1880 = vperm.xlu0 %1879, %v366
      %v1881 = vpop.permute.xlu0 %1880
      %1883 = vset.pattern.permute.xlu0 2
      %1884 = vperm.xlu0 %1883, %v367
      %v1885 = vpop.permute.xlu0 %1884
      %1887 = vset.pattern.permute.xlu0 2
      %1888 = vperm.xlu0 %1887, %v368
      %v1889 = vpop.permute.xlu0 %1888
      %1891 = vset.pattern.permute.xlu0 2
      %1892 = vperm.xlu0 %1891, %v369
      %v1893 = vpop.permute.xlu0 %1892
      %1895 = vset.pattern.permute.xlu0 2
      %1896 = vperm.xlu0 %1895, %v370
      %v1897 = vpop.permute.xlu0 %1896
      %1899 = vset.pattern.permute.xlu0 2
      %1900 = vperm.xlu0 %1899, %v371
      %v1901 = vpop.permute.xlu0 %1900
      %1903 = vset.pattern.permute.xlu0 2
      %1904 = vperm.xlu0 %1903, %v372
      %v1905 = vpop.permute.xlu0 %1904
      %1907 = vset.pattern.permute.xlu0 2
      %1908 = vperm.xlu0 %1907, %v373
      %v1909 = vpop.permute.xlu0 %1908
      %1911 = vset.pattern.permute.xlu0 2
      %1912 = vperm.xlu0 %1911, %v374
      %v1913 = vpop.permute.xlu0 %1912
      %1915 = vset.pattern.permute.xlu0 2
      %1916 = vperm.xlu0 %1915, %v375
      %v1917 = vpop.permute.xlu0 %1916
      %1919 = vset.pattern.permute.xlu0 2
      %1920 = vperm.xlu0 %1919, %v376
      %v1921 = vpop.permute.xlu0 %1920
      %1923 = vset.pattern.permute.xlu0 2
      %1924 = vperm.xlu0 %1923, %v377
      %v1925 = vpop.permute.xlu0 %1924
      %1927 = vset.pattern.permute.xlu0 2
      %1928 = vperm.xlu0 %1927, %v378
      %v1929 = vpop.permute.xlu0 %1928
      %1931 = vset.pattern.permute.xlu0 2
      %1932 = vperm.xlu0 %1931, %v379
      %v1933 = vpop.permute.xlu0 %1932
      %1935 = vset.pattern.permute.xlu0 2
      %1936 = vperm.xlu0 %1935, %v380
      %v1937 = vpop.permute.xlu0 %1936
      %1939 = vset.pattern.permute.xlu0 2
      %1940 = vperm.xlu0 %1939, %v381
      %v1941 = vpop.permute.xlu0 %1940
      %1943 = vset.pattern.permute.xlu0 2
      %1944 = vperm.xlu0 %1943, %v382
      %v1945 = vpop.permute.xlu0 %1944
      %1947 = vset.pattern.permute.xlu0 2
      %1948 = vperm.xlu0 %1947, %v383
      %v1949 = vpop.permute.xlu0 %1948
      %1951 = vset.pattern.permute.xlu0 2
      %1952 = vperm.xlu0 %1951, %v384
      %v1953 = vpop.permute.xlu0 %1952
      %1955 = vset.pattern.permute.xlu0 2
      %1956 = vperm.xlu0 %1955, %v385
      %v1957 = vpop.permute.xlu0 %1956
      %1959 = vset.pattern.permute.xlu0 2
      %1960 = vperm.xlu0 %1959, %v386
      %v1961 = vpop.permute.xlu0 %1960
      %1963 = vset.pattern.permute.xlu0 2
      %1964 = vperm.xlu0 %1963, %v387
      %v1965 = vpop.permute.xlu0 %1964
      %1967 = vset.pattern.permute.xlu0 2
      %1968 = vperm.xlu0 %1967, %v388
      %v1969 = vpop.permute.xlu0 %1968
      %1971 = vset.pattern.permute.xlu0 2
      %1972 = vperm.xlu0 %1971, %v389
      %v1973 = vpop.permute.xlu0 %1972
      %1975 = vset.pattern.permute.xlu0 2
      %1976 = vperm.xlu0 %1975, %v390
      %v1977 = vpop.permute.xlu0 %1976
      %1979 = vset.pattern.permute.xlu0 2
      %1980 = vperm.xlu0 %1979, %v391
      %v1981 = vpop.permute.xlu0 %1980
      %1983 = vset.pattern.permute.xlu0 2
      %1984 = vperm.xlu0 %1983, %v392
      %v1985 = vpop.permute.xlu0 %1984
      %1987 = vset.pattern.permute.xlu0 2
      %1988 = vperm.xlu0 %1987, %v393
      %v1989 = vpop.permute.xlu0 %1988
      %1991 = vset.pattern.permute.xlu0 2
      %1992 = vperm.xlu0 %1991, %v394
      %v1993 = vpop.permute.xlu0 %1992
      %v1995 = vlaneseq
      %v1996 = vshrl.u32 %v1995, 7
      %v1997 = vsub.s32 2, %v1996
      %v1998 = vrot.slane %v395, %v1997
      %v1999 = vlaneseq
      %v2000 = vshrl.u32 %v1999, 7
      %v2001 = vsub.s32 2, %v2000
      %v2002 = vrot.slane %v396, %v2001
      %v2003 = vlaneseq
      %v2004 = vshrl.u32 %v2003, 7
      %v2005 = vsub.s32 2, %v2004
      %v2006 = vrot.slane %v397, %v2005
      %v2007 = vlaneseq
      %v2008 = vshrl.u32 %v2007, 7
      %v2009 = vsub.s32 2, %v2008
      %v2010 = vrot.slane %v398, %v2009
      %v2011 = vlaneseq
      %v2012 = vshrl.u32 %v2011, 7
      %v2013 = vsub.s32 2, %v2012
      %v2014 = vrot.slane %v399, %v2013
      %v2015 = vlaneseq
      %v2016 = vshrl.u32 %v2015, 7
      %v2017 = vsub.s32 2, %v2016
      %v2018 = vrot.slane %v400, %v2017
      %v2019 = vlaneseq
      %v2020 = vshrl.u32 %v2019, 7
      %v2021 = vsub.s32 2, %v2020
      %v2022 = vrot.slane %v401, %v2021
      %v2023 = vlaneseq
      %v2024 = vshrl.u32 %v2023, 7
      %v2025 = vsub.s32 2, %v2024
      %v2026 = vrot.slane %v402, %v2025
      %v2027 = vlaneseq
      %v2028 = vshrl.u32 %v2027, 7
      %v2029 = vsub.s32 2, %v2028
      %v2030 = vrot.slane %v403, %v2029
      %v2031 = vlaneseq
      %v2032 = vshrl.u32 %v2031, 7
      %v2033 = vsub.s32 2, %v2032
      %v2034 = vrot.slane %v404, %v2033
      %v2035 = vlaneseq
      %v2036 = vshrl.u32 %v2035, 7
      %v2037 = vsub.s32 2, %v2036
      %v2038 = vrot.slane %v405, %v2037
      %v2039 = vlaneseq
      %v2040 = vshrl.u32 %v2039, 7
      %v2041 = vsub.s32 2, %v2040
      %v2042 = vrot.slane %v406, %v2041
      %v2043 = vlaneseq
      %v2044 = vshrl.u32 %v2043, 7
      %v2045 = vsub.s32 2, %v2044
      %v2046 = vrot.slane %v407, %v2045
      %v2047 = vlaneseq
      %v2048 = vshrl.u32 %v2047, 7
      %v2049 = vsub.s32 2, %v2048
      %v2050 = vrot.slane %v408, %v2049
      %v2051 = vlaneseq
      %v2052 = vshrl.u32 %v2051, 7
      %v2053 = vsub.s32 2, %v2052
      %v2054 = vrot.slane %v409, %v2053
      %v2055 = vlaneseq
      %v2056 = vshrl.u32 %v2055, 7
      %v2057 = vsub.s32 2, %v2056
      %v2058 = vrot.slane %v410, %v2057
      %v2059 = vlaneseq
      %v2060 = vshrl.u32 %v2059, 7
      %v2061 = vsub.s32 2, %v2060
      %v2062 = vrot.slane %v411, %v2061
      %v2063 = vlaneseq
      %v2064 = vshrl.u32 %v2063, 7
      %v2065 = vsub.s32 2, %v2064
      %v2066 = vrot.slane %v412, %v2065
      %v2067 = vlaneseq
      %v2068 = vshrl.u32 %v2067, 7
      %v2069 = vsub.s32 2, %v2068
      %v2070 = vrot.slane %v413, %v2069
      %v2071 = vlaneseq
      %v2072 = vshrl.u32 %v2071, 7
      %v2073 = vsub.s32 2, %v2072
      %v2074 = vrot.slane %v414, %v2073
      %v2075 = vlaneseq
      %v2076 = vshrl.u32 %v2075, 7
      %v2077 = vsub.s32 2, %v2076
      %v2078 = vrot.slane %v415, %v2077
      %v2079 = vlaneseq
      %v2080 = vshrl.u32 %v2079, 7
      %v2081 = vsub.s32 2, %v2080
      %v2082 = vrot.slane %v416, %v2081
      %v2083 = vlaneseq
      %v2084 = vshrl.u32 %v2083, 7
      %v2085 = vsub.s32 2, %v2084
      %v2086 = vrot.slane %v417, %v2085
      %v2087 = vlaneseq
      %v2088 = vshrl.u32 %v2087, 7
      %v2089 = vsub.s32 2, %v2088
      %v2090 = vrot.slane %v418, %v2089
      %v2091 = vlaneseq
      %v2092 = vshrl.u32 %v2091, 7
      %v2093 = vsub.s32 2, %v2092
      %v2094 = vrot.slane %v419, %v2093
      %v2095 = vlaneseq
      %v2096 = vshrl.u32 %v2095, 7
      %v2097 = vsub.s32 2, %v2096
      %v2098 = vrot.slane %v420, %v2097
      %v2099 = vlaneseq
      %v2100 = vshrl.u32 %v2099, 7
      %v2101 = vsub.s32 2, %v2100
      %v2102 = vrot.slane %v421, %v2101
      %v2103 = vlaneseq
      %v2104 = vshrl.u32 %v2103, 7
      %v2105 = vsub.s32 2, %v2104
      %v2106 = vrot.slane %v422, %v2105
      %v2107 = vlaneseq
      %v2108 = vshrl.u32 %v2107, 7
      %v2109 = vsub.s32 2, %v2108
      %v2110 = vrot.slane %v423, %v2109
      %v2111 = vlaneseq
      %v2112 = vshrl.u32 %v2111, 7
      %v2113 = vsub.s32 2, %v2112
      %v2114 = vrot.slane %v424, %v2113
      %v2115 = vlaneseq
      %v2116 = vshrl.u32 %v2115, 7
      %v2117 = vsub.s32 2, %v2116
      %v2118 = vrot.slane %v425, %v2117
      %v2119 = vlaneseq
      %v2120 = vshrl.u32 %v2119, 7
      %v2121 = vsub.s32 2, %v2120
      %v2122 = vrot.slane %v426, %v2121
      %v2123 = vlaneseq
      %v2124 = vshrl.u32 %v2123, 7
      %v2125 = vsub.s32 2, %v2124
      %v2126 = vrot.slane %v427, %v2125
      %v2127 = vlaneseq
      %v2128 = vshrl.u32 %v2127, 7
      %v2129 = vsub.s32 2, %v2128
      %v2130 = vrot.slane %v428, %v2129
      %v2131 = vlaneseq
      %v2132 = vshrl.u32 %v2131, 7
      %v2133 = vsub.s32 2, %v2132
      %v2134 = vrot.slane %v429, %v2133
      %v2135 = vlaneseq
      %v2136 = vshrl.u32 %v2135, 7
      %v2137 = vsub.s32 2, %v2136
      %v2138 = vrot.slane %v430, %v2137
      %v2139 = vlaneseq
      %v2140 = vshrl.u32 %v2139, 7
      %v2141 = vsub.s32 2, %v2140
      %v2142 = vrot.slane %v431, %v2141
      %v2143 = vlaneseq
      %v2144 = vshrl.u32 %v2143, 7
      %v2145 = vsub.s32 2, %v2144
      %v2146 = vrot.slane %v432, %v2145
      %v2147 = vlaneseq
      %v2148 = vshrl.u32 %v2147, 7
      %v2149 = vsub.s32 2, %v2148
      %v2150 = vrot.slane %v433, %v2149
      %v2151 = vlaneseq
      %v2152 = vshrl.u32 %v2151, 7
      %v2153 = vsub.s32 2, %v2152
      %v2154 = vrot.slane %v434, %v2153
      %v2155 = vlaneseq
      %v2156 = vshrl.u32 %v2155, 7
      %v2157 = vsub.s32 2, %v2156
      %v2158 = vrot.slane %v435, %v2157
      %v2159 = vlaneseq
      %v2160 = vshrl.u32 %v2159, 7
      %v2161 = vsub.s32 2, %v2160
      %v2162 = vrot.slane %v436, %v2161
      %v2163 = vlaneseq
      %v2164 = vshrl.u32 %v2163, 7
      %v2165 = vsub.s32 2, %v2164
      %v2166 = vrot.slane %v437, %v2165
      %v2167 = vlaneseq
      %v2168 = vshrl.u32 %v2167, 7
      %v2169 = vsub.s32 2, %v2168
      %v2170 = vrot.slane %v438, %v2169
      %v2171 = vlaneseq
      %v2172 = vshrl.u32 %v2171, 7
      %v2173 = vsub.s32 2, %v2172
      %v2174 = vrot.slane %v439, %v2173
      %v2175 = vlaneseq
      %v2176 = vshrl.u32 %v2175, 7
      %v2177 = vsub.s32 2, %v2176
      %v2178 = vrot.slane %v440, %v2177
      %v2179 = vlaneseq
      %v2180 = vshrl.u32 %v2179, 7
      %v2181 = vsub.s32 2, %v2180
      %v2182 = vrot.slane %v441, %v2181
      %v2183 = vlaneseq
      %v2184 = vshrl.u32 %v2183, 7
      %v2185 = vsub.s32 2, %v2184
      %v2186 = vrot.slane %v442, %v2185
      %v2187 = vlaneseq
      %v2188 = vshrl.u32 %v2187, 7
      %v2189 = vsub.s32 2, %v2188
      %v2190 = vrot.slane %v443, %v2189
      %v2191 = vlaneseq
      %v2192 = vshrl.u32 %v2191, 7
      %v2193 = vsub.s32 2, %v2192
      %v2194 = vrot.slane %v444, %v2193
      %v2195 = vlaneseq
      %v2196 = vshrl.u32 %v2195, 7
      %v2197 = vsub.s32 2, %v2196
      %v2198 = vrot.slane %v445, %v2197
      %v2199 = vlaneseq
      %v2200 = vshrl.u32 %v2199, 7
      %v2201 = vsub.s32 2, %v2200
      %v2202 = vrot.slane %v446, %v2201
      %v2203 = vlaneseq
      %v2204 = vshrl.u32 %v2203, 7
      %v2205 = vsub.s32 2, %v2204
      %v2206 = vrot.slane %v447, %v2205
      %v2207 = vlaneseq
      %v2208 = vshrl.u32 %v2207, 7
      %v2209 = vsub.s32 2, %v2208
      %v2210 = vrot.slane %v448, %v2209
      %v2211 = vlaneseq
      %v2212 = vshrl.u32 %v2211, 7
      %v2213 = vsub.s32 2, %v2212
      %v2214 = vrot.slane %v449, %v2213
      %v2215 = vlaneseq
      %v2216 = vshrl.u32 %v2215, 7
      %v2217 = vsub.s32 2, %v2216
      %v2218 = vrot.slane %v450, %v2217
      %v2219 = vlaneseq
      %v2220 = vshrl.u32 %v2219, 7
      %v2221 = vsub.s32 2, %v2220
      %v2222 = vrot.slane %v451, %v2221
      %v2223 = vlaneseq
      %v2224 = vshrl.u32 %v2223, 7
      %v2225 = vsub.s32 2, %v2224
      %v2226 = vrot.slane %v452, %v2225
      %v2227 = vlaneseq
      %v2228 = vshrl.u32 %v2227, 7
      %v2229 = vsub.s32 2, %v2228
      %v2230 = vrot.slane %v453, %v2229
      %v2231 = vlaneseq
      %v2232 = vshrl.u32 %v2231, 7
      %v2233 = vsub.s32 2, %v2232
      %v2234 = vrot.slane %v454, %v2233
      %v2235 = vlaneseq
      %v2236 = vshrl.u32 %v2235, 7
      %v2237 = vsub.s32 2, %v2236
      %v2238 = vrot.slane %v455, %v2237
      %v2239 = vlaneseq
      %v2240 = vshrl.u32 %v2239, 7
      %v2241 = vsub.s32 2, %v2240
      %v2242 = vrot.slane %v456, %v2241
      %v2243 = vlaneseq
      %v2244 = vshrl.u32 %v2243, 7
      %v2245 = vsub.s32 2, %v2244
      %v2246 = vrot.slane %v457, %v2245
      %v2247 = vlaneseq
      %v2248 = vshrl.u32 %v2247, 7
      %v2249 = vsub.s32 2, %v2248
      %v2250 = vrot.slane %v458, %v2249
      %v2251 = vmul.f32 %v1741, %v1998
      %v2252 = vmul.f32 %v1745, %v2002
      %v2253 = vmul.f32 %v1749, %v2006
      %v2254 = vmul.f32 %v1753, %v2010
      %v2255 = vmul.f32 %v1757, %v2014
      %v2256 = vmul.f32 %v1761, %v2018
      %v2257 = vmul.f32 %v1765, %v2022
      %v2258 = vmul.f32 %v1769, %v2026
      %v2259 = vmul.f32 %v1773, %v2030
      %v2260 = vmul.f32 %v1777, %v2034
      %v2261 = vmul.f32 %v1781, %v2038
      %v2262 = vmul.f32 %v1785, %v2042
      %v2263 = vmul.f32 %v1789, %v2046
      %v2264 = vmul.f32 %v1793, %v2050
      %v2265 = vmul.f32 %v1797, %v2054
      %v2266 = vmul.f32 %v1801, %v2058
      %v2267 = vmul.f32 %v1805, %v2062
      %v2268 = vmul.f32 %v1809, %v2066
      %v2269 = vmul.f32 %v1813, %v2070
      %v2270 = vmul.f32 %v1817, %v2074
      %v2271 = vmul.f32 %v1821, %v2078
      %v2272 = vmul.f32 %v1825, %v2082
      %v2273 = vmul.f32 %v1829, %v2086
      %v2274 = vmul.f32 %v1833, %v2090
      %v2275 = vmul.f32 %v1837, %v2094
      %v2276 = vmul.f32 %v1841, %v2098
      %v2277 = vmul.f32 %v1845, %v2102
      %v2278 = vmul.f32 %v1849, %v2106
      %v2279 = vmul.f32 %v1853, %v2110
      %v2280 = vmul.f32 %v1857, %v2114
      %v2281 = vmul.f32 %v1861, %v2118
      %v2282 = vmul.f32 %v1865, %v2122
      %v2283 = vmul.f32 %v1869, %v2126
      %v2284 = vmul.f32 %v1873, %v2130
      %v2285 = vmul.f32 %v1877, %v2134
      %v2286 = vmul.f32 %v1881, %v2138
      %v2287 = vmul.f32 %v1885, %v2142
      %v2288 = vmul.f32 %v1889, %v2146
      %v2289 = vmul.f32 %v1893, %v2150
      %v2290 = vmul.f32 %v1897, %v2154
      %v2291 = vmul.f32 %v1901, %v2158
      %v2292 = vmul.f32 %v1905, %v2162
      %v2293 = vmul.f32 %v1909, %v2166
      %v2294 = vmul.f32 %v1913, %v2170
      %v2295 = vmul.f32 %v1917, %v2174
      %v2296 = vmul.f32 %v1921, %v2178
      %v2297 = vmul.f32 %v1925, %v2182
      %v2298 = vmul.f32 %v1929, %v2186
      %v2299 = vmul.f32 %v1933, %v2190
      %v2300 = vmul.f32 %v1937, %v2194
      %v2301 = vmul.f32 %v1941, %v2198
      %v2302 = vmul.f32 %v1945, %v2202
      %v2303 = vmul.f32 %v1949, %v2206
      %v2304 = vmul.f32 %v1953, %v2210
      %v2305 = vmul.f32 %v1957, %v2214
      %v2306 = vmul.f32 %v1961, %v2218
      %v2307 = vmul.f32 %v1965, %v2222
      %v2308 = vmul.f32 %v1969, %v2226
      %v2309 = vmul.f32 %v1973, %v2230
      %v2310 = vmul.f32 %v1977, %v2234
      %v2311 = vmul.f32 %v1981, %v2238
      %v2312 = vmul.f32 %v1985, %v2242
      %v2313 = vmul.f32 %v1989, %v2246
      %v2314 = vmul.f32 %v1993, %v2250
      %v2315 = vadd.f32 %v1675, %v2251
      %v2316 = vadd.f32 %v1676, %v2252
      %v2317 = vadd.f32 %v1677, %v2253
      %v2318 = vadd.f32 %v1678, %v2254
      %v2319 = vadd.f32 %v1679, %v2255
      %v2320 = vadd.f32 %v1680, %v2256
      %v2321 = vadd.f32 %v1681, %v2257
      %v2322 = vadd.f32 %v1682, %v2258
      %v2323 = vadd.f32 %v1683, %v2259
      %v2324 = vadd.f32 %v1684, %v2260
      %v2325 = vadd.f32 %v1685, %v2261
      %v2326 = vadd.f32 %v1686, %v2262
      %v2327 = vadd.f32 %v1687, %v2263
      %v2328 = vadd.f32 %v1688, %v2264
      %v2329 = vadd.f32 %v1689, %v2265
      %v2330 = vadd.f32 %v1690, %v2266
      %v2331 = vadd.f32 %v1691, %v2267
      %v2332 = vadd.f32 %v1692, %v2268
      %v2333 = vadd.f32 %v1693, %v2269
      %v2334 = vadd.f32 %v1694, %v2270
      %v2335 = vadd.f32 %v1695, %v2271
      %v2336 = vadd.f32 %v1696, %v2272
      %v2337 = vadd.f32 %v1697, %v2273
      %v2338 = vadd.f32 %v1698, %v2274
      %v2339 = vadd.f32 %v1699, %v2275
      %v2340 = vadd.f32 %v1700, %v2276
      %v2341 = vadd.f32 %v1701, %v2277
      %v2342 = vadd.f32 %v1702, %v2278
      %v2343 = vadd.f32 %v1703, %v2279
      %v2344 = vadd.f32 %v1704, %v2280
      %v2345 = vadd.f32 %v1705, %v2281
      %v2346 = vadd.f32 %v1706, %v2282
      %v2347 = vadd.f32 %v1707, %v2283
      %v2348 = vadd.f32 %v1708, %v2284
      %v2349 = vadd.f32 %v1709, %v2285
      %v2350 = vadd.f32 %v1710, %v2286
      %v2351 = vadd.f32 %v1711, %v2287
      %v2352 = vadd.f32 %v1712, %v2288
      %v2353 = vadd.f32 %v1713, %v2289
      %v2354 = vadd.f32 %v1714, %v2290
      %v2355 = vadd.f32 %v1715, %v2291
      %v2356 = vadd.f32 %v1716, %v2292
      %v2357 = vadd.f32 %v1717, %v2293
      %v2358 = vadd.f32 %v1718, %v2294
      %v2359 = vadd.f32 %v1719, %v2295
      %v2360 = vadd.f32 %v1720, %v2296
      %v2361 = vadd.f32 %v1721, %v2297
      %v2362 = vadd.f32 %v1722, %v2298
      %v2363 = vadd.f32 %v1723, %v2299
      %v2364 = vadd.f32 %v1724, %v2300
      %v2365 = vadd.f32 %v1725, %v2301
      %v2366 = vadd.f32 %v1726, %v2302
      %v2367 = vadd.f32 %v1727, %v2303
      %v2368 = vadd.f32 %v1728, %v2304
      %v2369 = vadd.f32 %v1729, %v2305
      %v2370 = vadd.f32 %v1730, %v2306
      %v2371 = vadd.f32 %v1731, %v2307
      %v2372 = vadd.f32 %v1732, %v2308
      %v2373 = vadd.f32 %v1733, %v2309
      %v2374 = vadd.f32 %v1734, %v2310
      %v2375 = vadd.f32 %v1735, %v2311
      %v2376 = vadd.f32 %v1736, %v2312
      %v2377 = vadd.f32 %v1737, %v2313
      %v2378 = vadd.f32 %v1738, %v2314
      %2379 = vset.pattern.permute.xlu0 3
      %2380 = vperm.xlu0 %2379, %v331
      %v2381 = vpop.permute.xlu0 %2380
      %2383 = vset.pattern.permute.xlu0 3
      %2384 = vperm.xlu0 %2383, %v332
      %v2385 = vpop.permute.xlu0 %2384
      %2387 = vset.pattern.permute.xlu0 3
      %2388 = vperm.xlu0 %2387, %v333
      %v2389 = vpop.permute.xlu0 %2388
      %2391 = vset.pattern.permute.xlu0 3
      %2392 = vperm.xlu0 %2391, %v334
      %v2393 = vpop.permute.xlu0 %2392
      %2395 = vset.pattern.permute.xlu0 3
      %2396 = vperm.xlu0 %2395, %v335
      %v2397 = vpop.permute.xlu0 %2396
      %2399 = vset.pattern.permute.xlu0 3
      %2400 = vperm.xlu0 %2399, %v336
      %v2401 = vpop.permute.xlu0 %2400
      %2403 = vset.pattern.permute.xlu0 3
      %2404 = vperm.xlu0 %2403, %v337
      %v2405 = vpop.permute.xlu0 %2404
      %2407 = vset.pattern.permute.xlu0 3
      %2408 = vperm.xlu0 %2407, %v338
      %v2409 = vpop.permute.xlu0 %2408
      %2411 = vset.pattern.permute.xlu0 3
      %2412 = vperm.xlu0 %2411, %v339
      %v2413 = vpop.permute.xlu0 %2412
      %2415 = vset.pattern.permute.xlu0 3
      %2416 = vperm.xlu0 %2415, %v340
      %v2417 = vpop.permute.xlu0 %2416
      %2419 = vset.pattern.permute.xlu0 3
      %2420 = vperm.xlu0 %2419, %v341
      %v2421 = vpop.permute.xlu0 %2420
      %2423 = vset.pattern.permute.xlu0 3
      %2424 = vperm.xlu0 %2423, %v342
      %v2425 = vpop.permute.xlu0 %2424
      %2427 = vset.pattern.permute.xlu0 3
      %2428 = vperm.xlu0 %2427, %v343
      %v2429 = vpop.permute.xlu0 %2428
      %2431 = vset.pattern.permute.xlu0 3
      %2432 = vperm.xlu0 %2431, %v344
      %v2433 = vpop.permute.xlu0 %2432
      %2435 = vset.pattern.permute.xlu0 3
      %2436 = vperm.xlu0 %2435, %v345
      %v2437 = vpop.permute.xlu0 %2436
      %2439 = vset.pattern.permute.xlu0 3
      %2440 = vperm.xlu0 %2439, %v346
      %v2441 = vpop.permute.xlu0 %2440
      %2443 = vset.pattern.permute.xlu0 3
      %2444 = vperm.xlu0 %2443, %v347
      %v2445 = vpop.permute.xlu0 %2444
      %2447 = vset.pattern.permute.xlu0 3
      %2448 = vperm.xlu0 %2447, %v348
      %v2449 = vpop.permute.xlu0 %2448
      %2451 = vset.pattern.permute.xlu0 3
      %2452 = vperm.xlu0 %2451, %v349
      %v2453 = vpop.permute.xlu0 %2452
      %2455 = vset.pattern.permute.xlu0 3
      %2456 = vperm.xlu0 %2455, %v350
      %v2457 = vpop.permute.xlu0 %2456
      %2459 = vset.pattern.permute.xlu0 3
      %2460 = vperm.xlu0 %2459, %v351
      %v2461 = vpop.permute.xlu0 %2460
      %2463 = vset.pattern.permute.xlu0 3
      %2464 = vperm.xlu0 %2463, %v352
      %v2465 = vpop.permute.xlu0 %2464
      %2467 = vset.pattern.permute.xlu0 3
      %2468 = vperm.xlu0 %2467, %v353
      %v2469 = vpop.permute.xlu0 %2468
      %2471 = vset.pattern.permute.xlu0 3
      %2472 = vperm.xlu0 %2471, %v354
      %v2473 = vpop.permute.xlu0 %2472
      %2475 = vset.pattern.permute.xlu0 3
      %2476 = vperm.xlu0 %2475, %v355
      %v2477 = vpop.permute.xlu0 %2476
      %2479 = vset.pattern.permute.xlu0 3
      %2480 = vperm.xlu0 %2479, %v356
      %v2481 = vpop.permute.xlu0 %2480
      %2483 = vset.pattern.permute.xlu0 3
      %2484 = vperm.xlu0 %2483, %v357
      %v2485 = vpop.permute.xlu0 %2484
      %2487 = vset.pattern.permute.xlu0 3
      %2488 = vperm.xlu0 %2487, %v358
      %v2489 = vpop.permute.xlu0 %2488
      %2491 = vset.pattern.permute.xlu0 3
      %2492 = vperm.xlu0 %2491, %v359
      %v2493 = vpop.permute.xlu0 %2492
      %2495 = vset.pattern.permute.xlu0 3
      %2496 = vperm.xlu0 %2495, %v360
      %v2497 = vpop.permute.xlu0 %2496
      %2499 = vset.pattern.permute.xlu0 3
      %2500 = vperm.xlu0 %2499, %v361
      %v2501 = vpop.permute.xlu0 %2500
      %2503 = vset.pattern.permute.xlu0 3
      %2504 = vperm.xlu0 %2503, %v362
      %v2505 = vpop.permute.xlu0 %2504
      %2507 = vset.pattern.permute.xlu0 3
      %2508 = vperm.xlu0 %2507, %v363
      %v2509 = vpop.permute.xlu0 %2508
      %2511 = vset.pattern.permute.xlu0 3
      %2512 = vperm.xlu0 %2511, %v364
      %v2513 = vpop.permute.xlu0 %2512
      %2515 = vset.pattern.permute.xlu0 3
      %2516 = vperm.xlu0 %2515, %v365
      %v2517 = vpop.permute.xlu0 %2516
      %2519 = vset.pattern.permute.xlu0 3
      %2520 = vperm.xlu0 %2519, %v366
      %v2521 = vpop.permute.xlu0 %2520
      %2523 = vset.pattern.permute.xlu0 3
      %2524 = vperm.xlu0 %2523, %v367
      %v2525 = vpop.permute.xlu0 %2524
      %2527 = vset.pattern.permute.xlu0 3
      %2528 = vperm.xlu0 %2527, %v368
      %v2529 = vpop.permute.xlu0 %2528
      %2531 = vset.pattern.permute.xlu0 3
      %2532 = vperm.xlu0 %2531, %v369
      %v2533 = vpop.permute.xlu0 %2532
      %2535 = vset.pattern.permute.xlu0 3
      %2536 = vperm.xlu0 %2535, %v370
      %v2537 = vpop.permute.xlu0 %2536
      %2539 = vset.pattern.permute.xlu0 3
      %2540 = vperm.xlu0 %2539, %v371
      %v2541 = vpop.permute.xlu0 %2540
      %2543 = vset.pattern.permute.xlu0 3
      %2544 = vperm.xlu0 %2543, %v372
      %v2545 = vpop.permute.xlu0 %2544
      %2547 = vset.pattern.permute.xlu0 3
      %2548 = vperm.xlu0 %2547, %v373
      %v2549 = vpop.permute.xlu0 %2548
      %2551 = vset.pattern.permute.xlu0 3
      %2552 = vperm.xlu0 %2551, %v374
      %v2553 = vpop.permute.xlu0 %2552
      %2555 = vset.pattern.permute.xlu0 3
      %2556 = vperm.xlu0 %2555, %v375
      %v2557 = vpop.permute.xlu0 %2556
      %2559 = vset.pattern.permute.xlu0 3
      %2560 = vperm.xlu0 %2559, %v376
      %v2561 = vpop.permute.xlu0 %2560
      %2563 = vset.pattern.permute.xlu0 3
      %2564 = vperm.xlu0 %2563, %v377
      %v2565 = vpop.permute.xlu0 %2564
      %2567 = vset.pattern.permute.xlu0 3
      %2568 = vperm.xlu0 %2567, %v378
      %v2569 = vpop.permute.xlu0 %2568
      %2571 = vset.pattern.permute.xlu0 3
      %2572 = vperm.xlu0 %2571, %v379
      %v2573 = vpop.permute.xlu0 %2572
      %2575 = vset.pattern.permute.xlu0 3
      %2576 = vperm.xlu0 %2575, %v380
      %v2577 = vpop.permute.xlu0 %2576
      %2579 = vset.pattern.permute.xlu0 3
      %2580 = vperm.xlu0 %2579, %v381
      %v2581 = vpop.permute.xlu0 %2580
      %2583 = vset.pattern.permute.xlu0 3
      %2584 = vperm.xlu0 %2583, %v382
      %v2585 = vpop.permute.xlu0 %2584
      %2587 = vset.pattern.permute.xlu0 3
      %2588 = vperm.xlu0 %2587, %v383
      %v2589 = vpop.permute.xlu0 %2588
      %2591 = vset.pattern.permute.xlu0 3
      %2592 = vperm.xlu0 %2591, %v384
      %v2593 = vpop.permute.xlu0 %2592
      %2595 = vset.pattern.permute.xlu0 3
      %2596 = vperm.xlu0 %2595, %v385
      %v2597 = vpop.permute.xlu0 %2596
      %2599 = vset.pattern.permute.xlu0 3
      %2600 = vperm.xlu0 %2599, %v386
      %v2601 = vpop.permute.xlu0 %2600
      %2603 = vset.pattern.permute.xlu0 3
      %2604 = vperm.xlu0 %2603, %v387
      %v2605 = vpop.permute.xlu0 %2604
      %2607 = vset.pattern.permute.xlu0 3
      %2608 = vperm.xlu0 %2607, %v388
      %v2609 = vpop.permute.xlu0 %2608
      %2611 = vset.pattern.permute.xlu0 3
      %2612 = vperm.xlu0 %2611, %v389
      %v2613 = vpop.permute.xlu0 %2612
      %2615 = vset.pattern.permute.xlu0 3
      %2616 = vperm.xlu0 %2615, %v390
      %v2617 = vpop.permute.xlu0 %2616
      %2619 = vset.pattern.permute.xlu0 3
      %2620 = vperm.xlu0 %2619, %v391
      %v2621 = vpop.permute.xlu0 %2620
      %2623 = vset.pattern.permute.xlu0 3
      %2624 = vperm.xlu0 %2623, %v392
      %v2625 = vpop.permute.xlu0 %2624
      %2627 = vset.pattern.permute.xlu0 3
      %2628 = vperm.xlu0 %2627, %v393
      %v2629 = vpop.permute.xlu0 %2628
      %2631 = vset.pattern.permute.xlu0 3
      %2632 = vperm.xlu0 %2631, %v394
      %v2633 = vpop.permute.xlu0 %2632
      %v2635 = vlaneseq
      %v2636 = vshrl.u32 %v2635, 7
      %v2637 = vsub.s32 3, %v2636
      %v2638 = vrot.slane %v395, %v2637
      %v2639 = vlaneseq
      %v2640 = vshrl.u32 %v2639, 7
      %v2641 = vsub.s32 3, %v2640
      %v2642 = vrot.slane %v396, %v2641
      %v2643 = vlaneseq
      %v2644 = vshrl.u32 %v2643, 7
      %v2645 = vsub.s32 3, %v2644
      %v2646 = vrot.slane %v397, %v2645
      %v2647 = vlaneseq
      %v2648 = vshrl.u32 %v2647, 7
      %v2649 = vsub.s32 3, %v2648
      %v2650 = vrot.slane %v398, %v2649
      %v2651 = vlaneseq
      %v2652 = vshrl.u32 %v2651, 7
      %v2653 = vsub.s32 3, %v2652
      %v2654 = vrot.slane %v399, %v2653
      %v2655 = vlaneseq
      %v2656 = vshrl.u32 %v2655, 7
      %v2657 = vsub.s32 3, %v2656
      %v2658 = vrot.slane %v400, %v2657
      %v2659 = vlaneseq
      %v2660 = vshrl.u32 %v2659, 7
      %v2661 = vsub.s32 3, %v2660
      %v2662 = vrot.slane %v401, %v2661
      %v2663 = vlaneseq
      %v2664 = vshrl.u32 %v2663, 7
      %v2665 = vsub.s32 3, %v2664
      %v2666 = vrot.slane %v402, %v2665
      %v2667 = vlaneseq
      %v2668 = vshrl.u32 %v2667, 7
      %v2669 = vsub.s32 3, %v2668
      %v2670 = vrot.slane %v403, %v2669
      %v2671 = vlaneseq
      %v2672 = vshrl.u32 %v2671, 7
      %v2673 = vsub.s32 3, %v2672
      %v2674 = vrot.slane %v404, %v2673
      %v2675 = vlaneseq
      %v2676 = vshrl.u32 %v2675, 7
      %v2677 = vsub.s32 3, %v2676
      %v2678 = vrot.slane %v405, %v2677
      %v2679 = vlaneseq
      %v2680 = vshrl.u32 %v2679, 7
      %v2681 = vsub.s32 3, %v2680
      %v2682 = vrot.slane %v406, %v2681
      %v2683 = vlaneseq
      %v2684 = vshrl.u32 %v2683, 7
      %v2685 = vsub.s32 3, %v2684
      %v2686 = vrot.slane %v407, %v2685
      %v2687 = vlaneseq
      %v2688 = vshrl.u32 %v2687, 7
      %v2689 = vsub.s32 3, %v2688
      %v2690 = vrot.slane %v408, %v2689
      %v2691 = vlaneseq
      %v2692 = vshrl.u32 %v2691, 7
      %v2693 = vsub.s32 3, %v2692
      %v2694 = vrot.slane %v409, %v2693
      %v2695 = vlaneseq
      %v2696 = vshrl.u32 %v2695, 7
      %v2697 = vsub.s32 3, %v2696
      %v2698 = vrot.slane %v410, %v2697
      %v2699 = vlaneseq
      %v2700 = vshrl.u32 %v2699, 7
      %v2701 = vsub.s32 3, %v2700
      %v2702 = vrot.slane %v411, %v2701
      %v2703 = vlaneseq
      %v2704 = vshrl.u32 %v2703, 7
      %v2705 = vsub.s32 3, %v2704
      %v2706 = vrot.slane %v412, %v2705
      %v2707 = vlaneseq
      %v2708 = vshrl.u32 %v2707, 7
      %v2709 = vsub.s32 3, %v2708
      %v2710 = vrot.slane %v413, %v2709
      %v2711 = vlaneseq
      %v2712 = vshrl.u32 %v2711, 7
      %v2713 = vsub.s32 3, %v2712
      %v2714 = vrot.slane %v414, %v2713
      %v2715 = vlaneseq
      %v2716 = vshrl.u32 %v2715, 7
      %v2717 = vsub.s32 3, %v2716
      %v2718 = vrot.slane %v415, %v2717
      %v2719 = vlaneseq
      %v2720 = vshrl.u32 %v2719, 7
      %v2721 = vsub.s32 3, %v2720
      %v2722 = vrot.slane %v416, %v2721
      %v2723 = vlaneseq
      %v2724 = vshrl.u32 %v2723, 7
      %v2725 = vsub.s32 3, %v2724
      %v2726 = vrot.slane %v417, %v2725
      %v2727 = vlaneseq
      %v2728 = vshrl.u32 %v2727, 7
      %v2729 = vsub.s32 3, %v2728
      %v2730 = vrot.slane %v418, %v2729
      %v2731 = vlaneseq
      %v2732 = vshrl.u32 %v2731, 7
      %v2733 = vsub.s32 3, %v2732
      %v2734 = vrot.slane %v419, %v2733
      %v2735 = vlaneseq
      %v2736 = vshrl.u32 %v2735, 7
      %v2737 = vsub.s32 3, %v2736
      %v2738 = vrot.slane %v420, %v2737
      %v2739 = vlaneseq
      %v2740 = vshrl.u32 %v2739, 7
      %v2741 = vsub.s32 3, %v2740
      %v2742 = vrot.slane %v421, %v2741
      %v2743 = vlaneseq
      %v2744 = vshrl.u32 %v2743, 7
      %v2745 = vsub.s32 3, %v2744
      %v2746 = vrot.slane %v422, %v2745
      %v2747 = vlaneseq
      %v2748 = vshrl.u32 %v2747, 7
      %v2749 = vsub.s32 3, %v2748
      %v2750 = vrot.slane %v423, %v2749
      %v2751 = vlaneseq
      %v2752 = vshrl.u32 %v2751, 7
      %v2753 = vsub.s32 3, %v2752
      %v2754 = vrot.slane %v424, %v2753
      %v2755 = vlaneseq
      %v2756 = vshrl.u32 %v2755, 7
      %v2757 = vsub.s32 3, %v2756
      %v2758 = vrot.slane %v425, %v2757
      %v2759 = vlaneseq
      %v2760 = vshrl.u32 %v2759, 7
      %v2761 = vsub.s32 3, %v2760
      %v2762 = vrot.slane %v426, %v2761
      %v2763 = vlaneseq
      %v2764 = vshrl.u32 %v2763, 7
      %v2765 = vsub.s32 3, %v2764
      %v2766 = vrot.slane %v427, %v2765
      %v2767 = vlaneseq
      %v2768 = vshrl.u32 %v2767, 7
      %v2769 = vsub.s32 3, %v2768
      %v2770 = vrot.slane %v428, %v2769
      %v2771 = vlaneseq
      %v2772 = vshrl.u32 %v2771, 7
      %v2773 = vsub.s32 3, %v2772
      %v2774 = vrot.slane %v429, %v2773
      %v2775 = vlaneseq
      %v2776 = vshrl.u32 %v2775, 7
      %v2777 = vsub.s32 3, %v2776
      %v2778 = vrot.slane %v430, %v2777
      %v2779 = vlaneseq
      %v2780 = vshrl.u32 %v2779, 7
      %v2781 = vsub.s32 3, %v2780
      %v2782 = vrot.slane %v431, %v2781
      %v2783 = vlaneseq
      %v2784 = vshrl.u32 %v2783, 7
      %v2785 = vsub.s32 3, %v2784
      %v2786 = vrot.slane %v432, %v2785
      %v2787 = vlaneseq
      %v2788 = vshrl.u32 %v2787, 7
      %v2789 = vsub.s32 3, %v2788
      %v2790 = vrot.slane %v433, %v2789
      %v2791 = vlaneseq
      %v2792 = vshrl.u32 %v2791, 7
      %v2793 = vsub.s32 3, %v2792
      %v2794 = vrot.slane %v434, %v2793
      %v2795 = vlaneseq
      %v2796 = vshrl.u32 %v2795, 7
      %v2797 = vsub.s32 3, %v2796
      %v2798 = vrot.slane %v435, %v2797
      %v2799 = vlaneseq
      %v2800 = vshrl.u32 %v2799, 7
      %v2801 = vsub.s32 3, %v2800
      %v2802 = vrot.slane %v436, %v2801
      %v2803 = vlaneseq
      %v2804 = vshrl.u32 %v2803, 7
      %v2805 = vsub.s32 3, %v2804
      %v2806 = vrot.slane %v437, %v2805
      %v2807 = vlaneseq
      %v2808 = vshrl.u32 %v2807, 7
      %v2809 = vsub.s32 3, %v2808
      %v2810 = vrot.slane %v438, %v2809
      %v2811 = vlaneseq
      %v2812 = vshrl.u32 %v2811, 7
      %v2813 = vsub.s32 3, %v2812
      %v2814 = vrot.slane %v439, %v2813
      %v2815 = vlaneseq
      %v2816 = vshrl.u32 %v2815, 7
      %v2817 = vsub.s32 3, %v2816
      %v2818 = vrot.slane %v440, %v2817
      %v2819 = vlaneseq
      %v2820 = vshrl.u32 %v2819, 7
      %v2821 = vsub.s32 3, %v2820
      %v2822 = vrot.slane %v441, %v2821
      %v2823 = vlaneseq
      %v2824 = vshrl.u32 %v2823, 7
      %v2825 = vsub.s32 3, %v2824
      %v2826 = vrot.slane %v442, %v2825
      %v2827 = vlaneseq
      %v2828 = vshrl.u32 %v2827, 7
      %v2829 = vsub.s32 3, %v2828
      %v2830 = vrot.slane %v443, %v2829
      %v2831 = vlaneseq
      %v2832 = vshrl.u32 %v2831, 7
      %v2833 = vsub.s32 3, %v2832
      %v2834 = vrot.slane %v444, %v2833
      %v2835 = vlaneseq
      %v2836 = vshrl.u32 %v2835, 7
      %v2837 = vsub.s32 3, %v2836
      %v2838 = vrot.slane %v445, %v2837
      %v2839 = vlaneseq
      %v2840 = vshrl.u32 %v2839, 7
      %v2841 = vsub.s32 3, %v2840
      %v2842 = vrot.slane %v446, %v2841
      %v2843 = vlaneseq
      %v2844 = vshrl.u32 %v2843, 7
      %v2845 = vsub.s32 3, %v2844
      %v2846 = vrot.slane %v447, %v2845
      %v2847 = vlaneseq
      %v2848 = vshrl.u32 %v2847, 7
      %v2849 = vsub.s32 3, %v2848
      %v2850 = vrot.slane %v448, %v2849
      %v2851 = vlaneseq
      %v2852 = vshrl.u32 %v2851, 7
      %v2853 = vsub.s32 3, %v2852
      %v2854 = vrot.slane %v449, %v2853
      %v2855 = vlaneseq
      %v2856 = vshrl.u32 %v2855, 7
      %v2857 = vsub.s32 3, %v2856
      %v2858 = vrot.slane %v450, %v2857
      %v2859 = vlaneseq
      %v2860 = vshrl.u32 %v2859, 7
      %v2861 = vsub.s32 3, %v2860
      %v2862 = vrot.slane %v451, %v2861
      %v2863 = vlaneseq
      %v2864 = vshrl.u32 %v2863, 7
      %v2865 = vsub.s32 3, %v2864
      %v2866 = vrot.slane %v452, %v2865
      %v2867 = vlaneseq
      %v2868 = vshrl.u32 %v2867, 7
      %v2869 = vsub.s32 3, %v2868
      %v2870 = vrot.slane %v453, %v2869
      %v2871 = vlaneseq
      %v2872 = vshrl.u32 %v2871, 7
      %v2873 = vsub.s32 3, %v2872
      %v2874 = vrot.slane %v454, %v2873
      %v2875 = vlaneseq
      %v2876 = vshrl.u32 %v2875, 7
      %v2877 = vsub.s32 3, %v2876
      %v2878 = vrot.slane %v455, %v2877
      %v2879 = vlaneseq
      %v2880 = vshrl.u32 %v2879, 7
      %v2881 = vsub.s32 3, %v2880
      %v2882 = vrot.slane %v456, %v2881
      %v2883 = vlaneseq
      %v2884 = vshrl.u32 %v2883, 7
      %v2885 = vsub.s32 3, %v2884
      %v2886 = vrot.slane %v457, %v2885
      %v2887 = vlaneseq
      %v2888 = vshrl.u32 %v2887, 7
      %v2889 = vsub.s32 3, %v2888
      %v2890 = vrot.slane %v458, %v2889
      %v2891 = vmul.f32 %v2381, %v2638
      %v2892 = vmul.f32 %v2385, %v2642
      %v2893 = vmul.f32 %v2389, %v2646
      %v2894 = vmul.f32 %v2393, %v2650
      %v2895 = vmul.f32 %v2397, %v2654
      %v2896 = vmul.f32 %v2401, %v2658
      %v2897 = vmul.f32 %v2405, %v2662
      %v2898 = vmul.f32 %v2409, %v2666
      %v2899 = vmul.f32 %v2413, %v2670
      %v2900 = vmul.f32 %v2417, %v2674
      %v2901 = vmul.f32 %v2421, %v2678
      %v2902 = vmul.f32 %v2425, %v2682
      %v2903 = vmul.f32 %v2429, %v2686
      %v2904 = vmul.f32 %v2433, %v2690
      %v2905 = vmul.f32 %v2437, %v2694
      %v2906 = vmul.f32 %v2441, %v2698
      %v2907 = vmul.f32 %v2445, %v2702
      %v2908 = vmul.f32 %v2449, %v2706
      %v2909 = vmul.f32 %v2453, %v2710
      %v2910 = vmul.f32 %v2457, %v2714
      %v2911 = vmul.f32 %v2461, %v2718
      %v2912 = vmul.f32 %v2465, %v2722
      %v2913 = vmul.f32 %v2469, %v2726
      %v2914 = vmul.f32 %v2473, %v2730
      %v2915 = vmul.f32 %v2477, %v2734
      %v2916 = vmul.f32 %v2481, %v2738
      %v2917 = vmul.f32 %v2485, %v2742
      %v2918 = vmul.f32 %v2489, %v2746
      %v2919 = vmul.f32 %v2493, %v2750
      %v2920 = vmul.f32 %v2497, %v2754
      %v2921 = vmul.f32 %v2501, %v2758
      %v2922 = vmul.f32 %v2505, %v2762
      %v2923 = vmul.f32 %v2509, %v2766
      %v2924 = vmul.f32 %v2513, %v2770
      %v2925 = vmul.f32 %v2517, %v2774
      %v2926 = vmul.f32 %v2521, %v2778
      %v2927 = vmul.f32 %v2525, %v2782
      %v2928 = vmul.f32 %v2529, %v2786
      %v2929 = vmul.f32 %v2533, %v2790
      %v2930 = vmul.f32 %v2537, %v2794
      %v2931 = vmul.f32 %v2541, %v2798
      %v2932 = vmul.f32 %v2545, %v2802
      %v2933 = vmul.f32 %v2549, %v2806
      %v2934 = vmul.f32 %v2553, %v2810
      %v2935 = vmul.f32 %v2557, %v2814
      %v2936 = vmul.f32 %v2561, %v2818
      %v2937 = vmul.f32 %v2565, %v2822
      %v2938 = vmul.f32 %v2569, %v2826
      %v2939 = vmul.f32 %v2573, %v2830
      %v2940 = vmul.f32 %v2577, %v2834
      %v2941 = vmul.f32 %v2581, %v2838
      %v2942 = vmul.f32 %v2585, %v2842
      %v2943 = vmul.f32 %v2589, %v2846
      %v2944 = vmul.f32 %v2593, %v2850
      %v2945 = vmul.f32 %v2597, %v2854
      %v2946 = vmul.f32 %v2601, %v2858
      %v2947 = vmul.f32 %v2605, %v2862
      %v2948 = vmul.f32 %v2609, %v2866
      %v2949 = vmul.f32 %v2613, %v2870
      %v2950 = vmul.f32 %v2617, %v2874
      %v2951 = vmul.f32 %v2621, %v2878
      %v2952 = vmul.f32 %v2625, %v2882
      %v2953 = vmul.f32 %v2629, %v2886
      %v2954 = vmul.f32 %v2633, %v2890
      %v2955 = vadd.f32 %v2315, %v2891
      %v2956 = vadd.f32 %v2316, %v2892
      %v2957 = vadd.f32 %v2317, %v2893
      %v2958 = vadd.f32 %v2318, %v2894
      %v2959 = vadd.f32 %v2319, %v2895
      %v2960 = vadd.f32 %v2320, %v2896
      %v2961 = vadd.f32 %v2321, %v2897
      %v2962 = vadd.f32 %v2322, %v2898
      %v2963 = vadd.f32 %v2323, %v2899
      %v2964 = vadd.f32 %v2324, %v2900
      %v2965 = vadd.f32 %v2325, %v2901
      %v2966 = vadd.f32 %v2326, %v2902
      %v2967 = vadd.f32 %v2327, %v2903
      %v2968 = vadd.f32 %v2328, %v2904
      %v2969 = vadd.f32 %v2329, %v2905
      %v2970 = vadd.f32 %v2330, %v2906
      %v2971 = vadd.f32 %v2331, %v2907
      %v2972 = vadd.f32 %v2332, %v2908
      %v2973 = vadd.f32 %v2333, %v2909
      %v2974 = vadd.f32 %v2334, %v2910
      %v2975 = vadd.f32 %v2335, %v2911
      %v2976 = vadd.f32 %v2336, %v2912
      %v2977 = vadd.f32 %v2337, %v2913
      %v2978 = vadd.f32 %v2338, %v2914
      %v2979 = vadd.f32 %v2339, %v2915
      %v2980 = vadd.f32 %v2340, %v2916
      %v2981 = vadd.f32 %v2341, %v2917
      %v2982 = vadd.f32 %v2342, %v2918
      %v2983 = vadd.f32 %v2343, %v2919
      %v2984 = vadd.f32 %v2344, %v2920
      %v2985 = vadd.f32 %v2345, %v2921
      %v2986 = vadd.f32 %v2346, %v2922
      %v2987 = vadd.f32 %v2347, %v2923
      %v2988 = vadd.f32 %v2348, %v2924
      %v2989 = vadd.f32 %v2349, %v2925
      %v2990 = vadd.f32 %v2350, %v2926
      %v2991 = vadd.f32 %v2351, %v2927
      %v2992 = vadd.f32 %v2352, %v2928
      %v2993 = vadd.f32 %v2353, %v2929
      %v2994 = vadd.f32 %v2354, %v2930
      %v2995 = vadd.f32 %v2355, %v2931
      %v2996 = vadd.f32 %v2356, %v2932
      %v2997 = vadd.f32 %v2357, %v2933
      %v2998 = vadd.f32 %v2358, %v2934
      %v2999 = vadd.f32 %v2359, %v2935
      %v3000 = vadd.f32 %v2360, %v2936
      %v3001 = vadd.f32 %v2361, %v2937
      %v3002 = vadd.f32 %v2362, %v2938
      %v3003 = vadd.f32 %v2363, %v2939
      %v3004 = vadd.f32 %v2364, %v2940
      %v3005 = vadd.f32 %v2365, %v2941
      %v3006 = vadd.f32 %v2366, %v2942
      %v3007 = vadd.f32 %v2367, %v2943
      %v3008 = vadd.f32 %v2368, %v2944
      %v3009 = vadd.f32 %v2369, %v2945
      %v3010 = vadd.f32 %v2370, %v2946
      %v3011 = vadd.f32 %v2371, %v2947
      %v3012 = vadd.f32 %v2372, %v2948
      %v3013 = vadd.f32 %v2373, %v2949
      %v3014 = vadd.f32 %v2374, %v2950
      %v3015 = vadd.f32 %v2375, %v2951
      %v3016 = vadd.f32 %v2376, %v2952
      %v3017 = vadd.f32 %v2377, %v2953
      %v3018 = vadd.f32 %v2378, %v2954
      %3019 = vset.pattern.permute.xlu0 4
      %3020 = vperm.xlu0 %3019, %v331
      %v3021 = vpop.permute.xlu0 %3020
      %3023 = vset.pattern.permute.xlu0 4
      %3024 = vperm.xlu0 %3023, %v332
      %v3025 = vpop.permute.xlu0 %3024
      %3027 = vset.pattern.permute.xlu0 4
      %3028 = vperm.xlu0 %3027, %v333
      %v3029 = vpop.permute.xlu0 %3028
      %3031 = vset.pattern.permute.xlu0 4
      %3032 = vperm.xlu0 %3031, %v334
      %v3033 = vpop.permute.xlu0 %3032
      %3035 = vset.pattern.permute.xlu0 4
      %3036 = vperm.xlu0 %3035, %v335
      %v3037 = vpop.permute.xlu0 %3036
      %3039 = vset.pattern.permute.xlu0 4
      %3040 = vperm.xlu0 %3039, %v336
      %v3041 = vpop.permute.xlu0 %3040
      %3043 = vset.pattern.permute.xlu0 4
      %3044 = vperm.xlu0 %3043, %v337
      %v3045 = vpop.permute.xlu0 %3044
      %3047 = vset.pattern.permute.xlu0 4
      %3048 = vperm.xlu0 %3047, %v338
      %v3049 = vpop.permute.xlu0 %3048
      %3051 = vset.pattern.permute.xlu0 4
      %3052 = vperm.xlu0 %3051, %v339
      %v3053 = vpop.permute.xlu0 %3052
      %3055 = vset.pattern.permute.xlu0 4
      %3056 = vperm.xlu0 %3055, %v340
      %v3057 = vpop.permute.xlu0 %3056
      %3059 = vset.pattern.permute.xlu0 4
      %3060 = vperm.xlu0 %3059, %v341
      %v3061 = vpop.permute.xlu0 %3060
      %3063 = vset.pattern.permute.xlu0 4
      %3064 = vperm.xlu0 %3063, %v342
      %v3065 = vpop.permute.xlu0 %3064
      %3067 = vset.pattern.permute.xlu0 4
      %3068 = vperm.xlu0 %3067, %v343
      %v3069 = vpop.permute.xlu0 %3068
      %3071 = vset.pattern.permute.xlu0 4
      %3072 = vperm.xlu0 %3071, %v344
      %v3073 = vpop.permute.xlu0 %3072
      %3075 = vset.pattern.permute.xlu0 4
      %3076 = vperm.xlu0 %3075, %v345
      %v3077 = vpop.permute.xlu0 %3076
      %3079 = vset.pattern.permute.xlu0 4
      %3080 = vperm.xlu0 %3079, %v346
      %v3081 = vpop.permute.xlu0 %3080
      %3083 = vset.pattern.permute.xlu0 4
      %3084 = vperm.xlu0 %3083, %v347
      %v3085 = vpop.permute.xlu0 %3084
      %3087 = vset.pattern.permute.xlu0 4
      %3088 = vperm.xlu0 %3087, %v348
      %v3089 = vpop.permute.xlu0 %3088
      %3091 = vset.pattern.permute.xlu0 4
      %3092 = vperm.xlu0 %3091, %v349
      %v3093 = vpop.permute.xlu0 %3092
      %3095 = vset.pattern.permute.xlu0 4
      %3096 = vperm.xlu0 %3095, %v350
      %v3097 = vpop.permute.xlu0 %3096
      %3099 = vset.pattern.permute.xlu0 4
      %3100 = vperm.xlu0 %3099, %v351
      %v3101 = vpop.permute.xlu0 %3100
      %3103 = vset.pattern.permute.xlu0 4
      %3104 = vperm.xlu0 %3103, %v352
      %v3105 = vpop.permute.xlu0 %3104
      %3107 = vset.pattern.permute.xlu0 4
      %3108 = vperm.xlu0 %3107, %v353
      %v3109 = vpop.permute.xlu0 %3108
      %3111 = vset.pattern.permute.xlu0 4
      %3112 = vperm.xlu0 %3111, %v354
      %v3113 = vpop.permute.xlu0 %3112
      %3115 = vset.pattern.permute.xlu0 4
      %3116 = vperm.xlu0 %3115, %v355
      %v3117 = vpop.permute.xlu0 %3116
      %3119 = vset.pattern.permute.xlu0 4
      %3120 = vperm.xlu0 %3119, %v356
      %v3121 = vpop.permute.xlu0 %3120
      %3123 = vset.pattern.permute.xlu0 4
      %3124 = vperm.xlu0 %3123, %v357
      %v3125 = vpop.permute.xlu0 %3124
      %3127 = vset.pattern.permute.xlu0 4
      %3128 = vperm.xlu0 %3127, %v358
      %v3129 = vpop.permute.xlu0 %3128
      %3131 = vset.pattern.permute.xlu0 4
      %3132 = vperm.xlu0 %3131, %v359
      %v3133 = vpop.permute.xlu0 %3132
      %3135 = vset.pattern.permute.xlu0 4
      %3136 = vperm.xlu0 %3135, %v360
      %v3137 = vpop.permute.xlu0 %3136
      %3139 = vset.pattern.permute.xlu0 4
      %3140 = vperm.xlu0 %3139, %v361
      %v3141 = vpop.permute.xlu0 %3140
      %3143 = vset.pattern.permute.xlu0 4
      %3144 = vperm.xlu0 %3143, %v362
      %v3145 = vpop.permute.xlu0 %3144
      %3147 = vset.pattern.permute.xlu0 4
      %3148 = vperm.xlu0 %3147, %v363
      %v3149 = vpop.permute.xlu0 %3148
      %3151 = vset.pattern.permute.xlu0 4
      %3152 = vperm.xlu0 %3151, %v364
      %v3153 = vpop.permute.xlu0 %3152
      %3155 = vset.pattern.permute.xlu0 4
      %3156 = vperm.xlu0 %3155, %v365
      %v3157 = vpop.permute.xlu0 %3156
      %3159 = vset.pattern.permute.xlu0 4
      %3160 = vperm.xlu0 %3159, %v366
      %v3161 = vpop.permute.xlu0 %3160
      %3163 = vset.pattern.permute.xlu0 4
      %3164 = vperm.xlu0 %3163, %v367
      %v3165 = vpop.permute.xlu0 %3164
      %3167 = vset.pattern.permute.xlu0 4
      %3168 = vperm.xlu0 %3167, %v368
      %v3169 = vpop.permute.xlu0 %3168
      %3171 = vset.pattern.permute.xlu0 4
      %3172 = vperm.xlu0 %3171, %v369
      %v3173 = vpop.permute.xlu0 %3172
      %3175 = vset.pattern.permute.xlu0 4
      %3176 = vperm.xlu0 %3175, %v370
      %v3177 = vpop.permute.xlu0 %3176
      %3179 = vset.pattern.permute.xlu0 4
      %3180 = vperm.xlu0 %3179, %v371
      %v3181 = vpop.permute.xlu0 %3180
      %3183 = vset.pattern.permute.xlu0 4
      %3184 = vperm.xlu0 %3183, %v372
      %v3185 = vpop.permute.xlu0 %3184
      %3187 = vset.pattern.permute.xlu0 4
      %3188 = vperm.xlu0 %3187, %v373
      %v3189 = vpop.permute.xlu0 %3188
      %3191 = vset.pattern.permute.xlu0 4
      %3192 = vperm.xlu0 %3191, %v374
      %v3193 = vpop.permute.xlu0 %3192
      %3195 = vset.pattern.permute.xlu0 4
      %3196 = vperm.xlu0 %3195, %v375
      %v3197 = vpop.permute.xlu0 %3196
      %3199 = vset.pattern.permute.xlu0 4
      %3200 = vperm.xlu0 %3199, %v376
      %v3201 = vpop.permute.xlu0 %3200
      %3203 = vset.pattern.permute.xlu0 4
      %3204 = vperm.xlu0 %3203, %v377
      %v3205 = vpop.permute.xlu0 %3204
      %3207 = vset.pattern.permute.xlu0 4
      %3208 = vperm.xlu0 %3207, %v378
      %v3209 = vpop.permute.xlu0 %3208
      %3211 = vset.pattern.permute.xlu0 4
      %3212 = vperm.xlu0 %3211, %v379
      %v3213 = vpop.permute.xlu0 %3212
      %3215 = vset.pattern.permute.xlu0 4
      %3216 = vperm.xlu0 %3215, %v380
      %v3217 = vpop.permute.xlu0 %3216
      %3219 = vset.pattern.permute.xlu0 4
      %3220 = vperm.xlu0 %3219, %v381
      %v3221 = vpop.permute.xlu0 %3220
      %3223 = vset.pattern.permute.xlu0 4
      %3224 = vperm.xlu0 %3223, %v382
      %v3225 = vpop.permute.xlu0 %3224
      %3227 = vset.pattern.permute.xlu0 4
      %3228 = vperm.xlu0 %3227, %v383
      %v3229 = vpop.permute.xlu0 %3228
      %3231 = vset.pattern.permute.xlu0 4
      %3232 = vperm.xlu0 %3231, %v384
      %v3233 = vpop.permute.xlu0 %3232
      %3235 = vset.pattern.permute.xlu0 4
      %3236 = vperm.xlu0 %3235, %v385
      %v3237 = vpop.permute.xlu0 %3236
      %3239 = vset.pattern.permute.xlu0 4
      %3240 = vperm.xlu0 %3239, %v386
      %v3241 = vpop.permute.xlu0 %3240
      %3243 = vset.pattern.permute.xlu0 4
      %3244 = vperm.xlu0 %3243, %v387
      %v3245 = vpop.permute.xlu0 %3244
      %3247 = vset.pattern.permute.xlu0 4
      %3248 = vperm.xlu0 %3247, %v388
      %v3249 = vpop.permute.xlu0 %3248
      %3251 = vset.pattern.permute.xlu0 4
      %3252 = vperm.xlu0 %3251, %v389
      %v3253 = vpop.permute.xlu0 %3252
      %3255 = vset.pattern.permute.xlu0 4
      %3256 = vperm.xlu0 %3255, %v390
      %v3257 = vpop.permute.xlu0 %3256
      %3259 = vset.pattern.permute.xlu0 4
      %3260 = vperm.xlu0 %3259, %v391
      %v3261 = vpop.permute.xlu0 %3260
      %3263 = vset.pattern.permute.xlu0 4
      %3264 = vperm.xlu0 %3263, %v392
      %v3265 = vpop.permute.xlu0 %3264
      %3267 = vset.pattern.permute.xlu0 4
      %3268 = vperm.xlu0 %3267, %v393
      %v3269 = vpop.permute.xlu0 %3268
      %3271 = vset.pattern.permute.xlu0 4
      %3272 = vperm.xlu0 %3271, %v394
      %v3273 = vpop.permute.xlu0 %3272
      %v3275 = vlaneseq
      %v3276 = vshrl.u32 %v3275, 7
      %v3277 = vsub.s32 4, %v3276
      %v3278 = vrot.slane %v395, %v3277
      %v3279 = vlaneseq
      %v3280 = vshrl.u32 %v3279, 7
      %v3281 = vsub.s32 4, %v3280
      %v3282 = vrot.slane %v396, %v3281
      %v3283 = vlaneseq
      %v3284 = vshrl.u32 %v3283, 7
      %v3285 = vsub.s32 4, %v3284
      %v3286 = vrot.slane %v397, %v3285
      %v3287 = vlaneseq
      %v3288 = vshrl.u32 %v3287, 7
      %v3289 = vsub.s32 4, %v3288
      %v3290 = vrot.slane %v398, %v3289
      %v3291 = vlaneseq
      %v3292 = vshrl.u32 %v3291, 7
      %v3293 = vsub.s32 4, %v3292
      %v3294 = vrot.slane %v399, %v3293
      %v3295 = vlaneseq
      %v3296 = vshrl.u32 %v3295, 7
      %v3297 = vsub.s32 4, %v3296
      %v3298 = vrot.slane %v400, %v3297
      %v3299 = vlaneseq
      %v3300 = vshrl.u32 %v3299, 7
      %v3301 = vsub.s32 4, %v3300
      %v3302 = vrot.slane %v401, %v3301
      %v3303 = vlaneseq
      %v3304 = vshrl.u32 %v3303, 7
      %v3305 = vsub.s32 4, %v3304
      %v3306 = vrot.slane %v402, %v3305
      %v3307 = vlaneseq
      %v3308 = vshrl.u32 %v3307, 7
      %v3309 = vsub.s32 4, %v3308
      %v3310 = vrot.slane %v403, %v3309
      %v3311 = vlaneseq
      %v3312 = vshrl.u32 %v3311, 7
      %v3313 = vsub.s32 4, %v3312
      %v3314 = vrot.slane %v404, %v3313
      %v3315 = vlaneseq
      %v3316 = vshrl.u32 %v3315, 7
      %v3317 = vsub.s32 4, %v3316
      %v3318 = vrot.slane %v405, %v3317
      %v3319 = vlaneseq
      %v3320 = vshrl.u32 %v3319, 7
      %v3321 = vsub.s32 4, %v3320
      %v3322 = vrot.slane %v406, %v3321
      %v3323 = vlaneseq
      %v3324 = vshrl.u32 %v3323, 7
      %v3325 = vsub.s32 4, %v3324
      %v3326 = vrot.slane %v407, %v3325
      %v3327 = vlaneseq
      %v3328 = vshrl.u32 %v3327, 7
      %v3329 = vsub.s32 4, %v3328
      %v3330 = vrot.slane %v408, %v3329
      %v3331 = vlaneseq
      %v3332 = vshrl.u32 %v3331, 7
      %v3333 = vsub.s32 4, %v3332
      %v3334 = vrot.slane %v409, %v3333
      %v3335 = vlaneseq
      %v3336 = vshrl.u32 %v3335, 7
      %v3337 = vsub.s32 4, %v3336
      %v3338 = vrot.slane %v410, %v3337
      %v3339 = vlaneseq
      %v3340 = vshrl.u32 %v3339, 7
      %v3341 = vsub.s32 4, %v3340
      %v3342 = vrot.slane %v411, %v3341
      %v3343 = vlaneseq
      %v3344 = vshrl.u32 %v3343, 7
      %v3345 = vsub.s32 4, %v3344
      %v3346 = vrot.slane %v412, %v3345
      %v3347 = vlaneseq
      %v3348 = vshrl.u32 %v3347, 7
      %v3349 = vsub.s32 4, %v3348
      %v3350 = vrot.slane %v413, %v3349
      %v3351 = vlaneseq
      %v3352 = vshrl.u32 %v3351, 7
      %v3353 = vsub.s32 4, %v3352
      %v3354 = vrot.slane %v414, %v3353
      %v3355 = vlaneseq
      %v3356 = vshrl.u32 %v3355, 7
      %v3357 = vsub.s32 4, %v3356
      %v3358 = vrot.slane %v415, %v3357
      %v3359 = vlaneseq
      %v3360 = vshrl.u32 %v3359, 7
      %v3361 = vsub.s32 4, %v3360
      %v3362 = vrot.slane %v416, %v3361
      %v3363 = vlaneseq
      %v3364 = vshrl.u32 %v3363, 7
      %v3365 = vsub.s32 4, %v3364
      %v3366 = vrot.slane %v417, %v3365
      %v3367 = vlaneseq
      %v3368 = vshrl.u32 %v3367, 7
      %v3369 = vsub.s32 4, %v3368
      %v3370 = vrot.slane %v418, %v3369
      %v3371 = vlaneseq
      %v3372 = vshrl.u32 %v3371, 7
      %v3373 = vsub.s32 4, %v3372
      %v3374 = vrot.slane %v419, %v3373
      %v3375 = vlaneseq
      %v3376 = vshrl.u32 %v3375, 7
      %v3377 = vsub.s32 4, %v3376
      %v3378 = vrot.slane %v420, %v3377
      %v3379 = vlaneseq
      %v3380 = vshrl.u32 %v3379, 7
      %v3381 = vsub.s32 4, %v3380
      %v3382 = vrot.slane %v421, %v3381
      %v3383 = vlaneseq
      %v3384 = vshrl.u32 %v3383, 7
      %v3385 = vsub.s32 4, %v3384
      %v3386 = vrot.slane %v422, %v3385
      %v3387 = vlaneseq
      %v3388 = vshrl.u32 %v3387, 7
      %v3389 = vsub.s32 4, %v3388
      %v3390 = vrot.slane %v423, %v3389
      %v3391 = vlaneseq
      %v3392 = vshrl.u32 %v3391, 7
      %v3393 = vsub.s32 4, %v3392
      %v3394 = vrot.slane %v424, %v3393
      %v3395 = vlaneseq
      %v3396 = vshrl.u32 %v3395, 7
      %v3397 = vsub.s32 4, %v3396
      %v3398 = vrot.slane %v425, %v3397
      %v3399 = vlaneseq
      %v3400 = vshrl.u32 %v3399, 7
      %v3401 = vsub.s32 4, %v3400
      %v3402 = vrot.slane %v426, %v3401
      %v3403 = vlaneseq
      %v3404 = vshrl.u32 %v3403, 7
      %v3405 = vsub.s32 4, %v3404
      %v3406 = vrot.slane %v427, %v3405
      %v3407 = vlaneseq
      %v3408 = vshrl.u32 %v3407, 7
      %v3409 = vsub.s32 4, %v3408
      %v3410 = vrot.slane %v428, %v3409
      %v3411 = vlaneseq
      %v3412 = vshrl.u32 %v3411, 7
      %v3413 = vsub.s32 4, %v3412
      %v3414 = vrot.slane %v429, %v3413
      %v3415 = vlaneseq
      %v3416 = vshrl.u32 %v3415, 7
      %v3417 = vsub.s32 4, %v3416
      %v3418 = vrot.slane %v430, %v3417
      %v3419 = vlaneseq
      %v3420 = vshrl.u32 %v3419, 7
      %v3421 = vsub.s32 4, %v3420
      %v3422 = vrot.slane %v431, %v3421
      %v3423 = vlaneseq
      %v3424 = vshrl.u32 %v3423, 7
      %v3425 = vsub.s32 4, %v3424
      %v3426 = vrot.slane %v432, %v3425
      %v3427 = vlaneseq
      %v3428 = vshrl.u32 %v3427, 7
      %v3429 = vsub.s32 4, %v3428
      %v3430 = vrot.slane %v433, %v3429
      %v3431 = vlaneseq
      %v3432 = vshrl.u32 %v3431, 7
      %v3433 = vsub.s32 4, %v3432
      %v3434 = vrot.slane %v434, %v3433
      %v3435 = vlaneseq
      %v3436 = vshrl.u32 %v3435, 7
      %v3437 = vsub.s32 4, %v3436
      %v3438 = vrot.slane %v435, %v3437
      %v3439 = vlaneseq
      %v3440 = vshrl.u32 %v3439, 7
      %v3441 = vsub.s32 4, %v3440
      %v3442 = vrot.slane %v436, %v3441
      %v3443 = vlaneseq
      %v3444 = vshrl.u32 %v3443, 7
      %v3445 = vsub.s32 4, %v3444
      %v3446 = vrot.slane %v437, %v3445
      %v3447 = vlaneseq
      %v3448 = vshrl.u32 %v3447, 7
      %v3449 = vsub.s32 4, %v3448
      %v3450 = vrot.slane %v438, %v3449
      %v3451 = vlaneseq
      %v3452 = vshrl.u32 %v3451, 7
      %v3453 = vsub.s32 4, %v3452
      %v3454 = vrot.slane %v439, %v3453
      %v3455 = vlaneseq
      %v3456 = vshrl.u32 %v3455, 7
      %v3457 = vsub.s32 4, %v3456
      %v3458 = vrot.slane %v440, %v3457
      %v3459 = vlaneseq
      %v3460 = vshrl.u32 %v3459, 7
      %v3461 = vsub.s32 4, %v3460
      %v3462 = vrot.slane %v441, %v3461
      %v3463 = vlaneseq
      %v3464 = vshrl.u32 %v3463, 7
      %v3465 = vsub.s32 4, %v3464
      %v3466 = vrot.slane %v442, %v3465
      %v3467 = vlaneseq
      %v3468 = vshrl.u32 %v3467, 7
      %v3469 = vsub.s32 4, %v3468
      %v3470 = vrot.slane %v443, %v3469
      %v3471 = vlaneseq
      %v3472 = vshrl.u32 %v3471, 7
      %v3473 = vsub.s32 4, %v3472
      %v3474 = vrot.slane %v444, %v3473
      %v3475 = vlaneseq
      %v3476 = vshrl.u32 %v3475, 7
      %v3477 = vsub.s32 4, %v3476
      %v3478 = vrot.slane %v445, %v3477
      %v3479 = vlaneseq
      %v3480 = vshrl.u32 %v3479, 7
      %v3481 = vsub.s32 4, %v3480
      %v3482 = vrot.slane %v446, %v3481
      %v3483 = vlaneseq
      %v3484 = vshrl.u32 %v3483, 7
      %v3485 = vsub.s32 4, %v3484
      %v3486 = vrot.slane %v447, %v3485
      %v3487 = vlaneseq
      %v3488 = vshrl.u32 %v3487, 7
      %v3489 = vsub.s32 4, %v3488
      %v3490 = vrot.slane %v448, %v3489
      %v3491 = vlaneseq
      %v3492 = vshrl.u32 %v3491, 7
      %v3493 = vsub.s32 4, %v3492
      %v3494 = vrot.slane %v449, %v3493
      %v3495 = vlaneseq
      %v3496 = vshrl.u32 %v3495, 7
      %v3497 = vsub.s32 4, %v3496
      %v3498 = vrot.slane %v450, %v3497
      %v3499 = vlaneseq
      %v3500 = vshrl.u32 %v3499, 7
      %v3501 = vsub.s32 4, %v3500
      %v3502 = vrot.slane %v451, %v3501
      %v3503 = vlaneseq
      %v3504 = vshrl.u32 %v3503, 7
      %v3505 = vsub.s32 4, %v3504
      %v3506 = vrot.slane %v452, %v3505
      %v3507 = vlaneseq
      %v3508 = vshrl.u32 %v3507, 7
      %v3509 = vsub.s32 4, %v3508
      %v3510 = vrot.slane %v453, %v3509
      %v3511 = vlaneseq
      %v3512 = vshrl.u32 %v3511, 7
      %v3513 = vsub.s32 4, %v3512
      %v3514 = vrot.slane %v454, %v3513
      %v3515 = vlaneseq
      %v3516 = vshrl.u32 %v3515, 7
      %v3517 = vsub.s32 4, %v3516
      %v3518 = vrot.slane %v455, %v3517
      %v3519 = vlaneseq
      %v3520 = vshrl.u32 %v3519, 7
      %v3521 = vsub.s32 4, %v3520
      %v3522 = vrot.slane %v456, %v3521
      %v3523 = vlaneseq
      %v3524 = vshrl.u32 %v3523, 7
      %v3525 = vsub.s32 4, %v3524
      %v3526 = vrot.slane %v457, %v3525
      %v3527 = vlaneseq
      %v3528 = vshrl.u32 %v3527, 7
      %v3529 = vsub.s32 4, %v3528
      %v3530 = vrot.slane %v458, %v3529
      %v3531 = vmul.f32 %v3021, %v3278
      %v3532 = vmul.f32 %v3025, %v3282
      %v3533 = vmul.f32 %v3029, %v3286
      %v3534 = vmul.f32 %v3033, %v3290
      %v3535 = vmul.f32 %v3037, %v3294
      %v3536 = vmul.f32 %v3041, %v3298
      %v3537 = vmul.f32 %v3045, %v3302
      %v3538 = vmul.f32 %v3049, %v3306
      %v3539 = vmul.f32 %v3053, %v3310
      %v3540 = vmul.f32 %v3057, %v3314
      %v3541 = vmul.f32 %v3061, %v3318
      %v3542 = vmul.f32 %v3065, %v3322
      %v3543 = vmul.f32 %v3069, %v3326
      %v3544 = vmul.f32 %v3073, %v3330
      %v3545 = vmul.f32 %v3077, %v3334
      %v3546 = vmul.f32 %v3081, %v3338
      %v3547 = vmul.f32 %v3085, %v3342
      %v3548 = vmul.f32 %v3089, %v3346
      %v3549 = vmul.f32 %v3093, %v3350
      %v3550 = vmul.f32 %v3097, %v3354
      %v3551 = vmul.f32 %v3101, %v3358
      %v3552 = vmul.f32 %v3105, %v3362
      %v3553 = vmul.f32 %v3109, %v3366
      %v3554 = vmul.f32 %v3113, %v3370
      %v3555 = vmul.f32 %v3117, %v3374
      %v3556 = vmul.f32 %v3121, %v3378
      %v3557 = vmul.f32 %v3125, %v3382
      %v3558 = vmul.f32 %v3129, %v3386
      %v3559 = vmul.f32 %v3133, %v3390
      %v3560 = vmul.f32 %v3137, %v3394
      %v3561 = vmul.f32 %v3141, %v3398
      %v3562 = vmul.f32 %v3145, %v3402
      %v3563 = vmul.f32 %v3149, %v3406
      %v3564 = vmul.f32 %v3153, %v3410
      %v3565 = vmul.f32 %v3157, %v3414
      %v3566 = vmul.f32 %v3161, %v3418
      %v3567 = vmul.f32 %v3165, %v3422
      %v3568 = vmul.f32 %v3169, %v3426
      %v3569 = vmul.f32 %v3173, %v3430
      %v3570 = vmul.f32 %v3177, %v3434
      %v3571 = vmul.f32 %v3181, %v3438
      %v3572 = vmul.f32 %v3185, %v3442
      %v3573 = vmul.f32 %v3189, %v3446
      %v3574 = vmul.f32 %v3193, %v3450
      %v3575 = vmul.f32 %v3197, %v3454
      %v3576 = vmul.f32 %v3201, %v3458
      %v3577 = vmul.f32 %v3205, %v3462
      %v3578 = vmul.f32 %v3209, %v3466
      %v3579 = vmul.f32 %v3213, %v3470
      %v3580 = vmul.f32 %v3217, %v3474
      %v3581 = vmul.f32 %v3221, %v3478
      %v3582 = vmul.f32 %v3225, %v3482
      %v3583 = vmul.f32 %v3229, %v3486
      %v3584 = vmul.f32 %v3233, %v3490
      %v3585 = vmul.f32 %v3237, %v3494
      %v3586 = vmul.f32 %v3241, %v3498
      %v3587 = vmul.f32 %v3245, %v3502
      %v3588 = vmul.f32 %v3249, %v3506
      %v3589 = vmul.f32 %v3253, %v3510
      %v3590 = vmul.f32 %v3257, %v3514
      %v3591 = vmul.f32 %v3261, %v3518
      %v3592 = vmul.f32 %v3265, %v3522
      %v3593 = vmul.f32 %v3269, %v3526
      %v3594 = vmul.f32 %v3273, %v3530
      %v3595 = vadd.f32 %v2955, %v3531
      %v3596 = vadd.f32 %v2956, %v3532
      %v3597 = vadd.f32 %v2957, %v3533
      %v3598 = vadd.f32 %v2958, %v3534
      %v3599 = vadd.f32 %v2959, %v3535
      %v3600 = vadd.f32 %v2960, %v3536
      %v3601 = vadd.f32 %v2961, %v3537
      %v3602 = vadd.f32 %v2962, %v3538
      %v3603 = vadd.f32 %v2963, %v3539
      %v3604 = vadd.f32 %v2964, %v3540
      %v3605 = vadd.f32 %v2965, %v3541
      %v3606 = vadd.f32 %v2966, %v3542
      %v3607 = vadd.f32 %v2967, %v3543
      %v3608 = vadd.f32 %v2968, %v3544
      %v3609 = vadd.f32 %v2969, %v3545
      %v3610 = vadd.f32 %v2970, %v3546
      %v3611 = vadd.f32 %v2971, %v3547
      %v3612 = vadd.f32 %v2972, %v3548
      %v3613 = vadd.f32 %v2973, %v3549
      %v3614 = vadd.f32 %v2974, %v3550
      %v3615 = vadd.f32 %v2975, %v3551
      %v3616 = vadd.f32 %v2976, %v3552
      %v3617 = vadd.f32 %v2977, %v3553
      %v3618 = vadd.f32 %v2978, %v3554
      %v3619 = vadd.f32 %v2979, %v3555
      %v3620 = vadd.f32 %v2980, %v3556
      %v3621 = vadd.f32 %v2981, %v3557
      %v3622 = vadd.f32 %v2982, %v3558
      %v3623 = vadd.f32 %v2983, %v3559
      %v3624 = vadd.f32 %v2984, %v3560
      %v3625 = vadd.f32 %v2985, %v3561
      %v3626 = vadd.f32 %v2986, %v3562
      %v3627 = vadd.f32 %v2987, %v3563
      %v3628 = vadd.f32 %v2988, %v3564
      %v3629 = vadd.f32 %v2989, %v3565
      %v3630 = vadd.f32 %v2990, %v3566
      %v3631 = vadd.f32 %v2991, %v3567
      %v3632 = vadd.f32 %v2992, %v3568
      %v3633 = vadd.f32 %v2993, %v3569
      %v3634 = vadd.f32 %v2994, %v3570
      %v3635 = vadd.f32 %v2995, %v3571
      %v3636 = vadd.f32 %v2996, %v3572
      %v3637 = vadd.f32 %v2997, %v3573
      %v3638 = vadd.f32 %v2998, %v3574
      %v3639 = vadd.f32 %v2999, %v3575
      %v3640 = vadd.f32 %v3000, %v3576
      %v3641 = vadd.f32 %v3001, %v3577
      %v3642 = vadd.f32 %v3002, %v3578
      %v3643 = vadd.f32 %v3003, %v3579
      %v3644 = vadd.f32 %v3004, %v3580
      %v3645 = vadd.f32 %v3005, %v3581
      %v3646 = vadd.f32 %v3006, %v3582
      %v3647 = vadd.f32 %v3007, %v3583
      %v3648 = vadd.f32 %v3008, %v3584
      %v3649 = vadd.f32 %v3009, %v3585
      %v3650 = vadd.f32 %v3010, %v3586
      %v3651 = vadd.f32 %v3011, %v3587
      %v3652 = vadd.f32 %v3012, %v3588
      %v3653 = vadd.f32 %v3013, %v3589
      %v3654 = vadd.f32 %v3014, %v3590
      %v3655 = vadd.f32 %v3015, %v3591
      %v3656 = vadd.f32 %v3016, %v3592
      %v3657 = vadd.f32 %v3017, %v3593
      %v3658 = vadd.f32 %v3018, %v3594
      %3659 = vset.pattern.permute.xlu0 5
      %3660 = vperm.xlu0 %3659, %v331
      %v3661 = vpop.permute.xlu0 %3660
      %3663 = vset.pattern.permute.xlu0 5
      %3664 = vperm.xlu0 %3663, %v332
      %v3665 = vpop.permute.xlu0 %3664
      %3667 = vset.pattern.permute.xlu0 5
      %3668 = vperm.xlu0 %3667, %v333
      %v3669 = vpop.permute.xlu0 %3668
      %3671 = vset.pattern.permute.xlu0 5
      %3672 = vperm.xlu0 %3671, %v334
      %v3673 = vpop.permute.xlu0 %3672
      %3675 = vset.pattern.permute.xlu0 5
      %3676 = vperm.xlu0 %3675, %v335
      %v3677 = vpop.permute.xlu0 %3676
      %3679 = vset.pattern.permute.xlu0 5
      %3680 = vperm.xlu0 %3679, %v336
      %v3681 = vpop.permute.xlu0 %3680
      %3683 = vset.pattern.permute.xlu0 5
      %3684 = vperm.xlu0 %3683, %v337
      %v3685 = vpop.permute.xlu0 %3684
      %3687 = vset.pattern.permute.xlu0 5
      %3688 = vperm.xlu0 %3687, %v338
      %v3689 = vpop.permute.xlu0 %3688
      %3691 = vset.pattern.permute.xlu0 5
      %3692 = vperm.xlu0 %3691, %v339
      %v3693 = vpop.permute.xlu0 %3692
      %3695 = vset.pattern.permute.xlu0 5
      %3696 = vperm.xlu0 %3695, %v340
      %v3697 = vpop.permute.xlu0 %3696
      %3699 = vset.pattern.permute.xlu0 5
      %3700 = vperm.xlu0 %3699, %v341
      %v3701 = vpop.permute.xlu0 %3700
      %3703 = vset.pattern.permute.xlu0 5
      %3704 = vperm.xlu0 %3703, %v342
      %v3705 = vpop.permute.xlu0 %3704
      %3707 = vset.pattern.permute.xlu0 5
      %3708 = vperm.xlu0 %3707, %v343
      %v3709 = vpop.permute.xlu0 %3708
      %3711 = vset.pattern.permute.xlu0 5
      %3712 = vperm.xlu0 %3711, %v344
      %v3713 = vpop.permute.xlu0 %3712
      %3715 = vset.pattern.permute.xlu0 5
      %3716 = vperm.xlu0 %3715, %v345
      %v3717 = vpop.permute.xlu0 %3716
      %3719 = vset.pattern.permute.xlu0 5
      %3720 = vperm.xlu0 %3719, %v346
      %v3721 = vpop.permute.xlu0 %3720
      %3723 = vset.pattern.permute.xlu0 5
      %3724 = vperm.xlu0 %3723, %v347
      %v3725 = vpop.permute.xlu0 %3724
      %3727 = vset.pattern.permute.xlu0 5
      %3728 = vperm.xlu0 %3727, %v348
      %v3729 = vpop.permute.xlu0 %3728
      %3731 = vset.pattern.permute.xlu0 5
      %3732 = vperm.xlu0 %3731, %v349
      %v3733 = vpop.permute.xlu0 %3732
      %3735 = vset.pattern.permute.xlu0 5
      %3736 = vperm.xlu0 %3735, %v350
      %v3737 = vpop.permute.xlu0 %3736
      %3739 = vset.pattern.permute.xlu0 5
      %3740 = vperm.xlu0 %3739, %v351
      %v3741 = vpop.permute.xlu0 %3740
      %3743 = vset.pattern.permute.xlu0 5
      %3744 = vperm.xlu0 %3743, %v352
      %v3745 = vpop.permute.xlu0 %3744
      %3747 = vset.pattern.permute.xlu0 5
      %3748 = vperm.xlu0 %3747, %v353
      %v3749 = vpop.permute.xlu0 %3748
      %3751 = vset.pattern.permute.xlu0 5
      %3752 = vperm.xlu0 %3751, %v354
      %v3753 = vpop.permute.xlu0 %3752
      %3755 = vset.pattern.permute.xlu0 5
      %3756 = vperm.xlu0 %3755, %v355
      %v3757 = vpop.permute.xlu0 %3756
      %3759 = vset.pattern.permute.xlu0 5
      %3760 = vperm.xlu0 %3759, %v356
      %v3761 = vpop.permute.xlu0 %3760
      %3763 = vset.pattern.permute.xlu0 5
      %3764 = vperm.xlu0 %3763, %v357
      %v3765 = vpop.permute.xlu0 %3764
      %3767 = vset.pattern.permute.xlu0 5
      %3768 = vperm.xlu0 %3767, %v358
      %v3769 = vpop.permute.xlu0 %3768
      %3771 = vset.pattern.permute.xlu0 5
      %3772 = vperm.xlu0 %3771, %v359
      %v3773 = vpop.permute.xlu0 %3772
      %3775 = vset.pattern.permute.xlu0 5
      %3776 = vperm.xlu0 %3775, %v360
      %v3777 = vpop.permute.xlu0 %3776
      %3779 = vset.pattern.permute.xlu0 5
      %3780 = vperm.xlu0 %3779, %v361
      %v3781 = vpop.permute.xlu0 %3780
      %3783 = vset.pattern.permute.xlu0 5
      %3784 = vperm.xlu0 %3783, %v362
      %v3785 = vpop.permute.xlu0 %3784
      %3787 = vset.pattern.permute.xlu0 5
      %3788 = vperm.xlu0 %3787, %v363
      %v3789 = vpop.permute.xlu0 %3788
      %3791 = vset.pattern.permute.xlu0 5
      %3792 = vperm.xlu0 %3791, %v364
      %v3793 = vpop.permute.xlu0 %3792
      %3795 = vset.pattern.permute.xlu0 5
      %3796 = vperm.xlu0 %3795, %v365
      %v3797 = vpop.permute.xlu0 %3796
      %3799 = vset.pattern.permute.xlu0 5
      %3800 = vperm.xlu0 %3799, %v366
      %v3801 = vpop.permute.xlu0 %3800
      %3803 = vset.pattern.permute.xlu0 5
      %3804 = vperm.xlu0 %3803, %v367
      %v3805 = vpop.permute.xlu0 %3804
      %3807 = vset.pattern.permute.xlu0 5
      %3808 = vperm.xlu0 %3807, %v368
      %v3809 = vpop.permute.xlu0 %3808
      %3811 = vset.pattern.permute.xlu0 5
      %3812 = vperm.xlu0 %3811, %v369
      %v3813 = vpop.permute.xlu0 %3812
      %3815 = vset.pattern.permute.xlu0 5
      %3816 = vperm.xlu0 %3815, %v370
      %v3817 = vpop.permute.xlu0 %3816
      %3819 = vset.pattern.permute.xlu0 5
      %3820 = vperm.xlu0 %3819, %v371
      %v3821 = vpop.permute.xlu0 %3820
      %3823 = vset.pattern.permute.xlu0 5
      %3824 = vperm.xlu0 %3823, %v372
      %v3825 = vpop.permute.xlu0 %3824
      %3827 = vset.pattern.permute.xlu0 5
      %3828 = vperm.xlu0 %3827, %v373
      %v3829 = vpop.permute.xlu0 %3828
      %3831 = vset.pattern.permute.xlu0 5
      %3832 = vperm.xlu0 %3831, %v374
      %v3833 = vpop.permute.xlu0 %3832
      %3835 = vset.pattern.permute.xlu0 5
      %3836 = vperm.xlu0 %3835, %v375
      %v3837 = vpop.permute.xlu0 %3836
      %3839 = vset.pattern.permute.xlu0 5
      %3840 = vperm.xlu0 %3839, %v376
      %v3841 = vpop.permute.xlu0 %3840
      %3843 = vset.pattern.permute.xlu0 5
      %3844 = vperm.xlu0 %3843, %v377
      %v3845 = vpop.permute.xlu0 %3844
      %3847 = vset.pattern.permute.xlu0 5
      %3848 = vperm.xlu0 %3847, %v378
      %v3849 = vpop.permute.xlu0 %3848
      %3851 = vset.pattern.permute.xlu0 5
      %3852 = vperm.xlu0 %3851, %v379
      %v3853 = vpop.permute.xlu0 %3852
      %3855 = vset.pattern.permute.xlu0 5
      %3856 = vperm.xlu0 %3855, %v380
      %v3857 = vpop.permute.xlu0 %3856
      %3859 = vset.pattern.permute.xlu0 5
      %3860 = vperm.xlu0 %3859, %v381
      %v3861 = vpop.permute.xlu0 %3860
      %3863 = vset.pattern.permute.xlu0 5
      %3864 = vperm.xlu0 %3863, %v382
      %v3865 = vpop.permute.xlu0 %3864
      %3867 = vset.pattern.permute.xlu0 5
      %3868 = vperm.xlu0 %3867, %v383
      %v3869 = vpop.permute.xlu0 %3868
      %3871 = vset.pattern.permute.xlu0 5
      %3872 = vperm.xlu0 %3871, %v384
      %v3873 = vpop.permute.xlu0 %3872
      %3875 = vset.pattern.permute.xlu0 5
      %3876 = vperm.xlu0 %3875, %v385
      %v3877 = vpop.permute.xlu0 %3876
      %3879 = vset.pattern.permute.xlu0 5
      %3880 = vperm.xlu0 %3879, %v386
      %v3881 = vpop.permute.xlu0 %3880
      %3883 = vset.pattern.permute.xlu0 5
      %3884 = vperm.xlu0 %3883, %v387
      %v3885 = vpop.permute.xlu0 %3884
      %3887 = vset.pattern.permute.xlu0 5
      %3888 = vperm.xlu0 %3887, %v388
      %v3889 = vpop.permute.xlu0 %3888
      %3891 = vset.pattern.permute.xlu0 5
      %3892 = vperm.xlu0 %3891, %v389
      %v3893 = vpop.permute.xlu0 %3892
      %3895 = vset.pattern.permute.xlu0 5
      %3896 = vperm.xlu0 %3895, %v390
      %v3897 = vpop.permute.xlu0 %3896
      %3899 = vset.pattern.permute.xlu0 5
      %3900 = vperm.xlu0 %3899, %v391
      %v3901 = vpop.permute.xlu0 %3900
      %3903 = vset.pattern.permute.xlu0 5
      %3904 = vperm.xlu0 %3903, %v392
      %v3905 = vpop.permute.xlu0 %3904
      %3907 = vset.pattern.permute.xlu0 5
      %3908 = vperm.xlu0 %3907, %v393
      %v3909 = vpop.permute.xlu0 %3908
      %3911 = vset.pattern.permute.xlu0 5
      %3912 = vperm.xlu0 %3911, %v394
      %v3913 = vpop.permute.xlu0 %3912
      %v3915 = vlaneseq
      %v3916 = vshrl.u32 %v3915, 7
      %v3917 = vsub.s32 5, %v3916
      %v3918 = vrot.slane %v395, %v3917
      %v3919 = vlaneseq
      %v3920 = vshrl.u32 %v3919, 7
      %v3921 = vsub.s32 5, %v3920
      %v3922 = vrot.slane %v396, %v3921
      %v3923 = vlaneseq
      %v3924 = vshrl.u32 %v3923, 7
      %v3925 = vsub.s32 5, %v3924
      %v3926 = vrot.slane %v397, %v3925
      %v3927 = vlaneseq
      %v3928 = vshrl.u32 %v3927, 7
      %v3929 = vsub.s32 5, %v3928
      %v3930 = vrot.slane %v398, %v3929
      %v3931 = vlaneseq
      %v3932 = vshrl.u32 %v3931, 7
      %v3933 = vsub.s32 5, %v3932
      %v3934 = vrot.slane %v399, %v3933
      %v3935 = vlaneseq
      %v3936 = vshrl.u32 %v3935, 7
      %v3937 = vsub.s32 5, %v3936
      %v3938 = vrot.slane %v400, %v3937
      %v3939 = vlaneseq
      %v3940 = vshrl.u32 %v3939, 7
      %v3941 = vsub.s32 5, %v3940
      %v3942 = vrot.slane %v401, %v3941
      %v3943 = vlaneseq
      %v3944 = vshrl.u32 %v3943, 7
      %v3945 = vsub.s32 5, %v3944
      %v3946 = vrot.slane %v402, %v3945
      %v3947 = vlaneseq
      %v3948 = vshrl.u32 %v3947, 7
      %v3949 = vsub.s32 5, %v3948
      %v3950 = vrot.slane %v403, %v3949
      %v3951 = vlaneseq
      %v3952 = vshrl.u32 %v3951, 7
      %v3953 = vsub.s32 5, %v3952
      %v3954 = vrot.slane %v404, %v3953
      %v3955 = vlaneseq
      %v3956 = vshrl.u32 %v3955, 7
      %v3957 = vsub.s32 5, %v3956
      %v3958 = vrot.slane %v405, %v3957
      %v3959 = vlaneseq
      %v3960 = vshrl.u32 %v3959, 7
      %v3961 = vsub.s32 5, %v3960
      %v3962 = vrot.slane %v406, %v3961
      %v3963 = vlaneseq
      %v3964 = vshrl.u32 %v3963, 7
      %v3965 = vsub.s32 5, %v3964
      %v3966 = vrot.slane %v407, %v3965
      %v3967 = vlaneseq
      %v3968 = vshrl.u32 %v3967, 7
      %v3969 = vsub.s32 5, %v3968
      %v3970 = vrot.slane %v408, %v3969
      %v3971 = vlaneseq
      %v3972 = vshrl.u32 %v3971, 7
      %v3973 = vsub.s32 5, %v3972
      %v3974 = vrot.slane %v409, %v3973
      %v3975 = vlaneseq
      %v3976 = vshrl.u32 %v3975, 7
      %v3977 = vsub.s32 5, %v3976
      %v3978 = vrot.slane %v410, %v3977
      %v3979 = vlaneseq
      %v3980 = vshrl.u32 %v3979, 7
      %v3981 = vsub.s32 5, %v3980
      %v3982 = vrot.slane %v411, %v3981
      %v3983 = vlaneseq
      %v3984 = vshrl.u32 %v3983, 7
      %v3985 = vsub.s32 5, %v3984
      %v3986 = vrot.slane %v412, %v3985
      %v3987 = vlaneseq
      %v3988 = vshrl.u32 %v3987, 7
      %v3989 = vsub.s32 5, %v3988
      %v3990 = vrot.slane %v413, %v3989
      %v3991 = vlaneseq
      %v3992 = vshrl.u32 %v3991, 7
      %v3993 = vsub.s32 5, %v3992
      %v3994 = vrot.slane %v414, %v3993
      %v3995 = vlaneseq
      %v3996 = vshrl.u32 %v3995, 7
      %v3997 = vsub.s32 5, %v3996
      %v3998 = vrot.slane %v415, %v3997
      %v3999 = vlaneseq
      %v4000 = vshrl.u32 %v3999, 7
      %v4001 = vsub.s32 5, %v4000
      %v4002 = vrot.slane %v416, %v4001
      %v4003 = vlaneseq
      %v4004 = vshrl.u32 %v4003, 7
      %v4005 = vsub.s32 5, %v4004
      %v4006 = vrot.slane %v417, %v4005
      %v4007 = vlaneseq
      %v4008 = vshrl.u32 %v4007, 7
      %v4009 = vsub.s32 5, %v4008
      %v4010 = vrot.slane %v418, %v4009
      %v4011 = vlaneseq
      %v4012 = vshrl.u32 %v4011, 7
      %v4013 = vsub.s32 5, %v4012
      %v4014 = vrot.slane %v419, %v4013
      %v4015 = vlaneseq
      %v4016 = vshrl.u32 %v4015, 7
      %v4017 = vsub.s32 5, %v4016
      %v4018 = vrot.slane %v420, %v4017
      %v4019 = vlaneseq
      %v4020 = vshrl.u32 %v4019, 7
      %v4021 = vsub.s32 5, %v4020
      %v4022 = vrot.slane %v421, %v4021
      %v4023 = vlaneseq
      %v4024 = vshrl.u32 %v4023, 7
      %v4025 = vsub.s32 5, %v4024
      %v4026 = vrot.slane %v422, %v4025
      %v4027 = vlaneseq
      %v4028 = vshrl.u32 %v4027, 7
      %v4029 = vsub.s32 5, %v4028
      %v4030 = vrot.slane %v423, %v4029
      %v4031 = vlaneseq
      %v4032 = vshrl.u32 %v4031, 7
      %v4033 = vsub.s32 5, %v4032
      %v4034 = vrot.slane %v424, %v4033
      %v4035 = vlaneseq
      %v4036 = vshrl.u32 %v4035, 7
      %v4037 = vsub.s32 5, %v4036
      %v4038 = vrot.slane %v425, %v4037
      %v4039 = vlaneseq
      %v4040 = vshrl.u32 %v4039, 7
      %v4041 = vsub.s32 5, %v4040
      %v4042 = vrot.slane %v426, %v4041
      %v4043 = vlaneseq
      %v4044 = vshrl.u32 %v4043, 7
      %v4045 = vsub.s32 5, %v4044
      %v4046 = vrot.slane %v427, %v4045
      %v4047 = vlaneseq
      %v4048 = vshrl.u32 %v4047, 7
      %v4049 = vsub.s32 5, %v4048
      %v4050 = vrot.slane %v428, %v4049
      %v4051 = vlaneseq
      %v4052 = vshrl.u32 %v4051, 7
      %v4053 = vsub.s32 5, %v4052
      %v4054 = vrot.slane %v429, %v4053
      %v4055 = vlaneseq
      %v4056 = vshrl.u32 %v4055, 7
      %v4057 = vsub.s32 5, %v4056
      %v4058 = vrot.slane %v430, %v4057
      %v4059 = vlaneseq
      %v4060 = vshrl.u32 %v4059, 7
      %v4061 = vsub.s32 5, %v4060
      %v4062 = vrot.slane %v431, %v4061
      %v4063 = vlaneseq
      %v4064 = vshrl.u32 %v4063, 7
      %v4065 = vsub.s32 5, %v4064
      %v4066 = vrot.slane %v432, %v4065
      %v4067 = vlaneseq
      %v4068 = vshrl.u32 %v4067, 7
      %v4069 = vsub.s32 5, %v4068
      %v4070 = vrot.slane %v433, %v4069
      %v4071 = vlaneseq
      %v4072 = vshrl.u32 %v4071, 7
      %v4073 = vsub.s32 5, %v4072
      %v4074 = vrot.slane %v434, %v4073
      %v4075 = vlaneseq
      %v4076 = vshrl.u32 %v4075, 7
      %v4077 = vsub.s32 5, %v4076
      %v4078 = vrot.slane %v435, %v4077
      %v4079 = vlaneseq
      %v4080 = vshrl.u32 %v4079, 7
      %v4081 = vsub.s32 5, %v4080
      %v4082 = vrot.slane %v436, %v4081
      %v4083 = vlaneseq
      %v4084 = vshrl.u32 %v4083, 7
      %v4085 = vsub.s32 5, %v4084
      %v4086 = vrot.slane %v437, %v4085
      %v4087 = vlaneseq
      %v4088 = vshrl.u32 %v4087, 7
      %v4089 = vsub.s32 5, %v4088
      %v4090 = vrot.slane %v438, %v4089
      %v4091 = vlaneseq
      %v4092 = vshrl.u32 %v4091, 7
      %v4093 = vsub.s32 5, %v4092
      %v4094 = vrot.slane %v439, %v4093
      %v4095 = vlaneseq
      %v4096 = vshrl.u32 %v4095, 7
      %v4097 = vsub.s32 5, %v4096
      %v4098 = vrot.slane %v440, %v4097
      %v4099 = vlaneseq
      %v4100 = vshrl.u32 %v4099, 7
      %v4101 = vsub.s32 5, %v4100
      %v4102 = vrot.slane %v441, %v4101
      %v4103 = vlaneseq
      %v4104 = vshrl.u32 %v4103, 7
      %v4105 = vsub.s32 5, %v4104
      %v4106 = vrot.slane %v442, %v4105
      %v4107 = vlaneseq
      %v4108 = vshrl.u32 %v4107, 7
      %v4109 = vsub.s32 5, %v4108
      %v4110 = vrot.slane %v443, %v4109
      %v4111 = vlaneseq
      %v4112 = vshrl.u32 %v4111, 7
      %v4113 = vsub.s32 5, %v4112
      %v4114 = vrot.slane %v444, %v4113
      %v4115 = vlaneseq
      %v4116 = vshrl.u32 %v4115, 7
      %v4117 = vsub.s32 5, %v4116
      %v4118 = vrot.slane %v445, %v4117
      %v4119 = vlaneseq
      %v4120 = vshrl.u32 %v4119, 7
      %v4121 = vsub.s32 5, %v4120
      %v4122 = vrot.slane %v446, %v4121
      %v4123 = vlaneseq
      %v4124 = vshrl.u32 %v4123, 7
      %v4125 = vsub.s32 5, %v4124
      %v4126 = vrot.slane %v447, %v4125
      %v4127 = vlaneseq
      %v4128 = vshrl.u32 %v4127, 7
      %v4129 = vsub.s32 5, %v4128
      %v4130 = vrot.slane %v448, %v4129
      %v4131 = vlaneseq
      %v4132 = vshrl.u32 %v4131, 7
      %v4133 = vsub.s32 5, %v4132
      %v4134 = vrot.slane %v449, %v4133
      %v4135 = vlaneseq
      %v4136 = vshrl.u32 %v4135, 7
      %v4137 = vsub.s32 5, %v4136
      %v4138 = vrot.slane %v450, %v4137
      %v4139 = vlaneseq
      %v4140 = vshrl.u32 %v4139, 7
      %v4141 = vsub.s32 5, %v4140
      %v4142 = vrot.slane %v451, %v4141
      %v4143 = vlaneseq
      %v4144 = vshrl.u32 %v4143, 7
      %v4145 = vsub.s32 5, %v4144
      %v4146 = vrot.slane %v452, %v4145
      %v4147 = vlaneseq
      %v4148 = vshrl.u32 %v4147, 7
      %v4149 = vsub.s32 5, %v4148
      %v4150 = vrot.slane %v453, %v4149
      %v4151 = vlaneseq
      %v4152 = vshrl.u32 %v4151, 7
      %v4153 = vsub.s32 5, %v4152
      %v4154 = vrot.slane %v454, %v4153
      %v4155 = vlaneseq
      %v4156 = vshrl.u32 %v4155, 7
      %v4157 = vsub.s32 5, %v4156
      %v4158 = vrot.slane %v455, %v4157
      %v4159 = vlaneseq
      %v4160 = vshrl.u32 %v4159, 7
      %v4161 = vsub.s32 5, %v4160
      %v4162 = vrot.slane %v456, %v4161
      %v4163 = vlaneseq
      %v4164 = vshrl.u32 %v4163, 7
      %v4165 = vsub.s32 5, %v4164
      %v4166 = vrot.slane %v457, %v4165
      %v4167 = vlaneseq
      %v4168 = vshrl.u32 %v4167, 7
      %v4169 = vsub.s32 5, %v4168
      %v4170 = vrot.slane %v458, %v4169
      %v4171 = vmul.f32 %v3661, %v3918
      %v4172 = vmul.f32 %v3665, %v3922
      %v4173 = vmul.f32 %v3669, %v3926
      %v4174 = vmul.f32 %v3673, %v3930
      %v4175 = vmul.f32 %v3677, %v3934
      %v4176 = vmul.f32 %v3681, %v3938
      %v4177 = vmul.f32 %v3685, %v3942
      %v4178 = vmul.f32 %v3689, %v3946
      %v4179 = vmul.f32 %v3693, %v3950
      %v4180 = vmul.f32 %v3697, %v3954
      %v4181 = vmul.f32 %v3701, %v3958
      %v4182 = vmul.f32 %v3705, %v3962
      %v4183 = vmul.f32 %v3709, %v3966
      %v4184 = vmul.f32 %v3713, %v3970
      %v4185 = vmul.f32 %v3717, %v3974
      %v4186 = vmul.f32 %v3721, %v3978
      %v4187 = vmul.f32 %v3725, %v3982
      %v4188 = vmul.f32 %v3729, %v3986
      %v4189 = vmul.f32 %v3733, %v3990
      %v4190 = vmul.f32 %v3737, %v3994
      %v4191 = vmul.f32 %v3741, %v3998
      %v4192 = vmul.f32 %v3745, %v4002
      %v4193 = vmul.f32 %v3749, %v4006
      %v4194 = vmul.f32 %v3753, %v4010
      %v4195 = vmul.f32 %v3757, %v4014
      %v4196 = vmul.f32 %v3761, %v4018
      %v4197 = vmul.f32 %v3765, %v4022
      %v4198 = vmul.f32 %v3769, %v4026
      %v4199 = vmul.f32 %v3773, %v4030
      %v4200 = vmul.f32 %v3777, %v4034
      %v4201 = vmul.f32 %v3781, %v4038
      %v4202 = vmul.f32 %v3785, %v4042
      %v4203 = vmul.f32 %v3789, %v4046
      %v4204 = vmul.f32 %v3793, %v4050
      %v4205 = vmul.f32 %v3797, %v4054
      %v4206 = vmul.f32 %v3801, %v4058
      %v4207 = vmul.f32 %v3805, %v4062
      %v4208 = vmul.f32 %v3809, %v4066
      %v4209 = vmul.f32 %v3813, %v4070
      %v4210 = vmul.f32 %v3817, %v4074
      %v4211 = vmul.f32 %v3821, %v4078
      %v4212 = vmul.f32 %v3825, %v4082
      %v4213 = vmul.f32 %v3829, %v4086
      %v4214 = vmul.f32 %v3833, %v4090
      %v4215 = vmul.f32 %v3837, %v4094
      %v4216 = vmul.f32 %v3841, %v4098
      %v4217 = vmul.f32 %v3845, %v4102
      %v4218 = vmul.f32 %v3849, %v4106
      %v4219 = vmul.f32 %v3853, %v4110
      %v4220 = vmul.f32 %v3857, %v4114
      %v4221 = vmul.f32 %v3861, %v4118
      %v4222 = vmul.f32 %v3865, %v4122
      %v4223 = vmul.f32 %v3869, %v4126
      %v4224 = vmul.f32 %v3873, %v4130
      %v4225 = vmul.f32 %v3877, %v4134
      %v4226 = vmul.f32 %v3881, %v4138
      %v4227 = vmul.f32 %v3885, %v4142
      %v4228 = vmul.f32 %v3889, %v4146
      %v4229 = vmul.f32 %v3893, %v4150
      %v4230 = vmul.f32 %v3897, %v4154
      %v4231 = vmul.f32 %v3901, %v4158
      %v4232 = vmul.f32 %v3905, %v4162
      %v4233 = vmul.f32 %v3909, %v4166
      %v4234 = vmul.f32 %v3913, %v4170
      %v4235 = vadd.f32 %v3595, %v4171
      %v4236 = vadd.f32 %v3596, %v4172
      %v4237 = vadd.f32 %v3597, %v4173
      %v4238 = vadd.f32 %v3598, %v4174
      %v4239 = vadd.f32 %v3599, %v4175
      %v4240 = vadd.f32 %v3600, %v4176
      %v4241 = vadd.f32 %v3601, %v4177
      %v4242 = vadd.f32 %v3602, %v4178
      %v4243 = vadd.f32 %v3603, %v4179
      %v4244 = vadd.f32 %v3604, %v4180
      %v4245 = vadd.f32 %v3605, %v4181
      %v4246 = vadd.f32 %v3606, %v4182
      %v4247 = vadd.f32 %v3607, %v4183
      %v4248 = vadd.f32 %v3608, %v4184
      %v4249 = vadd.f32 %v3609, %v4185
      %v4250 = vadd.f32 %v3610, %v4186
      %v4251 = vadd.f32 %v3611, %v4187
      %v4252 = vadd.f32 %v3612, %v4188
      %v4253 = vadd.f32 %v3613, %v4189
      %v4254 = vadd.f32 %v3614, %v4190
      %v4255 = vadd.f32 %v3615, %v4191
      %v4256 = vadd.f32 %v3616, %v4192
      %v4257 = vadd.f32 %v3617, %v4193
      %v4258 = vadd.f32 %v3618, %v4194
      %v4259 = vadd.f32 %v3619, %v4195
      %v4260 = vadd.f32 %v3620, %v4196
      %v4261 = vadd.f32 %v3621, %v4197
      %v4262 = vadd.f32 %v3622, %v4198
      %v4263 = vadd.f32 %v3623, %v4199
      %v4264 = vadd.f32 %v3624, %v4200
      %v4265 = vadd.f32 %v3625, %v4201
      %v4266 = vadd.f32 %v3626, %v4202
      %v4267 = vadd.f32 %v3627, %v4203
      %v4268 = vadd.f32 %v3628, %v4204
      %v4269 = vadd.f32 %v3629, %v4205
      %v4270 = vadd.f32 %v3630, %v4206
      %v4271 = vadd.f32 %v3631, %v4207
      %v4272 = vadd.f32 %v3632, %v4208
      %v4273 = vadd.f32 %v3633, %v4209
      %v4274 = vadd.f32 %v3634, %v4210
      %v4275 = vadd.f32 %v3635, %v4211
      %v4276 = vadd.f32 %v3636, %v4212
      %v4277 = vadd.f32 %v3637, %v4213
      %v4278 = vadd.f32 %v3638, %v4214
      %v4279 = vadd.f32 %v3639, %v4215
      %v4280 = vadd.f32 %v3640, %v4216
      %v4281 = vadd.f32 %v3641, %v4217
      %v4282 = vadd.f32 %v3642, %v4218
      %v4283 = vadd.f32 %v3643, %v4219
      %v4284 = vadd.f32 %v3644, %v4220
      %v4285 = vadd.f32 %v3645, %v4221
      %v4286 = vadd.f32 %v3646, %v4222
      %v4287 = vadd.f32 %v3647, %v4223
      %v4288 = vadd.f32 %v3648, %v4224
      %v4289 = vadd.f32 %v3649, %v4225
      %v4290 = vadd.f32 %v3650, %v4226
      %v4291 = vadd.f32 %v3651, %v4227
      %v4292 = vadd.f32 %v3652, %v4228
      %v4293 = vadd.f32 %v3653, %v4229
      %v4294 = vadd.f32 %v3654, %v4230
      %v4295 = vadd.f32 %v3655, %v4231
      %v4296 = vadd.f32 %v3656, %v4232
      %v4297 = vadd.f32 %v3657, %v4233
      %v4298 = vadd.f32 %v3658, %v4234
      %4299 = vset.pattern.permute.xlu0 6
      %4300 = vperm.xlu0 %4299, %v331
      %v4301 = vpop.permute.xlu0 %4300
      %4303 = vset.pattern.permute.xlu0 6
      %4304 = vperm.xlu0 %4303, %v332
      %v4305 = vpop.permute.xlu0 %4304
      %4307 = vset.pattern.permute.xlu0 6
      %4308 = vperm.xlu0 %4307, %v333
      %v4309 = vpop.permute.xlu0 %4308
      %4311 = vset.pattern.permute.xlu0 6
      %4312 = vperm.xlu0 %4311, %v334
      %v4313 = vpop.permute.xlu0 %4312
      %4315 = vset.pattern.permute.xlu0 6
      %4316 = vperm.xlu0 %4315, %v335
      %v4317 = vpop.permute.xlu0 %4316
      %4319 = vset.pattern.permute.xlu0 6
      %4320 = vperm.xlu0 %4319, %v336
      %v4321 = vpop.permute.xlu0 %4320
      %4323 = vset.pattern.permute.xlu0 6
      %4324 = vperm.xlu0 %4323, %v337
      %v4325 = vpop.permute.xlu0 %4324
      %4327 = vset.pattern.permute.xlu0 6
      %4328 = vperm.xlu0 %4327, %v338
      %v4329 = vpop.permute.xlu0 %4328
      %4331 = vset.pattern.permute.xlu0 6
      %4332 = vperm.xlu0 %4331, %v339
      %v4333 = vpop.permute.xlu0 %4332
      %4335 = vset.pattern.permute.xlu0 6
      %4336 = vperm.xlu0 %4335, %v340
      %v4337 = vpop.permute.xlu0 %4336
      %4339 = vset.pattern.permute.xlu0 6
      %4340 = vperm.xlu0 %4339, %v341
      %v4341 = vpop.permute.xlu0 %4340
      %4343 = vset.pattern.permute.xlu0 6
      %4344 = vperm.xlu0 %4343, %v342
      %v4345 = vpop.permute.xlu0 %4344
      %4347 = vset.pattern.permute.xlu0 6
      %4348 = vperm.xlu0 %4347, %v343
      %v4349 = vpop.permute.xlu0 %4348
      %4351 = vset.pattern.permute.xlu0 6
      %4352 = vperm.xlu0 %4351, %v344
      %v4353 = vpop.permute.xlu0 %4352
      %4355 = vset.pattern.permute.xlu0 6
      %4356 = vperm.xlu0 %4355, %v345
      %v4357 = vpop.permute.xlu0 %4356
      %4359 = vset.pattern.permute.xlu0 6
      %4360 = vperm.xlu0 %4359, %v346
      %v4361 = vpop.permute.xlu0 %4360
      %4363 = vset.pattern.permute.xlu0 6
      %4364 = vperm.xlu0 %4363, %v347
      %v4365 = vpop.permute.xlu0 %4364
      %4367 = vset.pattern.permute.xlu0 6
      %4368 = vperm.xlu0 %4367, %v348
      %v4369 = vpop.permute.xlu0 %4368
      %4371 = vset.pattern.permute.xlu0 6
      %4372 = vperm.xlu0 %4371, %v349
      %v4373 = vpop.permute.xlu0 %4372
      %4375 = vset.pattern.permute.xlu0 6
      %4376 = vperm.xlu0 %4375, %v350
      %v4377 = vpop.permute.xlu0 %4376
      %4379 = vset.pattern.permute.xlu0 6
      %4380 = vperm.xlu0 %4379, %v351
      %v4381 = vpop.permute.xlu0 %4380
      %4383 = vset.pattern.permute.xlu0 6
      %4384 = vperm.xlu0 %4383, %v352
      %v4385 = vpop.permute.xlu0 %4384
      %4387 = vset.pattern.permute.xlu0 6
      %4388 = vperm.xlu0 %4387, %v353
      %v4389 = vpop.permute.xlu0 %4388
      %4391 = vset.pattern.permute.xlu0 6
      %4392 = vperm.xlu0 %4391, %v354
      %v4393 = vpop.permute.xlu0 %4392
      %4395 = vset.pattern.permute.xlu0 6
      %4396 = vperm.xlu0 %4395, %v355
      %v4397 = vpop.permute.xlu0 %4396
      %4399 = vset.pattern.permute.xlu0 6
      %4400 = vperm.xlu0 %4399, %v356
      %v4401 = vpop.permute.xlu0 %4400
      %4403 = vset.pattern.permute.xlu0 6
      %4404 = vperm.xlu0 %4403, %v357
      %v4405 = vpop.permute.xlu0 %4404
      %4407 = vset.pattern.permute.xlu0 6
      %4408 = vperm.xlu0 %4407, %v358
      %v4409 = vpop.permute.xlu0 %4408
      %4411 = vset.pattern.permute.xlu0 6
      %4412 = vperm.xlu0 %4411, %v359
      %v4413 = vpop.permute.xlu0 %4412
      %4415 = vset.pattern.permute.xlu0 6
      %4416 = vperm.xlu0 %4415, %v360
      %v4417 = vpop.permute.xlu0 %4416
      %4419 = vset.pattern.permute.xlu0 6
      %4420 = vperm.xlu0 %4419, %v361
      %v4421 = vpop.permute.xlu0 %4420
      %4423 = vset.pattern.permute.xlu0 6
      %4424 = vperm.xlu0 %4423, %v362
      %v4425 = vpop.permute.xlu0 %4424
      %4427 = vset.pattern.permute.xlu0 6
      %4428 = vperm.xlu0 %4427, %v363
      %v4429 = vpop.permute.xlu0 %4428
      %4431 = vset.pattern.permute.xlu0 6
      %4432 = vperm.xlu0 %4431, %v364
      %v4433 = vpop.permute.xlu0 %4432
      %4435 = vset.pattern.permute.xlu0 6
      %4436 = vperm.xlu0 %4435, %v365
      %v4437 = vpop.permute.xlu0 %4436
      %4439 = vset.pattern.permute.xlu0 6
      %4440 = vperm.xlu0 %4439, %v366
      %v4441 = vpop.permute.xlu0 %4440
      %4443 = vset.pattern.permute.xlu0 6
      %4444 = vperm.xlu0 %4443, %v367
      %v4445 = vpop.permute.xlu0 %4444
      %4447 = vset.pattern.permute.xlu0 6
      %4448 = vperm.xlu0 %4447, %v368
      %v4449 = vpop.permute.xlu0 %4448
      %4451 = vset.pattern.permute.xlu0 6
      %4452 = vperm.xlu0 %4451, %v369
      %v4453 = vpop.permute.xlu0 %4452
      %4455 = vset.pattern.permute.xlu0 6
      %4456 = vperm.xlu0 %4455, %v370
      %v4457 = vpop.permute.xlu0 %4456
      %4459 = vset.pattern.permute.xlu0 6
      %4460 = vperm.xlu0 %4459, %v371
      %v4461 = vpop.permute.xlu0 %4460
      %4463 = vset.pattern.permute.xlu0 6
      %4464 = vperm.xlu0 %4463, %v372
      %v4465 = vpop.permute.xlu0 %4464
      %4467 = vset.pattern.permute.xlu0 6
      %4468 = vperm.xlu0 %4467, %v373
      %v4469 = vpop.permute.xlu0 %4468
      %4471 = vset.pattern.permute.xlu0 6
      %4472 = vperm.xlu0 %4471, %v374
      %v4473 = vpop.permute.xlu0 %4472
      %4475 = vset.pattern.permute.xlu0 6
      %4476 = vperm.xlu0 %4475, %v375
      %v4477 = vpop.permute.xlu0 %4476
      %4479 = vset.pattern.permute.xlu0 6
      %4480 = vperm.xlu0 %4479, %v376
      %v4481 = vpop.permute.xlu0 %4480
      %4483 = vset.pattern.permute.xlu0 6
      %4484 = vperm.xlu0 %4483, %v377
      %v4485 = vpop.permute.xlu0 %4484
      %4487 = vset.pattern.permute.xlu0 6
      %4488 = vperm.xlu0 %4487, %v378
      %v4489 = vpop.permute.xlu0 %4488
      %4491 = vset.pattern.permute.xlu0 6
      %4492 = vperm.xlu0 %4491, %v379
      %v4493 = vpop.permute.xlu0 %4492
      %4495 = vset.pattern.permute.xlu0 6
      %4496 = vperm.xlu0 %4495, %v380
      %v4497 = vpop.permute.xlu0 %4496
      %4499 = vset.pattern.permute.xlu0 6
      %4500 = vperm.xlu0 %4499, %v381
      %v4501 = vpop.permute.xlu0 %4500
      %4503 = vset.pattern.permute.xlu0 6
      %4504 = vperm.xlu0 %4503, %v382
      %v4505 = vpop.permute.xlu0 %4504
      %4507 = vset.pattern.permute.xlu0 6
      %4508 = vperm.xlu0 %4507, %v383
      %v4509 = vpop.permute.xlu0 %4508
      %4511 = vset.pattern.permute.xlu0 6
      %4512 = vperm.xlu0 %4511, %v384
      %v4513 = vpop.permute.xlu0 %4512
      %4515 = vset.pattern.permute.xlu0 6
      %4516 = vperm.xlu0 %4515, %v385
      %v4517 = vpop.permute.xlu0 %4516
      %4519 = vset.pattern.permute.xlu0 6
      %4520 = vperm.xlu0 %4519, %v386
      %v4521 = vpop.permute.xlu0 %4520
      %4523 = vset.pattern.permute.xlu0 6
      %4524 = vperm.xlu0 %4523, %v387
      %v4525 = vpop.permute.xlu0 %4524
      %4527 = vset.pattern.permute.xlu0 6
      %4528 = vperm.xlu0 %4527, %v388
      %v4529 = vpop.permute.xlu0 %4528
      %4531 = vset.pattern.permute.xlu0 6
      %4532 = vperm.xlu0 %4531, %v389
      %v4533 = vpop.permute.xlu0 %4532
      %4535 = vset.pattern.permute.xlu0 6
      %4536 = vperm.xlu0 %4535, %v390
      %v4537 = vpop.permute.xlu0 %4536
      %4539 = vset.pattern.permute.xlu0 6
      %4540 = vperm.xlu0 %4539, %v391
      %v4541 = vpop.permute.xlu0 %4540
      %4543 = vset.pattern.permute.xlu0 6
      %4544 = vperm.xlu0 %4543, %v392
      %v4545 = vpop.permute.xlu0 %4544
      %4547 = vset.pattern.permute.xlu0 6
      %4548 = vperm.xlu0 %4547, %v393
      %v4549 = vpop.permute.xlu0 %4548
      %4551 = vset.pattern.permute.xlu0 6
      %4552 = vperm.xlu0 %4551, %v394
      %v4553 = vpop.permute.xlu0 %4552
      %v4555 = vlaneseq
      %v4556 = vshrl.u32 %v4555, 7
      %v4557 = vsub.s32 6, %v4556
      %v4558 = vrot.slane %v395, %v4557
      %v4559 = vlaneseq
      %v4560 = vshrl.u32 %v4559, 7
      %v4561 = vsub.s32 6, %v4560
      %v4562 = vrot.slane %v396, %v4561
      %v4563 = vlaneseq
      %v4564 = vshrl.u32 %v4563, 7
      %v4565 = vsub.s32 6, %v4564
      %v4566 = vrot.slane %v397, %v4565
      %v4567 = vlaneseq
      %v4568 = vshrl.u32 %v4567, 7
      %v4569 = vsub.s32 6, %v4568
      %v4570 = vrot.slane %v398, %v4569
      %v4571 = vlaneseq
      %v4572 = vshrl.u32 %v4571, 7
      %v4573 = vsub.s32 6, %v4572
      %v4574 = vrot.slane %v399, %v4573
      %v4575 = vlaneseq
      %v4576 = vshrl.u32 %v4575, 7
      %v4577 = vsub.s32 6, %v4576
      %v4578 = vrot.slane %v400, %v4577
      %v4579 = vlaneseq
      %v4580 = vshrl.u32 %v4579, 7
      %v4581 = vsub.s32 6, %v4580
      %v4582 = vrot.slane %v401, %v4581
      %v4583 = vlaneseq
      %v4584 = vshrl.u32 %v4583, 7
      %v4585 = vsub.s32 6, %v4584
      %v4586 = vrot.slane %v402, %v4585
      %v4587 = vlaneseq
      %v4588 = vshrl.u32 %v4587, 7
      %v4589 = vsub.s32 6, %v4588
      %v4590 = vrot.slane %v403, %v4589
      %v4591 = vlaneseq
      %v4592 = vshrl.u32 %v4591, 7
      %v4593 = vsub.s32 6, %v4592
      %v4594 = vrot.slane %v404, %v4593
      %v4595 = vlaneseq
      %v4596 = vshrl.u32 %v4595, 7
      %v4597 = vsub.s32 6, %v4596
      %v4598 = vrot.slane %v405, %v4597
      %v4599 = vlaneseq
      %v4600 = vshrl.u32 %v4599, 7
      %v4601 = vsub.s32 6, %v4600
      %v4602 = vrot.slane %v406, %v4601
      %v4603 = vlaneseq
      %v4604 = vshrl.u32 %v4603, 7
      %v4605 = vsub.s32 6, %v4604
      %v4606 = vrot.slane %v407, %v4605
      %v4607 = vlaneseq
      %v4608 = vshrl.u32 %v4607, 7
      %v4609 = vsub.s32 6, %v4608
      %v4610 = vrot.slane %v408, %v4609
      %v4611 = vlaneseq
      %v4612 = vshrl.u32 %v4611, 7
      %v4613 = vsub.s32 6, %v4612
      %v4614 = vrot.slane %v409, %v4613
      %v4615 = vlaneseq
      %v4616 = vshrl.u32 %v4615, 7
      %v4617 = vsub.s32 6, %v4616
      %v4618 = vrot.slane %v410, %v4617
      %v4619 = vlaneseq
      %v4620 = vshrl.u32 %v4619, 7
      %v4621 = vsub.s32 6, %v4620
      %v4622 = vrot.slane %v411, %v4621
      %v4623 = vlaneseq
      %v4624 = vshrl.u32 %v4623, 7
      %v4625 = vsub.s32 6, %v4624
      %v4626 = vrot.slane %v412, %v4625
      %v4627 = vlaneseq
      %v4628 = vshrl.u32 %v4627, 7
      %v4629 = vsub.s32 6, %v4628
      %v4630 = vrot.slane %v413, %v4629
      %v4631 = vlaneseq
      %v4632 = vshrl.u32 %v4631, 7
      %v4633 = vsub.s32 6, %v4632
      %v4634 = vrot.slane %v414, %v4633
      %v4635 = vlaneseq
      %v4636 = vshrl.u32 %v4635, 7
      %v4637 = vsub.s32 6, %v4636
      %v4638 = vrot.slane %v415, %v4637
      %v4639 = vlaneseq
      %v4640 = vshrl.u32 %v4639, 7
      %v4641 = vsub.s32 6, %v4640
      %v4642 = vrot.slane %v416, %v4641
      %v4643 = vlaneseq
      %v4644 = vshrl.u32 %v4643, 7
      %v4645 = vsub.s32 6, %v4644
      %v4646 = vrot.slane %v417, %v4645
      %v4647 = vlaneseq
      %v4648 = vshrl.u32 %v4647, 7
      %v4649 = vsub.s32 6, %v4648
      %v4650 = vrot.slane %v418, %v4649
      %v4651 = vlaneseq
      %v4652 = vshrl.u32 %v4651, 7
      %v4653 = vsub.s32 6, %v4652
      %v4654 = vrot.slane %v419, %v4653
      %v4655 = vlaneseq
      %v4656 = vshrl.u32 %v4655, 7
      %v4657 = vsub.s32 6, %v4656
      %v4658 = vrot.slane %v420, %v4657
      %v4659 = vlaneseq
      %v4660 = vshrl.u32 %v4659, 7
      %v4661 = vsub.s32 6, %v4660
      %v4662 = vrot.slane %v421, %v4661
      %v4663 = vlaneseq
      %v4664 = vshrl.u32 %v4663, 7
      %v4665 = vsub.s32 6, %v4664
      %v4666 = vrot.slane %v422, %v4665
      %v4667 = vlaneseq
      %v4668 = vshrl.u32 %v4667, 7
      %v4669 = vsub.s32 6, %v4668
      %v4670 = vrot.slane %v423, %v4669
      %v4671 = vlaneseq
      %v4672 = vshrl.u32 %v4671, 7
      %v4673 = vsub.s32 6, %v4672
      %v4674 = vrot.slane %v424, %v4673
      %v4675 = vlaneseq
      %v4676 = vshrl.u32 %v4675, 7
      %v4677 = vsub.s32 6, %v4676
      %v4678 = vrot.slane %v425, %v4677
      %v4679 = vlaneseq
      %v4680 = vshrl.u32 %v4679, 7
      %v4681 = vsub.s32 6, %v4680
      %v4682 = vrot.slane %v426, %v4681
      %v4683 = vlaneseq
      %v4684 = vshrl.u32 %v4683, 7
      %v4685 = vsub.s32 6, %v4684
      %v4686 = vrot.slane %v427, %v4685
      %v4687 = vlaneseq
      %v4688 = vshrl.u32 %v4687, 7
      %v4689 = vsub.s32 6, %v4688
      %v4690 = vrot.slane %v428, %v4689
      %v4691 = vlaneseq
      %v4692 = vshrl.u32 %v4691, 7
      %v4693 = vsub.s32 6, %v4692
      %v4694 = vrot.slane %v429, %v4693
      %v4695 = vlaneseq
      %v4696 = vshrl.u32 %v4695, 7
      %v4697 = vsub.s32 6, %v4696
      %v4698 = vrot.slane %v430, %v4697
      %v4699 = vlaneseq
      %v4700 = vshrl.u32 %v4699, 7
      %v4701 = vsub.s32 6, %v4700
      %v4702 = vrot.slane %v431, %v4701
      %v4703 = vlaneseq
      %v4704 = vshrl.u32 %v4703, 7
      %v4705 = vsub.s32 6, %v4704
      %v4706 = vrot.slane %v432, %v4705
      %v4707 = vlaneseq
      %v4708 = vshrl.u32 %v4707, 7
      %v4709 = vsub.s32 6, %v4708
      %v4710 = vrot.slane %v433, %v4709
      %v4711 = vlaneseq
      %v4712 = vshrl.u32 %v4711, 7
      %v4713 = vsub.s32 6, %v4712
      %v4714 = vrot.slane %v434, %v4713
      %v4715 = vlaneseq
      %v4716 = vshrl.u32 %v4715, 7
      %v4717 = vsub.s32 6, %v4716
      %v4718 = vrot.slane %v435, %v4717
      %v4719 = vlaneseq
      %v4720 = vshrl.u32 %v4719, 7
      %v4721 = vsub.s32 6, %v4720
      %v4722 = vrot.slane %v436, %v4721
      %v4723 = vlaneseq
      %v4724 = vshrl.u32 %v4723, 7
      %v4725 = vsub.s32 6, %v4724
      %v4726 = vrot.slane %v437, %v4725
      %v4727 = vlaneseq
      %v4728 = vshrl.u32 %v4727, 7
      %v4729 = vsub.s32 6, %v4728
      %v4730 = vrot.slane %v438, %v4729
      %v4731 = vlaneseq
      %v4732 = vshrl.u32 %v4731, 7
      %v4733 = vsub.s32 6, %v4732
      %v4734 = vrot.slane %v439, %v4733
      %v4735 = vlaneseq
      %v4736 = vshrl.u32 %v4735, 7
      %v4737 = vsub.s32 6, %v4736
      %v4738 = vrot.slane %v440, %v4737
      %v4739 = vlaneseq
      %v4740 = vshrl.u32 %v4739, 7
      %v4741 = vsub.s32 6, %v4740
      %v4742 = vrot.slane %v441, %v4741
      %v4743 = vlaneseq
      %v4744 = vshrl.u32 %v4743, 7
      %v4745 = vsub.s32 6, %v4744
      %v4746 = vrot.slane %v442, %v4745
      %v4747 = vlaneseq
      %v4748 = vshrl.u32 %v4747, 7
      %v4749 = vsub.s32 6, %v4748
      %v4750 = vrot.slane %v443, %v4749
      %v4751 = vlaneseq
      %v4752 = vshrl.u32 %v4751, 7
      %v4753 = vsub.s32 6, %v4752
      %v4754 = vrot.slane %v444, %v4753
      %v4755 = vlaneseq
      %v4756 = vshrl.u32 %v4755, 7
      %v4757 = vsub.s32 6, %v4756
      %v4758 = vrot.slane %v445, %v4757
      %v4759 = vlaneseq
      %v4760 = vshrl.u32 %v4759, 7
      %v4761 = vsub.s32 6, %v4760
      %v4762 = vrot.slane %v446, %v4761
      %v4763 = vlaneseq
      %v4764 = vshrl.u32 %v4763, 7
      %v4765 = vsub.s32 6, %v4764
      %v4766 = vrot.slane %v447, %v4765
      %v4767 = vlaneseq
      %v4768 = vshrl.u32 %v4767, 7
      %v4769 = vsub.s32 6, %v4768
      %v4770 = vrot.slane %v448, %v4769
      %v4771 = vlaneseq
      %v4772 = vshrl.u32 %v4771, 7
      %v4773 = vsub.s32 6, %v4772
      %v4774 = vrot.slane %v449, %v4773
      %v4775 = vlaneseq
      %v4776 = vshrl.u32 %v4775, 7
      %v4777 = vsub.s32 6, %v4776
      %v4778 = vrot.slane %v450, %v4777
      %v4779 = vlaneseq
      %v4780 = vshrl.u32 %v4779, 7
      %v4781 = vsub.s32 6, %v4780
      %v4782 = vrot.slane %v451, %v4781
      %v4783 = vlaneseq
      %v4784 = vshrl.u32 %v4783, 7
      %v4785 = vsub.s32 6, %v4784
      %v4786 = vrot.slane %v452, %v4785
      %v4787 = vlaneseq
      %v4788 = vshrl.u32 %v4787, 7
      %v4789 = vsub.s32 6, %v4788
      %v4790 = vrot.slane %v453, %v4789
      %v4791 = vlaneseq
      %v4792 = vshrl.u32 %v4791, 7
      %v4793 = vsub.s32 6, %v4792
      %v4794 = vrot.slane %v454, %v4793
      %v4795 = vlaneseq
      %v4796 = vshrl.u32 %v4795, 7
      %v4797 = vsub.s32 6, %v4796
      %v4798 = vrot.slane %v455, %v4797
      %v4799 = vlaneseq
      %v4800 = vshrl.u32 %v4799, 7
      %v4801 = vsub.s32 6, %v4800
      %v4802 = vrot.slane %v456, %v4801
      %v4803 = vlaneseq
      %v4804 = vshrl.u32 %v4803, 7
      %v4805 = vsub.s32 6, %v4804
      %v4806 = vrot.slane %v457, %v4805
      %v4807 = vlaneseq
      %v4808 = vshrl.u32 %v4807, 7
      %v4809 = vsub.s32 6, %v4808
      %v4810 = vrot.slane %v458, %v4809
      %v4811 = vmul.f32 %v4301, %v4558
      %v4812 = vmul.f32 %v4305, %v4562
      %v4813 = vmul.f32 %v4309, %v4566
      %v4814 = vmul.f32 %v4313, %v4570
      %v4815 = vmul.f32 %v4317, %v4574
      %v4816 = vmul.f32 %v4321, %v4578
      %v4817 = vmul.f32 %v4325, %v4582
      %v4818 = vmul.f32 %v4329, %v4586
      %v4819 = vmul.f32 %v4333, %v4590
      %v4820 = vmul.f32 %v4337, %v4594
      %v4821 = vmul.f32 %v4341, %v4598
      %v4822 = vmul.f32 %v4345, %v4602
      %v4823 = vmul.f32 %v4349, %v4606
      %v4824 = vmul.f32 %v4353, %v4610
      %v4825 = vmul.f32 %v4357, %v4614
      %v4826 = vmul.f32 %v4361, %v4618
      %v4827 = vmul.f32 %v4365, %v4622
      %v4828 = vmul.f32 %v4369, %v4626
      %v4829 = vmul.f32 %v4373, %v4630
      %v4830 = vmul.f32 %v4377, %v4634
      %v4831 = vmul.f32 %v4381, %v4638
      %v4832 = vmul.f32 %v4385, %v4642
      %v4833 = vmul.f32 %v4389, %v4646
      %v4834 = vmul.f32 %v4393, %v4650
      %v4835 = vmul.f32 %v4397, %v4654
      %v4836 = vmul.f32 %v4401, %v4658
      %v4837 = vmul.f32 %v4405, %v4662
      %v4838 = vmul.f32 %v4409, %v4666
      %v4839 = vmul.f32 %v4413, %v4670
      %v4840 = vmul.f32 %v4417, %v4674
      %v4841 = vmul.f32 %v4421, %v4678
      %v4842 = vmul.f32 %v4425, %v4682
      %v4843 = vmul.f32 %v4429, %v4686
      %v4844 = vmul.f32 %v4433, %v4690
      %v4845 = vmul.f32 %v4437, %v4694
      %v4846 = vmul.f32 %v4441, %v4698
      %v4847 = vmul.f32 %v4445, %v4702
      %v4848 = vmul.f32 %v4449, %v4706
      %v4849 = vmul.f32 %v4453, %v4710
      %v4850 = vmul.f32 %v4457, %v4714
      %v4851 = vmul.f32 %v4461, %v4718
      %v4852 = vmul.f32 %v4465, %v4722
      %v4853 = vmul.f32 %v4469, %v4726
      %v4854 = vmul.f32 %v4473, %v4730
      %v4855 = vmul.f32 %v4477, %v4734
      %v4856 = vmul.f32 %v4481, %v4738
      %v4857 = vmul.f32 %v4485, %v4742
      %v4858 = vmul.f32 %v4489, %v4746
      %v4859 = vmul.f32 %v4493, %v4750
      %v4860 = vmul.f32 %v4497, %v4754
      %v4861 = vmul.f32 %v4501, %v4758
      %v4862 = vmul.f32 %v4505, %v4762
      %v4863 = vmul.f32 %v4509, %v4766
      %v4864 = vmul.f32 %v4513, %v4770
      %v4865 = vmul.f32 %v4517, %v4774
      %v4866 = vmul.f32 %v4521, %v4778
      %v4867 = vmul.f32 %v4525, %v4782
      %v4868 = vmul.f32 %v4529, %v4786
      %v4869 = vmul.f32 %v4533, %v4790
      %v4870 = vmul.f32 %v4537, %v4794
      %v4871 = vmul.f32 %v4541, %v4798
      %v4872 = vmul.f32 %v4545, %v4802
      %v4873 = vmul.f32 %v4549, %v4806
      %v4874 = vmul.f32 %v4553, %v4810
      %v4875 = vadd.f32 %v4235, %v4811
      %v4876 = vadd.f32 %v4236, %v4812
      %v4877 = vadd.f32 %v4237, %v4813
      %v4878 = vadd.f32 %v4238, %v4814
      %v4879 = vadd.f32 %v4239, %v4815
      %v4880 = vadd.f32 %v4240, %v4816
      %v4881 = vadd.f32 %v4241, %v4817
      %v4882 = vadd.f32 %v4242, %v4818
      %v4883 = vadd.f32 %v4243, %v4819
      %v4884 = vadd.f32 %v4244, %v4820
      %v4885 = vadd.f32 %v4245, %v4821
      %v4886 = vadd.f32 %v4246, %v4822
      %v4887 = vadd.f32 %v4247, %v4823
      %v4888 = vadd.f32 %v4248, %v4824
      %v4889 = vadd.f32 %v4249, %v4825
      %v4890 = vadd.f32 %v4250, %v4826
      %v4891 = vadd.f32 %v4251, %v4827
      %v4892 = vadd.f32 %v4252, %v4828
      %v4893 = vadd.f32 %v4253, %v4829
      %v4894 = vadd.f32 %v4254, %v4830
      %v4895 = vadd.f32 %v4255, %v4831
      %v4896 = vadd.f32 %v4256, %v4832
      %v4897 = vadd.f32 %v4257, %v4833
      %v4898 = vadd.f32 %v4258, %v4834
      %v4899 = vadd.f32 %v4259, %v4835
      %v4900 = vadd.f32 %v4260, %v4836
      %v4901 = vadd.f32 %v4261, %v4837
      %v4902 = vadd.f32 %v4262, %v4838
      %v4903 = vadd.f32 %v4263, %v4839
      %v4904 = vadd.f32 %v4264, %v4840
      %v4905 = vadd.f32 %v4265, %v4841
      %v4906 = vadd.f32 %v4266, %v4842
      %v4907 = vadd.f32 %v4267, %v4843
      %v4908 = vadd.f32 %v4268, %v4844
      %v4909 = vadd.f32 %v4269, %v4845
      %v4910 = vadd.f32 %v4270, %v4846
      %v4911 = vadd.f32 %v4271, %v4847
      %v4912 = vadd.f32 %v4272, %v4848
      %v4913 = vadd.f32 %v4273, %v4849
      %v4914 = vadd.f32 %v4274, %v4850
      %v4915 = vadd.f32 %v4275, %v4851
      %v4916 = vadd.f32 %v4276, %v4852
      %v4917 = vadd.f32 %v4277, %v4853
      %v4918 = vadd.f32 %v4278, %v4854
      %v4919 = vadd.f32 %v4279, %v4855
      %v4920 = vadd.f32 %v4280, %v4856
      %v4921 = vadd.f32 %v4281, %v4857
      %v4922 = vadd.f32 %v4282, %v4858
      %v4923 = vadd.f32 %v4283, %v4859
      %v4924 = vadd.f32 %v4284, %v4860
      %v4925 = vadd.f32 %v4285, %v4861
      %v4926 = vadd.f32 %v4286, %v4862
      %v4927 = vadd.f32 %v4287, %v4863
      %v4928 = vadd.f32 %v4288, %v4864
      %v4929 = vadd.f32 %v4289, %v4865
      %v4930 = vadd.f32 %v4290, %v4866
      %v4931 = vadd.f32 %v4291, %v4867
      %v4932 = vadd.f32 %v4292, %v4868
      %v4933 = vadd.f32 %v4293, %v4869
      %v4934 = vadd.f32 %v4294, %v4870
      %v4935 = vadd.f32 %v4295, %v4871
      %v4936 = vadd.f32 %v4296, %v4872
      %v4937 = vadd.f32 %v4297, %v4873
      %v4938 = vadd.f32 %v4298, %v4874
      %4939 = vset.pattern.permute.xlu0 7
      %4940 = vperm.xlu0 %4939, %v331
      %v4941 = vpop.permute.xlu0 %4940
      %4943 = vset.pattern.permute.xlu0 7
      %4944 = vperm.xlu0 %4943, %v332
      %v4945 = vpop.permute.xlu0 %4944
      %4947 = vset.pattern.permute.xlu0 7
      %4948 = vperm.xlu0 %4947, %v333
      %v4949 = vpop.permute.xlu0 %4948
      %4951 = vset.pattern.permute.xlu0 7
      %4952 = vperm.xlu0 %4951, %v334
      %v4953 = vpop.permute.xlu0 %4952
      %4955 = vset.pattern.permute.xlu0 7
      %4956 = vperm.xlu0 %4955, %v335
      %v4957 = vpop.permute.xlu0 %4956
      %4959 = vset.pattern.permute.xlu0 7
      %4960 = vperm.xlu0 %4959, %v336
      %v4961 = vpop.permute.xlu0 %4960
      %4963 = vset.pattern.permute.xlu0 7
      %4964 = vperm.xlu0 %4963, %v337
      %v4965 = vpop.permute.xlu0 %4964
      %4967 = vset.pattern.permute.xlu0 7
      %4968 = vperm.xlu0 %4967, %v338
      %v4969 = vpop.permute.xlu0 %4968
      %4971 = vset.pattern.permute.xlu0 7
      %4972 = vperm.xlu0 %4971, %v339
      %v4973 = vpop.permute.xlu0 %4972
      %4975 = vset.pattern.permute.xlu0 7
      %4976 = vperm.xlu0 %4975, %v340
      %v4977 = vpop.permute.xlu0 %4976
      %4979 = vset.pattern.permute.xlu0 7
      %4980 = vperm.xlu0 %4979, %v341
      %v4981 = vpop.permute.xlu0 %4980
      %4983 = vset.pattern.permute.xlu0 7
      %4984 = vperm.xlu0 %4983, %v342
      %v4985 = vpop.permute.xlu0 %4984
      %4987 = vset.pattern.permute.xlu0 7
      %4988 = vperm.xlu0 %4987, %v343
      %v4989 = vpop.permute.xlu0 %4988
      %4991 = vset.pattern.permute.xlu0 7
      %4992 = vperm.xlu0 %4991, %v344
      %v4993 = vpop.permute.xlu0 %4992
      %4995 = vset.pattern.permute.xlu0 7
      %4996 = vperm.xlu0 %4995, %v345
      %v4997 = vpop.permute.xlu0 %4996
      %4999 = vset.pattern.permute.xlu0 7
      %5000 = vperm.xlu0 %4999, %v346
      %v5001 = vpop.permute.xlu0 %5000
      %5003 = vset.pattern.permute.xlu0 7
      %5004 = vperm.xlu0 %5003, %v347
      %v5005 = vpop.permute.xlu0 %5004
      %5007 = vset.pattern.permute.xlu0 7
      %5008 = vperm.xlu0 %5007, %v348
      %v5009 = vpop.permute.xlu0 %5008
      %5011 = vset.pattern.permute.xlu0 7
      %5012 = vperm.xlu0 %5011, %v349
      %v5013 = vpop.permute.xlu0 %5012
      %5015 = vset.pattern.permute.xlu0 7
      %5016 = vperm.xlu0 %5015, %v350
      %v5017 = vpop.permute.xlu0 %5016
      %5019 = vset.pattern.permute.xlu0 7
      %5020 = vperm.xlu0 %5019, %v351
      %v5021 = vpop.permute.xlu0 %5020
      %5023 = vset.pattern.permute.xlu0 7
      %5024 = vperm.xlu0 %5023, %v352
      %v5025 = vpop.permute.xlu0 %5024
      %5027 = vset.pattern.permute.xlu0 7
      %5028 = vperm.xlu0 %5027, %v353
      %v5029 = vpop.permute.xlu0 %5028
      %5031 = vset.pattern.permute.xlu0 7
      %5032 = vperm.xlu0 %5031, %v354
      %v5033 = vpop.permute.xlu0 %5032
      %5035 = vset.pattern.permute.xlu0 7
      %5036 = vperm.xlu0 %5035, %v355
      %v5037 = vpop.permute.xlu0 %5036
      %5039 = vset.pattern.permute.xlu0 7
      %5040 = vperm.xlu0 %5039, %v356
      %v5041 = vpop.permute.xlu0 %5040
      %5043 = vset.pattern.permute.xlu0 7
      %5044 = vperm.xlu0 %5043, %v357
      %v5045 = vpop.permute.xlu0 %5044
      %5047 = vset.pattern.permute.xlu0 7
      %5048 = vperm.xlu0 %5047, %v358
      %v5049 = vpop.permute.xlu0 %5048
      %5051 = vset.pattern.permute.xlu0 7
      %5052 = vperm.xlu0 %5051, %v359
      %v5053 = vpop.permute.xlu0 %5052
      %5055 = vset.pattern.permute.xlu0 7
      %5056 = vperm.xlu0 %5055, %v360
      %v5057 = vpop.permute.xlu0 %5056
      %5059 = vset.pattern.permute.xlu0 7
      %5060 = vperm.xlu0 %5059, %v361
      %v5061 = vpop.permute.xlu0 %5060
      %5063 = vset.pattern.permute.xlu0 7
      %5064 = vperm.xlu0 %5063, %v362
      %v5065 = vpop.permute.xlu0 %5064
      %5067 = vset.pattern.permute.xlu0 7
      %5068 = vperm.xlu0 %5067, %v363
      %v5069 = vpop.permute.xlu0 %5068
      %5071 = vset.pattern.permute.xlu0 7
      %5072 = vperm.xlu0 %5071, %v364
      %v5073 = vpop.permute.xlu0 %5072
      %5075 = vset.pattern.permute.xlu0 7
      %5076 = vperm.xlu0 %5075, %v365
      %v5077 = vpop.permute.xlu0 %5076
      %5079 = vset.pattern.permute.xlu0 7
      %5080 = vperm.xlu0 %5079, %v366
      %v5081 = vpop.permute.xlu0 %5080
      %5083 = vset.pattern.permute.xlu0 7
      %5084 = vperm.xlu0 %5083, %v367
      %v5085 = vpop.permute.xlu0 %5084
      %5087 = vset.pattern.permute.xlu0 7
      %5088 = vperm.xlu0 %5087, %v368
      %v5089 = vpop.permute.xlu0 %5088
      %5091 = vset.pattern.permute.xlu0 7
      %5092 = vperm.xlu0 %5091, %v369
      %v5093 = vpop.permute.xlu0 %5092
      %5095 = vset.pattern.permute.xlu0 7
      %5096 = vperm.xlu0 %5095, %v370
      %v5097 = vpop.permute.xlu0 %5096
      %5099 = vset.pattern.permute.xlu0 7
      %5100 = vperm.xlu0 %5099, %v371
      %v5101 = vpop.permute.xlu0 %5100
      %5103 = vset.pattern.permute.xlu0 7
      %5104 = vperm.xlu0 %5103, %v372
      %v5105 = vpop.permute.xlu0 %5104
      %5107 = vset.pattern.permute.xlu0 7
      %5108 = vperm.xlu0 %5107, %v373
      %v5109 = vpop.permute.xlu0 %5108
      %5111 = vset.pattern.permute.xlu0 7
      %5112 = vperm.xlu0 %5111, %v374
      %v5113 = vpop.permute.xlu0 %5112
      %5115 = vset.pattern.permute.xlu0 7
      %5116 = vperm.xlu0 %5115, %v375
      %v5117 = vpop.permute.xlu0 %5116
      %5119 = vset.pattern.permute.xlu0 7
      %5120 = vperm.xlu0 %5119, %v376
      %v5121 = vpop.permute.xlu0 %5120
      %5123 = vset.pattern.permute.xlu0 7
      %5124 = vperm.xlu0 %5123, %v377
      %v5125 = vpop.permute.xlu0 %5124
      %5127 = vset.pattern.permute.xlu0 7
      %5128 = vperm.xlu0 %5127, %v378
      %v5129 = vpop.permute.xlu0 %5128
      %5131 = vset.pattern.permute.xlu0 7
      %5132 = vperm.xlu0 %5131, %v379
      %v5133 = vpop.permute.xlu0 %5132
      %5135 = vset.pattern.permute.xlu0 7
      %5136 = vperm.xlu0 %5135, %v380
      %v5137 = vpop.permute.xlu0 %5136
      %5139 = vset.pattern.permute.xlu0 7
      %5140 = vperm.xlu0 %5139, %v381
      %v5141 = vpop.permute.xlu0 %5140
      %5143 = vset.pattern.permute.xlu0 7
      %5144 = vperm.xlu0 %5143, %v382
      %v5145 = vpop.permute.xlu0 %5144
      %5147 = vset.pattern.permute.xlu0 7
      %5148 = vperm.xlu0 %5147, %v383
      %v5149 = vpop.permute.xlu0 %5148
      %5151 = vset.pattern.permute.xlu0 7
      %5152 = vperm.xlu0 %5151, %v384
      %v5153 = vpop.permute.xlu0 %5152
      %5155 = vset.pattern.permute.xlu0 7
      %5156 = vperm.xlu0 %5155, %v385
      %v5157 = vpop.permute.xlu0 %5156
      %5159 = vset.pattern.permute.xlu0 7
      %5160 = vperm.xlu0 %5159, %v386
      %v5161 = vpop.permute.xlu0 %5160
      %5163 = vset.pattern.permute.xlu0 7
      %5164 = vperm.xlu0 %5163, %v387
      %v5165 = vpop.permute.xlu0 %5164
      %5167 = vset.pattern.permute.xlu0 7
      %5168 = vperm.xlu0 %5167, %v388
      %v5169 = vpop.permute.xlu0 %5168
      %5171 = vset.pattern.permute.xlu0 7
      %5172 = vperm.xlu0 %5171, %v389
      %v5173 = vpop.permute.xlu0 %5172
      %5175 = vset.pattern.permute.xlu0 7
      %5176 = vperm.xlu0 %5175, %v390
      %v5177 = vpop.permute.xlu0 %5176
      %5179 = vset.pattern.permute.xlu0 7
      %5180 = vperm.xlu0 %5179, %v391
      %v5181 = vpop.permute.xlu0 %5180
      %5183 = vset.pattern.permute.xlu0 7
      %5184 = vperm.xlu0 %5183, %v392
      %v5185 = vpop.permute.xlu0 %5184
      %5187 = vset.pattern.permute.xlu0 7
      %5188 = vperm.xlu0 %5187, %v393
      %v5189 = vpop.permute.xlu0 %5188
      %5191 = vset.pattern.permute.xlu0 7
      %5192 = vperm.xlu0 %5191, %v394
      %v5193 = vpop.permute.xlu0 %5192
      %v5195 = vlaneseq
      %v5196 = vshrl.u32 %v5195, 7
      %v5197 = vsub.s32 7, %v5196
      %v5198 = vrot.slane %v395, %v5197
      %v5199 = vlaneseq
      %v5200 = vshrl.u32 %v5199, 7
      %v5201 = vsub.s32 7, %v5200
      %v5202 = vrot.slane %v396, %v5201
      %v5203 = vlaneseq
      %v5204 = vshrl.u32 %v5203, 7
      %v5205 = vsub.s32 7, %v5204
      %v5206 = vrot.slane %v397, %v5205
      %v5207 = vlaneseq
      %v5208 = vshrl.u32 %v5207, 7
      %v5209 = vsub.s32 7, %v5208
      %v5210 = vrot.slane %v398, %v5209
      %v5211 = vlaneseq
      %v5212 = vshrl.u32 %v5211, 7
      %v5213 = vsub.s32 7, %v5212
      %v5214 = vrot.slane %v399, %v5213
      %v5215 = vlaneseq
      %v5216 = vshrl.u32 %v5215, 7
      %v5217 = vsub.s32 7, %v5216
      %v5218 = vrot.slane %v400, %v5217
      %v5219 = vlaneseq
      %v5220 = vshrl.u32 %v5219, 7
      %v5221 = vsub.s32 7, %v5220
      %v5222 = vrot.slane %v401, %v5221
      %v5223 = vlaneseq
      %v5224 = vshrl.u32 %v5223, 7
      %v5225 = vsub.s32 7, %v5224
      %v5226 = vrot.slane %v402, %v5225
      %v5227 = vlaneseq
      %v5228 = vshrl.u32 %v5227, 7
      %v5229 = vsub.s32 7, %v5228
      %v5230 = vrot.slane %v403, %v5229
      %v5231 = vlaneseq
      %v5232 = vshrl.u32 %v5231, 7
      %v5233 = vsub.s32 7, %v5232
      %v5234 = vrot.slane %v404, %v5233
      %v5235 = vlaneseq
      %v5236 = vshrl.u32 %v5235, 7
      %v5237 = vsub.s32 7, %v5236
      %v5238 = vrot.slane %v405, %v5237
      %v5239 = vlaneseq
      %v5240 = vshrl.u32 %v5239, 7
      %v5241 = vsub.s32 7, %v5240
      %v5242 = vrot.slane %v406, %v5241
      %v5243 = vlaneseq
      %v5244 = vshrl.u32 %v5243, 7
      %v5245 = vsub.s32 7, %v5244
      %v5246 = vrot.slane %v407, %v5245
      %v5247 = vlaneseq
      %v5248 = vshrl.u32 %v5247, 7
      %v5249 = vsub.s32 7, %v5248
      %v5250 = vrot.slane %v408, %v5249
      %v5251 = vlaneseq
      %v5252 = vshrl.u32 %v5251, 7
      %v5253 = vsub.s32 7, %v5252
      %v5254 = vrot.slane %v409, %v5253
      %v5255 = vlaneseq
      %v5256 = vshrl.u32 %v5255, 7
      %v5257 = vsub.s32 7, %v5256
      %v5258 = vrot.slane %v410, %v5257
      %v5259 = vlaneseq
      %v5260 = vshrl.u32 %v5259, 7
      %v5261 = vsub.s32 7, %v5260
      %v5262 = vrot.slane %v411, %v5261
      %v5263 = vlaneseq
      %v5264 = vshrl.u32 %v5263, 7
      %v5265 = vsub.s32 7, %v5264
      %v5266 = vrot.slane %v412, %v5265
      %v5267 = vlaneseq
      %v5268 = vshrl.u32 %v5267, 7
      %v5269 = vsub.s32 7, %v5268
      %v5270 = vrot.slane %v413, %v5269
      %v5271 = vlaneseq
      %v5272 = vshrl.u32 %v5271, 7
      %v5273 = vsub.s32 7, %v5272
      %v5274 = vrot.slane %v414, %v5273
      %v5275 = vlaneseq
      %v5276 = vshrl.u32 %v5275, 7
      %v5277 = vsub.s32 7, %v5276
      %v5278 = vrot.slane %v415, %v5277
      %v5279 = vlaneseq
      %v5280 = vshrl.u32 %v5279, 7
      %v5281 = vsub.s32 7, %v5280
      %v5282 = vrot.slane %v416, %v5281
      %v5283 = vlaneseq
      %v5284 = vshrl.u32 %v5283, 7
      %v5285 = vsub.s32 7, %v5284
      %v5286 = vrot.slane %v417, %v5285
      %v5287 = vlaneseq
      %v5288 = vshrl.u32 %v5287, 7
      %v5289 = vsub.s32 7, %v5288
      %v5290 = vrot.slane %v418, %v5289
      %v5291 = vlaneseq
      %v5292 = vshrl.u32 %v5291, 7
      %v5293 = vsub.s32 7, %v5292
      %v5294 = vrot.slane %v419, %v5293
      %v5295 = vlaneseq
      %v5296 = vshrl.u32 %v5295, 7
      %v5297 = vsub.s32 7, %v5296
      %v5298 = vrot.slane %v420, %v5297
      %v5299 = vlaneseq
      %v5300 = vshrl.u32 %v5299, 7
      %v5301 = vsub.s32 7, %v5300
      %v5302 = vrot.slane %v421, %v5301
      %v5303 = vlaneseq
      %v5304 = vshrl.u32 %v5303, 7
      %v5305 = vsub.s32 7, %v5304
      %v5306 = vrot.slane %v422, %v5305
      %v5307 = vlaneseq
      %v5308 = vshrl.u32 %v5307, 7
      %v5309 = vsub.s32 7, %v5308
      %v5310 = vrot.slane %v423, %v5309
      %v5311 = vlaneseq
      %v5312 = vshrl.u32 %v5311, 7
      %v5313 = vsub.s32 7, %v5312
      %v5314 = vrot.slane %v424, %v5313
      %v5315 = vlaneseq
      %v5316 = vshrl.u32 %v5315, 7
      %v5317 = vsub.s32 7, %v5316
      %v5318 = vrot.slane %v425, %v5317
      %v5319 = vlaneseq
      %v5320 = vshrl.u32 %v5319, 7
      %v5321 = vsub.s32 7, %v5320
      %v5322 = vrot.slane %v426, %v5321
      %v5323 = vlaneseq
      %v5324 = vshrl.u32 %v5323, 7
      %v5325 = vsub.s32 7, %v5324
      %v5326 = vrot.slane %v427, %v5325
      %v5327 = vlaneseq
      %v5328 = vshrl.u32 %v5327, 7
      %v5329 = vsub.s32 7, %v5328
      %v5330 = vrot.slane %v428, %v5329
      %v5331 = vlaneseq
      %v5332 = vshrl.u32 %v5331, 7
      %v5333 = vsub.s32 7, %v5332
      %v5334 = vrot.slane %v429, %v5333
      %v5335 = vlaneseq
      %v5336 = vshrl.u32 %v5335, 7
      %v5337 = vsub.s32 7, %v5336
      %v5338 = vrot.slane %v430, %v5337
      %v5339 = vlaneseq
      %v5340 = vshrl.u32 %v5339, 7
      %v5341 = vsub.s32 7, %v5340
      %v5342 = vrot.slane %v431, %v5341
      %v5343 = vlaneseq
      %v5344 = vshrl.u32 %v5343, 7
      %v5345 = vsub.s32 7, %v5344
      %v5346 = vrot.slane %v432, %v5345
      %v5347 = vlaneseq
      %v5348 = vshrl.u32 %v5347, 7
      %v5349 = vsub.s32 7, %v5348
      %v5350 = vrot.slane %v433, %v5349
      %v5351 = vlaneseq
      %v5352 = vshrl.u32 %v5351, 7
      %v5353 = vsub.s32 7, %v5352
      %v5354 = vrot.slane %v434, %v5353
      %v5355 = vlaneseq
      %v5356 = vshrl.u32 %v5355, 7
      %v5357 = vsub.s32 7, %v5356
      %v5358 = vrot.slane %v435, %v5357
      %v5359 = vlaneseq
      %v5360 = vshrl.u32 %v5359, 7
      %v5361 = vsub.s32 7, %v5360
      %v5362 = vrot.slane %v436, %v5361
      %v5363 = vlaneseq
      %v5364 = vshrl.u32 %v5363, 7
      %v5365 = vsub.s32 7, %v5364
      %v5366 = vrot.slane %v437, %v5365
      %v5367 = vlaneseq
      %v5368 = vshrl.u32 %v5367, 7
      %v5369 = vsub.s32 7, %v5368
      %v5370 = vrot.slane %v438, %v5369
      %v5371 = vlaneseq
      %v5372 = vshrl.u32 %v5371, 7
      %v5373 = vsub.s32 7, %v5372
      %v5374 = vrot.slane %v439, %v5373
      %v5375 = vlaneseq
      %v5376 = vshrl.u32 %v5375, 7
      %v5377 = vsub.s32 7, %v5376
      %v5378 = vrot.slane %v440, %v5377
      %v5379 = vlaneseq
      %v5380 = vshrl.u32 %v5379, 7
      %v5381 = vsub.s32 7, %v5380
      %v5382 = vrot.slane %v441, %v5381
      %v5383 = vlaneseq
      %v5384 = vshrl.u32 %v5383, 7
      %v5385 = vsub.s32 7, %v5384
      %v5386 = vrot.slane %v442, %v5385
      %v5387 = vlaneseq
      %v5388 = vshrl.u32 %v5387, 7
      %v5389 = vsub.s32 7, %v5388
      %v5390 = vrot.slane %v443, %v5389
      %v5391 = vlaneseq
      %v5392 = vshrl.u32 %v5391, 7
      %v5393 = vsub.s32 7, %v5392
      %v5394 = vrot.slane %v444, %v5393
      %v5395 = vlaneseq
      %v5396 = vshrl.u32 %v5395, 7
      %v5397 = vsub.s32 7, %v5396
      %v5398 = vrot.slane %v445, %v5397
      %v5399 = vlaneseq
      %v5400 = vshrl.u32 %v5399, 7
      %v5401 = vsub.s32 7, %v5400
      %v5402 = vrot.slane %v446, %v5401
      %v5403 = vlaneseq
      %v5404 = vshrl.u32 %v5403, 7
      %v5405 = vsub.s32 7, %v5404
      %v5406 = vrot.slane %v447, %v5405
      %v5407 = vlaneseq
      %v5408 = vshrl.u32 %v5407, 7
      %v5409 = vsub.s32 7, %v5408
      %v5410 = vrot.slane %v448, %v5409
      %v5411 = vlaneseq
      %v5412 = vshrl.u32 %v5411, 7
      %v5413 = vsub.s32 7, %v5412
      %v5414 = vrot.slane %v449, %v5413
      %v5415 = vlaneseq
      %v5416 = vshrl.u32 %v5415, 7
      %v5417 = vsub.s32 7, %v5416
      %v5418 = vrot.slane %v450, %v5417
      %v5419 = vlaneseq
      %v5420 = vshrl.u32 %v5419, 7
      %v5421 = vsub.s32 7, %v5420
      %v5422 = vrot.slane %v451, %v5421
      %v5423 = vlaneseq
      %v5424 = vshrl.u32 %v5423, 7
      %v5425 = vsub.s32 7, %v5424
      %v5426 = vrot.slane %v452, %v5425
      %v5427 = vlaneseq
      %v5428 = vshrl.u32 %v5427, 7
      %v5429 = vsub.s32 7, %v5428
      %v5430 = vrot.slane %v453, %v5429
      %v5431 = vlaneseq
      %v5432 = vshrl.u32 %v5431, 7
      %v5433 = vsub.s32 7, %v5432
      %v5434 = vrot.slane %v454, %v5433
      %v5435 = vlaneseq
      %v5436 = vshrl.u32 %v5435, 7
      %v5437 = vsub.s32 7, %v5436
      %v5438 = vrot.slane %v455, %v5437
      %v5439 = vlaneseq
      %v5440 = vshrl.u32 %v5439, 7
      %v5441 = vsub.s32 7, %v5440
      %v5442 = vrot.slane %v456, %v5441
      %v5443 = vlaneseq
      %v5444 = vshrl.u32 %v5443, 7
      %v5445 = vsub.s32 7, %v5444
      %v5446 = vrot.slane %v457, %v5445
      %v5447 = vlaneseq
      %v5448 = vshrl.u32 %v5447, 7
      %v5449 = vsub.s32 7, %v5448
      %v5450 = vrot.slane %v458, %v5449
      %v5451 = vmul.f32 %v4941, %v5198
      %v5452 = vmul.f32 %v4945, %v5202
      %v5453 = vmul.f32 %v4949, %v5206
      %v5454 = vmul.f32 %v4953, %v5210
      %v5455 = vmul.f32 %v4957, %v5214
      %v5456 = vmul.f32 %v4961, %v5218
      %v5457 = vmul.f32 %v4965, %v5222
      %v5458 = vmul.f32 %v4969, %v5226
      %v5459 = vmul.f32 %v4973, %v5230
      %v5460 = vmul.f32 %v4977, %v5234
      %v5461 = vmul.f32 %v4981, %v5238
      %v5462 = vmul.f32 %v4985, %v5242
      %v5463 = vmul.f32 %v4989, %v5246
      %v5464 = vmul.f32 %v4993, %v5250
      %v5465 = vmul.f32 %v4997, %v5254
      %v5466 = vmul.f32 %v5001, %v5258
      %v5467 = vmul.f32 %v5005, %v5262
      %v5468 = vmul.f32 %v5009, %v5266
      %v5469 = vmul.f32 %v5013, %v5270
      %v5470 = vmul.f32 %v5017, %v5274
      %v5471 = vmul.f32 %v5021, %v5278
      %v5472 = vmul.f32 %v5025, %v5282
      %v5473 = vmul.f32 %v5029, %v5286
      %v5474 = vmul.f32 %v5033, %v5290
      %v5475 = vmul.f32 %v5037, %v5294
      %v5476 = vmul.f32 %v5041, %v5298
      %v5477 = vmul.f32 %v5045, %v5302
      %v5478 = vmul.f32 %v5049, %v5306
      %v5479 = vmul.f32 %v5053, %v5310
      %v5480 = vmul.f32 %v5057, %v5314
      %v5481 = vmul.f32 %v5061, %v5318
      %v5482 = vmul.f32 %v5065, %v5322
      %v5483 = vmul.f32 %v5069, %v5326
      %v5484 = vmul.f32 %v5073, %v5330
      %v5485 = vmul.f32 %v5077, %v5334
      %v5486 = vmul.f32 %v5081, %v5338
      %v5487 = vmul.f32 %v5085, %v5342
      %v5488 = vmul.f32 %v5089, %v5346
      %v5489 = vmul.f32 %v5093, %v5350
      %v5490 = vmul.f32 %v5097, %v5354
      %v5491 = vmul.f32 %v5101, %v5358
      %v5492 = vmul.f32 %v5105, %v5362
      %v5493 = vmul.f32 %v5109, %v5366
      %v5494 = vmul.f32 %v5113, %v5370
      %v5495 = vmul.f32 %v5117, %v5374
      %v5496 = vmul.f32 %v5121, %v5378
      %v5497 = vmul.f32 %v5125, %v5382
      %v5498 = vmul.f32 %v5129, %v5386
      %v5499 = vmul.f32 %v5133, %v5390
      %v5500 = vmul.f32 %v5137, %v5394
      %v5501 = vmul.f32 %v5141, %v5398
      %v5502 = vmul.f32 %v5145, %v5402
      %v5503 = vmul.f32 %v5149, %v5406
      %v5504 = vmul.f32 %v5153, %v5410
      %v5505 = vmul.f32 %v5157, %v5414
      %v5506 = vmul.f32 %v5161, %v5418
      %v5507 = vmul.f32 %v5165, %v5422
      %v5508 = vmul.f32 %v5169, %v5426
      %v5509 = vmul.f32 %v5173, %v5430
      %v5510 = vmul.f32 %v5177, %v5434
      %v5511 = vmul.f32 %v5181, %v5438
      %v5512 = vmul.f32 %v5185, %v5442
      %v5513 = vmul.f32 %v5189, %v5446
      %v5514 = vmul.f32 %v5193, %v5450
      %v5515 = vadd.f32 %v4875, %v5451
      %v5516 = vadd.f32 %v4876, %v5452
      %v5517 = vadd.f32 %v4877, %v5453
      %v5518 = vadd.f32 %v4878, %v5454
      %v5519 = vadd.f32 %v4879, %v5455
      %v5520 = vadd.f32 %v4880, %v5456
      %v5521 = vadd.f32 %v4881, %v5457
      %v5522 = vadd.f32 %v4882, %v5458
      %v5523 = vadd.f32 %v4883, %v5459
      %v5524 = vadd.f32 %v4884, %v5460
      %v5525 = vadd.f32 %v4885, %v5461
      %v5526 = vadd.f32 %v4886, %v5462
      %v5527 = vadd.f32 %v4887, %v5463
      %v5528 = vadd.f32 %v4888, %v5464
      %v5529 = vadd.f32 %v4889, %v5465
      %v5530 = vadd.f32 %v4890, %v5466
      %v5531 = vadd.f32 %v4891, %v5467
      %v5532 = vadd.f32 %v4892, %v5468
      %v5533 = vadd.f32 %v4893, %v5469
      %v5534 = vadd.f32 %v4894, %v5470
      %v5535 = vadd.f32 %v4895, %v5471
      %v5536 = vadd.f32 %v4896, %v5472
      %v5537 = vadd.f32 %v4897, %v5473
      %v5538 = vadd.f32 %v4898, %v5474
      %v5539 = vadd.f32 %v4899, %v5475
      %v5540 = vadd.f32 %v4900, %v5476
      %v5541 = vadd.f32 %v4901, %v5477
      %v5542 = vadd.f32 %v4902, %v5478
      %v5543 = vadd.f32 %v4903, %v5479
      %v5544 = vadd.f32 %v4904, %v5480
      %v5545 = vadd.f32 %v4905, %v5481
      %v5546 = vadd.f32 %v4906, %v5482
      %v5547 = vadd.f32 %v4907, %v5483
      %v5548 = vadd.f32 %v4908, %v5484
      %v5549 = vadd.f32 %v4909, %v5485
      %v5550 = vadd.f32 %v4910, %v5486
      %v5551 = vadd.f32 %v4911, %v5487
      %v5552 = vadd.f32 %v4912, %v5488
      %v5553 = vadd.f32 %v4913, %v5489
      %v5554 = vadd.f32 %v4914, %v5490
      %v5555 = vadd.f32 %v4915, %v5491
      %v5556 = vadd.f32 %v4916, %v5492
      %v5557 = vadd.f32 %v4917, %v5493
      %v5558 = vadd.f32 %v4918, %v5494
      %v5559 = vadd.f32 %v4919, %v5495
      %v5560 = vadd.f32 %v4920, %v5496
      %v5561 = vadd.f32 %v4921, %v5497
      %v5562 = vadd.f32 %v4922, %v5498
      %v5563 = vadd.f32 %v4923, %v5499
      %v5564 = vadd.f32 %v4924, %v5500
      %v5565 = vadd.f32 %v4925, %v5501
      %v5566 = vadd.f32 %v4926, %v5502
      %v5567 = vadd.f32 %v4927, %v5503
      %v5568 = vadd.f32 %v4928, %v5504
      %v5569 = vadd.f32 %v4929, %v5505
      %v5570 = vadd.f32 %v4930, %v5506
      %v5571 = vadd.f32 %v4931, %v5507
      %v5572 = vadd.f32 %v4932, %v5508
      %v5573 = vadd.f32 %v4933, %v5509
      %v5574 = vadd.f32 %v4934, %v5510
      %v5575 = vadd.f32 %v4935, %v5511
      %v5576 = vadd.f32 %v4936, %v5512
      %v5577 = vadd.f32 %v4937, %v5513
      %v5578 = vadd.f32 %v4938, %v5514
      %v5579 = vadd.f32 %v395, %v5515
      %v5580 = vadd.f32 %v396, %v5516
      %v5581 = vadd.f32 %v397, %v5517
      %v5582 = vadd.f32 %v398, %v5518
      %v5583 = vadd.f32 %v399, %v5519
      %v5584 = vadd.f32 %v400, %v5520
      %v5585 = vadd.f32 %v401, %v5521
      %v5586 = vadd.f32 %v402, %v5522
      %v5587 = vadd.f32 %v403, %v5523
      %v5588 = vadd.f32 %v404, %v5524
      %v5589 = vadd.f32 %v405, %v5525
      %v5590 = vadd.f32 %v406, %v5526
      %v5591 = vadd.f32 %v407, %v5527
      %v5592 = vadd.f32 %v408, %v5528
      %v5593 = vadd.f32 %v409, %v5529
      %v5594 = vadd.f32 %v410, %v5530
      %v5595 = vadd.f32 %v411, %v5531
      %v5596 = vadd.f32 %v412, %v5532
      %v5597 = vadd.f32 %v413, %v5533
      %v5598 = vadd.f32 %v414, %v5534
      %v5599 = vadd.f32 %v415, %v5535
      %v5600 = vadd.f32 %v416, %v5536
      %v5601 = vadd.f32 %v417, %v5537
      %v5602 = vadd.f32 %v418, %v5538
      %v5603 = vadd.f32 %v419, %v5539
      %v5604 = vadd.f32 %v420, %v5540
      %v5605 = vadd.f32 %v421, %v5541
      %v5606 = vadd.f32 %v422, %v5542
      %v5607 = vadd.f32 %v423, %v5543
      %v5608 = vadd.f32 %v424, %v5544
      %v5609 = vadd.f32 %v425, %v5545
      %v5610 = vadd.f32 %v426, %v5546
      %v5611 = vadd.f32 %v427, %v5547
      %v5612 = vadd.f32 %v428, %v5548
      %v5613 = vadd.f32 %v429, %v5549
      %v5614 = vadd.f32 %v430, %v5550
      %v5615 = vadd.f32 %v431, %v5551
      %v5616 = vadd.f32 %v432, %v5552
      %v5617 = vadd.f32 %v433, %v5553
      %v5618 = vadd.f32 %v434, %v5554
      %v5619 = vadd.f32 %v435, %v5555
      %v5620 = vadd.f32 %v436, %v5556
      %v5621 = vadd.f32 %v437, %v5557
      %v5622 = vadd.f32 %v438, %v5558
      %v5623 = vadd.f32 %v439, %v5559
      %v5624 = vadd.f32 %v440, %v5560
      %v5625 = vadd.f32 %v441, %v5561
      %v5626 = vadd.f32 %v442, %v5562
      %v5627 = vadd.f32 %v443, %v5563
      %v5628 = vadd.f32 %v444, %v5564
      %v5629 = vadd.f32 %v445, %v5565
      %v5630 = vadd.f32 %v446, %v5566
      %v5631 = vadd.f32 %v447, %v5567
      %v5632 = vadd.f32 %v448, %v5568
      %v5633 = vadd.f32 %v449, %v5569
      %v5634 = vadd.f32 %v450, %v5570
      %v5635 = vadd.f32 %v451, %v5571
      %v5636 = vadd.f32 %v452, %v5572
      %v5637 = vadd.f32 %v453, %v5573
      %v5638 = vadd.f32 %v454, %v5574
      %v5639 = vadd.f32 %v455, %v5575
      %v5640 = vadd.f32 %v456, %v5576
      %v5641 = vadd.f32 %v457, %v5577
      %v5642 = vadd.f32 %v458, %v5578
      %v5643 = vld [vmem:[%s2] sm:$0xff]
      %v5644 = vld [vmem:[%s2 + $0x8] sm:$0xff]
      %v5645 = vld [vmem:[%s2 + $0x10] sm:$0xff]
      %v5646 = vld [vmem:[%s2 + $0x18] sm:$0xff]
      %v5647 = vld [vmem:[%s2 + $0x20] sm:$0xff]
      %v5648 = vld [vmem:[%s2 + $0x28] sm:$0xff]
      %v5649 = vld [vmem:[%s2 + $0x30] sm:$0xff]
      %v5650 = vld [vmem:[%s2 + $0x38] sm:$0xff]
      %v5651 = vld [vmem:[%s2 + $0x40] sm:$0xff]
      %v5652 = vld [vmem:[%s2 + $0x48] sm:$0xff]
      %v5653 = vld [vmem:[%s2 + $0x50] sm:$0xff]
      %v5654 = vld [vmem:[%s2 + $0x58] sm:$0xff]
      %v5655 = vld [vmem:[%s2 + $0x60] sm:$0xff]
      %v5656 = vld [vmem:[%s2 + $0x68] sm:$0xff]
      %v5657 = vld [vmem:[%s2 + $0x70] sm:$0xff]
      %v5658 = vld [vmem:[%s2 + $0x78] sm:$0xff]
      %v5659 = vld [vmem:[%s3] sm:$0x1]
      %v5661 = vlaneseq
      %v5662 = vshrl.u32 %v5661, 7
      %v5663 = vsub.s32 0, %v5662
      %v5664 = vrot.slane %v5659, %v5663
      %5666 = vmatprep.subr.mxu0 0.0
      %5667 = vmatpush1.msra.mxu0 %v5658
      %5668 = vmatprep.subr.mxu0 0.0
      %5669 = vmatpush1.msra.mxu0 %v5657
      %5670 = vmatprep.subr.mxu0 0.0
      %5671 = vmatpush1.msra.mxu0 %v5656
      %5672 = vmatprep.subr.mxu0 0.0
      %5673 = vmatpush1.msra.mxu0 %v5655
      %5674 = vmatprep.subr.mxu0 0.0
      %5675 = vmatpush1.msra.mxu0 %v5654
      %5676 = vmatprep.subr.mxu0 0.0
      %5677 = vmatpush1.msra.mxu0 %v5653
      %5678 = vmatprep.subr.mxu0 0.0
      %5679 = vmatpush1.msra.mxu0 %v5652
      %5680 = vmatprep.subr.mxu0 0.0
      %5681 = vmatpush1.msra.mxu0 %v5651
      %5682 = vmatprep.subr.mxu0 0.0
      %5683 = vmatpush1.msra.mxu0 %v5650
      %5684 = vmatprep.subr.mxu0 0.0
      %5685 = vmatpush1.msra.mxu0 %v5649
      %5686 = vmatprep.subr.mxu0 0.0
      %5687 = vmatpush1.msra.mxu0 %v5648
      %5688 = vmatprep.subr.mxu0 0.0
      %5689 = vmatpush1.msra.mxu0 %v5647
      %5690 = vmatprep.subr.mxu0 0.0
      %5691 = vmatpush1.msra.mxu0 %v5646
      %5692 = vmatprep.subr.mxu0 0.0
      %5693 = vmatpush1.msra.mxu0 %v5645
      %5694 = vmatprep.subr.mxu0 0.0
      %5695 = vmatpush1.msra.mxu0 %v5644
      %5696 = vmatprep.subr.mxu0 0.0
      %5697 = vmatpush1.msra.mxu0 %v5643
      %5698 = vmatprep.subr.mxu0 0.0
      %5699 = vmatpush2.msra.mxu0 0.0
      %5700 = vmatprep.subr.mxu0 0.0
      %5701 = vmatpush2.msra.mxu0 0.0
      %5702 = vmatprep.subr.mxu0 0.0
      %5703 = vmatpush2.msra.mxu0 0.0
      %5704 = vmatprep.subr.mxu0 0.0
      %5705 = vmatpush2.msra.mxu0 0.0
      %5706 = vmatprep.subr.mxu0 0.0
      %5707 = vmatpush2.msra.mxu0 0.0
      %5708 = vmatprep.subr.mxu0 0.0
      %5709 = vmatpush2.msra.mxu0 0.0
      %5710 = vmatprep.subr.mxu0 0.0
      %5711 = vmatpush2.msra.mxu0 0.0
      %5712 = vmatprep.subr.mxu0 0.0
      %5713 = vmatpush2.msra.mxu0 0.0
      %5714 = vmatprep.subr.mxu0 0.0
      %5715 = vmatpush2.msra.mxu0 0.0
      %5716 = vmatprep.subr.mxu0 0.0
      %5717 = vmatpush2.msra.mxu0 0.0
      %5718 = vmatprep.subr.mxu0 0.0
      %5719 = vmatpush2.msra.mxu0 0.0
      %5720 = vmatprep.subr.mxu0 0.0
      %5721 = vmatpush2.msra.mxu0 0.0
      %5722 = vmatprep.subr.mxu0 0.0
      %5723 = vmatpush2.msra.mxu0 0.0
      %5724 = vmatprep.subr.mxu0 0.0
      %5725 = vmatpush2.msra.mxu0 0.0
      %5726 = vmatprep.subr.mxu0 0.0
      %5727 = vmatpush2.msra.mxu0 0.0
      %5728 = vmatprep.subr.mxu0 0.0
      %5729 = vmatpush2.msra.mxu0 0.0
      %5730 = vmatprep.mubr.f32.mxu0 0.0
      %5731 = vmatmul.mubr.f32.gmra.mxu0 %v5579
      %v5732 = vpop.f32.mrf.mxu0
      %v5733 = vadd.f32 %v5664, %v5732
      %v5734 = vpop.f32.mrf.mxu0
      %5735 = vmatprep.mubr.f32.mxu0 0.0
      %5736 = vmatmul.mubr.f32.gmra.mxu0 %v5580
      %v5737 = vpop.f32.mrf.mxu0
      %v5738 = vadd.f32 %v5664, %v5737
      %v5739 = vpop.f32.mrf.mxu0
      %5740 = vmatprep.mubr.f32.mxu0 0.0
      %5741 = vmatmul.mubr.f32.gmra.mxu0 %v5581
      %v5742 = vpop.f32.mrf.mxu0
      %v5743 = vadd.f32 %v5664, %v5742
      %v5744 = vpop.f32.mrf.mxu0
      %5745 = vmatprep.mubr.f32.mxu0 0.0
      %5746 = vmatmul.mubr.f32.gmra.mxu0 %v5582
      %v5747 = vpop.f32.mrf.mxu0
      %v5748 = vadd.f32 %v5664, %v5747
      %v5749 = vpop.f32.mrf.mxu0
      %5750 = vmatprep.mubr.f32.mxu0 0.0
      %5751 = vmatmul.mubr.f32.gmra.mxu0 %v5583
      %v5752 = vpop.f32.mrf.mxu0
      %v5753 = vadd.f32 %v5664, %v5752
      %v5754 = vpop.f32.mrf.mxu0
      %5755 = vmatprep.mubr.f32.mxu0 0.0
      %5756 = vmatmul.mubr.f32.gmra.mxu0 %v5584
      %v5757 = vpop.f32.mrf.mxu0
      %v5758 = vadd.f32 %v5664, %v5757
      %v5759 = vpop.f32.mrf.mxu0
      %5760 = vmatprep.mubr.f32.mxu0 0.0
      %5761 = vmatmul.mubr.f32.gmra.mxu0 %v5585
      %v5762 = vpop.f32.mrf.mxu0
      %v5763 = vadd.f32 %v5664, %v5762
      %v5764 = vpop.f32.mrf.mxu0
      %5765 = vmatprep.mubr.f32.mxu0 0.0
      %5766 = vmatmul.mubr.f32.gmra.mxu0 %v5586
      %v5767 = vpop.f32.mrf.mxu0
      %v5768 = vadd.f32 %v5664, %v5767
      %v5769 = vpop.f32.mrf.mxu0
      %5770 = vmatprep.mubr.f32.mxu0 0.0
      %5771 = vmatmul.mubr.f32.gmra.mxu0 %v5587
      %v5772 = vpop.f32.mrf.mxu0
      %v5773 = vadd.f32 %v5664, %v5772
      %v5774 = vpop.f32.mrf.mxu0
      %5775 = vmatprep.mubr.f32.mxu0 0.0
      %5776 = vmatmul.mubr.f32.gmra.mxu0 %v5588
      %v5777 = vpop.f32.mrf.mxu0
      %v5778 = vadd.f32 %v5664, %v5777
      %v5779 = vpop.f32.mrf.mxu0
      %5780 = vmatprep.mubr.f32.mxu0 0.0
      %5781 = vmatmul.mubr.f32.gmra.mxu0 %v5589
      %v5782 = vpop.f32.mrf.mxu0
      %v5783 = vadd.f32 %v5664, %v5782
      %v5784 = vpop.f32.mrf.mxu0
      %5785 = vmatprep.mubr.f32.mxu0 0.0
      %5786 = vmatmul.mubr.f32.gmra.mxu0 %v5590
      %v5787 = vpop.f32.mrf.mxu0
      %v5788 = vadd.f32 %v5664, %v5787
      %v5789 = vpop.f32.mrf.mxu0
      %5790 = vmatprep.mubr.f32.mxu0 0.0
      %5791 = vmatmul.mubr.f32.gmra.mxu0 %v5591
      %v5792 = vpop.f32.mrf.mxu0
      %v5793 = vadd.f32 %v5664, %v5792
      %v5794 = vpop.f32.mrf.mxu0
      %5795 = vmatprep.mubr.f32.mxu0 0.0
      %5796 = vmatmul.mubr.f32.gmra.mxu0 %v5592
      %v5797 = vpop.f32.mrf.mxu0
      %v5798 = vadd.f32 %v5664, %v5797
      %v5799 = vpop.f32.mrf.mxu0
      %5800 = vmatprep.mubr.f32.mxu0 0.0
      %5801 = vmatmul.mubr.f32.gmra.mxu0 %v5593
      %v5802 = vpop.f32.mrf.mxu0
      %v5803 = vadd.f32 %v5664, %v5802
      %v5804 = vpop.f32.mrf.mxu0
      %5805 = vmatprep.mubr.f32.mxu0 0.0
      %5806 = vmatmul.mubr.f32.gmra.mxu0 %v5594
      %v5807 = vpop.f32.mrf.mxu0
      %v5808 = vadd.f32 %v5664, %v5807
      %v5809 = vpop.f32.mrf.mxu0
      %5810 = vmatprep.mubr.f32.mxu0 0.0
      %5811 = vmatmul.mubr.f32.gmra.mxu0 %v5595
      %v5812 = vpop.f32.mrf.mxu0
      %v5813 = vadd.f32 %v5664, %v5812
      %v5814 = vpop.f32.mrf.mxu0
      %5815 = vmatprep.mubr.f32.mxu0 0.0
      %5816 = vmatmul.mubr.f32.gmra.mxu0 %v5596
      %v5817 = vpop.f32.mrf.mxu0
      %v5818 = vadd.f32 %v5664, %v5817
      %v5819 = vpop.f32.mrf.mxu0
      %5820 = vmatprep.mubr.f32.mxu0 0.0
      %5821 = vmatmul.mubr.f32.gmra.mxu0 %v5597
      %v5822 = vpop.f32.mrf.mxu0
      %v5823 = vadd.f32 %v5664, %v5822
      %v5824 = vpop.f32.mrf.mxu0
      %5825 = vmatprep.mubr.f32.mxu0 0.0
      %5826 = vmatmul.mubr.f32.gmra.mxu0 %v5598
      %v5827 = vpop.f32.mrf.mxu0
      %v5828 = vadd.f32 %v5664, %v5827
      %v5829 = vpop.f32.mrf.mxu0
      %5830 = vmatprep.mubr.f32.mxu0 0.0
      %5831 = vmatmul.mubr.f32.gmra.mxu0 %v5599
      %v5832 = vpop.f32.mrf.mxu0
      %v5833 = vadd.f32 %v5664, %v5832
      %v5834 = vpop.f32.mrf.mxu0
      %5835 = vmatprep.mubr.f32.mxu0 0.0
      %5836 = vmatmul.mubr.f32.gmra.mxu0 %v5600
      %v5837 = vpop.f32.mrf.mxu0
      %v5838 = vadd.f32 %v5664, %v5837
      %v5839 = vpop.f32.mrf.mxu0
      %5840 = vmatprep.mubr.f32.mxu0 0.0
      %5841 = vmatmul.mubr.f32.gmra.mxu0 %v5601
      %v5842 = vpop.f32.mrf.mxu0
      %v5843 = vadd.f32 %v5664, %v5842
      %v5844 = vpop.f32.mrf.mxu0
      %5845 = vmatprep.mubr.f32.mxu0 0.0
      %5846 = vmatmul.mubr.f32.gmra.mxu0 %v5602
      %v5847 = vpop.f32.mrf.mxu0
      %v5848 = vadd.f32 %v5664, %v5847
      %v5849 = vpop.f32.mrf.mxu0
      %5850 = vmatprep.mubr.f32.mxu0 0.0
      %5851 = vmatmul.mubr.f32.gmra.mxu0 %v5603
      %v5852 = vpop.f32.mrf.mxu0
      %v5853 = vadd.f32 %v5664, %v5852
      %v5854 = vpop.f32.mrf.mxu0
      %5855 = vmatprep.mubr.f32.mxu0 0.0
      %5856 = vmatmul.mubr.f32.gmra.mxu0 %v5604
      %v5857 = vpop.f32.mrf.mxu0
      %v5858 = vadd.f32 %v5664, %v5857
      %v5859 = vpop.f32.mrf.mxu0
      %5860 = vmatprep.mubr.f32.mxu0 0.0
      %5861 = vmatmul.mubr.f32.gmra.mxu0 %v5605
      %v5862 = vpop.f32.mrf.mxu0
      %v5863 = vadd.f32 %v5664, %v5862
      %v5864 = vpop.f32.mrf.mxu0
      %5865 = vmatprep.mubr.f32.mxu0 0.0
      %5866 = vmatmul.mubr.f32.gmra.mxu0 %v5606
      %v5867 = vpop.f32.mrf.mxu0
      %v5868 = vadd.f32 %v5664, %v5867
      %v5869 = vpop.f32.mrf.mxu0
      %5870 = vmatprep.mubr.f32.mxu0 0.0
      %5871 = vmatmul.mubr.f32.gmra.mxu0 %v5607
      %v5872 = vpop.f32.mrf.mxu0
      %v5873 = vadd.f32 %v5664, %v5872
      %v5874 = vpop.f32.mrf.mxu0
      %5875 = vmatprep.mubr.f32.mxu0 0.0
      %5876 = vmatmul.mubr.f32.gmra.mxu0 %v5608
      %v5877 = vpop.f32.mrf.mxu0
      %v5878 = vadd.f32 %v5664, %v5877
      %v5879 = vpop.f32.mrf.mxu0
      %5880 = vmatprep.mubr.f32.mxu0 0.0
      %5881 = vmatmul.mubr.f32.gmra.mxu0 %v5609
      %v5882 = vpop.f32.mrf.mxu0
      %v5883 = vadd.f32 %v5664, %v5882
      %v5884 = vpop.f32.mrf.mxu0
      %5885 = vmatprep.mubr.f32.mxu0 0.0
      %5886 = vmatmul.mubr.f32.gmra.mxu0 %v5610
      %v5887 = vpop.f32.mrf.mxu0
      %v5888 = vadd.f32 %v5664, %v5887
      %v5889 = vpop.f32.mrf.mxu0
      %5890 = vmatprep.mubr.f32.mxu0 0.0
      %5891 = vmatmul.mubr.f32.gmra.mxu0 %v5611
      %v5892 = vpop.f32.mrf.mxu0
      %v5893 = vadd.f32 %v5664, %v5892
      %v5894 = vpop.f32.mrf.mxu0
      %5895 = vmatprep.mubr.f32.mxu0 0.0
      %5896 = vmatmul.mubr.f32.gmra.mxu0 %v5612
      %v5897 = vpop.f32.mrf.mxu0
      %v5898 = vadd.f32 %v5664, %v5897
      %v5899 = vpop.f32.mrf.mxu0
      %5900 = vmatprep.mubr.f32.mxu0 0.0
      %5901 = vmatmul.mubr.f32.gmra.mxu0 %v5613
      %v5902 = vpop.f32.mrf.mxu0
      %v5903 = vadd.f32 %v5664, %v5902
      %v5904 = vpop.f32.mrf.mxu0
      %5905 = vmatprep.mubr.f32.mxu0 0.0
      %5906 = vmatmul.mubr.f32.gmra.mxu0 %v5614
      %v5907 = vpop.f32.mrf.mxu0
      %v5908 = vadd.f32 %v5664, %v5907
      %v5909 = vpop.f32.mrf.mxu0
      %5910 = vmatprep.mubr.f32.mxu0 0.0
      %5911 = vmatmul.mubr.f32.gmra.mxu0 %v5615
      %v5912 = vpop.f32.mrf.mxu0
      %v5913 = vadd.f32 %v5664, %v5912
      %v5914 = vpop.f32.mrf.mxu0
      %5915 = vmatprep.mubr.f32.mxu0 0.0
      %5916 = vmatmul.mubr.f32.gmra.mxu0 %v5616
      %v5917 = vpop.f32.mrf.mxu0
      %v5918 = vadd.f32 %v5664, %v5917
      %v5919 = vpop.f32.mrf.mxu0
      %5920 = vmatprep.mubr.f32.mxu0 0.0
      %5921 = vmatmul.mubr.f32.gmra.mxu0 %v5617
      %v5922 = vpop.f32.mrf.mxu0
      %v5923 = vadd.f32 %v5664, %v5922
      %v5924 = vpop.f32.mrf.mxu0
      %5925 = vmatprep.mubr.f32.mxu0 0.0
      %5926 = vmatmul.mubr.f32.gmra.mxu0 %v5618
      %v5927 = vpop.f32.mrf.mxu0
      %v5928 = vadd.f32 %v5664, %v5927
      %v5929 = vpop.f32.mrf.mxu0
      %5930 = vmatprep.mubr.f32.mxu0 0.0
      %5931 = vmatmul.mubr.f32.gmra.mxu0 %v5619
      %v5932 = vpop.f32.mrf.mxu0
      %v5933 = vadd.f32 %v5664, %v5932
      %v5934 = vpop.f32.mrf.mxu0
      %5935 = vmatprep.mubr.f32.mxu0 0.0
      %5936 = vmatmul.mubr.f32.gmra.mxu0 %v5620
      %v5937 = vpop.f32.mrf.mxu0
      %v5938 = vadd.f32 %v5664, %v5937
      %v5939 = vpop.f32.mrf.mxu0
      %5940 = vmatprep.mubr.f32.mxu0 0.0
      %5941 = vmatmul.mubr.f32.gmra.mxu0 %v5621
      %v5942 = vpop.f32.mrf.mxu0
      %v5943 = vadd.f32 %v5664, %v5942
      %v5944 = vpop.f32.mrf.mxu0
      %5945 = vmatprep.mubr.f32.mxu0 0.0
      %5946 = vmatmul.mubr.f32.gmra.mxu0 %v5622
      %v5947 = vpop.f32.mrf.mxu0
      %v5948 = vadd.f32 %v5664, %v5947
      %v5949 = vpop.f32.mrf.mxu0
      %5950 = vmatprep.mubr.f32.mxu0 0.0
      %5951 = vmatmul.mubr.f32.gmra.mxu0 %v5623
      %v5952 = vpop.f32.mrf.mxu0
      %v5953 = vadd.f32 %v5664, %v5952
      %v5954 = vpop.f32.mrf.mxu0
      %5955 = vmatprep.mubr.f32.mxu0 0.0
      %5956 = vmatmul.mubr.f32.gmra.mxu0 %v5624
      %v5957 = vpop.f32.mrf.mxu0
      %v5958 = vadd.f32 %v5664, %v5957
      %v5959 = vpop.f32.mrf.mxu0
      %5960 = vmatprep.mubr.f32.mxu0 0.0
      %5961 = vmatmul.mubr.f32.gmra.mxu0 %v5625
      %v5962 = vpop.f32.mrf.mxu0
      %v5963 = vadd.f32 %v5664, %v5962
      %v5964 = vpop.f32.mrf.mxu0
      %5965 = vmatprep.mubr.f32.mxu0 0.0
      %5966 = vmatmul.mubr.f32.gmra.mxu0 %v5626
      %v5967 = vpop.f32.mrf.mxu0
      %v5968 = vadd.f32 %v5664, %v5967
      %v5969 = vpop.f32.mrf.mxu0
      %5970 = vmatprep.mubr.f32.mxu0 0.0
      %5971 = vmatmul.mubr.f32.gmra.mxu0 %v5627
      %v5972 = vpop.f32.mrf.mxu0
      %v5973 = vadd.f32 %v5664, %v5972
      %v5974 = vpop.f32.mrf.mxu0
      %5975 = vmatprep.mubr.f32.mxu0 0.0
      %5976 = vmatmul.mubr.f32.gmra.mxu0 %v5628
      %v5977 = vpop.f32.mrf.mxu0
      %v5978 = vadd.f32 %v5664, %v5977
      %v5979 = vpop.f32.mrf.mxu0
      %5980 = vmatprep.mubr.f32.mxu0 0.0
      %5981 = vmatmul.mubr.f32.gmra.mxu0 %v5629
      %v5982 = vpop.f32.mrf.mxu0
      %v5983 = vadd.f32 %v5664, %v5982
      %v5984 = vpop.f32.mrf.mxu0
      %5985 = vmatprep.mubr.f32.mxu0 0.0
      %5986 = vmatmul.mubr.f32.gmra.mxu0 %v5630
      %v5987 = vpop.f32.mrf.mxu0
      %v5988 = vadd.f32 %v5664, %v5987
      %v5989 = vpop.f32.mrf.mxu0
      %5990 = vmatprep.mubr.f32.mxu0 0.0
      %5991 = vmatmul.mubr.f32.gmra.mxu0 %v5631
      %v5992 = vpop.f32.mrf.mxu0
      %v5993 = vadd.f32 %v5664, %v5992
      %v5994 = vpop.f32.mrf.mxu0
      %5995 = vmatprep.mubr.f32.mxu0 0.0
      %5996 = vmatmul.mubr.f32.gmra.mxu0 %v5632
      %v5997 = vpop.f32.mrf.mxu0
      %v5998 = vadd.f32 %v5664, %v5997
      %v5999 = vpop.f32.mrf.mxu0
      %6000 = vmatprep.mubr.f32.mxu0 0.0
      %6001 = vmatmul.mubr.f32.gmra.mxu0 %v5633
      %v6002 = vpop.f32.mrf.mxu0
      %v6003 = vadd.f32 %v5664, %v6002
      %v6004 = vpop.f32.mrf.mxu0
      %6005 = vmatprep.mubr.f32.mxu0 0.0
      %6006 = vmatmul.mubr.f32.gmra.mxu0 %v5634
      %v6007 = vpop.f32.mrf.mxu0
      %v6008 = vadd.f32 %v5664, %v6007
      %v6009 = vpop.f32.mrf.mxu0
      %6010 = vmatprep.mubr.f32.mxu0 0.0
      %6011 = vmatmul.mubr.f32.gmra.mxu0 %v5635
      %v6012 = vpop.f32.mrf.mxu0
      %v6013 = vadd.f32 %v5664, %v6012
      %v6014 = vpop.f32.mrf.mxu0
      %6015 = vmatprep.mubr.f32.mxu0 0.0
      %6016 = vmatmul.mubr.f32.gmra.mxu0 %v5636
      %v6017 = vpop.f32.mrf.mxu0
      %v6018 = vadd.f32 %v5664, %v6017
      %v6019 = vpop.f32.mrf.mxu0
      %6020 = vmatprep.mubr.f32.mxu0 0.0
      %6021 = vmatmul.mubr.f32.gmra.mxu0 %v5637
      %v6022 = vpop.f32.mrf.mxu0
      %v6023 = vadd.f32 %v5664, %v6022
      %v6024 = vpop.f32.mrf.mxu0
      %6025 = vmatprep.mubr.f32.mxu0 0.0
      %6026 = vmatmul.mubr.f32.gmra.mxu0 %v5638
      %v6027 = vpop.f32.mrf.mxu0
      %v6028 = vadd.f32 %v5664, %v6027
      %v6029 = vpop.f32.mrf.mxu0
      %6030 = vmatprep.mubr.f32.mxu0 0.0
      %6031 = vmatmul.mubr.f32.gmra.mxu0 %v5639
      %v6032 = vpop.f32.mrf.mxu0
      %v6033 = vadd.f32 %v5664, %v6032
      %v6034 = vpop.f32.mrf.mxu0
      %6035 = vmatprep.mubr.f32.mxu0 0.0
      %6036 = vmatmul.mubr.f32.gmra.mxu0 %v5640
      %v6037 = vpop.f32.mrf.mxu0
      %v6038 = vadd.f32 %v5664, %v6037
      %v6039 = vpop.f32.mrf.mxu0
      %6040 = vmatprep.mubr.f32.mxu0 0.0
      %6041 = vmatmul.mubr.f32.gmra.mxu0 %v5641
      %v6042 = vpop.f32.mrf.mxu0
      %v6043 = vadd.f32 %v5664, %v6042
      %v6044 = vpop.f32.mrf.mxu0
      %6045 = vmatprep.mubr.f32.mxu0 0.0
      %6046 = vmatmul.mubr.f32.gmra.mxu0 %v5642
      %v6047 = vpop.f32.mrf.mxu0
      %v6048 = vadd.f32 %v5664, %v6047
      %v6049 = vpop.f32.mrf.mxu0
      %6050 = vdwg.mxu0
      %v6051 = vlaneseq
      %v6052 = vshrl.u32 %v6051, 7
      %v6053 = vsub.s32 0, %v6052
      %v6054 = vrot.slane %v5733, %v6053
      %v6055 = vlaneseq
      %v6056 = vshrl.u32 %v6055, 7
      %v6057 = vsub.s32 0, %v6056
      %v6058 = vrot.slane %v5738, %v6057
      %v6059 = vlaneseq
      %v6060 = vshrl.u32 %v6059, 7
      %v6061 = vsub.s32 0, %v6060
      %v6062 = vrot.slane %v5743, %v6061
      %v6063 = vlaneseq
      %v6064 = vshrl.u32 %v6063, 7
      %v6065 = vsub.s32 0, %v6064
      %v6066 = vrot.slane %v5748, %v6065
      %v6067 = vlaneseq
      %v6068 = vshrl.u32 %v6067, 7
      %v6069 = vsub.s32 0, %v6068
      %v6070 = vrot.slane %v5753, %v6069
      %v6071 = vlaneseq
      %v6072 = vshrl.u32 %v6071, 7
      %v6073 = vsub.s32 0, %v6072
      %v6074 = vrot.slane %v5758, %v6073
      %v6075 = vlaneseq
      %v6076 = vshrl.u32 %v6075, 7
      %v6077 = vsub.s32 0, %v6076
      %v6078 = vrot.slane %v5763, %v6077
      %v6079 = vlaneseq
      %v6080 = vshrl.u32 %v6079, 7
      %v6081 = vsub.s32 0, %v6080
      %v6082 = vrot.slane %v5768, %v6081
      %v6083 = vlaneseq
      %v6084 = vshrl.u32 %v6083, 7
      %v6085 = vsub.s32 0, %v6084
      %v6086 = vrot.slane %v5773, %v6085
      %v6087 = vlaneseq
      %v6088 = vshrl.u32 %v6087, 7
      %v6089 = vsub.s32 0, %v6088
      %v6090 = vrot.slane %v5778, %v6089
      %v6091 = vlaneseq
      %v6092 = vshrl.u32 %v6091, 7
      %v6093 = vsub.s32 0, %v6092
      %v6094 = vrot.slane %v5783, %v6093
      %v6095 = vlaneseq
      %v6096 = vshrl.u32 %v6095, 7
      %v6097 = vsub.s32 0, %v6096
      %v6098 = vrot.slane %v5788, %v6097
      %v6099 = vlaneseq
      %v6100 = vshrl.u32 %v6099, 7
      %v6101 = vsub.s32 0, %v6100
      %v6102 = vrot.slane %v5793, %v6101
      %v6103 = vlaneseq
      %v6104 = vshrl.u32 %v6103, 7
      %v6105 = vsub.s32 0, %v6104
      %v6106 = vrot.slane %v5798, %v6105
      %v6107 = vlaneseq
      %v6108 = vshrl.u32 %v6107, 7
      %v6109 = vsub.s32 0, %v6108
      %v6110 = vrot.slane %v5803, %v6109
      %v6111 = vlaneseq
      %v6112 = vshrl.u32 %v6111, 7
      %v6113 = vsub.s32 0, %v6112
      %v6114 = vrot.slane %v5808, %v6113
      %v6115 = vlaneseq
      %v6116 = vshrl.u32 %v6115, 7
      %v6117 = vsub.s32 0, %v6116
      %v6118 = vrot.slane %v5813, %v6117
      %v6119 = vlaneseq
      %v6120 = vshrl.u32 %v6119, 7
      %v6121 = vsub.s32 0, %v6120
      %v6122 = vrot.slane %v5818, %v6121
      %v6123 = vlaneseq
      %v6124 = vshrl.u32 %v6123, 7
      %v6125 = vsub.s32 0, %v6124
      %v6126 = vrot.slane %v5823, %v6125
      %v6127 = vlaneseq
      %v6128 = vshrl.u32 %v6127, 7
      %v6129 = vsub.s32 0, %v6128
      %v6130 = vrot.slane %v5828, %v6129
      %v6131 = vlaneseq
      %v6132 = vshrl.u32 %v6131, 7
      %v6133 = vsub.s32 0, %v6132
      %v6134 = vrot.slane %v5833, %v6133
      %v6135 = vlaneseq
      %v6136 = vshrl.u32 %v6135, 7
      %v6137 = vsub.s32 0, %v6136
      %v6138 = vrot.slane %v5838, %v6137
      %v6139 = vlaneseq
      %v6140 = vshrl.u32 %v6139, 7
      %v6141 = vsub.s32 0, %v6140
      %v6142 = vrot.slane %v5843, %v6141
      %v6143 = vlaneseq
      %v6144 = vshrl.u32 %v6143, 7
      %v6145 = vsub.s32 0, %v6144
      %v6146 = vrot.slane %v5848, %v6145
      %v6147 = vlaneseq
      %v6148 = vshrl.u32 %v6147, 7
      %v6149 = vsub.s32 0, %v6148
      %v6150 = vrot.slane %v5853, %v6149
      %v6151 = vlaneseq
      %v6152 = vshrl.u32 %v6151, 7
      %v6153 = vsub.s32 0, %v6152
      %v6154 = vrot.slane %v5858, %v6153
      %v6155 = vlaneseq
      %v6156 = vshrl.u32 %v6155, 7
      %v6157 = vsub.s32 0, %v6156
      %v6158 = vrot.slane %v5863, %v6157
      %v6159 = vlaneseq
      %v6160 = vshrl.u32 %v6159, 7
      %v6161 = vsub.s32 0, %v6160
      %v6162 = vrot.slane %v5868, %v6161
      %v6163 = vlaneseq
      %v6164 = vshrl.u32 %v6163, 7
      %v6165 = vsub.s32 0, %v6164
      %v6166 = vrot.slane %v5873, %v6165
      %v6167 = vlaneseq
      %v6168 = vshrl.u32 %v6167, 7
      %v6169 = vsub.s32 0, %v6168
      %v6170 = vrot.slane %v5878, %v6169
      %v6171 = vlaneseq
      %v6172 = vshrl.u32 %v6171, 7
      %v6173 = vsub.s32 0, %v6172
      %v6174 = vrot.slane %v5883, %v6173
      %v6175 = vlaneseq
      %v6176 = vshrl.u32 %v6175, 7
      %v6177 = vsub.s32 0, %v6176
      %v6178 = vrot.slane %v5888, %v6177
      %v6179 = vlaneseq
      %v6180 = vshrl.u32 %v6179, 7
      %v6181 = vsub.s32 0, %v6180
      %v6182 = vrot.slane %v5893, %v6181
      %v6183 = vlaneseq
      %v6184 = vshrl.u32 %v6183, 7
      %v6185 = vsub.s32 0, %v6184
      %v6186 = vrot.slane %v5898, %v6185
      %v6187 = vlaneseq
      %v6188 = vshrl.u32 %v6187, 7
      %v6189 = vsub.s32 0, %v6188
      %v6190 = vrot.slane %v5903, %v6189
      %v6191 = vlaneseq
      %v6192 = vshrl.u32 %v6191, 7
      %v6193 = vsub.s32 0, %v6192
      %v6194 = vrot.slane %v5908, %v6193
      %v6195 = vlaneseq
      %v6196 = vshrl.u32 %v6195, 7
      %v6197 = vsub.s32 0, %v6196
      %v6198 = vrot.slane %v5913, %v6197
      %v6199 = vlaneseq
      %v6200 = vshrl.u32 %v6199, 7
      %v6201 = vsub.s32 0, %v6200
      %v6202 = vrot.slane %v5918, %v6201
      %v6203 = vlaneseq
      %v6204 = vshrl.u32 %v6203, 7
      %v6205 = vsub.s32 0, %v6204
      %v6206 = vrot.slane %v5923, %v6205
      %v6207 = vlaneseq
      %v6208 = vshrl.u32 %v6207, 7
      %v6209 = vsub.s32 0, %v6208
      %v6210 = vrot.slane %v5928, %v6209
      %v6211 = vlaneseq
      %v6212 = vshrl.u32 %v6211, 7
      %v6213 = vsub.s32 0, %v6212
      %v6214 = vrot.slane %v5933, %v6213
      %v6215 = vlaneseq
      %v6216 = vshrl.u32 %v6215, 7
      %v6217 = vsub.s32 0, %v6216
      %v6218 = vrot.slane %v5938, %v6217
      %v6219 = vlaneseq
      %v6220 = vshrl.u32 %v6219, 7
      %v6221 = vsub.s32 0, %v6220
      %v6222 = vrot.slane %v5943, %v6221
      %v6223 = vlaneseq
      %v6224 = vshrl.u32 %v6223, 7
      %v6225 = vsub.s32 0, %v6224
      %v6226 = vrot.slane %v5948, %v6225
      %v6227 = vlaneseq
      %v6228 = vshrl.u32 %v6227, 7
      %v6229 = vsub.s32 0, %v6228
      %v6230 = vrot.slane %v5953, %v6229
      %v6231 = vlaneseq
      %v6232 = vshrl.u32 %v6231, 7
      %v6233 = vsub.s32 0, %v6232
      %v6234 = vrot.slane %v5958, %v6233
      %v6235 = vlaneseq
      %v6236 = vshrl.u32 %v6235, 7
      %v6237 = vsub.s32 0, %v6236
      %v6238 = vrot.slane %v5963, %v6237
      %v6239 = vlaneseq
      %v6240 = vshrl.u32 %v6239, 7
      %v6241 = vsub.s32 0, %v6240
      %v6242 = vrot.slane %v5968, %v6241
      %v6243 = vlaneseq
      %v6244 = vshrl.u32 %v6243, 7
      %v6245 = vsub.s32 0, %v6244
      %v6246 = vrot.slane %v5973, %v6245
      %v6247 = vlaneseq
      %v6248 = vshrl.u32 %v6247, 7
      %v6249 = vsub.s32 0, %v6248
      %v6250 = vrot.slane %v5978, %v6249
      %v6251 = vlaneseq
      %v6252 = vshrl.u32 %v6251, 7
      %v6253 = vsub.s32 0, %v6252
      %v6254 = vrot.slane %v5983, %v6253
      %v6255 = vlaneseq
      %v6256 = vshrl.u32 %v6255, 7
      %v6257 = vsub.s32 0, %v6256
      %v6258 = vrot.slane %v5988, %v6257
      %v6259 = vlaneseq
      %v6260 = vshrl.u32 %v6259, 7
      %v6261 = vsub.s32 0, %v6260
      %v6262 = vrot.slane %v5993, %v6261
      %v6263 = vlaneseq
      %v6264 = vshrl.u32 %v6263, 7
      %v6265 = vsub.s32 0, %v6264
      %v6266 = vrot.slane %v5998, %v6265
      %v6267 = vlaneseq
      %v6268 = vshrl.u32 %v6267, 7
      %v6269 = vsub.s32 0, %v6268
      %v6270 = vrot.slane %v6003, %v6269
      %v6271 = vlaneseq
      %v6272 = vshrl.u32 %v6271, 7
      %v6273 = vsub.s32 0, %v6272
      %v6274 = vrot.slane %v6008, %v6273
      %v6275 = vlaneseq
      %v6276 = vshrl.u32 %v6275, 7
      %v6277 = vsub.s32 0, %v6276
      %v6278 = vrot.slane %v6013, %v6277
      %v6279 = vlaneseq
      %v6280 = vshrl.u32 %v6279, 7
      %v6281 = vsub.s32 0, %v6280
      %v6282 = vrot.slane %v6018, %v6281
      %v6283 = vlaneseq
      %v6284 = vshrl.u32 %v6283, 7
      %v6285 = vsub.s32 0, %v6284
      %v6286 = vrot.slane %v6023, %v6285
      %v6287 = vlaneseq
      %v6288 = vshrl.u32 %v6287, 7
      %v6289 = vsub.s32 0, %v6288
      %v6290 = vrot.slane %v6028, %v6289
      %v6291 = vlaneseq
      %v6292 = vshrl.u32 %v6291, 7
      %v6293 = vsub.s32 0, %v6292
      %v6294 = vrot.slane %v6033, %v6293
      %v6295 = vlaneseq
      %v6296 = vshrl.u32 %v6295, 7
      %v6297 = vsub.s32 0, %v6296
      %v6298 = vrot.slane %v6038, %v6297
      %v6299 = vlaneseq
      %v6300 = vshrl.u32 %v6299, 7
      %v6301 = vsub.s32 0, %v6300
      %v6302 = vrot.slane %v6043, %v6301
      %v6303 = vlaneseq
      %v6304 = vshrl.u32 %v6303, 7
      %v6305 = vsub.s32 0, %v6304
      %v6306 = vrot.slane %v6048, %v6305
      %v6307 = vmul.f32 %v462, %v6054
      %v6308 = vmul.f32 %v467, %v6058
      %v6309 = vmul.f32 %v472, %v6062
      %v6310 = vmul.f32 %v477, %v6066
      %v6311 = vmul.f32 %v482, %v6070
      %v6312 = vmul.f32 %v487, %v6074
      %v6313 = vmul.f32 %v492, %v6078
      %v6314 = vmul.f32 %v497, %v6082
      %v6315 = vmul.f32 %v502, %v6086
      %v6316 = vmul.f32 %v507, %v6090
      %v6317 = vmul.f32 %v512, %v6094
      %v6318 = vmul.f32 %v517, %v6098
      %v6319 = vmul.f32 %v522, %v6102
      %v6320 = vmul.f32 %v527, %v6106
      %v6321 = vmul.f32 %v532, %v6110
      %v6322 = vmul.f32 %v537, %v6114
      %v6323 = vmul.f32 %v542, %v6118
      %v6324 = vmul.f32 %v547, %v6122
      %v6325 = vmul.f32 %v552, %v6126
      %v6326 = vmul.f32 %v557, %v6130
      %v6327 = vmul.f32 %v562, %v6134
      %v6328 = vmul.f32 %v567, %v6138
      %v6329 = vmul.f32 %v572, %v6142
      %v6330 = vmul.f32 %v577, %v6146
      %v6331 = vmul.f32 %v582, %v6150
      %v6332 = vmul.f32 %v587, %v6154
      %v6333 = vmul.f32 %v592, %v6158
      %v6334 = vmul.f32 %v597, %v6162
      %v6335 = vmul.f32 %v602, %v6166
      %v6336 = vmul.f32 %v607, %v6170
      %v6337 = vmul.f32 %v612, %v6174
      %v6338 = vmul.f32 %v617, %v6178
      %v6339 = vmul.f32 %v622, %v6182
      %v6340 = vmul.f32 %v627, %v6186
      %v6341 = vmul.f32 %v632, %v6190
      %v6342 = vmul.f32 %v637, %v6194
      %v6343 = vmul.f32 %v642, %v6198
      %v6344 = vmul.f32 %v647, %v6202
      %v6345 = vmul.f32 %v652, %v6206
      %v6346 = vmul.f32 %v657, %v6210
      %v6347 = vmul.f32 %v662, %v6214
      %v6348 = vmul.f32 %v667, %v6218
      %v6349 = vmul.f32 %v672, %v6222
      %v6350 = vmul.f32 %v677, %v6226
      %v6351 = vmul.f32 %v682, %v6230
      %v6352 = vmul.f32 %v687, %v6234
      %v6353 = vmul.f32 %v692, %v6238
      %v6354 = vmul.f32 %v697, %v6242
      %v6355 = vmul.f32 %v702, %v6246
      %v6356 = vmul.f32 %v707, %v6250
      %v6357 = vmul.f32 %v712, %v6254
      %v6358 = vmul.f32 %v717, %v6258
      %v6359 = vmul.f32 %v722, %v6262
      %v6360 = vmul.f32 %v727, %v6266
      %v6361 = vmul.f32 %v732, %v6270
      %v6362 = vmul.f32 %v737, %v6274
      %v6363 = vmul.f32 %v742, %v6278
      %v6364 = vmul.f32 %v747, %v6282
      %v6365 = vmul.f32 %v752, %v6286
      %v6366 = vmul.f32 %v757, %v6290
      %v6367 = vmul.f32 %v762, %v6294
      %v6368 = vmul.f32 %v767, %v6298
      %v6369 = vmul.f32 %v772, %v6302
      %v6370 = vmul.f32 %v777, %v6306
      %v6371 = vlaneseq
      %v6372 = vshrl.u32 %v6371, 7
      %v6373 = vsub.s32 1, %v6372
      %v6374 = vrot.slane %v5733, %v6373
      %v6375 = vlaneseq
      %v6376 = vshrl.u32 %v6375, 7
      %v6377 = vsub.s32 1, %v6376
      %v6378 = vrot.slane %v5738, %v6377
      %v6379 = vlaneseq
      %v6380 = vshrl.u32 %v6379, 7
      %v6381 = vsub.s32 1, %v6380
      %v6382 = vrot.slane %v5743, %v6381
      %v6383 = vlaneseq
      %v6384 = vshrl.u32 %v6383, 7
      %v6385 = vsub.s32 1, %v6384
      %v6386 = vrot.slane %v5748, %v6385
      %v6387 = vlaneseq
      %v6388 = vshrl.u32 %v6387, 7
      %v6389 = vsub.s32 1, %v6388
      %v6390 = vrot.slane %v5753, %v6389
      %v6391 = vlaneseq
      %v6392 = vshrl.u32 %v6391, 7
      %v6393 = vsub.s32 1, %v6392
      %v6394 = vrot.slane %v5758, %v6393
      %v6395 = vlaneseq
      %v6396 = vshrl.u32 %v6395, 7
      %v6397 = vsub.s32 1, %v6396
      %v6398 = vrot.slane %v5763, %v6397
      %v6399 = vlaneseq
      %v6400 = vshrl.u32 %v6399, 7
      %v6401 = vsub.s32 1, %v6400
      %v6402 = vrot.slane %v5768, %v6401
      %v6403 = vlaneseq
      %v6404 = vshrl.u32 %v6403, 7
      %v6405 = vsub.s32 1, %v6404
      %v6406 = vrot.slane %v5773, %v6405
      %v6407 = vlaneseq
      %v6408 = vshrl.u32 %v6407, 7
      %v6409 = vsub.s32 1, %v6408
      %v6410 = vrot.slane %v5778, %v6409
      %v6411 = vlaneseq
      %v6412 = vshrl.u32 %v6411, 7
      %v6413 = vsub.s32 1, %v6412
      %v6414 = vrot.slane %v5783, %v6413
      %v6415 = vlaneseq
      %v6416 = vshrl.u32 %v6415, 7
      %v6417 = vsub.s32 1, %v6416
      %v6418 = vrot.slane %v5788, %v6417
      %v6419 = vlaneseq
      %v6420 = vshrl.u32 %v6419, 7
      %v6421 = vsub.s32 1, %v6420
      %v6422 = vrot.slane %v5793, %v6421
      %v6423 = vlaneseq
      %v6424 = vshrl.u32 %v6423, 7
      %v6425 = vsub.s32 1, %v6424
      %v6426 = vrot.slane %v5798, %v6425
      %v6427 = vlaneseq
      %v6428 = vshrl.u32 %v6427, 7
      %v6429 = vsub.s32 1, %v6428
      %v6430 = vrot.slane %v5803, %v6429
      %v6431 = vlaneseq
      %v6432 = vshrl.u32 %v6431, 7
      %v6433 = vsub.s32 1, %v6432
      %v6434 = vrot.slane %v5808, %v6433
      %v6435 = vlaneseq
      %v6436 = vshrl.u32 %v6435, 7
      %v6437 = vsub.s32 1, %v6436
      %v6438 = vrot.slane %v5813, %v6437
      %v6439 = vlaneseq
      %v6440 = vshrl.u32 %v6439, 7
      %v6441 = vsub.s32 1, %v6440
      %v6442 = vrot.slane %v5818, %v6441
      %v6443 = vlaneseq
      %v6444 = vshrl.u32 %v6443, 7
      %v6445 = vsub.s32 1, %v6444
      %v6446 = vrot.slane %v5823, %v6445
      %v6447 = vlaneseq
      %v6448 = vshrl.u32 %v6447, 7
      %v6449 = vsub.s32 1, %v6448
      %v6450 = vrot.slane %v5828, %v6449
      %v6451 = vlaneseq
      %v6452 = vshrl.u32 %v6451, 7
      %v6453 = vsub.s32 1, %v6452
      %v6454 = vrot.slane %v5833, %v6453
      %v6455 = vlaneseq
      %v6456 = vshrl.u32 %v6455, 7
      %v6457 = vsub.s32 1, %v6456
      %v6458 = vrot.slane %v5838, %v6457
      %v6459 = vlaneseq
      %v6460 = vshrl.u32 %v6459, 7
      %v6461 = vsub.s32 1, %v6460
      %v6462 = vrot.slane %v5843, %v6461
      %v6463 = vlaneseq
      %v6464 = vshrl.u32 %v6463, 7
      %v6465 = vsub.s32 1, %v6464
      %v6466 = vrot.slane %v5848, %v6465
      %v6467 = vlaneseq
      %v6468 = vshrl.u32 %v6467, 7
      %v6469 = vsub.s32 1, %v6468
      %v6470 = vrot.slane %v5853, %v6469
      %v6471 = vlaneseq
      %v6472 = vshrl.u32 %v6471, 7
      %v6473 = vsub.s32 1, %v6472
      %v6474 = vrot.slane %v5858, %v6473
      %v6475 = vlaneseq
      %v6476 = vshrl.u32 %v6475, 7
      %v6477 = vsub.s32 1, %v6476
      %v6478 = vrot.slane %v5863, %v6477
      %v6479 = vlaneseq
      %v6480 = vshrl.u32 %v6479, 7
      %v6481 = vsub.s32 1, %v6480
      %v6482 = vrot.slane %v5868, %v6481
      %v6483 = vlaneseq
      %v6484 = vshrl.u32 %v6483, 7
      %v6485 = vsub.s32 1, %v6484
      %v6486 = vrot.slane %v5873, %v6485
      %v6487 = vlaneseq
      %v6488 = vshrl.u32 %v6487, 7
      %v6489 = vsub.s32 1, %v6488
      %v6490 = vrot.slane %v5878, %v6489
      %v6491 = vlaneseq
      %v6492 = vshrl.u32 %v6491, 7
      %v6493 = vsub.s32 1, %v6492
      %v6494 = vrot.slane %v5883, %v6493
      %v6495 = vlaneseq
      %v6496 = vshrl.u32 %v6495, 7
      %v6497 = vsub.s32 1, %v6496
      %v6498 = vrot.slane %v5888, %v6497
      %v6499 = vlaneseq
      %v6500 = vshrl.u32 %v6499, 7
      %v6501 = vsub.s32 1, %v6500
      %v6502 = vrot.slane %v5893, %v6501
      %v6503 = vlaneseq
      %v6504 = vshrl.u32 %v6503, 7
      %v6505 = vsub.s32 1, %v6504
      %v6506 = vrot.slane %v5898, %v6505
      %v6507 = vlaneseq
      %v6508 = vshrl.u32 %v6507, 7
      %v6509 = vsub.s32 1, %v6508
      %v6510 = vrot.slane %v5903, %v6509
      %v6511 = vlaneseq
      %v6512 = vshrl.u32 %v6511, 7
      %v6513 = vsub.s32 1, %v6512
      %v6514 = vrot.slane %v5908, %v6513
      %v6515 = vlaneseq
      %v6516 = vshrl.u32 %v6515, 7
      %v6517 = vsub.s32 1, %v6516
      %v6518 = vrot.slane %v5913, %v6517
      %v6519 = vlaneseq
      %v6520 = vshrl.u32 %v6519, 7
      %v6521 = vsub.s32 1, %v6520
      %v6522 = vrot.slane %v5918, %v6521
      %v6523 = vlaneseq
      %v6524 = vshrl.u32 %v6523, 7
      %v6525 = vsub.s32 1, %v6524
      %v6526 = vrot.slane %v5923, %v6525
      %v6527 = vlaneseq
      %v6528 = vshrl.u32 %v6527, 7
      %v6529 = vsub.s32 1, %v6528
      %v6530 = vrot.slane %v5928, %v6529
      %v6531 = vlaneseq
      %v6532 = vshrl.u32 %v6531, 7
      %v6533 = vsub.s32 1, %v6532
      %v6534 = vrot.slane %v5933, %v6533
      %v6535 = vlaneseq
      %v6536 = vshrl.u32 %v6535, 7
      %v6537 = vsub.s32 1, %v6536
      %v6538 = vrot.slane %v5938, %v6537
      %v6539 = vlaneseq
      %v6540 = vshrl.u32 %v6539, 7
      %v6541 = vsub.s32 1, %v6540
      %v6542 = vrot.slane %v5943, %v6541
      %v6543 = vlaneseq
      %v6544 = vshrl.u32 %v6543, 7
      %v6545 = vsub.s32 1, %v6544
      %v6546 = vrot.slane %v5948, %v6545
      %v6547 = vlaneseq
      %v6548 = vshrl.u32 %v6547, 7
      %v6549 = vsub.s32 1, %v6548
      %v6550 = vrot.slane %v5953, %v6549
      %v6551 = vlaneseq
      %v6552 = vshrl.u32 %v6551, 7
      %v6553 = vsub.s32 1, %v6552
      %v6554 = vrot.slane %v5958, %v6553
      %v6555 = vlaneseq
      %v6556 = vshrl.u32 %v6555, 7
      %v6557 = vsub.s32 1, %v6556
      %v6558 = vrot.slane %v5963, %v6557
      %v6559 = vlaneseq
      %v6560 = vshrl.u32 %v6559, 7
      %v6561 = vsub.s32 1, %v6560
      %v6562 = vrot.slane %v5968, %v6561
      %v6563 = vlaneseq
      %v6564 = vshrl.u32 %v6563, 7
      %v6565 = vsub.s32 1, %v6564
      %v6566 = vrot.slane %v5973, %v6565
      %v6567 = vlaneseq
      %v6568 = vshrl.u32 %v6567, 7
      %v6569 = vsub.s32 1, %v6568
      %v6570 = vrot.slane %v5978, %v6569
      %v6571 = vlaneseq
      %v6572 = vshrl.u32 %v6571, 7
      %v6573 = vsub.s32 1, %v6572
      %v6574 = vrot.slane %v5983, %v6573
      %v6575 = vlaneseq
      %v6576 = vshrl.u32 %v6575, 7
      %v6577 = vsub.s32 1, %v6576
      %v6578 = vrot.slane %v5988, %v6577
      %v6579 = vlaneseq
      %v6580 = vshrl.u32 %v6579, 7
      %v6581 = vsub.s32 1, %v6580
      %v6582 = vrot.slane %v5993, %v6581
      %v6583 = vlaneseq
      %v6584 = vshrl.u32 %v6583, 7
      %v6585 = vsub.s32 1, %v6584
      %v6586 = vrot.slane %v5998, %v6585
      %v6587 = vlaneseq
      %v6588 = vshrl.u32 %v6587, 7
      %v6589 = vsub.s32 1, %v6588
      %v6590 = vrot.slane %v6003, %v6589
      %v6591 = vlaneseq
      %v6592 = vshrl.u32 %v6591, 7
      %v6593 = vsub.s32 1, %v6592
      %v6594 = vrot.slane %v6008, %v6593
      %v6595 = vlaneseq
      %v6596 = vshrl.u32 %v6595, 7
      %v6597 = vsub.s32 1, %v6596
      %v6598 = vrot.slane %v6013, %v6597
      %v6599 = vlaneseq
      %v6600 = vshrl.u32 %v6599, 7
      %v6601 = vsub.s32 1, %v6600
      %v6602 = vrot.slane %v6018, %v6601
      %v6603 = vlaneseq
      %v6604 = vshrl.u32 %v6603, 7
      %v6605 = vsub.s32 1, %v6604
      %v6606 = vrot.slane %v6023, %v6605
      %v6607 = vlaneseq
      %v6608 = vshrl.u32 %v6607, 7
      %v6609 = vsub.s32 1, %v6608
      %v6610 = vrot.slane %v6028, %v6609
      %v6611 = vlaneseq
      %v6612 = vshrl.u32 %v6611, 7
      %v6613 = vsub.s32 1, %v6612
      %v6614 = vrot.slane %v6033, %v6613
      %v6615 = vlaneseq
      %v6616 = vshrl.u32 %v6615, 7
      %v6617 = vsub.s32 1, %v6616
      %v6618 = vrot.slane %v6038, %v6617
      %v6619 = vlaneseq
      %v6620 = vshrl.u32 %v6619, 7
      %v6621 = vsub.s32 1, %v6620
      %v6622 = vrot.slane %v6043, %v6621
      %v6623 = vlaneseq
      %v6624 = vshrl.u32 %v6623, 7
      %v6625 = vsub.s32 1, %v6624
      %v6626 = vrot.slane %v6048, %v6625
      %v6627 = vmul.f32 %v1101, %v6374
      %v6628 = vmul.f32 %v1105, %v6378
      %v6629 = vmul.f32 %v1109, %v6382
      %v6630 = vmul.f32 %v1113, %v6386
      %v6631 = vmul.f32 %v1117, %v6390
      %v6632 = vmul.f32 %v1121, %v6394
      %v6633 = vmul.f32 %v1125, %v6398
      %v6634 = vmul.f32 %v1129, %v6402
      %v6635 = vmul.f32 %v1133, %v6406
      %v6636 = vmul.f32 %v1137, %v6410
      %v6637 = vmul.f32 %v1141, %v6414
      %v6638 = vmul.f32 %v1145, %v6418
      %v6639 = vmul.f32 %v1149, %v6422
      %v6640 = vmul.f32 %v1153, %v6426
      %v6641 = vmul.f32 %v1157, %v6430
      %v6642 = vmul.f32 %v1161, %v6434
      %v6643 = vmul.f32 %v1165, %v6438
      %v6644 = vmul.f32 %v1169, %v6442
      %v6645 = vmul.f32 %v1173, %v6446
      %v6646 = vmul.f32 %v1177, %v6450
      %v6647 = vmul.f32 %v1181, %v6454
      %v6648 = vmul.f32 %v1185, %v6458
      %v6649 = vmul.f32 %v1189, %v6462
      %v6650 = vmul.f32 %v1193, %v6466
      %v6651 = vmul.f32 %v1197, %v6470
      %v6652 = vmul.f32 %v1201, %v6474
      %v6653 = vmul.f32 %v1205, %v6478
      %v6654 = vmul.f32 %v1209, %v6482
      %v6655 = vmul.f32 %v1213, %v6486
      %v6656 = vmul.f32 %v1217, %v6490
      %v6657 = vmul.f32 %v1221, %v6494
      %v6658 = vmul.f32 %v1225, %v6498
      %v6659 = vmul.f32 %v1229, %v6502
      %v6660 = vmul.f32 %v1233, %v6506
      %v6661 = vmul.f32 %v1237, %v6510
      %v6662 = vmul.f32 %v1241, %v6514
      %v6663 = vmul.f32 %v1245, %v6518
      %v6664 = vmul.f32 %v1249, %v6522
      %v6665 = vmul.f32 %v1253, %v6526
      %v6666 = vmul.f32 %v1257, %v6530
      %v6667 = vmul.f32 %v1261, %v6534
      %v6668 = vmul.f32 %v1265, %v6538
      %v6669 = vmul.f32 %v1269, %v6542
      %v6670 = vmul.f32 %v1273, %v6546
      %v6671 = vmul.f32 %v1277, %v6550
      %v6672 = vmul.f32 %v1281, %v6554
      %v6673 = vmul.f32 %v1285, %v6558
      %v6674 = vmul.f32 %v1289, %v6562
      %v6675 = vmul.f32 %v1293, %v6566
      %v6676 = vmul.f32 %v1297, %v6570
      %v6677 = vmul.f32 %v1301, %v6574
      %v6678 = vmul.f32 %v1305, %v6578
      %v6679 = vmul.f32 %v1309, %v6582
      %v6680 = vmul.f32 %v1313, %v6586
      %v6681 = vmul.f32 %v1317, %v6590
      %v6682 = vmul.f32 %v1321, %v6594
      %v6683 = vmul.f32 %v1325, %v6598
      %v6684 = vmul.f32 %v1329, %v6602
      %v6685 = vmul.f32 %v1333, %v6606
      %v6686 = vmul.f32 %v1337, %v6610
      %v6687 = vmul.f32 %v1341, %v6614
      %v6688 = vmul.f32 %v1345, %v6618
      %v6689 = vmul.f32 %v1349, %v6622
      %v6690 = vmul.f32 %v1353, %v6626
      %v6691 = vadd.f32 %v6307, %v6627
      %v6692 = vadd.f32 %v6308, %v6628
      %v6693 = vadd.f32 %v6309, %v6629
      %v6694 = vadd.f32 %v6310, %v6630
      %v6695 = vadd.f32 %v6311, %v6631
      %v6696 = vadd.f32 %v6312, %v6632
      %v6697 = vadd.f32 %v6313, %v6633
      %v6698 = vadd.f32 %v6314, %v6634
      %v6699 = vadd.f32 %v6315, %v6635
      %v6700 = vadd.f32 %v6316, %v6636
      %v6701 = vadd.f32 %v6317, %v6637
      %v6702 = vadd.f32 %v6318, %v6638
      %v6703 = vadd.f32 %v6319, %v6639
      %v6704 = vadd.f32 %v6320, %v6640
      %v6705 = vadd.f32 %v6321, %v6641
      %v6706 = vadd.f32 %v6322, %v6642
      %v6707 = vadd.f32 %v6323, %v6643
      %v6708 = vadd.f32 %v6324, %v6644
      %v6709 = vadd.f32 %v6325, %v6645
      %v6710 = vadd.f32 %v6326, %v6646
      %v6711 = vadd.f32 %v6327, %v6647
      %v6712 = vadd.f32 %v6328, %v6648
      %v6713 = vadd.f32 %v6329, %v6649
      %v6714 = vadd.f32 %v6330, %v6650
      %v6715 = vadd.f32 %v6331, %v6651
      %v6716 = vadd.f32 %v6332, %v6652
      %v6717 = vadd.f32 %v6333, %v6653
      %v6718 = vadd.f32 %v6334, %v6654
      %v6719 = vadd.f32 %v6335, %v6655
      %v6720 = vadd.f32 %v6336, %v6656
      %v6721 = vadd.f32 %v6337, %v6657
      %v6722 = vadd.f32 %v6338, %v6658
      %v6723 = vadd.f32 %v6339, %v6659
      %v6724 = vadd.f32 %v6340, %v6660
      %v6725 = vadd.f32 %v6341, %v6661
      %v6726 = vadd.f32 %v6342, %v6662
      %v6727 = vadd.f32 %v6343, %v6663
      %v6728 = vadd.f32 %v6344, %v6664
      %v6729 = vadd.f32 %v6345, %v6665
      %v6730 = vadd.f32 %v6346, %v6666
      %v6731 = vadd.f32 %v6347, %v6667
      %v6732 = vadd.f32 %v6348, %v6668
      %v6733 = vadd.f32 %v6349, %v6669
      %v6734 = vadd.f32 %v6350, %v6670
      %v6735 = vadd.f32 %v6351, %v6671
      %v6736 = vadd.f32 %v6352, %v6672
      %v6737 = vadd.f32 %v6353, %v6673
      %v6738 = vadd.f32 %v6354, %v6674
      %v6739 = vadd.f32 %v6355, %v6675
      %v6740 = vadd.f32 %v6356, %v6676
      %v6741 = vadd.f32 %v6357, %v6677
      %v6742 = vadd.f32 %v6358, %v6678
      %v6743 = vadd.f32 %v6359, %v6679
      %v6744 = vadd.f32 %v6360, %v6680
      %v6745 = vadd.f32 %v6361, %v6681
      %v6746 = vadd.f32 %v6362, %v6682
      %v6747 = vadd.f32 %v6363, %v6683
      %v6748 = vadd.f32 %v6364, %v6684
      %v6749 = vadd.f32 %v6365, %v6685
      %v6750 = vadd.f32 %v6366, %v6686
      %v6751 = vadd.f32 %v6367, %v6687
      %v6752 = vadd.f32 %v6368, %v6688
      %v6753 = vadd.f32 %v6369, %v6689
      %v6754 = vadd.f32 %v6370, %v6690
      %v6755 = vlaneseq
      %v6756 = vshrl.u32 %v6755, 7
      %v6757 = vsub.s32 2, %v6756
      %v6758 = vrot.slane %v5733, %v6757
      %v6759 = vlaneseq
      %v6760 = vshrl.u32 %v6759, 7
      %v6761 = vsub.s32 2, %v6760
      %v6762 = vrot.slane %v5738, %v6761
      %v6763 = vlaneseq
      %v6764 = vshrl.u32 %v6763, 7
      %v6765 = vsub.s32 2, %v6764
      %v6766 = vrot.slane %v5743, %v6765
      %v6767 = vlaneseq
      %v6768 = vshrl.u32 %v6767, 7
      %v6769 = vsub.s32 2, %v6768
      %v6770 = vrot.slane %v5748, %v6769
      %v6771 = vlaneseq
      %v6772 = vshrl.u32 %v6771, 7
      %v6773 = vsub.s32 2, %v6772
      %v6774 = vrot.slane %v5753, %v6773
      %v6775 = vlaneseq
      %v6776 = vshrl.u32 %v6775, 7
      %v6777 = vsub.s32 2, %v6776
      %v6778 = vrot.slane %v5758, %v6777
      %v6779 = vlaneseq
      %v6780 = vshrl.u32 %v6779, 7
      %v6781 = vsub.s32 2, %v6780
      %v6782 = vrot.slane %v5763, %v6781
      %v6783 = vlaneseq
      %v6784 = vshrl.u32 %v6783, 7
      %v6785 = vsub.s32 2, %v6784
      %v6786 = vrot.slane %v5768, %v6785
      %v6787 = vlaneseq
      %v6788 = vshrl.u32 %v6787, 7
      %v6789 = vsub.s32 2, %v6788
      %v6790 = vrot.slane %v5773, %v6789
      %v6791 = vlaneseq
      %v6792 = vshrl.u32 %v6791, 7
      %v6793 = vsub.s32 2, %v6792
      %v6794 = vrot.slane %v5778, %v6793
      %v6795 = vlaneseq
      %v6796 = vshrl.u32 %v6795, 7
      %v6797 = vsub.s32 2, %v6796
      %v6798 = vrot.slane %v5783, %v6797
      %v6799 = vlaneseq
      %v6800 = vshrl.u32 %v6799, 7
      %v6801 = vsub.s32 2, %v6800
      %v6802 = vrot.slane %v5788, %v6801
      %v6803 = vlaneseq
      %v6804 = vshrl.u32 %v6803, 7
      %v6805 = vsub.s32 2, %v6804
      %v6806 = vrot.slane %v5793, %v6805
      %v6807 = vlaneseq
      %v6808 = vshrl.u32 %v6807, 7
      %v6809 = vsub.s32 2, %v6808
      %v6810 = vrot.slane %v5798, %v6809
      %v6811 = vlaneseq
      %v6812 = vshrl.u32 %v6811, 7
      %v6813 = vsub.s32 2, %v6812
      %v6814 = vrot.slane %v5803, %v6813
      %v6815 = vlaneseq
      %v6816 = vshrl.u32 %v6815, 7
      %v6817 = vsub.s32 2, %v6816
      %v6818 = vrot.slane %v5808, %v6817
      %v6819 = vlaneseq
      %v6820 = vshrl.u32 %v6819, 7
      %v6821 = vsub.s32 2, %v6820
      %v6822 = vrot.slane %v5813, %v6821
      %v6823 = vlaneseq
      %v6824 = vshrl.u32 %v6823, 7
      %v6825 = vsub.s32 2, %v6824
      %v6826 = vrot.slane %v5818, %v6825
      %v6827 = vlaneseq
      %v6828 = vshrl.u32 %v6827, 7
      %v6829 = vsub.s32 2, %v6828
      %v6830 = vrot.slane %v5823, %v6829
      %v6831 = vlaneseq
      %v6832 = vshrl.u32 %v6831, 7
      %v6833 = vsub.s32 2, %v6832
      %v6834 = vrot.slane %v5828, %v6833
      %v6835 = vlaneseq
      %v6836 = vshrl.u32 %v6835, 7
      %v6837 = vsub.s32 2, %v6836
      %v6838 = vrot.slane %v5833, %v6837
      %v6839 = vlaneseq
      %v6840 = vshrl.u32 %v6839, 7
      %v6841 = vsub.s32 2, %v6840
      %v6842 = vrot.slane %v5838, %v6841
      %v6843 = vlaneseq
      %v6844 = vshrl.u32 %v6843, 7
      %v6845 = vsub.s32 2, %v6844
      %v6846 = vrot.slane %v5843, %v6845
      %v6847 = vlaneseq
      %v6848 = vshrl.u32 %v6847, 7
      %v6849 = vsub.s32 2, %v6848
      %v6850 = vrot.slane %v5848, %v6849
      %v6851 = vlaneseq
      %v6852 = vshrl.u32 %v6851, 7
      %v6853 = vsub.s32 2, %v6852
      %v6854 = vrot.slane %v5853, %v6853
      %v6855 = vlaneseq
      %v6856 = vshrl.u32 %v6855, 7
      %v6857 = vsub.s32 2, %v6856
      %v6858 = vrot.slane %v5858, %v6857
      %v6859 = vlaneseq
      %v6860 = vshrl.u32 %v6859, 7
      %v6861 = vsub.s32 2, %v6860
      %v6862 = vrot.slane %v5863, %v6861
      %v6863 = vlaneseq
      %v6864 = vshrl.u32 %v6863, 7
      %v6865 = vsub.s32 2, %v6864
      %v6866 = vrot.slane %v5868, %v6865
      %v6867 = vlaneseq
      %v6868 = vshrl.u32 %v6867, 7
      %v6869 = vsub.s32 2, %v6868
      %v6870 = vrot.slane %v5873, %v6869
      %v6871 = vlaneseq
      %v6872 = vshrl.u32 %v6871, 7
      %v6873 = vsub.s32 2, %v6872
      %v6874 = vrot.slane %v5878, %v6873
      %v6875 = vlaneseq
      %v6876 = vshrl.u32 %v6875, 7
      %v6877 = vsub.s32 2, %v6876
      %v6878 = vrot.slane %v5883, %v6877
      %v6879 = vlaneseq
      %v6880 = vshrl.u32 %v6879, 7
      %v6881 = vsub.s32 2, %v6880
      %v6882 = vrot.slane %v5888, %v6881
      %v6883 = vlaneseq
      %v6884 = vshrl.u32 %v6883, 7
      %v6885 = vsub.s32 2, %v6884
      %v6886 = vrot.slane %v5893, %v6885
      %v6887 = vlaneseq
      %v6888 = vshrl.u32 %v6887, 7
      %v6889 = vsub.s32 2, %v6888
      %v6890 = vrot.slane %v5898, %v6889
      %v6891 = vlaneseq
      %v6892 = vshrl.u32 %v6891, 7
      %v6893 = vsub.s32 2, %v6892
      %v6894 = vrot.slane %v5903, %v6893
      %v6895 = vlaneseq
      %v6896 = vshrl.u32 %v6895, 7
      %v6897 = vsub.s32 2, %v6896
      %v6898 = vrot.slane %v5908, %v6897
      %v6899 = vlaneseq
      %v6900 = vshrl.u32 %v6899, 7
      %v6901 = vsub.s32 2, %v6900
      %v6902 = vrot.slane %v5913, %v6901
      %v6903 = vlaneseq
      %v6904 = vshrl.u32 %v6903, 7
      %v6905 = vsub.s32 2, %v6904
      %v6906 = vrot.slane %v5918, %v6905
      %v6907 = vlaneseq
      %v6908 = vshrl.u32 %v6907, 7
      %v6909 = vsub.s32 2, %v6908
      %v6910 = vrot.slane %v5923, %v6909
      %v6911 = vlaneseq
      %v6912 = vshrl.u32 %v6911, 7
      %v6913 = vsub.s32 2, %v6912
      %v6914 = vrot.slane %v5928, %v6913
      %v6915 = vlaneseq
      %v6916 = vshrl.u32 %v6915, 7
      %v6917 = vsub.s32 2, %v6916
      %v6918 = vrot.slane %v5933, %v6917
      %v6919 = vlaneseq
      %v6920 = vshrl.u32 %v6919, 7
      %v6921 = vsub.s32 2, %v6920
      %v6922 = vrot.slane %v5938, %v6921
      %v6923 = vlaneseq
      %v6924 = vshrl.u32 %v6923, 7
      %v6925 = vsub.s32 2, %v6924
      %v6926 = vrot.slane %v5943, %v6925
      %v6927 = vlaneseq
      %v6928 = vshrl.u32 %v6927, 7
      %v6929 = vsub.s32 2, %v6928
      %v6930 = vrot.slane %v5948, %v6929
      %v6931 = vlaneseq
      %v6932 = vshrl.u32 %v6931, 7
      %v6933 = vsub.s32 2, %v6932
      %v6934 = vrot.slane %v5953, %v6933
      %v6935 = vlaneseq
      %v6936 = vshrl.u32 %v6935, 7
      %v6937 = vsub.s32 2, %v6936
      %v6938 = vrot.slane %v5958, %v6937
      %v6939 = vlaneseq
      %v6940 = vshrl.u32 %v6939, 7
      %v6941 = vsub.s32 2, %v6940
      %v6942 = vrot.slane %v5963, %v6941
      %v6943 = vlaneseq
      %v6944 = vshrl.u32 %v6943, 7
      %v6945 = vsub.s32 2, %v6944
      %v6946 = vrot.slane %v5968, %v6945
      %v6947 = vlaneseq
      %v6948 = vshrl.u32 %v6947, 7
      %v6949 = vsub.s32 2, %v6948
      %v6950 = vrot.slane %v5973, %v6949
      %v6951 = vlaneseq
      %v6952 = vshrl.u32 %v6951, 7
      %v6953 = vsub.s32 2, %v6952
      %v6954 = vrot.slane %v5978, %v6953
      %v6955 = vlaneseq
      %v6956 = vshrl.u32 %v6955, 7
      %v6957 = vsub.s32 2, %v6956
      %v6958 = vrot.slane %v5983, %v6957
      %v6959 = vlaneseq
      %v6960 = vshrl.u32 %v6959, 7
      %v6961 = vsub.s32 2, %v6960
      %v6962 = vrot.slane %v5988, %v6961
      %v6963 = vlaneseq
      %v6964 = vshrl.u32 %v6963, 7
      %v6965 = vsub.s32 2, %v6964
      %v6966 = vrot.slane %v5993, %v6965
      %v6967 = vlaneseq
      %v6968 = vshrl.u32 %v6967, 7
      %v6969 = vsub.s32 2, %v6968
      %v6970 = vrot.slane %v5998, %v6969
      %v6971 = vlaneseq
      %v6972 = vshrl.u32 %v6971, 7
      %v6973 = vsub.s32 2, %v6972
      %v6974 = vrot.slane %v6003, %v6973
      %v6975 = vlaneseq
      %v6976 = vshrl.u32 %v6975, 7
      %v6977 = vsub.s32 2, %v6976
      %v6978 = vrot.slane %v6008, %v6977
      %v6979 = vlaneseq
      %v6980 = vshrl.u32 %v6979, 7
      %v6981 = vsub.s32 2, %v6980
      %v6982 = vrot.slane %v6013, %v6981
      %v6983 = vlaneseq
      %v6984 = vshrl.u32 %v6983, 7
      %v6985 = vsub.s32 2, %v6984
      %v6986 = vrot.slane %v6018, %v6985
      %v6987 = vlaneseq
      %v6988 = vshrl.u32 %v6987, 7
      %v6989 = vsub.s32 2, %v6988
      %v6990 = vrot.slane %v6023, %v6989
      %v6991 = vlaneseq
      %v6992 = vshrl.u32 %v6991, 7
      %v6993 = vsub.s32 2, %v6992
      %v6994 = vrot.slane %v6028, %v6993
      %v6995 = vlaneseq
      %v6996 = vshrl.u32 %v6995, 7
      %v6997 = vsub.s32 2, %v6996
      %v6998 = vrot.slane %v6033, %v6997
      %v6999 = vlaneseq
      %v7000 = vshrl.u32 %v6999, 7
      %v7001 = vsub.s32 2, %v7000
      %v7002 = vrot.slane %v6038, %v7001
      %v7003 = vlaneseq
      %v7004 = vshrl.u32 %v7003, 7
      %v7005 = vsub.s32 2, %v7004
      %v7006 = vrot.slane %v6043, %v7005
      %v7007 = vlaneseq
      %v7008 = vshrl.u32 %v7007, 7
      %v7009 = vsub.s32 2, %v7008
      %v7010 = vrot.slane %v6048, %v7009
      %v7011 = vmul.f32 %v1741, %v6758
      %v7012 = vmul.f32 %v1745, %v6762
      %v7013 = vmul.f32 %v1749, %v6766
      %v7014 = vmul.f32 %v1753, %v6770
      %v7015 = vmul.f32 %v1757, %v6774
      %v7016 = vmul.f32 %v1761, %v6778
      %v7017 = vmul.f32 %v1765, %v6782
      %v7018 = vmul.f32 %v1769, %v6786
      %v7019 = vmul.f32 %v1773, %v6790
      %v7020 = vmul.f32 %v1777, %v6794
      %v7021 = vmul.f32 %v1781, %v6798
      %v7022 = vmul.f32 %v1785, %v6802
      %v7023 = vmul.f32 %v1789, %v6806
      %v7024 = vmul.f32 %v1793, %v6810
      %v7025 = vmul.f32 %v1797, %v6814
      %v7026 = vmul.f32 %v1801, %v6818
      %v7027 = vmul.f32 %v1805, %v6822
      %v7028 = vmul.f32 %v1809, %v6826
      %v7029 = vmul.f32 %v1813, %v6830
      %v7030 = vmul.f32 %v1817, %v6834
      %v7031 = vmul.f32 %v1821, %v6838
      %v7032 = vmul.f32 %v1825, %v6842
      %v7033 = vmul.f32 %v1829, %v6846
      %v7034 = vmul.f32 %v1833, %v6850
      %v7035 = vmul.f32 %v1837, %v6854
      %v7036 = vmul.f32 %v1841, %v6858
      %v7037 = vmul.f32 %v1845, %v6862
      %v7038 = vmul.f32 %v1849, %v6866
      %v7039 = vmul.f32 %v1853, %v6870
      %v7040 = vmul.f32 %v1857, %v6874
      %v7041 = vmul.f32 %v1861, %v6878
      %v7042 = vmul.f32 %v1865, %v6882
      %v7043 = vmul.f32 %v1869, %v6886
      %v7044 = vmul.f32 %v1873, %v6890
      %v7045 = vmul.f32 %v1877, %v6894
      %v7046 = vmul.f32 %v1881, %v6898
      %v7047 = vmul.f32 %v1885, %v6902
      %v7048 = vmul.f32 %v1889, %v6906
      %v7049 = vmul.f32 %v1893, %v6910
      %v7050 = vmul.f32 %v1897, %v6914
      %v7051 = vmul.f32 %v1901, %v6918
      %v7052 = vmul.f32 %v1905, %v6922
      %v7053 = vmul.f32 %v1909, %v6926
      %v7054 = vmul.f32 %v1913, %v6930
      %v7055 = vmul.f32 %v1917, %v6934
      %v7056 = vmul.f32 %v1921, %v6938
      %v7057 = vmul.f32 %v1925, %v6942
      %v7058 = vmul.f32 %v1929, %v6946
      %v7059 = vmul.f32 %v1933, %v6950
      %v7060 = vmul.f32 %v1937, %v6954
      %v7061 = vmul.f32 %v1941, %v6958
      %v7062 = vmul.f32 %v1945, %v6962
      %v7063 = vmul.f32 %v1949, %v6966
      %v7064 = vmul.f32 %v1953, %v6970
      %v7065 = vmul.f32 %v1957, %v6974
      %v7066 = vmul.f32 %v1961, %v6978
      %v7067 = vmul.f32 %v1965, %v6982
      %v7068 = vmul.f32 %v1969, %v6986
      %v7069 = vmul.f32 %v1973, %v6990
      %v7070 = vmul.f32 %v1977, %v6994
      %v7071 = vmul.f32 %v1981, %v6998
      %v7072 = vmul.f32 %v1985, %v7002
      %v7073 = vmul.f32 %v1989, %v7006
      %v7074 = vmul.f32 %v1993, %v7010
      %v7075 = vadd.f32 %v6691, %v7011
      %v7076 = vadd.f32 %v6692, %v7012
      %v7077 = vadd.f32 %v6693, %v7013
      %v7078 = vadd.f32 %v6694, %v7014
      %v7079 = vadd.f32 %v6695, %v7015
      %v7080 = vadd.f32 %v6696, %v7016
      %v7081 = vadd.f32 %v6697, %v7017
      %v7082 = vadd.f32 %v6698, %v7018
      %v7083 = vadd.f32 %v6699, %v7019
      %v7084 = vadd.f32 %v6700, %v7020
      %v7085 = vadd.f32 %v6701, %v7021
      %v7086 = vadd.f32 %v6702, %v7022
      %v7087 = vadd.f32 %v6703, %v7023
      %v7088 = vadd.f32 %v6704, %v7024
      %v7089 = vadd.f32 %v6705, %v7025
      %v7090 = vadd.f32 %v6706, %v7026
      %v7091 = vadd.f32 %v6707, %v7027
      %v7092 = vadd.f32 %v6708, %v7028
      %v7093 = vadd.f32 %v6709, %v7029
      %v7094 = vadd.f32 %v6710, %v7030
      %v7095 = vadd.f32 %v6711, %v7031
      %v7096 = vadd.f32 %v6712, %v7032
      %v7097 = vadd.f32 %v6713, %v7033
      %v7098 = vadd.f32 %v6714, %v7034
      %v7099 = vadd.f32 %v6715, %v7035
      %v7100 = vadd.f32 %v6716, %v7036
      %v7101 = vadd.f32 %v6717, %v7037
      %v7102 = vadd.f32 %v6718, %v7038
      %v7103 = vadd.f32 %v6719, %v7039
      %v7104 = vadd.f32 %v6720, %v7040
      %v7105 = vadd.f32 %v6721, %v7041
      %v7106 = vadd.f32 %v6722, %v7042
      %v7107 = vadd.f32 %v6723, %v7043
      %v7108 = vadd.f32 %v6724, %v7044
      %v7109 = vadd.f32 %v6725, %v7045
      %v7110 = vadd.f32 %v6726, %v7046
      %v7111 = vadd.f32 %v6727, %v7047
      %v7112 = vadd.f32 %v6728, %v7048
      %v7113 = vadd.f32 %v6729, %v7049
      %v7114 = vadd.f32 %v6730, %v7050
      %v7115 = vadd.f32 %v6731, %v7051
      %v7116 = vadd.f32 %v6732, %v7052
      %v7117 = vadd.f32 %v6733, %v7053
      %v7118 = vadd.f32 %v6734, %v7054
      %v7119 = vadd.f32 %v6735, %v7055
      %v7120 = vadd.f32 %v6736, %v7056
      %v7121 = vadd.f32 %v6737, %v7057
      %v7122 = vadd.f32 %v6738, %v7058
      %v7123 = vadd.f32 %v6739, %v7059
      %v7124 = vadd.f32 %v6740, %v7060
      %v7125 = vadd.f32 %v6741, %v7061
      %v7126 = vadd.f32 %v6742, %v7062
      %v7127 = vadd.f32 %v6743, %v7063
      %v7128 = vadd.f32 %v6744, %v7064
      %v7129 = vadd.f32 %v6745, %v7065
      %v7130 = vadd.f32 %v6746, %v7066
      %v7131 = vadd.f32 %v6747, %v7067
      %v7132 = vadd.f32 %v6748, %v7068
      %v7133 = vadd.f32 %v6749, %v7069
      %v7134 = vadd.f32 %v6750, %v7070
      %v7135 = vadd.f32 %v6751, %v7071
      %v7136 = vadd.f32 %v6752, %v7072
      %v7137 = vadd.f32 %v6753, %v7073
      %v7138 = vadd.f32 %v6754, %v7074
      %v7139 = vlaneseq
      %v7140 = vshrl.u32 %v7139, 7
      %v7141 = vsub.s32 3, %v7140
      %v7142 = vrot.slane %v5733, %v7141
      %v7143 = vlaneseq
      %v7144 = vshrl.u32 %v7143, 7
      %v7145 = vsub.s32 3, %v7144
      %v7146 = vrot.slane %v5738, %v7145
      %v7147 = vlaneseq
      %v7148 = vshrl.u32 %v7147, 7
      %v7149 = vsub.s32 3, %v7148
      %v7150 = vrot.slane %v5743, %v7149
      %v7151 = vlaneseq
      %v7152 = vshrl.u32 %v7151, 7
      %v7153 = vsub.s32 3, %v7152
      %v7154 = vrot.slane %v5748, %v7153
      %v7155 = vlaneseq
      %v7156 = vshrl.u32 %v7155, 7
      %v7157 = vsub.s32 3, %v7156
      %v7158 = vrot.slane %v5753, %v7157
      %v7159 = vlaneseq
      %v7160 = vshrl.u32 %v7159, 7
      %v7161 = vsub.s32 3, %v7160
      %v7162 = vrot.slane %v5758, %v7161
      %v7163 = vlaneseq
      %v7164 = vshrl.u32 %v7163, 7
      %v7165 = vsub.s32 3, %v7164
      %v7166 = vrot.slane %v5763, %v7165
      %v7167 = vlaneseq
      %v7168 = vshrl.u32 %v7167, 7
      %v7169 = vsub.s32 3, %v7168
      %v7170 = vrot.slane %v5768, %v7169
      %v7171 = vlaneseq
      %v7172 = vshrl.u32 %v7171, 7
      %v7173 = vsub.s32 3, %v7172
      %v7174 = vrot.slane %v5773, %v7173
      %v7175 = vlaneseq
      %v7176 = vshrl.u32 %v7175, 7
      %v7177 = vsub.s32 3, %v7176
      %v7178 = vrot.slane %v5778, %v7177
      %v7179 = vlaneseq
      %v7180 = vshrl.u32 %v7179, 7
      %v7181 = vsub.s32 3, %v7180
      %v7182 = vrot.slane %v5783, %v7181
      %v7183 = vlaneseq
      %v7184 = vshrl.u32 %v7183, 7
      %v7185 = vsub.s32 3, %v7184
      %v7186 = vrot.slane %v5788, %v7185
      %v7187 = vlaneseq
      %v7188 = vshrl.u32 %v7187, 7
      %v7189 = vsub.s32 3, %v7188
      %v7190 = vrot.slane %v5793, %v7189
      %v7191 = vlaneseq
      %v7192 = vshrl.u32 %v7191, 7
      %v7193 = vsub.s32 3, %v7192
      %v7194 = vrot.slane %v5798, %v7193
      %v7195 = vlaneseq
      %v7196 = vshrl.u32 %v7195, 7
      %v7197 = vsub.s32 3, %v7196
      %v7198 = vrot.slane %v5803, %v7197
      %v7199 = vlaneseq
      %v7200 = vshrl.u32 %v7199, 7
      %v7201 = vsub.s32 3, %v7200
      %v7202 = vrot.slane %v5808, %v7201
      %v7203 = vlaneseq
      %v7204 = vshrl.u32 %v7203, 7
      %v7205 = vsub.s32 3, %v7204
      %v7206 = vrot.slane %v5813, %v7205
      %v7207 = vlaneseq
      %v7208 = vshrl.u32 %v7207, 7
      %v7209 = vsub.s32 3, %v7208
      %v7210 = vrot.slane %v5818, %v7209
      %v7211 = vlaneseq
      %v7212 = vshrl.u32 %v7211, 7
      %v7213 = vsub.s32 3, %v7212
      %v7214 = vrot.slane %v5823, %v7213
      %v7215 = vlaneseq
      %v7216 = vshrl.u32 %v7215, 7
      %v7217 = vsub.s32 3, %v7216
      %v7218 = vrot.slane %v5828, %v7217
      %v7219 = vlaneseq
      %v7220 = vshrl.u32 %v7219, 7
      %v7221 = vsub.s32 3, %v7220
      %v7222 = vrot.slane %v5833, %v7221
      %v7223 = vlaneseq
      %v7224 = vshrl.u32 %v7223, 7
      %v7225 = vsub.s32 3, %v7224
      %v7226 = vrot.slane %v5838, %v7225
      %v7227 = vlaneseq
      %v7228 = vshrl.u32 %v7227, 7
      %v7229 = vsub.s32 3, %v7228
      %v7230 = vrot.slane %v5843, %v7229
      %v7231 = vlaneseq
      %v7232 = vshrl.u32 %v7231, 7
      %v7233 = vsub.s32 3, %v7232
      %v7234 = vrot.slane %v5848, %v7233
      %v7235 = vlaneseq
      %v7236 = vshrl.u32 %v7235, 7
      %v7237 = vsub.s32 3, %v7236
      %v7238 = vrot.slane %v5853, %v7237
      %v7239 = vlaneseq
      %v7240 = vshrl.u32 %v7239, 7
      %v7241 = vsub.s32 3, %v7240
      %v7242 = vrot.slane %v5858, %v7241
      %v7243 = vlaneseq
      %v7244 = vshrl.u32 %v7243, 7
      %v7245 = vsub.s32 3, %v7244
      %v7246 = vrot.slane %v5863, %v7245
      %v7247 = vlaneseq
      %v7248 = vshrl.u32 %v7247, 7
      %v7249 = vsub.s32 3, %v7248
      %v7250 = vrot.slane %v5868, %v7249
      %v7251 = vlaneseq
      %v7252 = vshrl.u32 %v7251, 7
      %v7253 = vsub.s32 3, %v7252
      %v7254 = vrot.slane %v5873, %v7253
      %v7255 = vlaneseq
      %v7256 = vshrl.u32 %v7255, 7
      %v7257 = vsub.s32 3, %v7256
      %v7258 = vrot.slane %v5878, %v7257
      %v7259 = vlaneseq
      %v7260 = vshrl.u32 %v7259, 7
      %v7261 = vsub.s32 3, %v7260
      %v7262 = vrot.slane %v5883, %v7261
      %v7263 = vlaneseq
      %v7264 = vshrl.u32 %v7263, 7
      %v7265 = vsub.s32 3, %v7264
      %v7266 = vrot.slane %v5888, %v7265
      %v7267 = vlaneseq
      %v7268 = vshrl.u32 %v7267, 7
      %v7269 = vsub.s32 3, %v7268
      %v7270 = vrot.slane %v5893, %v7269
      %v7271 = vlaneseq
      %v7272 = vshrl.u32 %v7271, 7
      %v7273 = vsub.s32 3, %v7272
      %v7274 = vrot.slane %v5898, %v7273
      %v7275 = vlaneseq
      %v7276 = vshrl.u32 %v7275, 7
      %v7277 = vsub.s32 3, %v7276
      %v7278 = vrot.slane %v5903, %v7277
      %v7279 = vlaneseq
      %v7280 = vshrl.u32 %v7279, 7
      %v7281 = vsub.s32 3, %v7280
      %v7282 = vrot.slane %v5908, %v7281
      %v7283 = vlaneseq
      %v7284 = vshrl.u32 %v7283, 7
      %v7285 = vsub.s32 3, %v7284
      %v7286 = vrot.slane %v5913, %v7285
      %v7287 = vlaneseq
      %v7288 = vshrl.u32 %v7287, 7
      %v7289 = vsub.s32 3, %v7288
      %v7290 = vrot.slane %v5918, %v7289
      %v7291 = vlaneseq
      %v7292 = vshrl.u32 %v7291, 7
      %v7293 = vsub.s32 3, %v7292
      %v7294 = vrot.slane %v5923, %v7293
      %v7295 = vlaneseq
      %v7296 = vshrl.u32 %v7295, 7
      %v7297 = vsub.s32 3, %v7296
      %v7298 = vrot.slane %v5928, %v7297
      %v7299 = vlaneseq
      %v7300 = vshrl.u32 %v7299, 7
      %v7301 = vsub.s32 3, %v7300
      %v7302 = vrot.slane %v5933, %v7301
      %v7303 = vlaneseq
      %v7304 = vshrl.u32 %v7303, 7
      %v7305 = vsub.s32 3, %v7304
      %v7306 = vrot.slane %v5938, %v7305
      %v7307 = vlaneseq
      %v7308 = vshrl.u32 %v7307, 7
      %v7309 = vsub.s32 3, %v7308
      %v7310 = vrot.slane %v5943, %v7309
      %v7311 = vlaneseq
      %v7312 = vshrl.u32 %v7311, 7
      %v7313 = vsub.s32 3, %v7312
      %v7314 = vrot.slane %v5948, %v7313
      %v7315 = vlaneseq
      %v7316 = vshrl.u32 %v7315, 7
      %v7317 = vsub.s32 3, %v7316
      %v7318 = vrot.slane %v5953, %v7317
      %v7319 = vlaneseq
      %v7320 = vshrl.u32 %v7319, 7
      %v7321 = vsub.s32 3, %v7320
      %v7322 = vrot.slane %v5958, %v7321
      %v7323 = vlaneseq
      %v7324 = vshrl.u32 %v7323, 7
      %v7325 = vsub.s32 3, %v7324
      %v7326 = vrot.slane %v5963, %v7325
      %v7327 = vlaneseq
      %v7328 = vshrl.u32 %v7327, 7
      %v7329 = vsub.s32 3, %v7328
      %v7330 = vrot.slane %v5968, %v7329
      %v7331 = vlaneseq
      %v7332 = vshrl.u32 %v7331, 7
      %v7333 = vsub.s32 3, %v7332
      %v7334 = vrot.slane %v5973, %v7333
      %v7335 = vlaneseq
      %v7336 = vshrl.u32 %v7335, 7
      %v7337 = vsub.s32 3, %v7336
      %v7338 = vrot.slane %v5978, %v7337
      %v7339 = vlaneseq
      %v7340 = vshrl.u32 %v7339, 7
      %v7341 = vsub.s32 3, %v7340
      %v7342 = vrot.slane %v5983, %v7341
      %v7343 = vlaneseq
      %v7344 = vshrl.u32 %v7343, 7
      %v7345 = vsub.s32 3, %v7344
      %v7346 = vrot.slane %v5988, %v7345
      %v7347 = vlaneseq
      %v7348 = vshrl.u32 %v7347, 7
      %v7349 = vsub.s32 3, %v7348
      %v7350 = vrot.slane %v5993, %v7349
      %v7351 = vlaneseq
      %v7352 = vshrl.u32 %v7351, 7
      %v7353 = vsub.s32 3, %v7352
      %v7354 = vrot.slane %v5998, %v7353
      %v7355 = vlaneseq
      %v7356 = vshrl.u32 %v7355, 7
      %v7357 = vsub.s32 3, %v7356
      %v7358 = vrot.slane %v6003, %v7357
      %v7359 = vlaneseq
      %v7360 = vshrl.u32 %v7359, 7
      %v7361 = vsub.s32 3, %v7360
      %v7362 = vrot.slane %v6008, %v7361
      %v7363 = vlaneseq
      %v7364 = vshrl.u32 %v7363, 7
      %v7365 = vsub.s32 3, %v7364
      %v7366 = vrot.slane %v6013, %v7365
      %v7367 = vlaneseq
      %v7368 = vshrl.u32 %v7367, 7
      %v7369 = vsub.s32 3, %v7368
      %v7370 = vrot.slane %v6018, %v7369
      %v7371 = vlaneseq
      %v7372 = vshrl.u32 %v7371, 7
      %v7373 = vsub.s32 3, %v7372
      %v7374 = vrot.slane %v6023, %v7373
      %v7375 = vlaneseq
      %v7376 = vshrl.u32 %v7375, 7
      %v7377 = vsub.s32 3, %v7376
      %v7378 = vrot.slane %v6028, %v7377
      %v7379 = vlaneseq
      %v7380 = vshrl.u32 %v7379, 7
      %v7381 = vsub.s32 3, %v7380
      %v7382 = vrot.slane %v6033, %v7381
      %v7383 = vlaneseq
      %v7384 = vshrl.u32 %v7383, 7
      %v7385 = vsub.s32 3, %v7384
      %v7386 = vrot.slane %v6038, %v7385
      %v7387 = vlaneseq
      %v7388 = vshrl.u32 %v7387, 7
      %v7389 = vsub.s32 3, %v7388
      %v7390 = vrot.slane %v6043, %v7389
      %v7391 = vlaneseq
      %v7392 = vshrl.u32 %v7391, 7
      %v7393 = vsub.s32 3, %v7392
      %v7394 = vrot.slane %v6048, %v7393
      %v7395 = vmul.f32 %v2381, %v7142
      %v7396 = vmul.f32 %v2385, %v7146
      %v7397 = vmul.f32 %v2389, %v7150
      %v7398 = vmul.f32 %v2393, %v7154
      %v7399 = vmul.f32 %v2397, %v7158
      %v7400 = vmul.f32 %v2401, %v7162
      %v7401 = vmul.f32 %v2405, %v7166
      %v7402 = vmul.f32 %v2409, %v7170
      %v7403 = vmul.f32 %v2413, %v7174
      %v7404 = vmul.f32 %v2417, %v7178
      %v7405 = vmul.f32 %v2421, %v7182
      %v7406 = vmul.f32 %v2425, %v7186
      %v7407 = vmul.f32 %v2429, %v7190
      %v7408 = vmul.f32 %v2433, %v7194
      %v7409 = vmul.f32 %v2437, %v7198
      %v7410 = vmul.f32 %v2441, %v7202
      %v7411 = vmul.f32 %v2445, %v7206
      %v7412 = vmul.f32 %v2449, %v7210
      %v7413 = vmul.f32 %v2453, %v7214
      %v7414 = vmul.f32 %v2457, %v7218
      %v7415 = vmul.f32 %v2461, %v7222
      %v7416 = vmul.f32 %v2465, %v7226
      %v7417 = vmul.f32 %v2469, %v7230
      %v7418 = vmul.f32 %v2473, %v7234
      %v7419 = vmul.f32 %v2477, %v7238
      %v7420 = vmul.f32 %v2481, %v7242
      %v7421 = vmul.f32 %v2485, %v7246
      %v7422 = vmul.f32 %v2489, %v7250
      %v7423 = vmul.f32 %v2493, %v7254
      %v7424 = vmul.f32 %v2497, %v7258
      %v7425 = vmul.f32 %v2501, %v7262
      %v7426 = vmul.f32 %v2505, %v7266
      %v7427 = vmul.f32 %v2509, %v7270
      %v7428 = vmul.f32 %v2513, %v7274
      %v7429 = vmul.f32 %v2517, %v7278
      %v7430 = vmul.f32 %v2521, %v7282
      %v7431 = vmul.f32 %v2525, %v7286
      %v7432 = vmul.f32 %v2529, %v7290
      %v7433 = vmul.f32 %v2533, %v7294
      %v7434 = vmul.f32 %v2537, %v7298
      %v7435 = vmul.f32 %v2541, %v7302
      %v7436 = vmul.f32 %v2545, %v7306
      %v7437 = vmul.f32 %v2549, %v7310
      %v7438 = vmul.f32 %v2553, %v7314
      %v7439 = vmul.f32 %v2557, %v7318
      %v7440 = vmul.f32 %v2561, %v7322
      %v7441 = vmul.f32 %v2565, %v7326
      %v7442 = vmul.f32 %v2569, %v7330
      %v7443 = vmul.f32 %v2573, %v7334
      %v7444 = vmul.f32 %v2577, %v7338
      %v7445 = vmul.f32 %v2581, %v7342
      %v7446 = vmul.f32 %v2585, %v7346
      %v7447 = vmul.f32 %v2589, %v7350
      %v7448 = vmul.f32 %v2593, %v7354
      %v7449 = vmul.f32 %v2597, %v7358
      %v7450 = vmul.f32 %v2601, %v7362
      %v7451 = vmul.f32 %v2605, %v7366
      %v7452 = vmul.f32 %v2609, %v7370
      %v7453 = vmul.f32 %v2613, %v7374
      %v7454 = vmul.f32 %v2617, %v7378
      %v7455 = vmul.f32 %v2621, %v7382
      %v7456 = vmul.f32 %v2625, %v7386
      %v7457 = vmul.f32 %v2629, %v7390
      %v7458 = vmul.f32 %v2633, %v7394
      %v7459 = vadd.f32 %v7075, %v7395
      %v7460 = vadd.f32 %v7076, %v7396
      %v7461 = vadd.f32 %v7077, %v7397
      %v7462 = vadd.f32 %v7078, %v7398
      %v7463 = vadd.f32 %v7079, %v7399
      %v7464 = vadd.f32 %v7080, %v7400
      %v7465 = vadd.f32 %v7081, %v7401
      %v7466 = vadd.f32 %v7082, %v7402
      %v7467 = vadd.f32 %v7083, %v7403
      %v7468 = vadd.f32 %v7084, %v7404
      %v7469 = vadd.f32 %v7085, %v7405
      %v7470 = vadd.f32 %v7086, %v7406
      %v7471 = vadd.f32 %v7087, %v7407
      %v7472 = vadd.f32 %v7088, %v7408
      %v7473 = vadd.f32 %v7089, %v7409
      %v7474 = vadd.f32 %v7090, %v7410
      %v7475 = vadd.f32 %v7091, %v7411
      %v7476 = vadd.f32 %v7092, %v7412
      %v7477 = vadd.f32 %v7093, %v7413
      %v7478 = vadd.f32 %v7094, %v7414
      %v7479 = vadd.f32 %v7095, %v7415
      %v7480 = vadd.f32 %v7096, %v7416
      %v7481 = vadd.f32 %v7097, %v7417
      %v7482 = vadd.f32 %v7098, %v7418
      %v7483 = vadd.f32 %v7099, %v7419
      %v7484 = vadd.f32 %v7100, %v7420
      %v7485 = vadd.f32 %v7101, %v7421
      %v7486 = vadd.f32 %v7102, %v7422
      %v7487 = vadd.f32 %v7103, %v7423
      %v7488 = vadd.f32 %v7104, %v7424
      %v7489 = vadd.f32 %v7105, %v7425
      %v7490 = vadd.f32 %v7106, %v7426
      %v7491 = vadd.f32 %v7107, %v7427
      %v7492 = vadd.f32 %v7108, %v7428
      %v7493 = vadd.f32 %v7109, %v7429
      %v7494 = vadd.f32 %v7110, %v7430
      %v7495 = vadd.f32 %v7111, %v7431
      %v7496 = vadd.f32 %v7112, %v7432
      %v7497 = vadd.f32 %v7113, %v7433
      %v7498 = vadd.f32 %v7114, %v7434
      %v7499 = vadd.f32 %v7115, %v7435
      %v7500 = vadd.f32 %v7116, %v7436
      %v7501 = vadd.f32 %v7117, %v7437
      %v7502 = vadd.f32 %v7118, %v7438
      %v7503 = vadd.f32 %v7119, %v7439
      %v7504 = vadd.f32 %v7120, %v7440
      %v7505 = vadd.f32 %v7121, %v7441
      %v7506 = vadd.f32 %v7122, %v7442
      %v7507 = vadd.f32 %v7123, %v7443
      %v7508 = vadd.f32 %v7124, %v7444
      %v7509 = vadd.f32 %v7125, %v7445
      %v7510 = vadd.f32 %v7126, %v7446
      %v7511 = vadd.f32 %v7127, %v7447
      %v7512 = vadd.f32 %v7128, %v7448
      %v7513 = vadd.f32 %v7129, %v7449
      %v7514 = vadd.f32 %v7130, %v7450
      %v7515 = vadd.f32 %v7131, %v7451
      %v7516 = vadd.f32 %v7132, %v7452
      %v7517 = vadd.f32 %v7133, %v7453
      %v7518 = vadd.f32 %v7134, %v7454
      %v7519 = vadd.f32 %v7135, %v7455
      %v7520 = vadd.f32 %v7136, %v7456
      %v7521 = vadd.f32 %v7137, %v7457
      %v7522 = vadd.f32 %v7138, %v7458
      %v7523 = vlaneseq
      %v7524 = vshrl.u32 %v7523, 7
      %v7525 = vsub.s32 4, %v7524
      %v7526 = vrot.slane %v5733, %v7525
      %v7527 = vlaneseq
      %v7528 = vshrl.u32 %v7527, 7
      %v7529 = vsub.s32 4, %v7528
      %v7530 = vrot.slane %v5738, %v7529
      %v7531 = vlaneseq
      %v7532 = vshrl.u32 %v7531, 7
      %v7533 = vsub.s32 4, %v7532
      %v7534 = vrot.slane %v5743, %v7533
      %v7535 = vlaneseq
      %v7536 = vshrl.u32 %v7535, 7
      %v7537 = vsub.s32 4, %v7536
      %v7538 = vrot.slane %v5748, %v7537
      %v7539 = vlaneseq
      %v7540 = vshrl.u32 %v7539, 7
      %v7541 = vsub.s32 4, %v7540
      %v7542 = vrot.slane %v5753, %v7541
      %v7543 = vlaneseq
      %v7544 = vshrl.u32 %v7543, 7
      %v7545 = vsub.s32 4, %v7544
      %v7546 = vrot.slane %v5758, %v7545
      %v7547 = vlaneseq
      %v7548 = vshrl.u32 %v7547, 7
      %v7549 = vsub.s32 4, %v7548
      %v7550 = vrot.slane %v5763, %v7549
      %v7551 = vlaneseq
      %v7552 = vshrl.u32 %v7551, 7
      %v7553 = vsub.s32 4, %v7552
      %v7554 = vrot.slane %v5768, %v7553
      %v7555 = vlaneseq
      %v7556 = vshrl.u32 %v7555, 7
      %v7557 = vsub.s32 4, %v7556
      %v7558 = vrot.slane %v5773, %v7557
      %v7559 = vlaneseq
      %v7560 = vshrl.u32 %v7559, 7
      %v7561 = vsub.s32 4, %v7560
      %v7562 = vrot.slane %v5778, %v7561
      %v7563 = vlaneseq
      %v7564 = vshrl.u32 %v7563, 7
      %v7565 = vsub.s32 4, %v7564
      %v7566 = vrot.slane %v5783, %v7565
      %v7567 = vlaneseq
      %v7568 = vshrl.u32 %v7567, 7
      %v7569 = vsub.s32 4, %v7568
      %v7570 = vrot.slane %v5788, %v7569
      %v7571 = vlaneseq
      %v7572 = vshrl.u32 %v7571, 7
      %v7573 = vsub.s32 4, %v7572
      %v7574 = vrot.slane %v5793, %v7573
      %v7575 = vlaneseq
      %v7576 = vshrl.u32 %v7575, 7
      %v7577 = vsub.s32 4, %v7576
      %v7578 = vrot.slane %v5798, %v7577
      %v7579 = vlaneseq
      %v7580 = vshrl.u32 %v7579, 7
      %v7581 = vsub.s32 4, %v7580
      %v7582 = vrot.slane %v5803, %v7581
      %v7583 = vlaneseq
      %v7584 = vshrl.u32 %v7583, 7
      %v7585 = vsub.s32 4, %v7584
      %v7586 = vrot.slane %v5808, %v7585
      %v7587 = vlaneseq
      %v7588 = vshrl.u32 %v7587, 7
      %v7589 = vsub.s32 4, %v7588
      %v7590 = vrot.slane %v5813, %v7589
      %v7591 = vlaneseq
      %v7592 = vshrl.u32 %v7591, 7
      %v7593 = vsub.s32 4, %v7592
      %v7594 = vrot.slane %v5818, %v7593
      %v7595 = vlaneseq
      %v7596 = vshrl.u32 %v7595, 7
      %v7597 = vsub.s32 4, %v7596
      %v7598 = vrot.slane %v5823, %v7597
      %v7599 = vlaneseq
      %v7600 = vshrl.u32 %v7599, 7
      %v7601 = vsub.s32 4, %v7600
      %v7602 = vrot.slane %v5828, %v7601
      %v7603 = vlaneseq
      %v7604 = vshrl.u32 %v7603, 7
      %v7605 = vsub.s32 4, %v7604
      %v7606 = vrot.slane %v5833, %v7605
      %v7607 = vlaneseq
      %v7608 = vshrl.u32 %v7607, 7
      %v7609 = vsub.s32 4, %v7608
      %v7610 = vrot.slane %v5838, %v7609
      %v7611 = vlaneseq
      %v7612 = vshrl.u32 %v7611, 7
      %v7613 = vsub.s32 4, %v7612
      %v7614 = vrot.slane %v5843, %v7613
      %v7615 = vlaneseq
      %v7616 = vshrl.u32 %v7615, 7
      %v7617 = vsub.s32 4, %v7616
      %v7618 = vrot.slane %v5848, %v7617
      %v7619 = vlaneseq
      %v7620 = vshrl.u32 %v7619, 7
      %v7621 = vsub.s32 4, %v7620
      %v7622 = vrot.slane %v5853, %v7621
      %v7623 = vlaneseq
      %v7624 = vshrl.u32 %v7623, 7
      %v7625 = vsub.s32 4, %v7624
      %v7626 = vrot.slane %v5858, %v7625
      %v7627 = vlaneseq
      %v7628 = vshrl.u32 %v7627, 7
      %v7629 = vsub.s32 4, %v7628
      %v7630 = vrot.slane %v5863, %v7629
      %v7631 = vlaneseq
      %v7632 = vshrl.u32 %v7631, 7
      %v7633 = vsub.s32 4, %v7632
      %v7634 = vrot.slane %v5868, %v7633
      %v7635 = vlaneseq
      %v7636 = vshrl.u32 %v7635, 7
      %v7637 = vsub.s32 4, %v7636
      %v7638 = vrot.slane %v5873, %v7637
      %v7639 = vlaneseq
      %v7640 = vshrl.u32 %v7639, 7
      %v7641 = vsub.s32 4, %v7640
      %v7642 = vrot.slane %v5878, %v7641
      %v7643 = vlaneseq
      %v7644 = vshrl.u32 %v7643, 7
      %v7645 = vsub.s32 4, %v7644
      %v7646 = vrot.slane %v5883, %v7645
      %v7647 = vlaneseq
      %v7648 = vshrl.u32 %v7647, 7
      %v7649 = vsub.s32 4, %v7648
      %v7650 = vrot.slane %v5888, %v7649
      %v7651 = vlaneseq
      %v7652 = vshrl.u32 %v7651, 7
      %v7653 = vsub.s32 4, %v7652
      %v7654 = vrot.slane %v5893, %v7653
      %v7655 = vlaneseq
      %v7656 = vshrl.u32 %v7655, 7
      %v7657 = vsub.s32 4, %v7656
      %v7658 = vrot.slane %v5898, %v7657
      %v7659 = vlaneseq
      %v7660 = vshrl.u32 %v7659, 7
      %v7661 = vsub.s32 4, %v7660
      %v7662 = vrot.slane %v5903, %v7661
      %v7663 = vlaneseq
      %v7664 = vshrl.u32 %v7663, 7
      %v7665 = vsub.s32 4, %v7664
      %v7666 = vrot.slane %v5908, %v7665
      %v7667 = vlaneseq
      %v7668 = vshrl.u32 %v7667, 7
      %v7669 = vsub.s32 4, %v7668
      %v7670 = vrot.slane %v5913, %v7669
      %v7671 = vlaneseq
      %v7672 = vshrl.u32 %v7671, 7
      %v7673 = vsub.s32 4, %v7672
      %v7674 = vrot.slane %v5918, %v7673
      %v7675 = vlaneseq
      %v7676 = vshrl.u32 %v7675, 7
      %v7677 = vsub.s32 4, %v7676
      %v7678 = vrot.slane %v5923, %v7677
      %v7679 = vlaneseq
      %v7680 = vshrl.u32 %v7679, 7
      %v7681 = vsub.s32 4, %v7680
      %v7682 = vrot.slane %v5928, %v7681
      %v7683 = vlaneseq
      %v7684 = vshrl.u32 %v7683, 7
      %v7685 = vsub.s32 4, %v7684
      %v7686 = vrot.slane %v5933, %v7685
      %v7687 = vlaneseq
      %v7688 = vshrl.u32 %v7687, 7
      %v7689 = vsub.s32 4, %v7688
      %v7690 = vrot.slane %v5938, %v7689
      %v7691 = vlaneseq
      %v7692 = vshrl.u32 %v7691, 7
      %v7693 = vsub.s32 4, %v7692
      %v7694 = vrot.slane %v5943, %v7693
      %v7695 = vlaneseq
      %v7696 = vshrl.u32 %v7695, 7
      %v7697 = vsub.s32 4, %v7696
      %v7698 = vrot.slane %v5948, %v7697
      %v7699 = vlaneseq
      %v7700 = vshrl.u32 %v7699, 7
      %v7701 = vsub.s32 4, %v7700
      %v7702 = vrot.slane %v5953, %v7701
      %v7703 = vlaneseq
      %v7704 = vshrl.u32 %v7703, 7
      %v7705 = vsub.s32 4, %v7704
      %v7706 = vrot.slane %v5958, %v7705
      %v7707 = vlaneseq
      %v7708 = vshrl.u32 %v7707, 7
      %v7709 = vsub.s32 4, %v7708
      %v7710 = vrot.slane %v5963, %v7709
      %v7711 = vlaneseq
      %v7712 = vshrl.u32 %v7711, 7
      %v7713 = vsub.s32 4, %v7712
      %v7714 = vrot.slane %v5968, %v7713
      %v7715 = vlaneseq
      %v7716 = vshrl.u32 %v7715, 7
      %v7717 = vsub.s32 4, %v7716
      %v7718 = vrot.slane %v5973, %v7717
      %v7719 = vlaneseq
      %v7720 = vshrl.u32 %v7719, 7
      %v7721 = vsub.s32 4, %v7720
      %v7722 = vrot.slane %v5978, %v7721
      %v7723 = vlaneseq
      %v7724 = vshrl.u32 %v7723, 7
      %v7725 = vsub.s32 4, %v7724
      %v7726 = vrot.slane %v5983, %v7725
      %v7727 = vlaneseq
      %v7728 = vshrl.u32 %v7727, 7
      %v7729 = vsub.s32 4, %v7728
      %v7730 = vrot.slane %v5988, %v7729
      %v7731 = vlaneseq
      %v7732 = vshrl.u32 %v7731, 7
      %v7733 = vsub.s32 4, %v7732
      %v7734 = vrot.slane %v5993, %v7733
      %v7735 = vlaneseq
      %v7736 = vshrl.u32 %v7735, 7
      %v7737 = vsub.s32 4, %v7736
      %v7738 = vrot.slane %v5998, %v7737
      %v7739 = vlaneseq
      %v7740 = vshrl.u32 %v7739, 7
      %v7741 = vsub.s32 4, %v7740
      %v7742 = vrot.slane %v6003, %v7741
      %v7743 = vlaneseq
      %v7744 = vshrl.u32 %v7743, 7
      %v7745 = vsub.s32 4, %v7744
      %v7746 = vrot.slane %v6008, %v7745
      %v7747 = vlaneseq
      %v7748 = vshrl.u32 %v7747, 7
      %v7749 = vsub.s32 4, %v7748
      %v7750 = vrot.slane %v6013, %v7749
      %v7751 = vlaneseq
      %v7752 = vshrl.u32 %v7751, 7
      %v7753 = vsub.s32 4, %v7752
      %v7754 = vrot.slane %v6018, %v7753
      %v7755 = vlaneseq
      %v7756 = vshrl.u32 %v7755, 7
      %v7757 = vsub.s32 4, %v7756
      %v7758 = vrot.slane %v6023, %v7757
      %v7759 = vlaneseq
      %v7760 = vshrl.u32 %v7759, 7
      %v7761 = vsub.s32 4, %v7760
      %v7762 = vrot.slane %v6028, %v7761
      %v7763 = vlaneseq
      %v7764 = vshrl.u32 %v7763, 7
      %v7765 = vsub.s32 4, %v7764
      %v7766 = vrot.slane %v6033, %v7765
      %v7767 = vlaneseq
      %v7768 = vshrl.u32 %v7767, 7
      %v7769 = vsub.s32 4, %v7768
      %v7770 = vrot.slane %v6038, %v7769
      %v7771 = vlaneseq
      %v7772 = vshrl.u32 %v7771, 7
      %v7773 = vsub.s32 4, %v7772
      %v7774 = vrot.slane %v6043, %v7773
      %v7775 = vlaneseq
      %v7776 = vshrl.u32 %v7775, 7
      %v7777 = vsub.s32 4, %v7776
      %v7778 = vrot.slane %v6048, %v7777
      %v7779 = vmul.f32 %v3021, %v7526
      %v7780 = vmul.f32 %v3025, %v7530
      %v7781 = vmul.f32 %v3029, %v7534
      %v7782 = vmul.f32 %v3033, %v7538
      %v7783 = vmul.f32 %v3037, %v7542
      %v7784 = vmul.f32 %v3041, %v7546
      %v7785 = vmul.f32 %v3045, %v7550
      %v7786 = vmul.f32 %v3049, %v7554
      %v7787 = vmul.f32 %v3053, %v7558
      %v7788 = vmul.f32 %v3057, %v7562
      %v7789 = vmul.f32 %v3061, %v7566
      %v7790 = vmul.f32 %v3065, %v7570
      %v7791 = vmul.f32 %v3069, %v7574
      %v7792 = vmul.f32 %v3073, %v7578
      %v7793 = vmul.f32 %v3077, %v7582
      %v7794 = vmul.f32 %v3081, %v7586
      %v7795 = vmul.f32 %v3085, %v7590
      %v7796 = vmul.f32 %v3089, %v7594
      %v7797 = vmul.f32 %v3093, %v7598
      %v7798 = vmul.f32 %v3097, %v7602
      %v7799 = vmul.f32 %v3101, %v7606
      %v7800 = vmul.f32 %v3105, %v7610
      %v7801 = vmul.f32 %v3109, %v7614
      %v7802 = vmul.f32 %v3113, %v7618
      %v7803 = vmul.f32 %v3117, %v7622
      %v7804 = vmul.f32 %v3121, %v7626
      %v7805 = vmul.f32 %v3125, %v7630
      %v7806 = vmul.f32 %v3129, %v7634
      %v7807 = vmul.f32 %v3133, %v7638
      %v7808 = vmul.f32 %v3137, %v7642
      %v7809 = vmul.f32 %v3141, %v7646
      %v7810 = vmul.f32 %v3145, %v7650
      %v7811 = vmul.f32 %v3149, %v7654
      %v7812 = vmul.f32 %v3153, %v7658
      %v7813 = vmul.f32 %v3157, %v7662
      %v7814 = vmul.f32 %v3161, %v7666
      %v7815 = vmul.f32 %v3165, %v7670
      %v7816 = vmul.f32 %v3169, %v7674
      %v7817 = vmul.f32 %v3173, %v7678
      %v7818 = vmul.f32 %v3177, %v7682
      %v7819 = vmul.f32 %v3181, %v7686
      %v7820 = vmul.f32 %v3185, %v7690
      %v7821 = vmul.f32 %v3189, %v7694
      %v7822 = vmul.f32 %v3193, %v7698
      %v7823 = vmul.f32 %v3197, %v7702
      %v7824 = vmul.f32 %v3201, %v7706
      %v7825 = vmul.f32 %v3205, %v7710
      %v7826 = vmul.f32 %v3209, %v7714
      %v7827 = vmul.f32 %v3213, %v7718
      %v7828 = vmul.f32 %v3217, %v7722
      %v7829 = vmul.f32 %v3221, %v7726
      %v7830 = vmul.f32 %v3225, %v7730
      %v7831 = vmul.f32 %v3229, %v7734
      %v7832 = vmul.f32 %v3233, %v7738
      %v7833 = vmul.f32 %v3237, %v7742
      %v7834 = vmul.f32 %v3241, %v7746
      %v7835 = vmul.f32 %v3245, %v7750
      %v7836 = vmul.f32 %v3249, %v7754
      %v7837 = vmul.f32 %v3253, %v7758
      %v7838 = vmul.f32 %v3257, %v7762
      %v7839 = vmul.f32 %v3261, %v7766
      %v7840 = vmul.f32 %v3265, %v7770
      %v7841 = vmul.f32 %v3269, %v7774
      %v7842 = vmul.f32 %v3273, %v7778
      %v7843 = vadd.f32 %v7459, %v7779
      %v7844 = vadd.f32 %v7460, %v7780
      %v7845 = vadd.f32 %v7461, %v7781
      %v7846 = vadd.f32 %v7462, %v7782
      %v7847 = vadd.f32 %v7463, %v7783
      %v7848 = vadd.f32 %v7464, %v7784
      %v7849 = vadd.f32 %v7465, %v7785
      %v7850 = vadd.f32 %v7466, %v7786
      %v7851 = vadd.f32 %v7467, %v7787
      %v7852 = vadd.f32 %v7468, %v7788
      %v7853 = vadd.f32 %v7469, %v7789
      %v7854 = vadd.f32 %v7470, %v7790
      %v7855 = vadd.f32 %v7471, %v7791
      %v7856 = vadd.f32 %v7472, %v7792
      %v7857 = vadd.f32 %v7473, %v7793
      %v7858 = vadd.f32 %v7474, %v7794
      %v7859 = vadd.f32 %v7475, %v7795
      %v7860 = vadd.f32 %v7476, %v7796
      %v7861 = vadd.f32 %v7477, %v7797
      %v7862 = vadd.f32 %v7478, %v7798
      %v7863 = vadd.f32 %v7479, %v7799
      %v7864 = vadd.f32 %v7480, %v7800
      %v7865 = vadd.f32 %v7481, %v7801
      %v7866 = vadd.f32 %v7482, %v7802
      %v7867 = vadd.f32 %v7483, %v7803
      %v7868 = vadd.f32 %v7484, %v7804
      %v7869 = vadd.f32 %v7485, %v7805
      %v7870 = vadd.f32 %v7486, %v7806
      %v7871 = vadd.f32 %v7487, %v7807
      %v7872 = vadd.f32 %v7488, %v7808
      %v7873 = vadd.f32 %v7489, %v7809
      %v7874 = vadd.f32 %v7490, %v7810
      %v7875 = vadd.f32 %v7491, %v7811
      %v7876 = vadd.f32 %v7492, %v7812
      %v7877 = vadd.f32 %v7493, %v7813
      %v7878 = vadd.f32 %v7494, %v7814
      %v7879 = vadd.f32 %v7495, %v7815
      %v7880 = vadd.f32 %v7496, %v7816
      %v7881 = vadd.f32 %v7497, %v7817
      %v7882 = vadd.f32 %v7498, %v7818
      %v7883 = vadd.f32 %v7499, %v7819
      %v7884 = vadd.f32 %v7500, %v7820
      %v7885 = vadd.f32 %v7501, %v7821
      %v7886 = vadd.f32 %v7502, %v7822
      %v7887 = vadd.f32 %v7503, %v7823
      %v7888 = vadd.f32 %v7504, %v7824
      %v7889 = vadd.f32 %v7505, %v7825
      %v7890 = vadd.f32 %v7506, %v7826
      %v7891 = vadd.f32 %v7507, %v7827
      %v7892 = vadd.f32 %v7508, %v7828
      %v7893 = vadd.f32 %v7509, %v7829
      %v7894 = vadd.f32 %v7510, %v7830
      %v7895 = vadd.f32 %v7511, %v7831
      %v7896 = vadd.f32 %v7512, %v7832
      %v7897 = vadd.f32 %v7513, %v7833
      %v7898 = vadd.f32 %v7514, %v7834
      %v7899 = vadd.f32 %v7515, %v7835
      %v7900 = vadd.f32 %v7516, %v7836
      %v7901 = vadd.f32 %v7517, %v7837
      %v7902 = vadd.f32 %v7518, %v7838
      %v7903 = vadd.f32 %v7519, %v7839
      %v7904 = vadd.f32 %v7520, %v7840
      %v7905 = vadd.f32 %v7521, %v7841
      %v7906 = vadd.f32 %v7522, %v7842
      %v7907 = vlaneseq
      %v7908 = vshrl.u32 %v7907, 7
      %v7909 = vsub.s32 5, %v7908
      %v7910 = vrot.slane %v5733, %v7909
      %v7911 = vlaneseq
      %v7912 = vshrl.u32 %v7911, 7
      %v7913 = vsub.s32 5, %v7912
      %v7914 = vrot.slane %v5738, %v7913
      %v7915 = vlaneseq
      %v7916 = vshrl.u32 %v7915, 7
      %v7917 = vsub.s32 5, %v7916
      %v7918 = vrot.slane %v5743, %v7917
      %v7919 = vlaneseq
      %v7920 = vshrl.u32 %v7919, 7
      %v7921 = vsub.s32 5, %v7920
      %v7922 = vrot.slane %v5748, %v7921
      %v7923 = vlaneseq
      %v7924 = vshrl.u32 %v7923, 7
      %v7925 = vsub.s32 5, %v7924
      %v7926 = vrot.slane %v5753, %v7925
      %v7927 = vlaneseq
      %v7928 = vshrl.u32 %v7927, 7
      %v7929 = vsub.s32 5, %v7928
      %v7930 = vrot.slane %v5758, %v7929
      %v7931 = vlaneseq
      %v7932 = vshrl.u32 %v7931, 7
      %v7933 = vsub.s32 5, %v7932
      %v7934 = vrot.slane %v5763, %v7933
      %v7935 = vlaneseq
      %v7936 = vshrl.u32 %v7935, 7
      %v7937 = vsub.s32 5, %v7936
      %v7938 = vrot.slane %v5768, %v7937
      %v7939 = vlaneseq
      %v7940 = vshrl.u32 %v7939, 7
      %v7941 = vsub.s32 5, %v7940
      %v7942 = vrot.slane %v5773, %v7941
      %v7943 = vlaneseq
      %v7944 = vshrl.u32 %v7943, 7
      %v7945 = vsub.s32 5, %v7944
      %v7946 = vrot.slane %v5778, %v7945
      %v7947 = vlaneseq
      %v7948 = vshrl.u32 %v7947, 7
      %v7949 = vsub.s32 5, %v7948
      %v7950 = vrot.slane %v5783, %v7949
      %v7951 = vlaneseq
      %v7952 = vshrl.u32 %v7951, 7
      %v7953 = vsub.s32 5, %v7952
      %v7954 = vrot.slane %v5788, %v7953
      %v7955 = vlaneseq
      %v7956 = vshrl.u32 %v7955, 7
      %v7957 = vsub.s32 5, %v7956
      %v7958 = vrot.slane %v5793, %v7957
      %v7959 = vlaneseq
      %v7960 = vshrl.u32 %v7959, 7
      %v7961 = vsub.s32 5, %v7960
      %v7962 = vrot.slane %v5798, %v7961
      %v7963 = vlaneseq
      %v7964 = vshrl.u32 %v7963, 7
      %v7965 = vsub.s32 5, %v7964
      %v7966 = vrot.slane %v5803, %v7965
      %v7967 = vlaneseq
      %v7968 = vshrl.u32 %v7967, 7
      %v7969 = vsub.s32 5, %v7968
      %v7970 = vrot.slane %v5808, %v7969
      %v7971 = vlaneseq
      %v7972 = vshrl.u32 %v7971, 7
      %v7973 = vsub.s32 5, %v7972
      %v7974 = vrot.slane %v5813, %v7973
      %v7975 = vlaneseq
      %v7976 = vshrl.u32 %v7975, 7
      %v7977 = vsub.s32 5, %v7976
      %v7978 = vrot.slane %v5818, %v7977
      %v7979 = vlaneseq
      %v7980 = vshrl.u32 %v7979, 7
      %v7981 = vsub.s32 5, %v7980
      %v7982 = vrot.slane %v5823, %v7981
      %v7983 = vlaneseq
      %v7984 = vshrl.u32 %v7983, 7
      %v7985 = vsub.s32 5, %v7984
      %v7986 = vrot.slane %v5828, %v7985
      %v7987 = vlaneseq
      %v7988 = vshrl.u32 %v7987, 7
      %v7989 = vsub.s32 5, %v7988
      %v7990 = vrot.slane %v5833, %v7989
      %v7991 = vlaneseq
      %v7992 = vshrl.u32 %v7991, 7
      %v7993 = vsub.s32 5, %v7992
      %v7994 = vrot.slane %v5838, %v7993
      %v7995 = vlaneseq
      %v7996 = vshrl.u32 %v7995, 7
      %v7997 = vsub.s32 5, %v7996
      %v7998 = vrot.slane %v5843, %v7997
      %v7999 = vlaneseq
      %v8000 = vshrl.u32 %v7999, 7
      %v8001 = vsub.s32 5, %v8000
      %v8002 = vrot.slane %v5848, %v8001
      %v8003 = vlaneseq
      %v8004 = vshrl.u32 %v8003, 7
      %v8005 = vsub.s32 5, %v8004
      %v8006 = vrot.slane %v5853, %v8005
      %v8007 = vlaneseq
      %v8008 = vshrl.u32 %v8007, 7
      %v8009 = vsub.s32 5, %v8008
      %v8010 = vrot.slane %v5858, %v8009
      %v8011 = vlaneseq
      %v8012 = vshrl.u32 %v8011, 7
      %v8013 = vsub.s32 5, %v8012
      %v8014 = vrot.slane %v5863, %v8013
      %v8015 = vlaneseq
      %v8016 = vshrl.u32 %v8015, 7
      %v8017 = vsub.s32 5, %v8016
      %v8018 = vrot.slane %v5868, %v8017
      %v8019 = vlaneseq
      %v8020 = vshrl.u32 %v8019, 7
      %v8021 = vsub.s32 5, %v8020
      %v8022 = vrot.slane %v5873, %v8021
      %v8023 = vlaneseq
      %v8024 = vshrl.u32 %v8023, 7
      %v8025 = vsub.s32 5, %v8024
      %v8026 = vrot.slane %v5878, %v8025
      %v8027 = vlaneseq
      %v8028 = vshrl.u32 %v8027, 7
      %v8029 = vsub.s32 5, %v8028
      %v8030 = vrot.slane %v5883, %v8029
      %v8031 = vlaneseq
      %v8032 = vshrl.u32 %v8031, 7
      %v8033 = vsub.s32 5, %v8032
      %v8034 = vrot.slane %v5888, %v8033
      %v8035 = vlaneseq
      %v8036 = vshrl.u32 %v8035, 7
      %v8037 = vsub.s32 5, %v8036
      %v8038 = vrot.slane %v5893, %v8037
      %v8039 = vlaneseq
      %v8040 = vshrl.u32 %v8039, 7
      %v8041 = vsub.s32 5, %v8040
      %v8042 = vrot.slane %v5898, %v8041
      %v8043 = vlaneseq
      %v8044 = vshrl.u32 %v8043, 7
      %v8045 = vsub.s32 5, %v8044
      %v8046 = vrot.slane %v5903, %v8045
      %v8047 = vlaneseq
      %v8048 = vshrl.u32 %v8047, 7
      %v8049 = vsub.s32 5, %v8048
      %v8050 = vrot.slane %v5908, %v8049
      %v8051 = vlaneseq
      %v8052 = vshrl.u32 %v8051, 7
      %v8053 = vsub.s32 5, %v8052
      %v8054 = vrot.slane %v5913, %v8053
      %v8055 = vlaneseq
      %v8056 = vshrl.u32 %v8055, 7
      %v8057 = vsub.s32 5, %v8056
      %v8058 = vrot.slane %v5918, %v8057
      %v8059 = vlaneseq
      %v8060 = vshrl.u32 %v8059, 7
      %v8061 = vsub.s32 5, %v8060
      %v8062 = vrot.slane %v5923, %v8061
      %v8063 = vlaneseq
      %v8064 = vshrl.u32 %v8063, 7
      %v8065 = vsub.s32 5, %v8064
      %v8066 = vrot.slane %v5928, %v8065
      %v8067 = vlaneseq
      %v8068 = vshrl.u32 %v8067, 7
      %v8069 = vsub.s32 5, %v8068
      %v8070 = vrot.slane %v5933, %v8069
      %v8071 = vlaneseq
      %v8072 = vshrl.u32 %v8071, 7
      %v8073 = vsub.s32 5, %v8072
      %v8074 = vrot.slane %v5938, %v8073
      %v8075 = vlaneseq
      %v8076 = vshrl.u32 %v8075, 7
      %v8077 = vsub.s32 5, %v8076
      %v8078 = vrot.slane %v5943, %v8077
      %v8079 = vlaneseq
      %v8080 = vshrl.u32 %v8079, 7
      %v8081 = vsub.s32 5, %v8080
      %v8082 = vrot.slane %v5948, %v8081
      %v8083 = vlaneseq
      %v8084 = vshrl.u32 %v8083, 7
      %v8085 = vsub.s32 5, %v8084
      %v8086 = vrot.slane %v5953, %v8085
      %v8087 = vlaneseq
      %v8088 = vshrl.u32 %v8087, 7
      %v8089 = vsub.s32 5, %v8088
      %v8090 = vrot.slane %v5958, %v8089
      %v8091 = vlaneseq
      %v8092 = vshrl.u32 %v8091, 7
      %v8093 = vsub.s32 5, %v8092
      %v8094 = vrot.slane %v5963, %v8093
      %v8095 = vlaneseq
      %v8096 = vshrl.u32 %v8095, 7
      %v8097 = vsub.s32 5, %v8096
      %v8098 = vrot.slane %v5968, %v8097
      %v8099 = vlaneseq
      %v8100 = vshrl.u32 %v8099, 7
      %v8101 = vsub.s32 5, %v8100
      %v8102 = vrot.slane %v5973, %v8101
      %v8103 = vlaneseq
      %v8104 = vshrl.u32 %v8103, 7
      %v8105 = vsub.s32 5, %v8104
      %v8106 = vrot.slane %v5978, %v8105
      %v8107 = vlaneseq
      %v8108 = vshrl.u32 %v8107, 7
      %v8109 = vsub.s32 5, %v8108
      %v8110 = vrot.slane %v5983, %v8109
      %v8111 = vlaneseq
      %v8112 = vshrl.u32 %v8111, 7
      %v8113 = vsub.s32 5, %v8112
      %v8114 = vrot.slane %v5988, %v8113
      %v8115 = vlaneseq
      %v8116 = vshrl.u32 %v8115, 7
      %v8117 = vsub.s32 5, %v8116
      %v8118 = vrot.slane %v5993, %v8117
      %v8119 = vlaneseq
      %v8120 = vshrl.u32 %v8119, 7
      %v8121 = vsub.s32 5, %v8120
      %v8122 = vrot.slane %v5998, %v8121
      %v8123 = vlaneseq
      %v8124 = vshrl.u32 %v8123, 7
      %v8125 = vsub.s32 5, %v8124
      %v8126 = vrot.slane %v6003, %v8125
      %v8127 = vlaneseq
      %v8128 = vshrl.u32 %v8127, 7
      %v8129 = vsub.s32 5, %v8128
      %v8130 = vrot.slane %v6008, %v8129
      %v8131 = vlaneseq
      %v8132 = vshrl.u32 %v8131, 7
      %v8133 = vsub.s32 5, %v8132
      %v8134 = vrot.slane %v6013, %v8133
      %v8135 = vlaneseq
      %v8136 = vshrl.u32 %v8135, 7
      %v8137 = vsub.s32 5, %v8136
      %v8138 = vrot.slane %v6018, %v8137
      %v8139 = vlaneseq
      %v8140 = vshrl.u32 %v8139, 7
      %v8141 = vsub.s32 5, %v8140
      %v8142 = vrot.slane %v6023, %v8141
      %v8143 = vlaneseq
      %v8144 = vshrl.u32 %v8143, 7
      %v8145 = vsub.s32 5, %v8144
      %v8146 = vrot.slane %v6028, %v8145
      %v8147 = vlaneseq
      %v8148 = vshrl.u32 %v8147, 7
      %v8149 = vsub.s32 5, %v8148
      %v8150 = vrot.slane %v6033, %v8149
      %v8151 = vlaneseq
      %v8152 = vshrl.u32 %v8151, 7
      %v8153 = vsub.s32 5, %v8152
      %v8154 = vrot.slane %v6038, %v8153
      %v8155 = vlaneseq
      %v8156 = vshrl.u32 %v8155, 7
      %v8157 = vsub.s32 5, %v8156
      %v8158 = vrot.slane %v6043, %v8157
      %v8159 = vlaneseq
      %v8160 = vshrl.u32 %v8159, 7
      %v8161 = vsub.s32 5, %v8160
      %v8162 = vrot.slane %v6048, %v8161
      %v8163 = vmul.f32 %v3661, %v7910
      %v8164 = vmul.f32 %v3665, %v7914
      %v8165 = vmul.f32 %v3669, %v7918
      %v8166 = vmul.f32 %v3673, %v7922
      %v8167 = vmul.f32 %v3677, %v7926
      %v8168 = vmul.f32 %v3681, %v7930
      %v8169 = vmul.f32 %v3685, %v7934
      %v8170 = vmul.f32 %v3689, %v7938
      %v8171 = vmul.f32 %v3693, %v7942
      %v8172 = vmul.f32 %v3697, %v7946
      %v8173 = vmul.f32 %v3701, %v7950
      %v8174 = vmul.f32 %v3705, %v7954
      %v8175 = vmul.f32 %v3709, %v7958
      %v8176 = vmul.f32 %v3713, %v7962
      %v8177 = vmul.f32 %v3717, %v7966
      %v8178 = vmul.f32 %v3721, %v7970
      %v8179 = vmul.f32 %v3725, %v7974
      %v8180 = vmul.f32 %v3729, %v7978
      %v8181 = vmul.f32 %v3733, %v7982
      %v8182 = vmul.f32 %v3737, %v7986
      %v8183 = vmul.f32 %v3741, %v7990
      %v8184 = vmul.f32 %v3745, %v7994
      %v8185 = vmul.f32 %v3749, %v7998
      %v8186 = vmul.f32 %v3753, %v8002
      %v8187 = vmul.f32 %v3757, %v8006
      %v8188 = vmul.f32 %v3761, %v8010
      %v8189 = vmul.f32 %v3765, %v8014
      %v8190 = vmul.f32 %v3769, %v8018
      %v8191 = vmul.f32 %v3773, %v8022
      %v8192 = vmul.f32 %v3777, %v8026
      %v8193 = vmul.f32 %v3781, %v8030
      %v8194 = vmul.f32 %v3785, %v8034
      %v8195 = vmul.f32 %v3789, %v8038
      %v8196 = vmul.f32 %v3793, %v8042
      %v8197 = vmul.f32 %v3797, %v8046
      %v8198 = vmul.f32 %v3801, %v8050
      %v8199 = vmul.f32 %v3805, %v8054
      %v8200 = vmul.f32 %v3809, %v8058
      %v8201 = vmul.f32 %v3813, %v8062
      %v8202 = vmul.f32 %v3817, %v8066
      %v8203 = vmul.f32 %v3821, %v8070
      %v8204 = vmul.f32 %v3825, %v8074
      %v8205 = vmul.f32 %v3829, %v8078
      %v8206 = vmul.f32 %v3833, %v8082
      %v8207 = vmul.f32 %v3837, %v8086
      %v8208 = vmul.f32 %v3841, %v8090
      %v8209 = vmul.f32 %v3845, %v8094
      %v8210 = vmul.f32 %v3849, %v8098
      %v8211 = vmul.f32 %v3853, %v8102
      %v8212 = vmul.f32 %v3857, %v8106
      %v8213 = vmul.f32 %v3861, %v8110
      %v8214 = vmul.f32 %v3865, %v8114
      %v8215 = vmul.f32 %v3869, %v8118
      %v8216 = vmul.f32 %v3873, %v8122
      %v8217 = vmul.f32 %v3877, %v8126
      %v8218 = vmul.f32 %v3881, %v8130
      %v8219 = vmul.f32 %v3885, %v8134
      %v8220 = vmul.f32 %v3889, %v8138
      %v8221 = vmul.f32 %v3893, %v8142
      %v8222 = vmul.f32 %v3897, %v8146
      %v8223 = vmul.f32 %v3901, %v8150
      %v8224 = vmul.f32 %v3905, %v8154
      %v8225 = vmul.f32 %v3909, %v8158
      %v8226 = vmul.f32 %v3913, %v8162
      %v8227 = vadd.f32 %v7843, %v8163
      %v8228 = vadd.f32 %v7844, %v8164
      %v8229 = vadd.f32 %v7845, %v8165
      %v8230 = vadd.f32 %v7846, %v8166
      %v8231 = vadd.f32 %v7847, %v8167
      %v8232 = vadd.f32 %v7848, %v8168
      %v8233 = vadd.f32 %v7849, %v8169
      %v8234 = vadd.f32 %v7850, %v8170
      %v8235 = vadd.f32 %v7851, %v8171
      %v8236 = vadd.f32 %v7852, %v8172
      %v8237 = vadd.f32 %v7853, %v8173
      %v8238 = vadd.f32 %v7854, %v8174
      %v8239 = vadd.f32 %v7855, %v8175
      %v8240 = vadd.f32 %v7856, %v8176
      %v8241 = vadd.f32 %v7857, %v8177
      %v8242 = vadd.f32 %v7858, %v8178
      %v8243 = vadd.f32 %v7859, %v8179
      %v8244 = vadd.f32 %v7860, %v8180
      %v8245 = vadd.f32 %v7861, %v8181
      %v8246 = vadd.f32 %v7862, %v8182
      %v8247 = vadd.f32 %v7863, %v8183
      %v8248 = vadd.f32 %v7864, %v8184
      %v8249 = vadd.f32 %v7865, %v8185
      %v8250 = vadd.f32 %v7866, %v8186
      %v8251 = vadd.f32 %v7867, %v8187
      %v8252 = vadd.f32 %v7868, %v8188
      %v8253 = vadd.f32 %v7869, %v8189
      %v8254 = vadd.f32 %v7870, %v8190
      %v8255 = vadd.f32 %v7871, %v8191
      %v8256 = vadd.f32 %v7872, %v8192
      %v8257 = vadd.f32 %v7873, %v8193
      %v8258 = vadd.f32 %v7874, %v8194
      %v8259 = vadd.f32 %v7875, %v8195
      %v8260 = vadd.f32 %v7876, %v8196
      %v8261 = vadd.f32 %v7877, %v8197
      %v8262 = vadd.f32 %v7878, %v8198
      %v8263 = vadd.f32 %v7879, %v8199
      %v8264 = vadd.f32 %v7880, %v8200
      %v8265 = vadd.f32 %v7881, %v8201
      %v8266 = vadd.f32 %v7882, %v8202
      %v8267 = vadd.f32 %v7883, %v8203
      %v8268 = vadd.f32 %v7884, %v8204
      %v8269 = vadd.f32 %v7885, %v8205
      %v8270 = vadd.f32 %v7886, %v8206
      %v8271 = vadd.f32 %v7887, %v8207
      %v8272 = vadd.f32 %v7888, %v8208
      %v8273 = vadd.f32 %v7889, %v8209
      %v8274 = vadd.f32 %v7890, %v8210
      %v8275 = vadd.f32 %v7891, %v8211
      %v8276 = vadd.f32 %v7892, %v8212
      %v8277 = vadd.f32 %v7893, %v8213
      %v8278 = vadd.f32 %v7894, %v8214
      %v8279 = vadd.f32 %v7895, %v8215
      %v8280 = vadd.f32 %v7896, %v8216
      %v8281 = vadd.f32 %v7897, %v8217
      %v8282 = vadd.f32 %v7898, %v8218
      %v8283 = vadd.f32 %v7899, %v8219
      %v8284 = vadd.f32 %v7900, %v8220
      %v8285 = vadd.f32 %v7901, %v8221
      %v8286 = vadd.f32 %v7902, %v8222
      %v8287 = vadd.f32 %v7903, %v8223
      %v8288 = vadd.f32 %v7904, %v8224
      %v8289 = vadd.f32 %v7905, %v8225
      %v8290 = vadd.f32 %v7906, %v8226
      %v8291 = vlaneseq
      %v8292 = vshrl.u32 %v8291, 7
      %v8293 = vsub.s32 6, %v8292
      %v8294 = vrot.slane %v5733, %v8293
      %v8295 = vlaneseq
      %v8296 = vshrl.u32 %v8295, 7
      %v8297 = vsub.s32 6, %v8296
      %v8298 = vrot.slane %v5738, %v8297
      %v8299 = vlaneseq
      %v8300 = vshrl.u32 %v8299, 7
      %v8301 = vsub.s32 6, %v8300
      %v8302 = vrot.slane %v5743, %v8301
      %v8303 = vlaneseq
      %v8304 = vshrl.u32 %v8303, 7
      %v8305 = vsub.s32 6, %v8304
      %v8306 = vrot.slane %v5748, %v8305
      %v8307 = vlaneseq
      %v8308 = vshrl.u32 %v8307, 7
      %v8309 = vsub.s32 6, %v8308
      %v8310 = vrot.slane %v5753, %v8309
      %v8311 = vlaneseq
      %v8312 = vshrl.u32 %v8311, 7
      %v8313 = vsub.s32 6, %v8312
      %v8314 = vrot.slane %v5758, %v8313
      %v8315 = vlaneseq
      %v8316 = vshrl.u32 %v8315, 7
      %v8317 = vsub.s32 6, %v8316
      %v8318 = vrot.slane %v5763, %v8317
      %v8319 = vlaneseq
      %v8320 = vshrl.u32 %v8319, 7
      %v8321 = vsub.s32 6, %v8320
      %v8322 = vrot.slane %v5768, %v8321
      %v8323 = vlaneseq
      %v8324 = vshrl.u32 %v8323, 7
      %v8325 = vsub.s32 6, %v8324
      %v8326 = vrot.slane %v5773, %v8325
      %v8327 = vlaneseq
      %v8328 = vshrl.u32 %v8327, 7
      %v8329 = vsub.s32 6, %v8328
      %v8330 = vrot.slane %v5778, %v8329
      %v8331 = vlaneseq
      %v8332 = vshrl.u32 %v8331, 7
      %v8333 = vsub.s32 6, %v8332
      %v8334 = vrot.slane %v5783, %v8333
      %v8335 = vlaneseq
      %v8336 = vshrl.u32 %v8335, 7
      %v8337 = vsub.s32 6, %v8336
      %v8338 = vrot.slane %v5788, %v8337
      %v8339 = vlaneseq
      %v8340 = vshrl.u32 %v8339, 7
      %v8341 = vsub.s32 6, %v8340
      %v8342 = vrot.slane %v5793, %v8341
      %v8343 = vlaneseq
      %v8344 = vshrl.u32 %v8343, 7
      %v8345 = vsub.s32 6, %v8344
      %v8346 = vrot.slane %v5798, %v8345
      %v8347 = vlaneseq
      %v8348 = vshrl.u32 %v8347, 7
      %v8349 = vsub.s32 6, %v8348
      %v8350 = vrot.slane %v5803, %v8349
      %v8351 = vlaneseq
      %v8352 = vshrl.u32 %v8351, 7
      %v8353 = vsub.s32 6, %v8352
      %v8354 = vrot.slane %v5808, %v8353
      %v8355 = vlaneseq
      %v8356 = vshrl.u32 %v8355, 7
      %v8357 = vsub.s32 6, %v8356
      %v8358 = vrot.slane %v5813, %v8357
      %v8359 = vlaneseq
      %v8360 = vshrl.u32 %v8359, 7
      %v8361 = vsub.s32 6, %v8360
      %v8362 = vrot.slane %v5818, %v8361
      %v8363 = vlaneseq
      %v8364 = vshrl.u32 %v8363, 7
      %v8365 = vsub.s32 6, %v8364
      %v8366 = vrot.slane %v5823, %v8365
      %v8367 = vlaneseq
      %v8368 = vshrl.u32 %v8367, 7
      %v8369 = vsub.s32 6, %v8368
      %v8370 = vrot.slane %v5828, %v8369
      %v8371 = vlaneseq
      %v8372 = vshrl.u32 %v8371, 7
      %v8373 = vsub.s32 6, %v8372
      %v8374 = vrot.slane %v5833, %v8373
      %v8375 = vlaneseq
      %v8376 = vshrl.u32 %v8375, 7
      %v8377 = vsub.s32 6, %v8376
      %v8378 = vrot.slane %v5838, %v8377
      %v8379 = vlaneseq
      %v8380 = vshrl.u32 %v8379, 7
      %v8381 = vsub.s32 6, %v8380
      %v8382 = vrot.slane %v5843, %v8381
      %v8383 = vlaneseq
      %v8384 = vshrl.u32 %v8383, 7
      %v8385 = vsub.s32 6, %v8384
      %v8386 = vrot.slane %v5848, %v8385
      %v8387 = vlaneseq
      %v8388 = vshrl.u32 %v8387, 7
      %v8389 = vsub.s32 6, %v8388
      %v8390 = vrot.slane %v5853, %v8389
      %v8391 = vlaneseq
      %v8392 = vshrl.u32 %v8391, 7
      %v8393 = vsub.s32 6, %v8392
      %v8394 = vrot.slane %v5858, %v8393
      %v8395 = vlaneseq
      %v8396 = vshrl.u32 %v8395, 7
      %v8397 = vsub.s32 6, %v8396
      %v8398 = vrot.slane %v5863, %v8397
      %v8399 = vlaneseq
      %v8400 = vshrl.u32 %v8399, 7
      %v8401 = vsub.s32 6, %v8400
      %v8402 = vrot.slane %v5868, %v8401
      %v8403 = vlaneseq
      %v8404 = vshrl.u32 %v8403, 7
      %v8405 = vsub.s32 6, %v8404
      %v8406 = vrot.slane %v5873, %v8405
      %v8407 = vlaneseq
      %v8408 = vshrl.u32 %v8407, 7
      %v8409 = vsub.s32 6, %v8408
      %v8410 = vrot.slane %v5878, %v8409
      %v8411 = vlaneseq
      %v8412 = vshrl.u32 %v8411, 7
      %v8413 = vsub.s32 6, %v8412
      %v8414 = vrot.slane %v5883, %v8413
      %v8415 = vlaneseq
      %v8416 = vshrl.u32 %v8415, 7
      %v8417 = vsub.s32 6, %v8416
      %v8418 = vrot.slane %v5888, %v8417
      %v8419 = vlaneseq
      %v8420 = vshrl.u32 %v8419, 7
      %v8421 = vsub.s32 6, %v8420
      %v8422 = vrot.slane %v5893, %v8421
      %v8423 = vlaneseq
      %v8424 = vshrl.u32 %v8423, 7
      %v8425 = vsub.s32 6, %v8424
      %v8426 = vrot.slane %v5898, %v8425
      %v8427 = vlaneseq
      %v8428 = vshrl.u32 %v8427, 7
      %v8429 = vsub.s32 6, %v8428
      %v8430 = vrot.slane %v5903, %v8429
      %v8431 = vlaneseq
      %v8432 = vshrl.u32 %v8431, 7
      %v8433 = vsub.s32 6, %v8432
      %v8434 = vrot.slane %v5908, %v8433
      %v8435 = vlaneseq
      %v8436 = vshrl.u32 %v8435, 7
      %v8437 = vsub.s32 6, %v8436
      %v8438 = vrot.slane %v5913, %v8437
      %v8439 = vlaneseq
      %v8440 = vshrl.u32 %v8439, 7
      %v8441 = vsub.s32 6, %v8440
      %v8442 = vrot.slane %v5918, %v8441
      %v8443 = vlaneseq
      %v8444 = vshrl.u32 %v8443, 7
      %v8445 = vsub.s32 6, %v8444
      %v8446 = vrot.slane %v5923, %v8445
      %v8447 = vlaneseq
      %v8448 = vshrl.u32 %v8447, 7
      %v8449 = vsub.s32 6, %v8448
      %v8450 = vrot.slane %v5928, %v8449
      %v8451 = vlaneseq
      %v8452 = vshrl.u32 %v8451, 7
      %v8453 = vsub.s32 6, %v8452
      %v8454 = vrot.slane %v5933, %v8453
      %v8455 = vlaneseq
      %v8456 = vshrl.u32 %v8455, 7
      %v8457 = vsub.s32 6, %v8456
      %v8458 = vrot.slane %v5938, %v8457
      %v8459 = vlaneseq
      %v8460 = vshrl.u32 %v8459, 7
      %v8461 = vsub.s32 6, %v8460
      %v8462 = vrot.slane %v5943, %v8461
      %v8463 = vlaneseq
      %v8464 = vshrl.u32 %v8463, 7
      %v8465 = vsub.s32 6, %v8464
      %v8466 = vrot.slane %v5948, %v8465
      %v8467 = vlaneseq
      %v8468 = vshrl.u32 %v8467, 7
      %v8469 = vsub.s32 6, %v8468
      %v8470 = vrot.slane %v5953, %v8469
      %v8471 = vlaneseq
      %v8472 = vshrl.u32 %v8471, 7
      %v8473 = vsub.s32 6, %v8472
      %v8474 = vrot.slane %v5958, %v8473
      %v8475 = vlaneseq
      %v8476 = vshrl.u32 %v8475, 7
      %v8477 = vsub.s32 6, %v8476
      %v8478 = vrot.slane %v5963, %v8477
      %v8479 = vlaneseq
      %v8480 = vshrl.u32 %v8479, 7
      %v8481 = vsub.s32 6, %v8480
      %v8482 = vrot.slane %v5968, %v8481
      %v8483 = vlaneseq
      %v8484 = vshrl.u32 %v8483, 7
      %v8485 = vsub.s32 6, %v8484
      %v8486 = vrot.slane %v5973, %v8485
      %v8487 = vlaneseq
      %v8488 = vshrl.u32 %v8487, 7
      %v8489 = vsub.s32 6, %v8488
      %v8490 = vrot.slane %v5978, %v8489
      %v8491 = vlaneseq
      %v8492 = vshrl.u32 %v8491, 7
      %v8493 = vsub.s32 6, %v8492
      %v8494 = vrot.slane %v5983, %v8493
      %v8495 = vlaneseq
      %v8496 = vshrl.u32 %v8495, 7
      %v8497 = vsub.s32 6, %v8496
      %v8498 = vrot.slane %v5988, %v8497
      %v8499 = vlaneseq
      %v8500 = vshrl.u32 %v8499, 7
      %v8501 = vsub.s32 6, %v8500
      %v8502 = vrot.slane %v5993, %v8501
      %v8503 = vlaneseq
      %v8504 = vshrl.u32 %v8503, 7
      %v8505 = vsub.s32 6, %v8504
      %v8506 = vrot.slane %v5998, %v8505
      %v8507 = vlaneseq
      %v8508 = vshrl.u32 %v8507, 7
      %v8509 = vsub.s32 6, %v8508
      %v8510 = vrot.slane %v6003, %v8509
      %v8511 = vlaneseq
      %v8512 = vshrl.u32 %v8511, 7
      %v8513 = vsub.s32 6, %v8512
      %v8514 = vrot.slane %v6008, %v8513
      %v8515 = vlaneseq
      %v8516 = vshrl.u32 %v8515, 7
      %v8517 = vsub.s32 6, %v8516
      %v8518 = vrot.slane %v6013, %v8517
      %v8519 = vlaneseq
      %v8520 = vshrl.u32 %v8519, 7
      %v8521 = vsub.s32 6, %v8520
      %v8522 = vrot.slane %v6018, %v8521
      %v8523 = vlaneseq
      %v8524 = vshrl.u32 %v8523, 7
      %v8525 = vsub.s32 6, %v8524
      %v8526 = vrot.slane %v6023, %v8525
      %v8527 = vlaneseq
      %v8528 = vshrl.u32 %v8527, 7
      %v8529 = vsub.s32 6, %v8528
      %v8530 = vrot.slane %v6028, %v8529
      %v8531 = vlaneseq
      %v8532 = vshrl.u32 %v8531, 7
      %v8533 = vsub.s32 6, %v8532
      %v8534 = vrot.slane %v6033, %v8533
      %v8535 = vlaneseq
      %v8536 = vshrl.u32 %v8535, 7
      %v8537 = vsub.s32 6, %v8536
      %v8538 = vrot.slane %v6038, %v8537
      %v8539 = vlaneseq
      %v8540 = vshrl.u32 %v8539, 7
      %v8541 = vsub.s32 6, %v8540
      %v8542 = vrot.slane %v6043, %v8541
      %v8543 = vlaneseq
      %v8544 = vshrl.u32 %v8543, 7
      %v8545 = vsub.s32 6, %v8544
      %v8546 = vrot.slane %v6048, %v8545
      %v8547 = vmul.f32 %v4301, %v8294
      %v8548 = vmul.f32 %v4305, %v8298
      %v8549 = vmul.f32 %v4309, %v8302
      %v8550 = vmul.f32 %v4313, %v8306
      %v8551 = vmul.f32 %v4317, %v8310
      %v8552 = vmul.f32 %v4321, %v8314
      %v8553 = vmul.f32 %v4325, %v8318
      %v8554 = vmul.f32 %v4329, %v8322
      %v8555 = vmul.f32 %v4333, %v8326
      %v8556 = vmul.f32 %v4337, %v8330
      %v8557 = vmul.f32 %v4341, %v8334
      %v8558 = vmul.f32 %v4345, %v8338
      %v8559 = vmul.f32 %v4349, %v8342
      %v8560 = vmul.f32 %v4353, %v8346
      %v8561 = vmul.f32 %v4357, %v8350
      %v8562 = vmul.f32 %v4361, %v8354
      %v8563 = vmul.f32 %v4365, %v8358
      %v8564 = vmul.f32 %v4369, %v8362
      %v8565 = vmul.f32 %v4373, %v8366
      %v8566 = vmul.f32 %v4377, %v8370
      %v8567 = vmul.f32 %v4381, %v8374
      %v8568 = vmul.f32 %v4385, %v8378
      %v8569 = vmul.f32 %v4389, %v8382
      %v8570 = vmul.f32 %v4393, %v8386
      %v8571 = vmul.f32 %v4397, %v8390
      %v8572 = vmul.f32 %v4401, %v8394
      %v8573 = vmul.f32 %v4405, %v8398
      %v8574 = vmul.f32 %v4409, %v8402
      %v8575 = vmul.f32 %v4413, %v8406
      %v8576 = vmul.f32 %v4417, %v8410
      %v8577 = vmul.f32 %v4421, %v8414
      %v8578 = vmul.f32 %v4425, %v8418
      %v8579 = vmul.f32 %v4429, %v8422
      %v8580 = vmul.f32 %v4433, %v8426
      %v8581 = vmul.f32 %v4437, %v8430
      %v8582 = vmul.f32 %v4441, %v8434
      %v8583 = vmul.f32 %v4445, %v8438
      %v8584 = vmul.f32 %v4449, %v8442
      %v8585 = vmul.f32 %v4453, %v8446
      %v8586 = vmul.f32 %v4457, %v8450
      %v8587 = vmul.f32 %v4461, %v8454
      %v8588 = vmul.f32 %v4465, %v8458
      %v8589 = vmul.f32 %v4469, %v8462
      %v8590 = vmul.f32 %v4473, %v8466
      %v8591 = vmul.f32 %v4477, %v8470
      %v8592 = vmul.f32 %v4481, %v8474
      %v8593 = vmul.f32 %v4485, %v8478
      %v8594 = vmul.f32 %v4489, %v8482
      %v8595 = vmul.f32 %v4493, %v8486
      %v8596 = vmul.f32 %v4497, %v8490
      %v8597 = vmul.f32 %v4501, %v8494
      %v8598 = vmul.f32 %v4505, %v8498
      %v8599 = vmul.f32 %v4509, %v8502
      %v8600 = vmul.f32 %v4513, %v8506
      %v8601 = vmul.f32 %v4517, %v8510
      %v8602 = vmul.f32 %v4521, %v8514
      %v8603 = vmul.f32 %v4525, %v8518
      %v8604 = vmul.f32 %v4529, %v8522
      %v8605 = vmul.f32 %v4533, %v8526
      %v8606 = vmul.f32 %v4537, %v8530
      %v8607 = vmul.f32 %v4541, %v8534
      %v8608 = vmul.f32 %v4545, %v8538
      %v8609 = vmul.f32 %v4549, %v8542
      %v8610 = vmul.f32 %v4553, %v8546
      %v8611 = vadd.f32 %v8227, %v8547
      %v8612 = vadd.f32 %v8228, %v8548
      %v8613 = vadd.f32 %v8229, %v8549
      %v8614 = vadd.f32 %v8230, %v8550
      %v8615 = vadd.f32 %v8231, %v8551
      %v8616 = vadd.f32 %v8232, %v8552
      %v8617 = vadd.f32 %v8233, %v8553
      %v8618 = vadd.f32 %v8234, %v8554
      %v8619 = vadd.f32 %v8235, %v8555
      %v8620 = vadd.f32 %v8236, %v8556
      %v8621 = vadd.f32 %v8237, %v8557
      %v8622 = vadd.f32 %v8238, %v8558
      %v8623 = vadd.f32 %v8239, %v8559
      %v8624 = vadd.f32 %v8240, %v8560
      %v8625 = vadd.f32 %v8241, %v8561
      %v8626 = vadd.f32 %v8242, %v8562
      %v8627 = vadd.f32 %v8243, %v8563
      %v8628 = vadd.f32 %v8244, %v8564
      %v8629 = vadd.f32 %v8245, %v8565
      %v8630 = vadd.f32 %v8246, %v8566
      %v8631 = vadd.f32 %v8247, %v8567
      %v8632 = vadd.f32 %v8248, %v8568
      %v8633 = vadd.f32 %v8249, %v8569
      %v8634 = vadd.f32 %v8250, %v8570
      %v8635 = vadd.f32 %v8251, %v8571
      %v8636 = vadd.f32 %v8252, %v8572
      %v8637 = vadd.f32 %v8253, %v8573
      %v8638 = vadd.f32 %v8254, %v8574
      %v8639 = vadd.f32 %v8255, %v8575
      %v8640 = vadd.f32 %v8256, %v8576
      %v8641 = vadd.f32 %v8257, %v8577
      %v8642 = vadd.f32 %v8258, %v8578
      %v8643 = vadd.f32 %v8259, %v8579
      %v8644 = vadd.f32 %v8260, %v8580
      %v8645 = vadd.f32 %v8261, %v8581
      %v8646 = vadd.f32 %v8262, %v8582
      %v8647 = vadd.f32 %v8263, %v8583
      %v8648 = vadd.f32 %v8264, %v8584
      %v8649 = vadd.f32 %v8265, %v8585
      %v8650 = vadd.f32 %v8266, %v8586
      %v8651 = vadd.f32 %v8267, %v8587
      %v8652 = vadd.f32 %v8268, %v8588
      %v8653 = vadd.f32 %v8269, %v8589
      %v8654 = vadd.f32 %v8270, %v8590
      %v8655 = vadd.f32 %v8271, %v8591
      %v8656 = vadd.f32 %v8272, %v8592
      %v8657 = vadd.f32 %v8273, %v8593
      %v8658 = vadd.f32 %v8274, %v8594
      %v8659 = vadd.f32 %v8275, %v8595
      %v8660 = vadd.f32 %v8276, %v8596
      %v8661 = vadd.f32 %v8277, %v8597
      %v8662 = vadd.f32 %v8278, %v8598
      %v8663 = vadd.f32 %v8279, %v8599
      %v8664 = vadd.f32 %v8280, %v8600
      %v8665 = vadd.f32 %v8281, %v8601
      %v8666 = vadd.f32 %v8282, %v8602
      %v8667 = vadd.f32 %v8283, %v8603
      %v8668 = vadd.f32 %v8284, %v8604
      %v8669 = vadd.f32 %v8285, %v8605
      %v8670 = vadd.f32 %v8286, %v8606
      %v8671 = vadd.f32 %v8287, %v8607
      %v8672 = vadd.f32 %v8288, %v8608
      %v8673 = vadd.f32 %v8289, %v8609
      %v8674 = vadd.f32 %v8290, %v8610
      %v8675 = vlaneseq
      %v8676 = vshrl.u32 %v8675, 7
      %v8677 = vsub.s32 7, %v8676
      %v8678 = vrot.slane %v5733, %v8677
      %v8679 = vlaneseq
      %v8680 = vshrl.u32 %v8679, 7
      %v8681 = vsub.s32 7, %v8680
      %v8682 = vrot.slane %v5738, %v8681
      %v8683 = vlaneseq
      %v8684 = vshrl.u32 %v8683, 7
      %v8685 = vsub.s32 7, %v8684
      %v8686 = vrot.slane %v5743, %v8685
      %v8687 = vlaneseq
      %v8688 = vshrl.u32 %v8687, 7
      %v8689 = vsub.s32 7, %v8688
      %v8690 = vrot.slane %v5748, %v8689
      %v8691 = vlaneseq
      %v8692 = vshrl.u32 %v8691, 7
      %v8693 = vsub.s32 7, %v8692
      %v8694 = vrot.slane %v5753, %v8693
      %v8695 = vlaneseq
      %v8696 = vshrl.u32 %v8695, 7
      %v8697 = vsub.s32 7, %v8696
      %v8698 = vrot.slane %v5758, %v8697
      %v8699 = vlaneseq
      %v8700 = vshrl.u32 %v8699, 7
      %v8701 = vsub.s32 7, %v8700
      %v8702 = vrot.slane %v5763, %v8701
      %v8703 = vlaneseq
      %v8704 = vshrl.u32 %v8703, 7
      %v8705 = vsub.s32 7, %v8704
      %v8706 = vrot.slane %v5768, %v8705
      %v8707 = vlaneseq
      %v8708 = vshrl.u32 %v8707, 7
      %v8709 = vsub.s32 7, %v8708
      %v8710 = vrot.slane %v5773, %v8709
      %v8711 = vlaneseq
      %v8712 = vshrl.u32 %v8711, 7
      %v8713 = vsub.s32 7, %v8712
      %v8714 = vrot.slane %v5778, %v8713
      %v8715 = vlaneseq
      %v8716 = vshrl.u32 %v8715, 7
      %v8717 = vsub.s32 7, %v8716
      %v8718 = vrot.slane %v5783, %v8717
      %v8719 = vlaneseq
      %v8720 = vshrl.u32 %v8719, 7
      %v8721 = vsub.s32 7, %v8720
      %v8722 = vrot.slane %v5788, %v8721
      %v8723 = vlaneseq
      %v8724 = vshrl.u32 %v8723, 7
      %v8725 = vsub.s32 7, %v8724
      %v8726 = vrot.slane %v5793, %v8725
      %v8727 = vlaneseq
      %v8728 = vshrl.u32 %v8727, 7
      %v8729 = vsub.s32 7, %v8728
      %v8730 = vrot.slane %v5798, %v8729
      %v8731 = vlaneseq
      %v8732 = vshrl.u32 %v8731, 7
      %v8733 = vsub.s32 7, %v8732
      %v8734 = vrot.slane %v5803, %v8733
      %v8735 = vlaneseq
      %v8736 = vshrl.u32 %v8735, 7
      %v8737 = vsub.s32 7, %v8736
      %v8738 = vrot.slane %v5808, %v8737
      %v8739 = vlaneseq
      %v8740 = vshrl.u32 %v8739, 7
      %v8741 = vsub.s32 7, %v8740
      %v8742 = vrot.slane %v5813, %v8741
      %v8743 = vlaneseq
      %v8744 = vshrl.u32 %v8743, 7
      %v8745 = vsub.s32 7, %v8744
      %v8746 = vrot.slane %v5818, %v8745
      %v8747 = vlaneseq
      %v8748 = vshrl.u32 %v8747, 7
      %v8749 = vsub.s32 7, %v8748
      %v8750 = vrot.slane %v5823, %v8749
      %v8751 = vlaneseq
      %v8752 = vshrl.u32 %v8751, 7
      %v8753 = vsub.s32 7, %v8752
      %v8754 = vrot.slane %v5828, %v8753
      %v8755 = vlaneseq
      %v8756 = vshrl.u32 %v8755, 7
      %v8757 = vsub.s32 7, %v8756
      %v8758 = vrot.slane %v5833, %v8757
      %v8759 = vlaneseq
      %v8760 = vshrl.u32 %v8759, 7
      %v8761 = vsub.s32 7, %v8760
      %v8762 = vrot.slane %v5838, %v8761
      %v8763 = vlaneseq
      %v8764 = vshrl.u32 %v8763, 7
      %v8765 = vsub.s32 7, %v8764
      %v8766 = vrot.slane %v5843, %v8765
      %v8767 = vlaneseq
      %v8768 = vshrl.u32 %v8767, 7
      %v8769 = vsub.s32 7, %v8768
      %v8770 = vrot.slane %v5848, %v8769
      %v8771 = vlaneseq
      %v8772 = vshrl.u32 %v8771, 7
      %v8773 = vsub.s32 7, %v8772
      %v8774 = vrot.slane %v5853, %v8773
      %v8775 = vlaneseq
      %v8776 = vshrl.u32 %v8775, 7
      %v8777 = vsub.s32 7, %v8776
      %v8778 = vrot.slane %v5858, %v8777
      %v8779 = vlaneseq
      %v8780 = vshrl.u32 %v8779, 7
      %v8781 = vsub.s32 7, %v8780
      %v8782 = vrot.slane %v5863, %v8781
      %v8783 = vlaneseq
      %v8784 = vshrl.u32 %v8783, 7
      %v8785 = vsub.s32 7, %v8784
      %v8786 = vrot.slane %v5868, %v8785
      %v8787 = vlaneseq
      %v8788 = vshrl.u32 %v8787, 7
      %v8789 = vsub.s32 7, %v8788
      %v8790 = vrot.slane %v5873, %v8789
      %v8791 = vlaneseq
      %v8792 = vshrl.u32 %v8791, 7
      %v8793 = vsub.s32 7, %v8792
      %v8794 = vrot.slane %v5878, %v8793
      %v8795 = vlaneseq
      %v8796 = vshrl.u32 %v8795, 7
      %v8797 = vsub.s32 7, %v8796
      %v8798 = vrot.slane %v5883, %v8797
      %v8799 = vlaneseq
      %v8800 = vshrl.u32 %v8799, 7
      %v8801 = vsub.s32 7, %v8800
      %v8802 = vrot.slane %v5888, %v8801
      %v8803 = vlaneseq
      %v8804 = vshrl.u32 %v8803, 7
      %v8805 = vsub.s32 7, %v8804
      %v8806 = vrot.slane %v5893, %v8805
      %v8807 = vlaneseq
      %v8808 = vshrl.u32 %v8807, 7
      %v8809 = vsub.s32 7, %v8808
      %v8810 = vrot.slane %v5898, %v8809
      %v8811 = vlaneseq
      %v8812 = vshrl.u32 %v8811, 7
      %v8813 = vsub.s32 7, %v8812
      %v8814 = vrot.slane %v5903, %v8813
      %v8815 = vlaneseq
      %v8816 = vshrl.u32 %v8815, 7
      %v8817 = vsub.s32 7, %v8816
      %v8818 = vrot.slane %v5908, %v8817
      %v8819 = vlaneseq
      %v8820 = vshrl.u32 %v8819, 7
      %v8821 = vsub.s32 7, %v8820
      %v8822 = vrot.slane %v5913, %v8821
      %v8823 = vlaneseq
      %v8824 = vshrl.u32 %v8823, 7
      %v8825 = vsub.s32 7, %v8824
      %v8826 = vrot.slane %v5918, %v8825
      %v8827 = vlaneseq
      %v8828 = vshrl.u32 %v8827, 7
      %v8829 = vsub.s32 7, %v8828
      %v8830 = vrot.slane %v5923, %v8829
      %v8831 = vlaneseq
      %v8832 = vshrl.u32 %v8831, 7
      %v8833 = vsub.s32 7, %v8832
      %v8834 = vrot.slane %v5928, %v8833
      %v8835 = vlaneseq
      %v8836 = vshrl.u32 %v8835, 7
      %v8837 = vsub.s32 7, %v8836
      %v8838 = vrot.slane %v5933, %v8837
      %v8839 = vlaneseq
      %v8840 = vshrl.u32 %v8839, 7
      %v8841 = vsub.s32 7, %v8840
      %v8842 = vrot.slane %v5938, %v8841
      %v8843 = vlaneseq
      %v8844 = vshrl.u32 %v8843, 7
      %v8845 = vsub.s32 7, %v8844
      %v8846 = vrot.slane %v5943, %v8845
      %v8847 = vlaneseq
      %v8848 = vshrl.u32 %v8847, 7
      %v8849 = vsub.s32 7, %v8848
      %v8850 = vrot.slane %v5948, %v8849
      %v8851 = vlaneseq
      %v8852 = vshrl.u32 %v8851, 7
      %v8853 = vsub.s32 7, %v8852
      %v8854 = vrot.slane %v5953, %v8853
      %v8855 = vlaneseq
      %v8856 = vshrl.u32 %v8855, 7
      %v8857 = vsub.s32 7, %v8856
      %v8858 = vrot.slane %v5958, %v8857
      %v8859 = vlaneseq
      %v8860 = vshrl.u32 %v8859, 7
      %v8861 = vsub.s32 7, %v8860
      %v8862 = vrot.slane %v5963, %v8861
      %v8863 = vlaneseq
      %v8864 = vshrl.u32 %v8863, 7
      %v8865 = vsub.s32 7, %v8864
      %v8866 = vrot.slane %v5968, %v8865
      %v8867 = vlaneseq
      %v8868 = vshrl.u32 %v8867, 7
      %v8869 = vsub.s32 7, %v8868
      %v8870 = vrot.slane %v5973, %v8869
      %v8871 = vlaneseq
      %v8872 = vshrl.u32 %v8871, 7
      %v8873 = vsub.s32 7, %v8872
      %v8874 = vrot.slane %v5978, %v8873
      %v8875 = vlaneseq
      %v8876 = vshrl.u32 %v8875, 7
      %v8877 = vsub.s32 7, %v8876
      %v8878 = vrot.slane %v5983, %v8877
      %v8879 = vlaneseq
      %v8880 = vshrl.u32 %v8879, 7
      %v8881 = vsub.s32 7, %v8880
      %v8882 = vrot.slane %v5988, %v8881
      %v8883 = vlaneseq
      %v8884 = vshrl.u32 %v8883, 7
      %v8885 = vsub.s32 7, %v8884
      %v8886 = vrot.slane %v5993, %v8885
      %v8887 = vlaneseq
      %v8888 = vshrl.u32 %v8887, 7
      %v8889 = vsub.s32 7, %v8888
      %v8890 = vrot.slane %v5998, %v8889
      %v8891 = vlaneseq
      %v8892 = vshrl.u32 %v8891, 7
      %v8893 = vsub.s32 7, %v8892
      %v8894 = vrot.slane %v6003, %v8893
      %v8895 = vlaneseq
      %v8896 = vshrl.u32 %v8895, 7
      %v8897 = vsub.s32 7, %v8896
      %v8898 = vrot.slane %v6008, %v8897
      %v8899 = vlaneseq
      %v8900 = vshrl.u32 %v8899, 7
      %v8901 = vsub.s32 7, %v8900
      %v8902 = vrot.slane %v6013, %v8901
      %v8903 = vlaneseq
      %v8904 = vshrl.u32 %v8903, 7
      %v8905 = vsub.s32 7, %v8904
      %v8906 = vrot.slane %v6018, %v8905
      %v8907 = vlaneseq
      %v8908 = vshrl.u32 %v8907, 7
      %v8909 = vsub.s32 7, %v8908
      %v8910 = vrot.slane %v6023, %v8909
      %v8911 = vlaneseq
      %v8912 = vshrl.u32 %v8911, 7
      %v8913 = vsub.s32 7, %v8912
      %v8914 = vrot.slane %v6028, %v8913
      %v8915 = vlaneseq
      %v8916 = vshrl.u32 %v8915, 7
      %v8917 = vsub.s32 7, %v8916
      %v8918 = vrot.slane %v6033, %v8917
      %v8919 = vlaneseq
      %v8920 = vshrl.u32 %v8919, 7
      %v8921 = vsub.s32 7, %v8920
      %v8922 = vrot.slane %v6038, %v8921
      %v8923 = vlaneseq
      %v8924 = vshrl.u32 %v8923, 7
      %v8925 = vsub.s32 7, %v8924
      %v8926 = vrot.slane %v6043, %v8925
      %v8927 = vlaneseq
      %v8928 = vshrl.u32 %v8927, 7
      %v8929 = vsub.s32 7, %v8928
      %v8930 = vrot.slane %v6048, %v8929
      %v8931 = vmul.f32 %v4941, %v8678
      %v8932 = vmul.f32 %v4945, %v8682
      %v8933 = vmul.f32 %v4949, %v8686
      %v8934 = vmul.f32 %v4953, %v8690
      %v8935 = vmul.f32 %v4957, %v8694
      %v8936 = vmul.f32 %v4961, %v8698
      %v8937 = vmul.f32 %v4965, %v8702
      %v8938 = vmul.f32 %v4969, %v8706
      %v8939 = vmul.f32 %v4973, %v8710
      %v8940 = vmul.f32 %v4977, %v8714
      %v8941 = vmul.f32 %v4981, %v8718
      %v8942 = vmul.f32 %v4985, %v8722
      %v8943 = vmul.f32 %v4989, %v8726
      %v8944 = vmul.f32 %v4993, %v8730
      %v8945 = vmul.f32 %v4997, %v8734
      %v8946 = vmul.f32 %v5001, %v8738
      %v8947 = vmul.f32 %v5005, %v8742
      %v8948 = vmul.f32 %v5009, %v8746
      %v8949 = vmul.f32 %v5013, %v8750
      %v8950 = vmul.f32 %v5017, %v8754
      %v8951 = vmul.f32 %v5021, %v8758
      %v8952 = vmul.f32 %v5025, %v8762
      %v8953 = vmul.f32 %v5029, %v8766
      %v8954 = vmul.f32 %v5033, %v8770
      %v8955 = vmul.f32 %v5037, %v8774
      %v8956 = vmul.f32 %v5041, %v8778
      %v8957 = vmul.f32 %v5045, %v8782
      %v8958 = vmul.f32 %v5049, %v8786
      %v8959 = vmul.f32 %v5053, %v8790
      %v8960 = vmul.f32 %v5057, %v8794
      %v8961 = vmul.f32 %v5061, %v8798
      %v8962 = vmul.f32 %v5065, %v8802
      %v8963 = vmul.f32 %v5069, %v8806
      %v8964 = vmul.f32 %v5073, %v8810
      %v8965 = vmul.f32 %v5077, %v8814
      %v8966 = vmul.f32 %v5081, %v8818
      %v8967 = vmul.f32 %v5085, %v8822
      %v8968 = vmul.f32 %v5089, %v8826
      %v8969 = vmul.f32 %v5093, %v8830
      %v8970 = vmul.f32 %v5097, %v8834
      %v8971 = vmul.f32 %v5101, %v8838
      %v8972 = vmul.f32 %v5105, %v8842
      %v8973 = vmul.f32 %v5109, %v8846
      %v8974 = vmul.f32 %v5113, %v8850
      %v8975 = vmul.f32 %v5117, %v8854
      %v8976 = vmul.f32 %v5121, %v8858
      %v8977 = vmul.f32 %v5125, %v8862
      %v8978 = vmul.f32 %v5129, %v8866
      %v8979 = vmul.f32 %v5133, %v8870
      %v8980 = vmul.f32 %v5137, %v8874
      %v8981 = vmul.f32 %v5141, %v8878
      %v8982 = vmul.f32 %v5145, %v8882
      %v8983 = vmul.f32 %v5149, %v8886
      %v8984 = vmul.f32 %v5153, %v8890
      %v8985 = vmul.f32 %v5157, %v8894
      %v8986 = vmul.f32 %v5161, %v8898
      %v8987 = vmul.f32 %v5165, %v8902
      %v8988 = vmul.f32 %v5169, %v8906
      %v8989 = vmul.f32 %v5173, %v8910
      %v8990 = vmul.f32 %v5177, %v8914
      %v8991 = vmul.f32 %v5181, %v8918
      %v8992 = vmul.f32 %v5185, %v8922
      %v8993 = vmul.f32 %v5189, %v8926
      %v8994 = vmul.f32 %v5193, %v8930
      %v8995 = vadd.f32 %v8611, %v8931
      %v8996 = vadd.f32 %v8612, %v8932
      %v8997 = vadd.f32 %v8613, %v8933
      %v8998 = vadd.f32 %v8614, %v8934
      %v8999 = vadd.f32 %v8615, %v8935
      %v9000 = vadd.f32 %v8616, %v8936
      %v9001 = vadd.f32 %v8617, %v8937
      %v9002 = vadd.f32 %v8618, %v8938
      %v9003 = vadd.f32 %v8619, %v8939
      %v9004 = vadd.f32 %v8620, %v8940
      %v9005 = vadd.f32 %v8621, %v8941
      %v9006 = vadd.f32 %v8622, %v8942
      %v9007 = vadd.f32 %v8623, %v8943
      %v9008 = vadd.f32 %v8624, %v8944
      %v9009 = vadd.f32 %v8625, %v8945
      %v9010 = vadd.f32 %v8626, %v8946
      %v9011 = vadd.f32 %v8627, %v8947
      %v9012 = vadd.f32 %v8628, %v8948
      %v9013 = vadd.f32 %v8629, %v8949
      %v9014 = vadd.f32 %v8630, %v8950
      %v9015 = vadd.f32 %v8631, %v8951
      %v9016 = vadd.f32 %v8632, %v8952
      %v9017 = vadd.f32 %v8633, %v8953
      %v9018 = vadd.f32 %v8634, %v8954
      %v9019 = vadd.f32 %v8635, %v8955
      %v9020 = vadd.f32 %v8636, %v8956
      %v9021 = vadd.f32 %v8637, %v8957
      %v9022 = vadd.f32 %v8638, %v8958
      %v9023 = vadd.f32 %v8639, %v8959
      %v9024 = vadd.f32 %v8640, %v8960
      %v9025 = vadd.f32 %v8641, %v8961
      %v9026 = vadd.f32 %v8642, %v8962
      %v9027 = vadd.f32 %v8643, %v8963
      %v9028 = vadd.f32 %v8644, %v8964
      %v9029 = vadd.f32 %v8645, %v8965
      %v9030 = vadd.f32 %v8646, %v8966
      %v9031 = vadd.f32 %v8647, %v8967
      %v9032 = vadd.f32 %v8648, %v8968
      %v9033 = vadd.f32 %v8649, %v8969
      %v9034 = vadd.f32 %v8650, %v8970
      %v9035 = vadd.f32 %v8651, %v8971
      %v9036 = vadd.f32 %v8652, %v8972
      %v9037 = vadd.f32 %v8653, %v8973
      %v9038 = vadd.f32 %v8654, %v8974
      %v9039 = vadd.f32 %v8655, %v8975
      %v9040 = vadd.f32 %v8656, %v8976
      %v9041 = vadd.f32 %v8657, %v8977
      %v9042 = vadd.f32 %v8658, %v8978
      %v9043 = vadd.f32 %v8659, %v8979
      %v9044 = vadd.f32 %v8660, %v8980
      %v9045 = vadd.f32 %v8661, %v8981
      %v9046 = vadd.f32 %v8662, %v8982
      %v9047 = vadd.f32 %v8663, %v8983
      %v9048 = vadd.f32 %v8664, %v8984
      %v9049 = vadd.f32 %v8665, %v8985
      %v9050 = vadd.f32 %v8666, %v8986
      %v9051 = vadd.f32 %v8667, %v8987
      %v9052 = vadd.f32 %v8668, %v8988
      %v9053 = vadd.f32 %v8669, %v8989
      %v9054 = vadd.f32 %v8670, %v8990
      %v9055 = vadd.f32 %v8671, %v8991
      %v9056 = vadd.f32 %v8672, %v8992
      %v9057 = vadd.f32 %v8673, %v8993
      %v9058 = vadd.f32 %v8674, %v8994
      %v9059 = vadd.f32 %v5733, %v8995
      %v9060 = vadd.f32 %v5738, %v8996
      %v9061 = vadd.f32 %v5743, %v8997
      %v9062 = vadd.f32 %v5748, %v8998
      %v9063 = vadd.f32 %v5753, %v8999
      %v9064 = vadd.f32 %v5758, %v9000
      %v9065 = vadd.f32 %v5763, %v9001
      %v9066 = vadd.f32 %v5768, %v9002
      %v9067 = vadd.f32 %v5773, %v9003
      %v9068 = vadd.f32 %v5778, %v9004
      %v9069 = vadd.f32 %v5783, %v9005
      %v9070 = vadd.f32 %v5788, %v9006
      %v9071 = vadd.f32 %v5793, %v9007
      %v9072 = vadd.f32 %v5798, %v9008
      %v9073 = vadd.f32 %v5803, %v9009
      %v9074 = vadd.f32 %v5808, %v9010
      %v9075 = vadd.f32 %v5813, %v9011
      %v9076 = vadd.f32 %v5818, %v9012
      %v9077 = vadd.f32 %v5823, %v9013
      %v9078 = vadd.f32 %v5828, %v9014
      %v9079 = vadd.f32 %v5833, %v9015
      %v9080 = vadd.f32 %v5838, %v9016
      %v9081 = vadd.f32 %v5843, %v9017
      %v9082 = vadd.f32 %v5848, %v9018
      %v9083 = vadd.f32 %v5853, %v9019
      %v9084 = vadd.f32 %v5858, %v9020
      %v9085 = vadd.f32 %v5863, %v9021
      %v9086 = vadd.f32 %v5868, %v9022
      %v9087 = vadd.f32 %v5873, %v9023
      %v9088 = vadd.f32 %v5878, %v9024
      %v9089 = vadd.f32 %v5883, %v9025
      %v9090 = vadd.f32 %v5888, %v9026
      %v9091 = vadd.f32 %v5893, %v9027
      %v9092 = vadd.f32 %v5898, %v9028
      %v9093 = vadd.f32 %v5903, %v9029
      %v9094 = vadd.f32 %v5908, %v9030
      %v9095 = vadd.f32 %v5913, %v9031
      %v9096 = vadd.f32 %v5918, %v9032
      %v9097 = vadd.f32 %v5923, %v9033
      %v9098 = vadd.f32 %v5928, %v9034
      %v9099 = vadd.f32 %v5933, %v9035
      %v9100 = vadd.f32 %v5938, %v9036
      %v9101 = vadd.f32 %v5943, %v9037
      %v9102 = vadd.f32 %v5948, %v9038
      %v9103 = vadd.f32 %v5953, %v9039
      %v9104 = vadd.f32 %v5958, %v9040
      %v9105 = vadd.f32 %v5963, %v9041
      %v9106 = vadd.f32 %v5968, %v9042
      %v9107 = vadd.f32 %v5973, %v9043
      %v9108 = vadd.f32 %v5978, %v9044
      %v9109 = vadd.f32 %v5983, %v9045
      %v9110 = vadd.f32 %v5988, %v9046
      %v9111 = vadd.f32 %v5993, %v9047
      %v9112 = vadd.f32 %v5998, %v9048
      %v9113 = vadd.f32 %v6003, %v9049
      %v9114 = vadd.f32 %v6008, %v9050
      %v9115 = vadd.f32 %v6013, %v9051
      %v9116 = vadd.f32 %v6018, %v9052
      %v9117 = vadd.f32 %v6023, %v9053
      %v9118 = vadd.f32 %v6028, %v9054
      %v9119 = vadd.f32 %v6033, %v9055
      %v9120 = vadd.f32 %v6038, %v9056
      %v9121 = vadd.f32 %v6043, %v9057
      %v9122 = vadd.f32 %v6048, %v9058
      %v9123 = vld [vmem:[%s4] sm:$0xff]
      %v9124 = vld [vmem:[%s4 + $0x8] sm:$0xff]
      %v9125 = vld [vmem:[%s4 + $0x10] sm:$0xff]
      %v9126 = vld [vmem:[%s4 + $0x18] sm:$0xff]
      %v9127 = vld [vmem:[%s4 + $0x20] sm:$0xff]
      %v9128 = vld [vmem:[%s4 + $0x28] sm:$0xff]
      %v9129 = vld [vmem:[%s4 + $0x30] sm:$0xff]
      %v9130 = vld [vmem:[%s4 + $0x38] sm:$0xff]
      %v9131 = vld [vmem:[%s4 + $0x40] sm:$0xff]
      %v9132 = vld [vmem:[%s4 + $0x48] sm:$0xff]
      %v9133 = vld [vmem:[%s4 + $0x50] sm:$0xff]
      %v9134 = vld [vmem:[%s4 + $0x58] sm:$0xff]
      %v9135 = vld [vmem:[%s4 + $0x60] sm:$0xff]
      %v9136 = vld [vmem:[%s4 + $0x68] sm:$0xff]
      %v9137 = vld [vmem:[%s4 + $0x70] sm:$0xff]
      %v9138 = vld [vmem:[%s4 + $0x78] sm:$0xff]
      %v9139 = vld [vmem:[%s5] sm:$0x1]
      %v9141 = vlaneseq
      %v9142 = vshrl.u32 %v9141, 7
      %v9143 = vsub.s32 0, %v9142
      %v9144 = vrot.slane %v9139, %v9143
      %9146 = vmatprep.subr.mxu0 0.0
      %9147 = vmatpush1.msra.mxu0 %v9138
      %9148 = vmatprep.subr.mxu0 0.0
      %9149 = vmatpush1.msra.mxu0 %v9137
      %9150 = vmatprep.subr.mxu0 0.0
      %9151 = vmatpush1.msra.mxu0 %v9136
      %9152 = vmatprep.subr.mxu0 0.0
      %9153 = vmatpush1.msra.mxu0 %v9135
      %9154 = vmatprep.subr.mxu0 0.0
      %9155 = vmatpush1.msra.mxu0 %v9134
      %9156 = vmatprep.subr.mxu0 0.0
      %9157 = vmatpush1.msra.mxu0 %v9133
      %9158 = vmatprep.subr.mxu0 0.0
      %9159 = vmatpush1.msra.mxu0 %v9132
      %9160 = vmatprep.subr.mxu0 0.0
      %9161 = vmatpush1.msra.mxu0 %v9131
      %9162 = vmatprep.subr.mxu0 0.0
      %9163 = vmatpush1.msra.mxu0 %v9130
      %9164 = vmatprep.subr.mxu0 0.0
      %9165 = vmatpush1.msra.mxu0 %v9129
      %9166 = vmatprep.subr.mxu0 0.0
      %9167 = vmatpush1.msra.mxu0 %v9128
      %9168 = vmatprep.subr.mxu0 0.0
      %9169 = vmatpush1.msra.mxu0 %v9127
      %9170 = vmatprep.subr.mxu0 0.0
      %9171 = vmatpush1.msra.mxu0 %v9126
      %9172 = vmatprep.subr.mxu0 0.0
      %9173 = vmatpush1.msra.mxu0 %v9125
      %9174 = vmatprep.subr.mxu0 0.0
      %9175 = vmatpush1.msra.mxu0 %v9124
      %9176 = vmatprep.subr.mxu0 0.0
      %9177 = vmatpush1.msra.mxu0 %v9123
      %9178 = vmatprep.subr.mxu0 0.0
      %9179 = vmatpush2.msra.mxu0 0.0
      %9180 = vmatprep.subr.mxu0 0.0
      %9181 = vmatpush2.msra.mxu0 0.0
      %9182 = vmatprep.subr.mxu0 0.0
      %9183 = vmatpush2.msra.mxu0 0.0
      %9184 = vmatprep.subr.mxu0 0.0
      %9185 = vmatpush2.msra.mxu0 0.0
      %9186 = vmatprep.subr.mxu0 0.0
      %9187 = vmatpush2.msra.mxu0 0.0
      %9188 = vmatprep.subr.mxu0 0.0
      %9189 = vmatpush2.msra.mxu0 0.0
      %9190 = vmatprep.subr.mxu0 0.0
      %9191 = vmatpush2.msra.mxu0 0.0
      %9192 = vmatprep.subr.mxu0 0.0
      %9193 = vmatpush2.msra.mxu0 0.0
      %9194 = vmatprep.subr.mxu0 0.0
      %9195 = vmatpush2.msra.mxu0 0.0
      %9196 = vmatprep.subr.mxu0 0.0
      %9197 = vmatpush2.msra.mxu0 0.0
      %9198 = vmatprep.subr.mxu0 0.0
      %9199 = vmatpush2.msra.mxu0 0.0
      %9200 = vmatprep.subr.mxu0 0.0
      %9201 = vmatpush2.msra.mxu0 0.0
      %9202 = vmatprep.subr.mxu0 0.0
      %9203 = vmatpush2.msra.mxu0 0.0
      %9204 = vmatprep.subr.mxu0 0.0
      %9205 = vmatpush2.msra.mxu0 0.0
      %9206 = vmatprep.subr.mxu0 0.0
      %9207 = vmatpush2.msra.mxu0 0.0
      %9208 = vmatprep.subr.mxu0 0.0
      %9209 = vmatpush2.msra.mxu0 0.0
      %9210 = vmatprep.mubr.f32.mxu0 0.0
      %9211 = vmatmul.mubr.f32.gmra.mxu0 %v9059
      %v9212 = vpop.f32.mrf.mxu0
      %v9213 = vadd.f32 %v9144, %v9212
      %v9214 = vpop.f32.mrf.mxu0
      %9215 = vmatprep.mubr.f32.mxu0 0.0
      %9216 = vmatmul.mubr.f32.gmra.mxu0 %v9060
      %v9217 = vpop.f32.mrf.mxu0
      %v9218 = vadd.f32 %v9144, %v9217
      %v9219 = vpop.f32.mrf.mxu0
      %9220 = vmatprep.mubr.f32.mxu0 0.0
      %9221 = vmatmul.mubr.f32.gmra.mxu0 %v9061
      %v9222 = vpop.f32.mrf.mxu0
      %v9223 = vadd.f32 %v9144, %v9222
      %v9224 = vpop.f32.mrf.mxu0
      %9225 = vmatprep.mubr.f32.mxu0 0.0
      %9226 = vmatmul.mubr.f32.gmra.mxu0 %v9062
      %v9227 = vpop.f32.mrf.mxu0
      %v9228 = vadd.f32 %v9144, %v9227
      %v9229 = vpop.f32.mrf.mxu0
      %9230 = vmatprep.mubr.f32.mxu0 0.0
      %9231 = vmatmul.mubr.f32.gmra.mxu0 %v9063
      %v9232 = vpop.f32.mrf.mxu0
      %v9233 = vadd.f32 %v9144, %v9232
      %v9234 = vpop.f32.mrf.mxu0
      %9235 = vmatprep.mubr.f32.mxu0 0.0
      %9236 = vmatmul.mubr.f32.gmra.mxu0 %v9064
      %v9237 = vpop.f32.mrf.mxu0
      %v9238 = vadd.f32 %v9144, %v9237
      %v9239 = vpop.f32.mrf.mxu0
      %9240 = vmatprep.mubr.f32.mxu0 0.0
      %9241 = vmatmul.mubr.f32.gmra.mxu0 %v9065
      %v9242 = vpop.f32.mrf.mxu0
      %v9243 = vadd.f32 %v9144, %v9242
      %v9244 = vpop.f32.mrf.mxu0
      %9245 = vmatprep.mubr.f32.mxu0 0.0
      %9246 = vmatmul.mubr.f32.gmra.mxu0 %v9066
      %v9247 = vpop.f32.mrf.mxu0
      %v9248 = vadd.f32 %v9144, %v9247
      %v9249 = vpop.f32.mrf.mxu0
      %9250 = vmatprep.mubr.f32.mxu0 0.0
      %9251 = vmatmul.mubr.f32.gmra.mxu0 %v9067
      %v9252 = vpop.f32.mrf.mxu0
      %v9253 = vadd.f32 %v9144, %v9252
      %v9254 = vpop.f32.mrf.mxu0
      %9255 = vmatprep.mubr.f32.mxu0 0.0
      %9256 = vmatmul.mubr.f32.gmra.mxu0 %v9068
      %v9257 = vpop.f32.mrf.mxu0
      %v9258 = vadd.f32 %v9144, %v9257
      %v9259 = vpop.f32.mrf.mxu0
      %9260 = vmatprep.mubr.f32.mxu0 0.0
      %9261 = vmatmul.mubr.f32.gmra.mxu0 %v9069
      %v9262 = vpop.f32.mrf.mxu0
      %v9263 = vadd.f32 %v9144, %v9262
      %v9264 = vpop.f32.mrf.mxu0
      %9265 = vmatprep.mubr.f32.mxu0 0.0
      %9266 = vmatmul.mubr.f32.gmra.mxu0 %v9070
      %v9267 = vpop.f32.mrf.mxu0
      %v9268 = vadd.f32 %v9144, %v9267
      %v9269 = vpop.f32.mrf.mxu0
      %9270 = vmatprep.mubr.f32.mxu0 0.0
      %9271 = vmatmul.mubr.f32.gmra.mxu0 %v9071
      %v9272 = vpop.f32.mrf.mxu0
      %v9273 = vadd.f32 %v9144, %v9272
      %v9274 = vpop.f32.mrf.mxu0
      %9275 = vmatprep.mubr.f32.mxu0 0.0
      %9276 = vmatmul.mubr.f32.gmra.mxu0 %v9072
      %v9277 = vpop.f32.mrf.mxu0
      %v9278 = vadd.f32 %v9144, %v9277
      %v9279 = vpop.f32.mrf.mxu0
      %9280 = vmatprep.mubr.f32.mxu0 0.0
      %9281 = vmatmul.mubr.f32.gmra.mxu0 %v9073
      %v9282 = vpop.f32.mrf.mxu0
      %v9283 = vadd.f32 %v9144, %v9282
      %v9284 = vpop.f32.mrf.mxu0
      %9285 = vmatprep.mubr.f32.mxu0 0.0
      %9286 = vmatmul.mubr.f32.gmra.mxu0 %v9074
      %v9287 = vpop.f32.mrf.mxu0
      %v9288 = vadd.f32 %v9144, %v9287
      %v9289 = vpop.f32.mrf.mxu0
      %9290 = vmatprep.mubr.f32.mxu0 0.0
      %9291 = vmatmul.mubr.f32.gmra.mxu0 %v9075
      %v9292 = vpop.f32.mrf.mxu0
      %v9293 = vadd.f32 %v9144, %v9292
      %v9294 = vpop.f32.mrf.mxu0
      %9295 = vmatprep.mubr.f32.mxu0 0.0
      %9296 = vmatmul.mubr.f32.gmra.mxu0 %v9076
      %v9297 = vpop.f32.mrf.mxu0
      %v9298 = vadd.f32 %v9144, %v9297
      %v9299 = vpop.f32.mrf.mxu0
      %9300 = vmatprep.mubr.f32.mxu0 0.0
      %9301 = vmatmul.mubr.f32.gmra.mxu0 %v9077
      %v9302 = vpop.f32.mrf.mxu0
      %v9303 = vadd.f32 %v9144, %v9302
      %v9304 = vpop.f32.mrf.mxu0
      %9305 = vmatprep.mubr.f32.mxu0 0.0
      %9306 = vmatmul.mubr.f32.gmra.mxu0 %v9078
      %v9307 = vpop.f32.mrf.mxu0
      %v9308 = vadd.f32 %v9144, %v9307
      %v9309 = vpop.f32.mrf.mxu0
      %9310 = vmatprep.mubr.f32.mxu0 0.0
      %9311 = vmatmul.mubr.f32.gmra.mxu0 %v9079
      %v9312 = vpop.f32.mrf.mxu0
      %v9313 = vadd.f32 %v9144, %v9312
      %v9314 = vpop.f32.mrf.mxu0
      %9315 = vmatprep.mubr.f32.mxu0 0.0
      %9316 = vmatmul.mubr.f32.gmra.mxu0 %v9080
      %v9317 = vpop.f32.mrf.mxu0
      %v9318 = vadd.f32 %v9144, %v9317
      %v9319 = vpop.f32.mrf.mxu0
      %9320 = vmatprep.mubr.f32.mxu0 0.0
      %9321 = vmatmul.mubr.f32.gmra.mxu0 %v9081
      %v9322 = vpop.f32.mrf.mxu0
      %v9323 = vadd.f32 %v9144, %v9322
      %v9324 = vpop.f32.mrf.mxu0
      %9325 = vmatprep.mubr.f32.mxu0 0.0
      %9326 = vmatmul.mubr.f32.gmra.mxu0 %v9082
      %v9327 = vpop.f32.mrf.mxu0
      %v9328 = vadd.f32 %v9144, %v9327
      %v9329 = vpop.f32.mrf.mxu0
      %9330 = vmatprep.mubr.f32.mxu0 0.0
      %9331 = vmatmul.mubr.f32.gmra.mxu0 %v9083
      %v9332 = vpop.f32.mrf.mxu0
      %v9333 = vadd.f32 %v9144, %v9332
      %v9334 = vpop.f32.mrf.mxu0
      %9335 = vmatprep.mubr.f32.mxu0 0.0
      %9336 = vmatmul.mubr.f32.gmra.mxu0 %v9084
      %v9337 = vpop.f32.mrf.mxu0
      %v9338 = vadd.f32 %v9144, %v9337
      %v9339 = vpop.f32.mrf.mxu0
      %9340 = vmatprep.mubr.f32.mxu0 0.0
      %9341 = vmatmul.mubr.f32.gmra.mxu0 %v9085
      %v9342 = vpop.f32.mrf.mxu0
      %v9343 = vadd.f32 %v9144, %v9342
      %v9344 = vpop.f32.mrf.mxu0
      %9345 = vmatprep.mubr.f32.mxu0 0.0
      %9346 = vmatmul.mubr.f32.gmra.mxu0 %v9086
      %v9347 = vpop.f32.mrf.mxu0
      %v9348 = vadd.f32 %v9144, %v9347
      %v9349 = vpop.f32.mrf.mxu0
      %9350 = vmatprep.mubr.f32.mxu0 0.0
      %9351 = vmatmul.mubr.f32.gmra.mxu0 %v9087
      %v9352 = vpop.f32.mrf.mxu0
      %v9353 = vadd.f32 %v9144, %v9352
      %v9354 = vpop.f32.mrf.mxu0
      %9355 = vmatprep.mubr.f32.mxu0 0.0
      %9356 = vmatmul.mubr.f32.gmra.mxu0 %v9088
      %v9357 = vpop.f32.mrf.mxu0
      %v9358 = vadd.f32 %v9144, %v9357
      %v9359 = vpop.f32.mrf.mxu0
      %9360 = vmatprep.mubr.f32.mxu0 0.0
      %9361 = vmatmul.mubr.f32.gmra.mxu0 %v9089
      %v9362 = vpop.f32.mrf.mxu0
      %v9363 = vadd.f32 %v9144, %v9362
      %v9364 = vpop.f32.mrf.mxu0
      %9365 = vmatprep.mubr.f32.mxu0 0.0
      %9366 = vmatmul.mubr.f32.gmra.mxu0 %v9090
      %v9367 = vpop.f32.mrf.mxu0
      %v9368 = vadd.f32 %v9144, %v9367
      %v9369 = vpop.f32.mrf.mxu0
      %9370 = vmatprep.mubr.f32.mxu0 0.0
      %9371 = vmatmul.mubr.f32.gmra.mxu0 %v9091
      %v9372 = vpop.f32.mrf.mxu0
      %v9373 = vadd.f32 %v9144, %v9372
      %v9374 = vpop.f32.mrf.mxu0
      %9375 = vmatprep.mubr.f32.mxu0 0.0
      %9376 = vmatmul.mubr.f32.gmra.mxu0 %v9092
      %v9377 = vpop.f32.mrf.mxu0
      %v9378 = vadd.f32 %v9144, %v9377
      %v9379 = vpop.f32.mrf.mxu0
      %9380 = vmatprep.mubr.f32.mxu0 0.0
      %9381 = vmatmul.mubr.f32.gmra.mxu0 %v9093
      %v9382 = vpop.f32.mrf.mxu0
      %v9383 = vadd.f32 %v9144, %v9382
      %v9384 = vpop.f32.mrf.mxu0
      %9385 = vmatprep.mubr.f32.mxu0 0.0
      %9386 = vmatmul.mubr.f32.gmra.mxu0 %v9094
      %v9387 = vpop.f32.mrf.mxu0
      %v9388 = vadd.f32 %v9144, %v9387
      %v9389 = vpop.f32.mrf.mxu0
      %9390 = vmatprep.mubr.f32.mxu0 0.0
      %9391 = vmatmul.mubr.f32.gmra.mxu0 %v9095
      %v9392 = vpop.f32.mrf.mxu0
      %v9393 = vadd.f32 %v9144, %v9392
      %v9394 = vpop.f32.mrf.mxu0
      %9395 = vmatprep.mubr.f32.mxu0 0.0
      %9396 = vmatmul.mubr.f32.gmra.mxu0 %v9096
      %v9397 = vpop.f32.mrf.mxu0
      %v9398 = vadd.f32 %v9144, %v9397
      %v9399 = vpop.f32.mrf.mxu0
      %9400 = vmatprep.mubr.f32.mxu0 0.0
      %9401 = vmatmul.mubr.f32.gmra.mxu0 %v9097
      %v9402 = vpop.f32.mrf.mxu0
      %v9403 = vadd.f32 %v9144, %v9402
      %v9404 = vpop.f32.mrf.mxu0
      %9405 = vmatprep.mubr.f32.mxu0 0.0
      %9406 = vmatmul.mubr.f32.gmra.mxu0 %v9098
      %v9407 = vpop.f32.mrf.mxu0
      %v9408 = vadd.f32 %v9144, %v9407
      %v9409 = vpop.f32.mrf.mxu0
      %9410 = vmatprep.mubr.f32.mxu0 0.0
      %9411 = vmatmul.mubr.f32.gmra.mxu0 %v9099
      %v9412 = vpop.f32.mrf.mxu0
      %v9413 = vadd.f32 %v9144, %v9412
      %v9414 = vpop.f32.mrf.mxu0
      %9415 = vmatprep.mubr.f32.mxu0 0.0
      %9416 = vmatmul.mubr.f32.gmra.mxu0 %v9100
      %v9417 = vpop.f32.mrf.mxu0
      %v9418 = vadd.f32 %v9144, %v9417
      %v9419 = vpop.f32.mrf.mxu0
      %9420 = vmatprep.mubr.f32.mxu0 0.0
      %9421 = vmatmul.mubr.f32.gmra.mxu0 %v9101
      %v9422 = vpop.f32.mrf.mxu0
      %v9423 = vadd.f32 %v9144, %v9422
      %v9424 = vpop.f32.mrf.mxu0
      %9425 = vmatprep.mubr.f32.mxu0 0.0
      %9426 = vmatmul.mubr.f32.gmra.mxu0 %v9102
      %v9427 = vpop.f32.mrf.mxu0
      %v9428 = vadd.f32 %v9144, %v9427
      %v9429 = vpop.f32.mrf.mxu0
      %9430 = vmatprep.mubr.f32.mxu0 0.0
      %9431 = vmatmul.mubr.f32.gmra.mxu0 %v9103
      %v9432 = vpop.f32.mrf.mxu0
      %v9433 = vadd.f32 %v9144, %v9432
      %v9434 = vpop.f32.mrf.mxu0
      %9435 = vmatprep.mubr.f32.mxu0 0.0
      %9436 = vmatmul.mubr.f32.gmra.mxu0 %v9104
      %v9437 = vpop.f32.mrf.mxu0
      %v9438 = vadd.f32 %v9144, %v9437
      %v9439 = vpop.f32.mrf.mxu0
      %9440 = vmatprep.mubr.f32.mxu0 0.0
      %9441 = vmatmul.mubr.f32.gmra.mxu0 %v9105
      %v9442 = vpop.f32.mrf.mxu0
      %v9443 = vadd.f32 %v9144, %v9442
      %v9444 = vpop.f32.mrf.mxu0
      %9445 = vmatprep.mubr.f32.mxu0 0.0
      %9446 = vmatmul.mubr.f32.gmra.mxu0 %v9106
      %v9447 = vpop.f32.mrf.mxu0
      %v9448 = vadd.f32 %v9144, %v9447
      %v9449 = vpop.f32.mrf.mxu0
      %9450 = vmatprep.mubr.f32.mxu0 0.0
      %9451 = vmatmul.mubr.f32.gmra.mxu0 %v9107
      %v9452 = vpop.f32.mrf.mxu0
      %v9453 = vadd.f32 %v9144, %v9452
      %v9454 = vpop.f32.mrf.mxu0
      %9455 = vmatprep.mubr.f32.mxu0 0.0
      %9456 = vmatmul.mubr.f32.gmra.mxu0 %v9108
      %v9457 = vpop.f32.mrf.mxu0
      %v9458 = vadd.f32 %v9144, %v9457
      %v9459 = vpop.f32.mrf.mxu0
      %9460 = vmatprep.mubr.f32.mxu0 0.0
      %9461 = vmatmul.mubr.f32.gmra.mxu0 %v9109
      %v9462 = vpop.f32.mrf.mxu0
      %v9463 = vadd.f32 %v9144, %v9462
      %v9464 = vpop.f32.mrf.mxu0
      %9465 = vmatprep.mubr.f32.mxu0 0.0
      %9466 = vmatmul.mubr.f32.gmra.mxu0 %v9110
      %v9467 = vpop.f32.mrf.mxu0
      %v9468 = vadd.f32 %v9144, %v9467
      %v9469 = vpop.f32.mrf.mxu0
      %9470 = vmatprep.mubr.f32.mxu0 0.0
      %9471 = vmatmul.mubr.f32.gmra.mxu0 %v9111
      %v9472 = vpop.f32.mrf.mxu0
      %v9473 = vadd.f32 %v9144, %v9472
      %v9474 = vpop.f32.mrf.mxu0
      %9475 = vmatprep.mubr.f32.mxu0 0.0
      %9476 = vmatmul.mubr.f32.gmra.mxu0 %v9112
      %v9477 = vpop.f32.mrf.mxu0
      %v9478 = vadd.f32 %v9144, %v9477
      %v9479 = vpop.f32.mrf.mxu0
      %9480 = vmatprep.mubr.f32.mxu0 0.0
      %9481 = vmatmul.mubr.f32.gmra.mxu0 %v9113
      %v9482 = vpop.f32.mrf.mxu0
      %v9483 = vadd.f32 %v9144, %v9482
      %v9484 = vpop.f32.mrf.mxu0
      %9485 = vmatprep.mubr.f32.mxu0 0.0
      %9486 = vmatmul.mubr.f32.gmra.mxu0 %v9114
      %v9487 = vpop.f32.mrf.mxu0
      %v9488 = vadd.f32 %v9144, %v9487
      %v9489 = vpop.f32.mrf.mxu0
      %9490 = vmatprep.mubr.f32.mxu0 0.0
      %9491 = vmatmul.mubr.f32.gmra.mxu0 %v9115
      %v9492 = vpop.f32.mrf.mxu0
      %v9493 = vadd.f32 %v9144, %v9492
      %v9494 = vpop.f32.mrf.mxu0
      %9495 = vmatprep.mubr.f32.mxu0 0.0
      %9496 = vmatmul.mubr.f32.gmra.mxu0 %v9116
      %v9497 = vpop.f32.mrf.mxu0
      %v9498 = vadd.f32 %v9144, %v9497
      %v9499 = vpop.f32.mrf.mxu0
      %9500 = vmatprep.mubr.f32.mxu0 0.0
      %9501 = vmatmul.mubr.f32.gmra.mxu0 %v9117
      %v9502 = vpop.f32.mrf.mxu0
      %v9503 = vadd.f32 %v9144, %v9502
      %v9504 = vpop.f32.mrf.mxu0
      %9505 = vmatprep.mubr.f32.mxu0 0.0
      %9506 = vmatmul.mubr.f32.gmra.mxu0 %v9118
      %v9507 = vpop.f32.mrf.mxu0
      %v9508 = vadd.f32 %v9144, %v9507
      %v9509 = vpop.f32.mrf.mxu0
      %9510 = vmatprep.mubr.f32.mxu0 0.0
      %9511 = vmatmul.mubr.f32.gmra.mxu0 %v9119
      %v9512 = vpop.f32.mrf.mxu0
      %v9513 = vadd.f32 %v9144, %v9512
      %v9514 = vpop.f32.mrf.mxu0
      %9515 = vmatprep.mubr.f32.mxu0 0.0
      %9516 = vmatmul.mubr.f32.gmra.mxu0 %v9120
      %v9517 = vpop.f32.mrf.mxu0
      %v9518 = vadd.f32 %v9144, %v9517
      %v9519 = vpop.f32.mrf.mxu0
      %9520 = vmatprep.mubr.f32.mxu0 0.0
      %9521 = vmatmul.mubr.f32.gmra.mxu0 %v9121
      %v9522 = vpop.f32.mrf.mxu0
      %v9523 = vadd.f32 %v9144, %v9522
      %v9524 = vpop.f32.mrf.mxu0
      %9525 = vmatprep.mubr.f32.mxu0 0.0
      %9526 = vmatmul.mubr.f32.gmra.mxu0 %v9122
      %v9527 = vpop.f32.mrf.mxu0
      %v9528 = vadd.f32 %v9144, %v9527
      %v9529 = vpop.f32.mrf.mxu0
      %9530 = vdwg.mxu0
      %v9531 = vadd.f32 %v9213, %v395
      %v9532 = vadd.f32 %v9218, %v396
      %v9533 = vadd.f32 %v9223, %v397
      %v9534 = vadd.f32 %v9228, %v398
      %v9535 = vadd.f32 %v9233, %v399
      %v9536 = vadd.f32 %v9238, %v400
      %v9537 = vadd.f32 %v9243, %v401
      %v9538 = vadd.f32 %v9248, %v402
      %v9539 = vadd.f32 %v9253, %v403
      %v9540 = vadd.f32 %v9258, %v404
      %v9541 = vadd.f32 %v9263, %v405
      %v9542 = vadd.f32 %v9268, %v406
      %v9543 = vadd.f32 %v9273, %v407
      %v9544 = vadd.f32 %v9278, %v408
      %v9545 = vadd.f32 %v9283, %v409
      %v9546 = vadd.f32 %v9288, %v410
      %v9547 = vadd.f32 %v9293, %v411
      %v9548 = vadd.f32 %v9298, %v412
      %v9549 = vadd.f32 %v9303, %v413
      %v9550 = vadd.f32 %v9308, %v414
      %v9551 = vadd.f32 %v9313, %v415
      %v9552 = vadd.f32 %v9318, %v416
      %v9553 = vadd.f32 %v9323, %v417
      %v9554 = vadd.f32 %v9328, %v418
      %v9555 = vadd.f32 %v9333, %v419
      %v9556 = vadd.f32 %v9338, %v420
      %v9557 = vadd.f32 %v9343, %v421
      %v9558 = vadd.f32 %v9348, %v422
      %v9559 = vadd.f32 %v9353, %v423
      %v9560 = vadd.f32 %v9358, %v424
      %v9561 = vadd.f32 %v9363, %v425
      %v9562 = vadd.f32 %v9368, %v426
      %v9563 = vadd.f32 %v9373, %v427
      %v9564 = vadd.f32 %v9378, %v428
      %v9565 = vadd.f32 %v9383, %v429
      %v9566 = vadd.f32 %v9388, %v430
      %v9567 = vadd.f32 %v9393, %v431
      %v9568 = vadd.f32 %v9398, %v432
      %v9569 = vadd.f32 %v9403, %v433
      %v9570 = vadd.f32 %v9408, %v434
      %v9571 = vadd.f32 %v9413, %v435
      %v9572 = vadd.f32 %v9418, %v436
      %v9573 = vadd.f32 %v9423, %v437
      %v9574 = vadd.f32 %v9428, %v438
      %v9575 = vadd.f32 %v9433, %v439
      %v9576 = vadd.f32 %v9438, %v440
      %v9577 = vadd.f32 %v9443, %v441
      %v9578 = vadd.f32 %v9448, %v442
      %v9579 = vadd.f32 %v9453, %v443
      %v9580 = vadd.f32 %v9458, %v444
      %v9581 = vadd.f32 %v9463, %v445
      %v9582 = vadd.f32 %v9468, %v446
      %v9583 = vadd.f32 %v9473, %v447
      %v9584 = vadd.f32 %v9478, %v448
      %v9585 = vadd.f32 %v9483, %v449
      %v9586 = vadd.f32 %v9488, %v450
      %v9587 = vadd.f32 %v9493, %v451
      %v9588 = vadd.f32 %v9498, %v452
      %v9589 = vadd.f32 %v9503, %v453
      %v9590 = vadd.f32 %v9508, %v454
      %v9591 = vadd.f32 %v9513, %v455
      %v9592 = vadd.f32 %v9518, %v456
      %v9593 = vadd.f32 %v9523, %v457
      %v9594 = vadd.f32 %v9528, %v458
      %v9595 = vrot.slane %v9531, 4
      %v9596 = vadd.f32 %v9531, %v9595
      %v9597 = vrot.slane %v9596, 2
      %v9598 = vadd.f32 %v9596, %v9597
      %v9599 = vrot.slane %v9598, 1
      %v9600 = vadd.f32 %v9598, %v9599
      %v9601 = vrot.slane %v9532, 4
      %v9602 = vadd.f32 %v9532, %v9601
      %v9603 = vrot.slane %v9602, 2
      %v9604 = vadd.f32 %v9602, %v9603
      %v9605 = vrot.slane %v9604, 1
      %v9606 = vadd.f32 %v9604, %v9605
      %v9607 = vrot.slane %v9533, 4
      %v9608 = vadd.f32 %v9533, %v9607
      %v9609 = vrot.slane %v9608, 2
      %v9610 = vadd.f32 %v9608, %v9609
      %v9611 = vrot.slane %v9610, 1
      %v9612 = vadd.f32 %v9610, %v9611
      %v9613 = vrot.slane %v9534, 4
      %v9614 = vadd.f32 %v9534, %v9613
      %v9615 = vrot.slane %v9614, 2
      %v9616 = vadd.f32 %v9614, %v9615
      %v9617 = vrot.slane %v9616, 1
      %v9618 = vadd.f32 %v9616, %v9617
      %v9619 = vrot.slane %v9535, 4
      %v9620 = vadd.f32 %v9535, %v9619
      %v9621 = vrot.slane %v9620, 2
      %v9622 = vadd.f32 %v9620, %v9621
      %v9623 = vrot.slane %v9622, 1
      %v9624 = vadd.f32 %v9622, %v9623
      %v9625 = vrot.slane %v9536, 4
      %v9626 = vadd.f32 %v9536, %v9625
      %v9627 = vrot.slane %v9626, 2
      %v9628 = vadd.f32 %v9626, %v9627
      %v9629 = vrot.slane %v9628, 1
      %v9630 = vadd.f32 %v9628, %v9629
      %v9631 = vrot.slane %v9537, 4
      %v9632 = vadd.f32 %v9537, %v9631
      %v9633 = vrot.slane %v9632, 2
      %v9634 = vadd.f32 %v9632, %v9633
      %v9635 = vrot.slane %v9634, 1
      %v9636 = vadd.f32 %v9634, %v9635
      %v9637 = vrot.slane %v9538, 4
      %v9638 = vadd.f32 %v9538, %v9637
      %v9639 = vrot.slane %v9638, 2
      %v9640 = vadd.f32 %v9638, %v9639
      %v9641 = vrot.slane %v9640, 1
      %v9642 = vadd.f32 %v9640, %v9641
      %v9643 = vrot.slane %v9539, 4
      %v9644 = vadd.f32 %v9539, %v9643
      %v9645 = vrot.slane %v9644, 2
      %v9646 = vadd.f32 %v9644, %v9645
      %v9647 = vrot.slane %v9646, 1
      %v9648 = vadd.f32 %v9646, %v9647
      %v9649 = vrot.slane %v9540, 4
      %v9650 = vadd.f32 %v9540, %v9649
      %v9651 = vrot.slane %v9650, 2
      %v9652 = vadd.f32 %v9650, %v9651
      %v9653 = vrot.slane %v9652, 1
      %v9654 = vadd.f32 %v9652, %v9653
      %v9655 = vrot.slane %v9541, 4
      %v9656 = vadd.f32 %v9541, %v9655
      %v9657 = vrot.slane %v9656, 2
      %v9658 = vadd.f32 %v9656, %v9657
      %v9659 = vrot.slane %v9658, 1
      %v9660 = vadd.f32 %v9658, %v9659
      %v9661 = vrot.slane %v9542, 4
      %v9662 = vadd.f32 %v9542, %v9661
      %v9663 = vrot.slane %v9662, 2
      %v9664 = vadd.f32 %v9662, %v9663
      %v9665 = vrot.slane %v9664, 1
      %v9666 = vadd.f32 %v9664, %v9665
      %v9667 = vrot.slane %v9543, 4
      %v9668 = vadd.f32 %v9543, %v9667
      %v9669 = vrot.slane %v9668, 2
      %v9670 = vadd.f32 %v9668, %v9669
      %v9671 = vrot.slane %v9670, 1
      %v9672 = vadd.f32 %v9670, %v9671
      %v9673 = vrot.slane %v9544, 4
      %v9674 = vadd.f32 %v9544, %v9673
      %v9675 = vrot.slane %v9674, 2
      %v9676 = vadd.f32 %v9674, %v9675
      %v9677 = vrot.slane %v9676, 1
      %v9678 = vadd.f32 %v9676, %v9677
      %v9679 = vrot.slane %v9545, 4
      %v9680 = vadd.f32 %v9545, %v9679
      %v9681 = vrot.slane %v9680, 2
      %v9682 = vadd.f32 %v9680, %v9681
      %v9683 = vrot.slane %v9682, 1
      %v9684 = vadd.f32 %v9682, %v9683
      %v9685 = vrot.slane %v9546, 4
      %v9686 = vadd.f32 %v9546, %v9685
      %v9687 = vrot.slane %v9686, 2
      %v9688 = vadd.f32 %v9686, %v9687
      %v9689 = vrot.slane %v9688, 1
      %v9690 = vadd.f32 %v9688, %v9689
      %v9691 = vrot.slane %v9547, 4
      %v9692 = vadd.f32 %v9547, %v9691
      %v9693 = vrot.slane %v9692, 2
      %v9694 = vadd.f32 %v9692, %v9693
      %v9695 = vrot.slane %v9694, 1
      %v9696 = vadd.f32 %v9694, %v9695
      %v9697 = vrot.slane %v9548, 4
      %v9698 = vadd.f32 %v9548, %v9697
      %v9699 = vrot.slane %v9698, 2
      %v9700 = vadd.f32 %v9698, %v9699
      %v9701 = vrot.slane %v9700, 1
      %v9702 = vadd.f32 %v9700, %v9701
      %v9703 = vrot.slane %v9549, 4
      %v9704 = vadd.f32 %v9549, %v9703
      %v9705 = vrot.slane %v9704, 2
      %v9706 = vadd.f32 %v9704, %v9705
      %v9707 = vrot.slane %v9706, 1
      %v9708 = vadd.f32 %v9706, %v9707
      %v9709 = vrot.slane %v9550, 4
      %v9710 = vadd.f32 %v9550, %v9709
      %v9711 = vrot.slane %v9710, 2
      %v9712 = vadd.f32 %v9710, %v9711
      %v9713 = vrot.slane %v9712, 1
      %v9714 = vadd.f32 %v9712, %v9713
      %v9715 = vrot.slane %v9551, 4
      %v9716 = vadd.f32 %v9551, %v9715
      %v9717 = vrot.slane %v9716, 2
      %v9718 = vadd.f32 %v9716, %v9717
      %v9719 = vrot.slane %v9718, 1
      %v9720 = vadd.f32 %v9718, %v9719
      %v9721 = vrot.slane %v9552, 4
      %v9722 = vadd.f32 %v9552, %v9721
      %v9723 = vrot.slane %v9722, 2
      %v9724 = vadd.f32 %v9722, %v9723
      %v9725 = vrot.slane %v9724, 1
      %v9726 = vadd.f32 %v9724, %v9725
      %v9727 = vrot.slane %v9553, 4
      %v9728 = vadd.f32 %v9553, %v9727
      %v9729 = vrot.slane %v9728, 2
      %v9730 = vadd.f32 %v9728, %v9729
      %v9731 = vrot.slane %v9730, 1
      %v9732 = vadd.f32 %v9730, %v9731
      %v9733 = vrot.slane %v9554, 4
      %v9734 = vadd.f32 %v9554, %v9733
      %v9735 = vrot.slane %v9734, 2
      %v9736 = vadd.f32 %v9734, %v9735
      %v9737 = vrot.slane %v9736, 1
      %v9738 = vadd.f32 %v9736, %v9737
      %v9739 = vrot.slane %v9555, 4
      %v9740 = vadd.f32 %v9555, %v9739
      %v9741 = vrot.slane %v9740, 2
      %v9742 = vadd.f32 %v9740, %v9741
      %v9743 = vrot.slane %v9742, 1
      %v9744 = vadd.f32 %v9742, %v9743
      %v9745 = vrot.slane %v9556, 4
      %v9746 = vadd.f32 %v9556, %v9745
      %v9747 = vrot.slane %v9746, 2
      %v9748 = vadd.f32 %v9746, %v9747
      %v9749 = vrot.slane %v9748, 1
      %v9750 = vadd.f32 %v9748, %v9749
      %v9751 = vrot.slane %v9557, 4
      %v9752 = vadd.f32 %v9557, %v9751
      %v9753 = vrot.slane %v9752, 2
      %v9754 = vadd.f32 %v9752, %v9753
      %v9755 = vrot.slane %v9754, 1
      %v9756 = vadd.f32 %v9754, %v9755
      %v9757 = vrot.slane %v9558, 4
      %v9758 = vadd.f32 %v9558, %v9757
      %v9759 = vrot.slane %v9758, 2
      %v9760 = vadd.f32 %v9758, %v9759
      %v9761 = vrot.slane %v9760, 1
      %v9762 = vadd.f32 %v9760, %v9761
      %v9763 = vrot.slane %v9559, 4
      %v9764 = vadd.f32 %v9559, %v9763
      %v9765 = vrot.slane %v9764, 2
      %v9766 = vadd.f32 %v9764, %v9765
      %v9767 = vrot.slane %v9766, 1
      %v9768 = vadd.f32 %v9766, %v9767
      %v9769 = vrot.slane %v9560, 4
      %v9770 = vadd.f32 %v9560, %v9769
      %v9771 = vrot.slane %v9770, 2
      %v9772 = vadd.f32 %v9770, %v9771
      %v9773 = vrot.slane %v9772, 1
      %v9774 = vadd.f32 %v9772, %v9773
      %v9775 = vrot.slane %v9561, 4
      %v9776 = vadd.f32 %v9561, %v9775
      %v9777 = vrot.slane %v9776, 2
      %v9778 = vadd.f32 %v9776, %v9777
      %v9779 = vrot.slane %v9778, 1
      %v9780 = vadd.f32 %v9778, %v9779
      %v9781 = vrot.slane %v9562, 4
      %v9782 = vadd.f32 %v9562, %v9781
      %v9783 = vrot.slane %v9782, 2
      %v9784 = vadd.f32 %v9782, %v9783
      %v9785 = vrot.slane %v9784, 1
      %v9786 = vadd.f32 %v9784, %v9785
      %v9787 = vrot.slane %v9563, 4
      %v9788 = vadd.f32 %v9563, %v9787
      %v9789 = vrot.slane %v9788, 2
      %v9790 = vadd.f32 %v9788, %v9789
      %v9791 = vrot.slane %v9790, 1
      %v9792 = vadd.f32 %v9790, %v9791
      %v9793 = vrot.slane %v9564, 4
      %v9794 = vadd.f32 %v9564, %v9793
      %v9795 = vrot.slane %v9794, 2
      %v9796 = vadd.f32 %v9794, %v9795
      %v9797 = vrot.slane %v9796, 1
      %v9798 = vadd.f32 %v9796, %v9797
      %v9799 = vrot.slane %v9565, 4
      %v9800 = vadd.f32 %v9565, %v9799
      %v9801 = vrot.slane %v9800, 2
      %v9802 = vadd.f32 %v9800, %v9801
      %v9803 = vrot.slane %v9802, 1
      %v9804 = vadd.f32 %v9802, %v9803
      %v9805 = vrot.slane %v9566, 4
      %v9806 = vadd.f32 %v9566, %v9805
      %v9807 = vrot.slane %v9806, 2
      %v9808 = vadd.f32 %v9806, %v9807
      %v9809 = vrot.slane %v9808, 1
      %v9810 = vadd.f32 %v9808, %v9809
      %v9811 = vrot.slane %v9567, 4
      %v9812 = vadd.f32 %v9567, %v9811
      %v9813 = vrot.slane %v9812, 2
      %v9814 = vadd.f32 %v9812, %v9813
      %v9815 = vrot.slane %v9814, 1
      %v9816 = vadd.f32 %v9814, %v9815
      %v9817 = vrot.slane %v9568, 4
      %v9818 = vadd.f32 %v9568, %v9817
      %v9819 = vrot.slane %v9818, 2
      %v9820 = vadd.f32 %v9818, %v9819
      %v9821 = vrot.slane %v9820, 1
      %v9822 = vadd.f32 %v9820, %v9821
      %v9823 = vrot.slane %v9569, 4
      %v9824 = vadd.f32 %v9569, %v9823
      %v9825 = vrot.slane %v9824, 2
      %v9826 = vadd.f32 %v9824, %v9825
      %v9827 = vrot.slane %v9826, 1
      %v9828 = vadd.f32 %v9826, %v9827
      %v9829 = vrot.slane %v9570, 4
      %v9830 = vadd.f32 %v9570, %v9829
      %v9831 = vrot.slane %v9830, 2
      %v9832 = vadd.f32 %v9830, %v9831
      %v9833 = vrot.slane %v9832, 1
      %v9834 = vadd.f32 %v9832, %v9833
      %v9835 = vrot.slane %v9571, 4
      %v9836 = vadd.f32 %v9571, %v9835
      %v9837 = vrot.slane %v9836, 2
      %v9838 = vadd.f32 %v9836, %v9837
      %v9839 = vrot.slane %v9838, 1
      %v9840 = vadd.f32 %v9838, %v9839
      %v9841 = vrot.slane %v9572, 4
      %v9842 = vadd.f32 %v9572, %v9841
      %v9843 = vrot.slane %v9842, 2
      %v9844 = vadd.f32 %v9842, %v9843
      %v9845 = vrot.slane %v9844, 1
      %v9846 = vadd.f32 %v9844, %v9845
      %v9847 = vrot.slane %v9573, 4
      %v9848 = vadd.f32 %v9573, %v9847
      %v9849 = vrot.slane %v9848, 2
      %v9850 = vadd.f32 %v9848, %v9849
      %v9851 = vrot.slane %v9850, 1
      %v9852 = vadd.f32 %v9850, %v9851
      %v9853 = vrot.slane %v9574, 4
      %v9854 = vadd.f32 %v9574, %v9853
      %v9855 = vrot.slane %v9854, 2
      %v9856 = vadd.f32 %v9854, %v9855
      %v9857 = vrot.slane %v9856, 1
      %v9858 = vadd.f32 %v9856, %v9857
      %v9859 = vrot.slane %v9575, 4
      %v9860 = vadd.f32 %v9575, %v9859
      %v9861 = vrot.slane %v9860, 2
      %v9862 = vadd.f32 %v9860, %v9861
      %v9863 = vrot.slane %v9862, 1
      %v9864 = vadd.f32 %v9862, %v9863
      %v9865 = vrot.slane %v9576, 4
      %v9866 = vadd.f32 %v9576, %v9865
      %v9867 = vrot.slane %v9866, 2
      %v9868 = vadd.f32 %v9866, %v9867
      %v9869 = vrot.slane %v9868, 1
      %v9870 = vadd.f32 %v9868, %v9869
      %v9871 = vrot.slane %v9577, 4
      %v9872 = vadd.f32 %v9577, %v9871
      %v9873 = vrot.slane %v9872, 2
      %v9874 = vadd.f32 %v9872, %v9873
      %v9875 = vrot.slane %v9874, 1
      %v9876 = vadd.f32 %v9874, %v9875
      %v9877 = vrot.slane %v9578, 4
      %v9878 = vadd.f32 %v9578, %v9877
      %v9879 = vrot.slane %v9878, 2
      %v9880 = vadd.f32 %v9878, %v9879
      %v9881 = vrot.slane %v9880, 1
      %v9882 = vadd.f32 %v9880, %v9881
      %v9883 = vrot.slane %v9579, 4
      %v9884 = vadd.f32 %v9579, %v9883
      %v9885 = vrot.slane %v9884, 2
      %v9886 = vadd.f32 %v9884, %v9885
      %v9887 = vrot.slane %v9886, 1
      %v9888 = vadd.f32 %v9886, %v9887
      %v9889 = vrot.slane %v9580, 4
      %v9890 = vadd.f32 %v9580, %v9889
      %v9891 = vrot.slane %v9890, 2
      %v9892 = vadd.f32 %v9890, %v9891
      %v9893 = vrot.slane %v9892, 1
      %v9894 = vadd.f32 %v9892, %v9893
      %v9895 = vrot.slane %v9581, 4
      %v9896 = vadd.f32 %v9581, %v9895
      %v9897 = vrot.slane %v9896, 2
      %v9898 = vadd.f32 %v9896, %v9897
      %v9899 = vrot.slane %v9898, 1
      %v9900 = vadd.f32 %v9898, %v9899
      %v9901 = vrot.slane %v9582, 4
      %v9902 = vadd.f32 %v9582, %v9901
      %v9903 = vrot.slane %v9902, 2
      %v9904 = vadd.f32 %v9902, %v9903
      %v9905 = vrot.slane %v9904, 1
      %v9906 = vadd.f32 %v9904, %v9905
      %v9907 = vrot.slane %v9583, 4
      %v9908 = vadd.f32 %v9583, %v9907
      %v9909 = vrot.slane %v9908, 2
      %v9910 = vadd.f32 %v9908, %v9909
      %v9911 = vrot.slane %v9910, 1
      %v9912 = vadd.f32 %v9910, %v9911
      %v9913 = vrot.slane %v9584, 4
      %v9914 = vadd.f32 %v9584, %v9913
      %v9915 = vrot.slane %v9914, 2
      %v9916 = vadd.f32 %v9914, %v9915
      %v9917 = vrot.slane %v9916, 1
      %v9918 = vadd.f32 %v9916, %v9917
      %v9919 = vrot.slane %v9585, 4
      %v9920 = vadd.f32 %v9585, %v9919
      %v9921 = vrot.slane %v9920, 2
      %v9922 = vadd.f32 %v9920, %v9921
      %v9923 = vrot.slane %v9922, 1
      %v9924 = vadd.f32 %v9922, %v9923
      %v9925 = vrot.slane %v9586, 4
      %v9926 = vadd.f32 %v9586, %v9925
      %v9927 = vrot.slane %v9926, 2
      %v9928 = vadd.f32 %v9926, %v9927
      %v9929 = vrot.slane %v9928, 1
      %v9930 = vadd.f32 %v9928, %v9929
      %v9931 = vrot.slane %v9587, 4
      %v9932 = vadd.f32 %v9587, %v9931
      %v9933 = vrot.slane %v9932, 2
      %v9934 = vadd.f32 %v9932, %v9933
      %v9935 = vrot.slane %v9934, 1
      %v9936 = vadd.f32 %v9934, %v9935
      %v9937 = vrot.slane %v9588, 4
      %v9938 = vadd.f32 %v9588, %v9937
      %v9939 = vrot.slane %v9938, 2
      %v9940 = vadd.f32 %v9938, %v9939
      %v9941 = vrot.slane %v9940, 1
      %v9942 = vadd.f32 %v9940, %v9941
      %v9943 = vrot.slane %v9589, 4
      %v9944 = vadd.f32 %v9589, %v9943
      %v9945 = vrot.slane %v9944, 2
      %v9946 = vadd.f32 %v9944, %v9945
      %v9947 = vrot.slane %v9946, 1
      %v9948 = vadd.f32 %v9946, %v9947
      %v9949 = vrot.slane %v9590, 4
      %v9950 = vadd.f32 %v9590, %v9949
      %v9951 = vrot.slane %v9950, 2
      %v9952 = vadd.f32 %v9950, %v9951
      %v9953 = vrot.slane %v9952, 1
      %v9954 = vadd.f32 %v9952, %v9953
      %v9955 = vrot.slane %v9591, 4
      %v9956 = vadd.f32 %v9591, %v9955
      %v9957 = vrot.slane %v9956, 2
      %v9958 = vadd.f32 %v9956, %v9957
      %v9959 = vrot.slane %v9958, 1
      %v9960 = vadd.f32 %v9958, %v9959
      %v9961 = vrot.slane %v9592, 4
      %v9962 = vadd.f32 %v9592, %v9961
      %v9963 = vrot.slane %v9962, 2
      %v9964 = vadd.f32 %v9962, %v9963
      %v9965 = vrot.slane %v9964, 1
      %v9966 = vadd.f32 %v9964, %v9965
      %v9967 = vrot.slane %v9593, 4
      %v9968 = vadd.f32 %v9593, %v9967
      %v9969 = vrot.slane %v9968, 2
      %v9970 = vadd.f32 %v9968, %v9969
      %v9971 = vrot.slane %v9970, 1
      %v9972 = vadd.f32 %v9970, %v9971
      %v9973 = vrot.slane %v9594, 4
      %v9974 = vadd.f32 %v9594, %v9973
      %v9975 = vrot.slane %v9974, 2
      %v9976 = vadd.f32 %v9974, %v9975
      %v9977 = vrot.slane %v9976, 1
      %v9978 = vadd.f32 %v9976, %v9977
      %v9979 = vmul.f32 %v9600, 0.125
      %v9980 = vmul.f32 %v9606, 0.125
      %v9981 = vmul.f32 %v9612, 0.125
      %v9982 = vmul.f32 %v9618, 0.125
      %v9983 = vmul.f32 %v9624, 0.125
      %v9984 = vmul.f32 %v9630, 0.125
      %v9985 = vmul.f32 %v9636, 0.125
      %v9986 = vmul.f32 %v9642, 0.125
      %v9987 = vmul.f32 %v9648, 0.125
      %v9988 = vmul.f32 %v9654, 0.125
      %v9989 = vmul.f32 %v9660, 0.125
      %v9990 = vmul.f32 %v9666, 0.125
      %v9991 = vmul.f32 %v9672, 0.125
      %v9992 = vmul.f32 %v9678, 0.125
      %v9993 = vmul.f32 %v9684, 0.125
      %v9994 = vmul.f32 %v9690, 0.125
      %v9995 = vmul.f32 %v9696, 0.125
      %v9996 = vmul.f32 %v9702, 0.125
      %v9997 = vmul.f32 %v9708, 0.125
      %v9998 = vmul.f32 %v9714, 0.125
      %v9999 = vmul.f32 %v9720, 0.125
      %v10000 = vmul.f32 %v9726, 0.125
      %v10001 = vmul.f32 %v9732, 0.125
      %v10002 = vmul.f32 %v9738, 0.125
      %v10003 = vmul.f32 %v9744, 0.125
      %v10004 = vmul.f32 %v9750, 0.125
      %v10005 = vmul.f32 %v9756, 0.125
      %v10006 = vmul.f32 %v9762, 0.125
      %v10007 = vmul.f32 %v9768, 0.125
      %v10008 = vmul.f32 %v9774, 0.125
      %v10009 = vmul.f32 %v9780, 0.125
      %v10010 = vmul.f32 %v9786, 0.125
      %v10011 = vmul.f32 %v9792, 0.125
      %v10012 = vmul.f32 %v9798, 0.125
      %v10013 = vmul.f32 %v9804, 0.125
      %v10014 = vmul.f32 %v9810, 0.125
      %v10015 = vmul.f32 %v9816, 0.125
      %v10016 = vmul.f32 %v9822, 0.125
      %v10017 = vmul.f32 %v9828, 0.125
      %v10018 = vmul.f32 %v9834, 0.125
      %v10019 = vmul.f32 %v9840, 0.125
      %v10020 = vmul.f32 %v9846, 0.125
      %v10021 = vmul.f32 %v9852, 0.125
      %v10022 = vmul.f32 %v9858, 0.125
      %v10023 = vmul.f32 %v9864, 0.125
      %v10024 = vmul.f32 %v9870, 0.125
      %v10025 = vmul.f32 %v9876, 0.125
      %v10026 = vmul.f32 %v9882, 0.125
      %v10027 = vmul.f32 %v9888, 0.125
      %v10028 = vmul.f32 %v9894, 0.125
      %v10029 = vmul.f32 %v9900, 0.125
      %v10030 = vmul.f32 %v9906, 0.125
      %v10031 = vmul.f32 %v9912, 0.125
      %v10032 = vmul.f32 %v9918, 0.125
      %v10033 = vmul.f32 %v9924, 0.125
      %v10034 = vmul.f32 %v9930, 0.125
      %v10035 = vmul.f32 %v9936, 0.125
      %v10036 = vmul.f32 %v9942, 0.125
      %v10037 = vmul.f32 %v9948, 0.125
      %v10038 = vmul.f32 %v9954, 0.125
      %v10039 = vmul.f32 %v9960, 0.125
      %v10040 = vmul.f32 %v9966, 0.125
      %v10041 = vmul.f32 %v9972, 0.125
      %v10042 = vmul.f32 %v9978, 0.125
      %v10043 = vld [vmem:[%s6] sm:$0xff]
      %v10044 = vld [vmem:[%s6 + $0x8] sm:$0xff]
      %v10045 = vld [vmem:[%s6 + $0x10] sm:$0xff]
      %v10046 = vld [vmem:[%s6 + $0x18] sm:$0xff]
      %v10047 = vld [vmem:[%s6 + $0x20] sm:$0xff]
      %v10048 = vld [vmem:[%s6 + $0x28] sm:$0xff]
      %v10049 = vld [vmem:[%s6 + $0x30] sm:$0xff]
      %v10050 = vld [vmem:[%s6 + $0x38] sm:$0xff]
      %v10051 = vld [vmem:[%s6 + $0x40] sm:$0xff]
      %v10052 = vld [vmem:[%s6 + $0x48] sm:$0xff]
      %v10053 = vld [vmem:[%s6 + $0x50] sm:$0xff]
      %v10054 = vld [vmem:[%s6 + $0x58] sm:$0xff]
      %v10055 = vld [vmem:[%s6 + $0x60] sm:$0xff]
      %v10056 = vld [vmem:[%s6 + $0x68] sm:$0xff]
      %v10057 = vld [vmem:[%s6 + $0x70] sm:$0xff]
      %v10058 = vld [vmem:[%s6 + $0x78] sm:$0xff]
      %v10059 = vld [vmem:[%s7] sm:$0x1]
      %v10061 = vlaneseq
      %v10062 = vshrl.u32 %v10061, 7
      %v10063 = vsub.s32 0, %v10062
      %v10064 = vrot.slane %v10059, %v10063
      %vm10130 = vcmask 1041409
      %v10131 = vsel %vm10130, %v9980, %v9979
      %vm10132 = vcmask 1042434
      %v10133 = vsel %vm10132, %v9981, %v10131
      %vm10134 = vcmask 1043459
      %v10135 = vsel %vm10134, %v9982, %v10133
      %vm10136 = vcmask 1044484
      %v10137 = vsel %vm10136, %v9983, %v10135
      %vm10138 = vcmask 1045509
      %v10139 = vsel %vm10138, %v9984, %v10137
      %vm10140 = vcmask 1046534
      %v10141 = vsel %vm10140, %v9985, %v10139
      %vm10142 = vcmask 1047559
      %v10143 = vsel %vm10142, %v9986, %v10141
      %v10144 = vsel %vm10130, %v9988, %v9987
      %v10145 = vsel %vm10132, %v9989, %v10144
      %v10146 = vsel %vm10134, %v9990, %v10145
      %v10147 = vsel %vm10136, %v9991, %v10146
      %v10148 = vsel %vm10138, %v9992, %v10147
      %v10149 = vsel %vm10140, %v9993, %v10148
      %v10150 = vsel %vm10142, %v9994, %v10149
      %v10151 = vsel %vm10130, %v9996, %v9995
      %v10152 = vsel %vm10132, %v9997, %v10151
      %v10153 = vsel %vm10134, %v9998, %v10152
      %v10154 = vsel %vm10136, %v9999, %v10153
      %v10155 = vsel %vm10138, %v10000, %v10154
      %v10156 = vsel %vm10140, %v10001, %v10155
      %v10157 = vsel %vm10142, %v10002, %v10156
      %v10158 = vsel %vm10130, %v10004, %v10003
      %v10159 = vsel %vm10132, %v10005, %v10158
      %v10160 = vsel %vm10134, %v10006, %v10159
      %v10161 = vsel %vm10136, %v10007, %v10160
      %v10162 = vsel %vm10138, %v10008, %v10161
      %v10163 = vsel %vm10140, %v10009, %v10162
      %v10164 = vsel %vm10142, %v10010, %v10163
      %v10165 = vsel %vm10130, %v10012, %v10011
      %v10166 = vsel %vm10132, %v10013, %v10165
      %v10167 = vsel %vm10134, %v10014, %v10166
      %v10168 = vsel %vm10136, %v10015, %v10167
      %v10169 = vsel %vm10138, %v10016, %v10168
      %v10170 = vsel %vm10140, %v10017, %v10169
      %v10171 = vsel %vm10142, %v10018, %v10170
      %v10172 = vsel %vm10130, %v10020, %v10019
      %v10173 = vsel %vm10132, %v10021, %v10172
      %v10174 = vsel %vm10134, %v10022, %v10173
      %v10175 = vsel %vm10136, %v10023, %v10174
      %v10176 = vsel %vm10138, %v10024, %v10175
      %v10177 = vsel %vm10140, %v10025, %v10176
      %v10178 = vsel %vm10142, %v10026, %v10177
      %v10179 = vsel %vm10130, %v10028, %v10027
      %v10180 = vsel %vm10132, %v10029, %v10179
      %v10181 = vsel %vm10134, %v10030, %v10180
      %v10182 = vsel %vm10136, %v10031, %v10181
      %v10183 = vsel %vm10138, %v10032, %v10182
      %v10184 = vsel %vm10140, %v10033, %v10183
      %v10185 = vsel %vm10142, %v10034, %v10184
      %v10186 = vsel %vm10130, %v10036, %v10035
      %v10187 = vsel %vm10132, %v10037, %v10186
      %v10188 = vsel %vm10134, %v10038, %v10187
      %v10189 = vsel %vm10136, %v10039, %v10188
      %v10190 = vsel %vm10138, %v10040, %v10189
      %v10191 = vsel %vm10140, %v10041, %v10190
      %v10192 = vsel %vm10142, %v10042, %v10191
      %10201 = vmatprep.subr.mxu0 0.0
      %10202 = vmatpush1.msra.mxu0 %v10058
      %10203 = vmatprep.subr.mxu0 0.0
      %10204 = vmatpush1.msra.mxu0 %v10057
      %10205 = vmatprep.subr.mxu0 0.0
      %10206 = vmatpush1.msra.mxu0 %v10056
      %10207 = vmatprep.subr.mxu0 0.0
      %10208 = vmatpush1.msra.mxu0 %v10055
      %10209 = vmatprep.subr.mxu0 0.0
      %10210 = vmatpush1.msra.mxu0 %v10054
      %10211 = vmatprep.subr.mxu0 0.0
      %10212 = vmatpush1.msra.mxu0 %v10053
      %10213 = vmatprep.subr.mxu0 0.0
      %10214 = vmatpush1.msra.mxu0 %v10052
      %10215 = vmatprep.subr.mxu0 0.0
      %10216 = vmatpush1.msra.mxu0 %v10051
      %10217 = vmatprep.subr.mxu0 0.0
      %10218 = vmatpush1.msra.mxu0 %v10050
      %10219 = vmatprep.subr.mxu0 0.0
      %10220 = vmatpush1.msra.mxu0 %v10049
      %10221 = vmatprep.subr.mxu0 0.0
      %10222 = vmatpush1.msra.mxu0 %v10048
      %10223 = vmatprep.subr.mxu0 0.0
      %10224 = vmatpush1.msra.mxu0 %v10047
      %10225 = vmatprep.subr.mxu0 0.0
      %10226 = vmatpush1.msra.mxu0 %v10046
      %10227 = vmatprep.subr.mxu0 0.0
      %10228 = vmatpush1.msra.mxu0 %v10045
      %10229 = vmatprep.subr.mxu0 0.0
      %10230 = vmatpush1.msra.mxu0 %v10044
      %10231 = vmatprep.subr.mxu0 0.0
      %10232 = vmatpush1.msra.mxu0 %v10043
      %10233 = vmatprep.subr.mxu0 0.0
      %10234 = vmatpush2.msra.mxu0 0.0
      %10235 = vmatprep.subr.mxu0 0.0
      %10236 = vmatpush2.msra.mxu0 0.0
      %10237 = vmatprep.subr.mxu0 0.0
      %10238 = vmatpush2.msra.mxu0 0.0
      %10239 = vmatprep.subr.mxu0 0.0
      %10240 = vmatpush2.msra.mxu0 0.0
      %10241 = vmatprep.subr.mxu0 0.0
      %10242 = vmatpush2.msra.mxu0 0.0
      %10243 = vmatprep.subr.mxu0 0.0
      %10244 = vmatpush2.msra.mxu0 0.0
      %10245 = vmatprep.subr.mxu0 0.0
      %10246 = vmatpush2.msra.mxu0 0.0
      %10247 = vmatprep.subr.mxu0 0.0
      %10248 = vmatpush2.msra.mxu0 0.0
      %10249 = vmatprep.subr.mxu0 0.0
      %10250 = vmatpush2.msra.mxu0 0.0
      %10251 = vmatprep.subr.mxu0 0.0
      %10252 = vmatpush2.msra.mxu0 0.0
      %10253 = vmatprep.subr.mxu0 0.0
      %10254 = vmatpush2.msra.mxu0 0.0
      %10255 = vmatprep.subr.mxu0 0.0
      %10256 = vmatpush2.msra.mxu0 0.0
      %10257 = vmatprep.subr.mxu0 0.0
      %10258 = vmatpush2.msra.mxu0 0.0
      %10259 = vmatprep.subr.mxu0 0.0
      %10260 = vmatpush2.msra.mxu0 0.0
      %10261 = vmatprep.subr.mxu0 0.0
      %10262 = vmatpush2.msra.mxu0 0.0
      %10263 = vmatprep.subr.mxu0 0.0
      %10264 = vmatpush2.msra.mxu0 0.0
      %10265 = vmatprep.mubr.f32.mxu0 0.0
      %10266 = vmatmul.mubr.f32.gmra.mxu0 %v10143
      %v10267 = vpop.f32.mrf.mxu0
      %v10268 = vadd.f32 %v10064, %v10267
      %v10269 = vpop.f32.mrf.mxu0
      %10270 = vmatprep.mubr.f32.mxu0 0.0
      %10271 = vmatmul.mubr.f32.gmra.mxu0 %v10150
      %v10272 = vpop.f32.mrf.mxu0
      %v10273 = vadd.f32 %v10064, %v10272
      %v10274 = vpop.f32.mrf.mxu0
      %10275 = vmatprep.mubr.f32.mxu0 0.0
      %10276 = vmatmul.mubr.f32.gmra.mxu0 %v10157
      %v10277 = vpop.f32.mrf.mxu0
      %v10278 = vadd.f32 %v10064, %v10277
      %v10279 = vpop.f32.mrf.mxu0
      %10280 = vmatprep.mubr.f32.mxu0 0.0
      %10281 = vmatmul.mubr.f32.gmra.mxu0 %v10164
      %v10282 = vpop.f32.mrf.mxu0
      %v10283 = vadd.f32 %v10064, %v10282
      %v10284 = vpop.f32.mrf.mxu0
      %10285 = vmatprep.mubr.f32.mxu0 0.0
      %10286 = vmatmul.mubr.f32.gmra.mxu0 %v10171
      %v10287 = vpop.f32.mrf.mxu0
      %v10288 = vadd.f32 %v10064, %v10287
      %v10289 = vpop.f32.mrf.mxu0
      %10290 = vmatprep.mubr.f32.mxu0 0.0
      %10291 = vmatmul.mubr.f32.gmra.mxu0 %v10178
      %v10292 = vpop.f32.mrf.mxu0
      %v10293 = vadd.f32 %v10064, %v10292
      %v10294 = vpop.f32.mrf.mxu0
      %10295 = vmatprep.mubr.f32.mxu0 0.0
      %10296 = vmatmul.mubr.f32.gmra.mxu0 %v10185
      %v10297 = vpop.f32.mrf.mxu0
      %v10298 = vadd.f32 %v10064, %v10297
      %v10299 = vpop.f32.mrf.mxu0
      %10300 = vmatprep.mubr.f32.mxu0 0.0
      %10301 = vmatmul.mubr.f32.gmra.mxu0 %v10192
      %v10302 = vpop.f32.mrf.mxu0
      %v10303 = vadd.f32 %v10064, %v10302
      %v10304 = vpop.f32.mrf.mxu0
      %10305 = vdwg.mxu0
      %v10306 = vtanh.pop %v10268
      %v10307 = vtanh.pop %v10273
      %v10308 = vtanh.pop %v10278
      %v10309 = vtanh.pop %v10283
      %v10310 = vtanh.pop %v10288
      %v10311 = vtanh.pop %v10293
      %v10312 = vtanh.pop %v10298
      %v10313 = vtanh.pop %v10303
      %vm10314 = vcmask 15360
      %10315 = vst.msk [vmem:[%s329] sm:$0xff] %vm10314, %v10306
      %10316 = vst.msk [vmem:[%s329 + $0x8] sm:$0xff] %vm10314, %v10307
      %10317 = vst.msk [vmem:[%s329 + $0x10] sm:$0xff] %vm10314, %v10308
      %10318 = vst.msk [vmem:[%s329 + $0x18] sm:$0xff] %vm10314, %v10309
      %10319 = vst.msk [vmem:[%s329 + $0x20] sm:$0xff] %vm10314, %v10310
      %10320 = vst.msk [vmem:[%s329 + $0x28] sm:$0xff] %vm10314, %v10311
      %10321 = vst.msk [vmem:[%s329 + $0x30] sm:$0xff] %vm10314, %v10312
      %10322 = vst.msk [vmem:[%s329 + $0x38] sm:$0xff] %vm10314, %v10313
      %s10323 = smul.u32 8, %s19
      %p10324 = scmp.lt.s32.totalorder %s10323, 31
      %s10325 = scalar_select %p10324, %s10323, 31
      %s10326 = smul.addr %s10325, 8
      %s10327 = scalar_lea.vmem %s8, %s10326
      // Predicated region
      $region53: #{tpu_custom_call.1} parent=51 // pred_check
        %p10328 = pneg %p215
      $region54: #{tpu_custom_call.1} parent=51 // pred_check_branch
        %10330 = sbr.rel (%p10328) target = $region56
      $region55: #{tpu_custom_call.1} parent=51 // pred_region
        %s10331 = smul.u32 8, %s19
      $region56: #{tpu_custom_call.1} parent=51 // pred_fallthru
        _
    $region52: #{tpu_custom_call.1} parent=5 // pred_fallthru
      _
    %p10332 = scmp.le.s32.totalorder 2, %s14
    // Predicated region
    $region57: #{tpu_custom_call.1} parent=5 // pred_check
      %p10333 = pneg %p10332
    $region58: #{tpu_custom_call.1} parent=5 // pred_check_branch
      %10335 = sbr.rel (%p10333) target = $region60
    $region59: #{tpu_custom_call.1} parent=5 // pred_region
      %s10336 = ssub.s32 %s14, 2
      // Predicated region
      $region61: #{tpu_custom_call.1} parent=59 // pred_check
        %p10337 = pneg %p221
      $region62: #{tpu_custom_call.1} parent=59 // pred_check_branch
        %10339 = sbr.rel (%p10337) target = $region64
      $region63: #{tpu_custom_call.1} parent=59 // pred_region
        %s10340 = smul.u32 8, %s20
        %p10341 = scmp.lt.s32.totalorder %s10340, 31
        %s10342 = scalar_select %p10341, %s10340, 31
        %s10343 = smul.addr %s10342, 8
        %s10344 = scalar_lea.vmem %s8, %s10343
      $region64: #{tpu_custom_call.1} parent=59 // pred_fallthru
        _
    $region60: #{tpu_custom_call.1} parent=5 // pred_fallthru
      _
  $region6: #{tpu_custom_call.1} parent=0 // loop_footer
    %s18 = sadd.s32 1, %s14
  $region7: #{tpu_custom_call.1} parent=0 // loop_footer_branch
    %13 = sbr.rel target = $region3
  $region8: #{tpu_custom_call.1} parent=0 // loop_exit
    _

</llo_original>
